<compile_context>
chip_gen: v7x
topology: tpu7x:2x2x1
jax: 0.10.0
libtpu: 0.0.40
codegen_flags: <defaults>
</compile_context>

<pallas_src>
import functools

import jax
import jax.numpy as jnp
from jax.experimental import pallas as pl
from jax.experimental.pallas import tpu as pltpu

# Plain Python floats (NOT jnp scalars): module-level jnp scalars are traced
# jax.Arrays and get captured as kernel constants (the v2 trace failure).
_NEG = -3.0e38   # -inf sentinel for max-pool padding
_EPS = 1e-5      # BatchNorm eps


def _pool_and_conv(xp, H, W, w9=None):
    """Candidate ops on a zero-padded NHWC block.

    xp : (Bt, H+2, W+2, Ch) f32 zero-padded half-channel input.
    w9 : optional (9, Ch, Ch) bf16 conv weights laid out as (kh*kw, ci, co).
    Returns (max_pool, avg_pool, conv), each (Bt, H, W, Ch) f32, pre-BN.
    conv is None when w9 is None (pass 2 recomputes only the cheap pools).
    """
    Bt, Hp, Wp, Ch = xp.shape
    M = Bt * H * W
    f32 = jnp.float32

    # Column (W-direction) pad mask from a 2-D sublane iota (broadcasts over H).
    wcol = jax.lax.broadcasted_iota(jnp.int32, (Wp, Ch), 0)      # (Wp, Ch)
    w_is_pad = (wcol == 0) | (wcol == W + 1)

    sum_pool = jnp.zeros((Bt, H, W, Ch), f32)
    conv = jnp.zeros((M, Ch), f32) if w9 is not None else None
    m_all = jnp.full((Bt, H, W, Ch), _NEG, f32)
    top = jnp.full((Bt, 1, W, Ch), _NEG, f32)   # valid-row max for out row 0
    bot = jnp.full((Bt, 1, W, Ch), _NEG, f32)   # ... for out row H-1
    for dh in range(3):
        rm = jnp.full((Bt, H, W, Ch), _NEG, f32)  # horizontal max of this row tap
        for dw in range(3):
            s = xp[:, dh:dh + H, dw:dw + W, :]                    # (Bt,H,W,Ch)
            sum_pool = sum_pool + s
            if w9 is not None:
                # ReLU tap -> one accumulating K=Ch matmul.  No lane-axis
                # im2col concat: Ch stays on lanes and the tap dies here.
                tap = jnp.maximum(s, 0.0).astype(jnp.bfloat16).reshape(M, Ch)
                conv = conv + jnp.dot(tap, w9[dh * 3 + dw],
                                      preferred_element_type=jnp.float32)
            rm = jnp.maximum(rm, jnp.where(w_is_pad[dw:dw + W, :], _NEG, s))
        m_all = jnp.maximum(m_all, rm)
        if dh >= 1:      # row taps that hit valid rows for output row 0
            top = jnp.maximum(top, rm[:, 0:1])
        if dh <= 1:      # row taps that hit valid rows for output row H-1
            bot = jnp.maximum(bot, rm[:, H - 1:H])
    # MaxPool2d(3,1,1): padding behaves like -inf; fix the two H-border rows.
    max_pool = jnp.concatenate([top, m_all[:, 1:H - 1], bot], axis=1)

    # AvgPool2d(3,1,1, count_include_pad=False): exact per-position counts.
    ccol = jax.lax.broadcasted_iota(jnp.int32, (W, Ch), 0)
    cnt_w = 3.0 - (ccol == 0).astype(f32) - (ccol == W - 1).astype(f32)
    avg = sum_pool * (1.0 / cnt_w)
    avg_pool = jnp.concatenate(
        [avg[:, 0:1] * 0.5, avg[:, 1:H - 1] * (1.0 / 3.0), avg[:, H - 1:H] * 0.5],
        axis=1)

    if w9 is None:
        return max_pool, avg_pool, None
    return max_pool, avg_pool, conv.reshape(Bt, H, W, Ch)


def _sum_sumsq(v):
    """(Bt,H,W,Ch) f32 -> (2,Ch): per-channel [sum, sum-of-squares].

    H and Bt are reduced first (cheap VPU adds across vregs); the single
    cross-sublane (XLU) reduce only sees the small (2, W, Ch) remainder.
    """
    p = jnp.sum(v, axis=1)          # (Bt, W, Ch)
    p = jnp.sum(p, axis=0)          # (W, Ch)
    q = jnp.sum(v * v, axis=1)
    q = jnp.sum(q, axis=0)
    pq = jnp.stack([p, q], axis=0)  # (2, W, Ch)
    return jnp.sum(pq, axis=1)      # (2, Ch)


def _stats_kernel(xp_ref, w_ref, stats_ref, conv_ref, *, H, W):
    """Pass 1: conv (the only MXU work, done once) + per-channel BN sums."""
    @pl.when(pl.program_id(1) == 0)
    def _init():
        stats_ref[...] = jnp.zeros_like(stats_ref)

    Bt = xp_ref.shape[0]
    Ch = xp_ref.shape[-1]
    maxp, avgp, conv = _pool_and_conv(xp_ref[...], H, W, w9=w_ref[...])

    conv_bf = conv.astype(jnp.bfloat16)
    conv_ref[...] = conv_bf.reshape(Bt, H * W, Ch)        # reused by pass 2

    # Conv stats are taken on the bf16-rounded values that pass 2 will read.
    stats_ref[0, 0:2, :] += _sum_sumsq(maxp)
    stats_ref[0, 2:4, :] += _sum_sumsq(avgp)
    stats_ref[0, 4:6, :] += _sum_sumsq(conv_bf.astype(jnp.float32))


def _apply_kernel(alpha_ref, stats_ref, xp_ref, conv_ref, out_ref, *, H, W, count):
    """Pass 2: recompute cheap pools, BN with global stats, weighted sum, and
    store a lane-dense (Ch, H*W) NCHW-compatible slab per image."""
    Bt = xp_ref.shape[0]
    Ch = xp_ref.shape[-1]
    x = xp_ref[...]
    maxp, avgp, _ = _pool_and_conv(x, H, W)                # pools only (cheap)
    convp = conv_ref[...].astype(jnp.float32).reshape(Bt, H, W, Ch)
    x_id = x[:, 1:H + 1, 1:W + 1, :]                       # skip_connect

    st = stats_ref[...]                                    # (6, Ch) global sums
    inv_n = 1.0 / float(count)

    def _bn(y, row):                                       # BatchNorm2d(affine=False)
        m = st[row:row + 1, :] * inv_n                     # (1, Ch) batch mean
        var = st[row + 1:row + 2, :] * inv_n - m * m
        # TODO(synk): E[x^2]-E[x]^2 can cancel for large-mean activations;
        # switch to a shifted accumulation if BN outputs drift.
        return (y - m) * jax.lax.rsqrt(var + _EPS)

    res = (alpha_ref[0] * x_id
           + alpha_ref[1] * _bn(maxp, 0)
           + alpha_ref[2] * _bn(avgp, 2)
           + alpha_ref[3] * _bn(convp, 4))
    res = res.reshape(Bt, H * W, Ch)
    for b in range(Bt):        # per-image 2-D transpose -> unmasked, lane-dense stores
        out_ref[b, :, :] = res[b].T


def mixed_op_forward(x_nchw, conv_w_hwio, weights):
    """MixedOp.forward(x, weights_full) for the C >= k, stride=1 path.

    x_nchw      : (N, C, H, W) f32 (PyTorch NCHW convention)
    conv_w_hwio : (3, 3, C//2, C//2) f32 conv_3x3 weights (kh, kw, ci, co)
    weights     : (4,) f32 positive architecture weights (one per op).
                  (weights_full[weights_full > 0] is a no-op for softmax.)
    """
    N, C, H, W = x_nchw.shape
    k = 2
    assert C >= k and C % k == 0
    assert H >= 3 and W >= 3
    assert weights.shape[0] == 4
    Ch = C // k
    Hp, Wp = H + 2, W + 2
    HW = H * W

    x_nchw = x_nchw.astype(jnp.float32)
    # Half-channel split; one fused copy in: slice + transpose + zero pad.
    xt = jnp.transpose(x_nchw[:, :Ch], (0, 2, 3, 1))                 # NHWC
    xp = jnp.pad(xt, ((0, 0), (1, 1), (1, 1), (0, 0)))
    w9 = conv_w_hwio.reshape(9, Ch, Ch).astype(jnp.bfloat16)
    alphas = weights.astype(jnp.float32)

    # Batch tile: biggest divisor of N whose per-step working set (~14 live
    # full-size f32 copies inside _pool_and_conv) fits the budget.
    per_img = Hp * Wp * Ch * 4
    work_budget = 32 * 1024 * 1024
    cap = max(1, work_budget // max(per_img * 14, 1))
    Bt = 1
    for d in range(1, N + 1):
        if N % d == 0 and d <= cap:
            Bt = d
    NB = N // Bt
    # Per-TensorCore stats shards (v7x megacore); falls back to 1 shard.
    S = 2 if (NB % 2 == 0 and NB >= 2) else 1
    T = NB // S

    count = N * H * W
    vmem_lim = 48 * 1024 * 1024   # safe under v7x's 64 MiB physical VMEM
    # TODO(synk): raise toward ~96-112 MiB (and the Bt cap) on v5e/v6e (128 MiB).
    # NOTE: resident inputs (w9, stats) could use pipeline_mode=pl.Buffered(1)
    # to drop one pipeline buffer each; negligible at these channel counts.

    # Pass 1: per-shard BN sums + bf16 conv output (conv computed once).
    stats_sh, conv_hbm = pl.pallas_call(
        functools.partial(_stats_kernel, H=H, W=W),
        out_shape=(jax.ShapeDtypeStruct((S, 6, Ch), jnp.float32),
                   jax.ShapeDtypeStruct((N, HW, Ch), jnp.bfloat16)),
        grid=(S, T),
        in_specs=[
            pl.BlockSpec((Bt, Hp, Wp, Ch), lambda s, t: (s * T + t, 0, 0, 0)),
            pl.BlockSpec((9, Ch, Ch), lambda s, t: (0, 0, 0)),       # resident
        ],
        out_specs=(
            pl.BlockSpec((1, 6, Ch), lambda s, t: (s, 0, 0)),        # per-shard acc
            pl.BlockSpec((Bt, HW, Ch), lambda s, t: (s * T + t, 0, 0)),
        ),
        compiler_params=pltpu.CompilerParams(
            dimension_semantics=("parallel", "arbitrary"),
            vmem_limit_bytes=vmem_lim),
    )(xp, w9)

    stats = jnp.sum(stats_sh, axis=0)                                # (6, Ch)

    # Pass 2: pools recomputed, conv read back, BN + weighted sum, NCHW slabs.
    temp1 = pl.pallas_call(
        functools.partial(_apply_kernel, H=H, W=W, count=count),
        out_shape=jax.ShapeDtypeStruct((N, Ch, HW), jnp.float32),
        grid=(NB,),
        in_specs=[
            pl.BlockSpec(memory_space=pltpu.MemorySpace.SMEM),       # alphas (4,)
            pl.BlockSpec((6, Ch), lambda n: (0, 0)),                 # global stats
            pl.BlockSpec((Bt, Hp, Wp, Ch), lambda n: (n, 0, 0, 0)),  # padded x
            pl.BlockSpec((Bt, HW, Ch), lambda n: (n, 0, 0)),         # conv (bf16)
        ],
        out_specs=pl.BlockSpec((Bt, Ch, HW), lambda n: (n, 0, 0)),
        compiler_params=pltpu.CompilerParams(
            dimension_semantics=("parallel",),
            vmem_limit_bytes=vmem_lim),
    )(alphas, stats, xp, conv_hbm)

    # stride=1: cat([temp1, xtemp2], dim=1) + channel_shuffle(groups=2)
    # == interleave temp1 / xtemp2 channels; temp1 is already NCHW-compatible.
    t1 = temp1.reshape(N, Ch, H, W)
    ans = jnp.stack([t1, x_nchw[:, Ch:]], axis=2).reshape(N, C, H, W)
    return ans


if __name__ == "__main__":
    key = jax.random.PRNGKey(0)
    k1, k2, k3 = jax.random.split(key, 3)

    N, C, H, W = 2, 8, 16, 16            # small NCHW input, stride=1, k=2
    Ch = C // 2

    x = jax.random.normal(k1, (N, C, H, W), dtype=jnp.float32)
    conv_w = 0.1 * jax.random.normal(k2, (3, 3, Ch, Ch), dtype=jnp.float32)

    # Architecture weights: softmax outputs are always > 0, so the module's
    # `weights_full[weights_full > 0]` filter is a no-op here.
    weights_full = jax.nn.softmax(jax.random.normal(k3, (4,), dtype=jnp.float32))

    fwd = jax.jit(mixed_op_forward)
    out = fwd(x, conv_w, weights_full)
    jax.block_until_ready(out)
    assert out.shape == (N, C, H, W) and out.dtype == jnp.float32
    print("KERNEL_OK")
</pallas_src>

<mosaic_0001>
module attributes {stable_mosaic.version = 11 : i64} {
  func.func @_apply_kernel(%arg0: i32, %arg1: memref<4xf32, #tpu.memory_space<smem>>, %arg2: memref<6x4xf32, #tpu.memory_space<vmem>>, %arg3: memref<2x18x18x4xf32, #tpu.memory_space<vmem>>, %arg4: memref<2x256x4xbf16, #tpu.memory_space<vmem>>, %arg5: memref<2x4x256xf32, #tpu.memory_space<vmem>>) attributes {dimension_semantics = [#tpu.dimension_semantics<parallel>], iteration_bounds = array<i64: 1>, scalar_prefetch = 0 : i64, scratch_operands = 0 : i64, tpu.core_type = #tpu.core_type<tc>, window_params = [{transform_indices = @transform_0, window_bounds = array<i64: 4>}, {pipeline_mode = #tpu.pipeline_mode<synchronous>, transform_indices = @transform_1, window_bounds = array<i64: 6, 4>}, {transform_indices = @transform_2, window_bounds = array<i64: 2, 18, 18, 4>}, {transform_indices = @transform_3, window_bounds = array<i64: 2, 256, 4>}, {transform_indices = @transform_4, window_bounds = array<i64: 2, 4, 256>}]} {
    %c0 = arith.constant 0 : index
    %c0_0 = arith.constant 0 : index
    %c0_1 = arith.constant 0 : index
    %c0_2 = arith.constant 0 : index
    %0 = vector.load %arg3[%c0, %c0_0, %c0_1, %c0_2] : memref<2x18x18x4xf32, #tpu.memory_space<vmem>>, vector<2x18x18x4xf32>
    %1 = tpu.iota {dimensions = array<i32: 0>} : vector<18x4xi32>
    %c0_i32 = arith.constant 0 : i32
    %2 = vector.broadcast %c0_i32 : i32 to vector<18x4xi32>
    %3 = arith.cmpi eq, %1, %2 : vector<18x4xi32>
    %c17_i32 = arith.constant 17 : i32
    %4 = vector.broadcast %c17_i32 : i32 to vector<18x4xi32>
    %5 = arith.cmpi eq, %1, %4 : vector<18x4xi32>
    %6 = arith.ori %3, %5 : vector<18x4xi1>
    %cst = arith.constant 0.000000e+00 : f32
    %7 = vector.broadcast %cst : f32 to vector<2x16x16x4xf32>
    %cst_3 = arith.constant -3.000000e+38 : f32
    %8 = vector.broadcast %cst_3 : f32 to vector<2x16x16x4xf32>
    %cst_4 = arith.constant -3.000000e+38 : f32
    %9 = vector.broadcast %cst_4 : f32 to vector<2x1x16x4xf32>
    %cst_5 = arith.constant -3.000000e+38 : f32
    %10 = vector.broadcast %cst_5 : f32 to vector<2x1x16x4xf32>
    %cst_6 = arith.constant -3.000000e+38 : f32
    %11 = vector.broadcast %cst_6 : f32 to vector<2x16x16x4xf32>
    %12 = vector.extract_strided_slice %0 {offsets = [0, 0, 0, 0], sizes = [2, 16, 16, 4], strides = [1, 1, 1, 1]} : vector<2x18x18x4xf32> to vector<2x16x16x4xf32>
    %13 = arith.addf %7, %12 : vector<2x16x16x4xf32>
    %14 = vector.extract_strided_slice %6 {offsets = [0, 0], sizes = [16, 4], strides = [1, 1]} : vector<18x4xi1> to vector<16x4xi1>
    %cst_7 = arith.constant -3.000000e+38 : f32
    %15 = vector.shape_cast %14 : vector<16x4xi1> to vector<1x1x16x4xi1>
    %16 = vector.broadcast %15 : vector<1x1x16x4xi1> to vector<2x16x16x4xi1>
    %17 = vector.broadcast %cst_7 : f32 to vector<2x16x16x4xf32>
    %18 = arith.select %16, %17, %12 : vector<2x16x16x4xi1>, vector<2x16x16x4xf32>
    %19 = arith.maximumf %11, %18 : vector<2x16x16x4xf32>
    %20 = vector.extract_strided_slice %0 {offsets = [0, 0, 1, 0], sizes = [2, 16, 16, 4], strides = [1, 1, 1, 1]} : vector<2x18x18x4xf32> to vector<2x16x16x4xf32>
    %21 = arith.addf %13, %20 : vector<2x16x16x4xf32>
    %22 = vector.extract_strided_slice %6 {offsets = [1, 0], sizes = [16, 4], strides = [1, 1]} : vector<18x4xi1> to vector<16x4xi1>
    %cst_8 = arith.constant -3.000000e+38 : f32
    %23 = vector.shape_cast %22 : vector<16x4xi1> to vector<1x1x16x4xi1>
    %24 = vector.broadcast %23 : vector<1x1x16x4xi1> to vector<2x16x16x4xi1>
    %25 = vector.broadcast %cst_8 : f32 to vector<2x16x16x4xf32>
    %26 = arith.select %24, %25, %20 : vector<2x16x16x4xi1>, vector<2x16x16x4xf32>
    %27 = arith.maximumf %19, %26 : vector<2x16x16x4xf32>
    %28 = vector.extract_strided_slice %0 {offsets = [0, 0, 2, 0], sizes = [2, 16, 16, 4], strides = [1, 1, 1, 1]} : vector<2x18x18x4xf32> to vector<2x16x16x4xf32>
    %29 = arith.addf %21, %28 : vector<2x16x16x4xf32>
    %30 = vector.extract_strided_slice %6 {offsets = [2, 0], sizes = [16, 4], strides = [1, 1]} : vector<18x4xi1> to vector<16x4xi1>
    %cst_9 = arith.constant -3.000000e+38 : f32
    %31 = vector.shape_cast %30 : vector<16x4xi1> to vector<1x1x16x4xi1>
    %32 = vector.broadcast %31 : vector<1x1x16x4xi1> to vector<2x16x16x4xi1>
    %33 = vector.broadcast %cst_9 : f32 to vector<2x16x16x4xf32>
    %34 = arith.select %32, %33, %28 : vector<2x16x16x4xi1>, vector<2x16x16x4xf32>
    %35 = arith.maximumf %27, %34 : vector<2x16x16x4xf32>
    %36 = arith.maximumf %8, %35 : vector<2x16x16x4xf32>
    %37 = vector.extract_strided_slice %35 {offsets = [0, 15, 0, 0], sizes = [2, 1, 16, 4], strides = [1, 1, 1, 1]} : vector<2x16x16x4xf32> to vector<2x1x16x4xf32>
    %38 = arith.maximumf %10, %37 : vector<2x1x16x4xf32>
    %cst_10 = arith.constant -3.000000e+38 : f32
    %39 = vector.broadcast %cst_10 : f32 to vector<2x16x16x4xf32>
    %40 = vector.extract_strided_slice %0 {offsets = [0, 1, 0, 0], sizes = [2, 16, 16, 4], strides = [1, 1, 1, 1]} : vector<2x18x18x4xf32> to vector<2x16x16x4xf32>
    %41 = arith.addf %29, %40 : vector<2x16x16x4xf32>
    %42 = vector.extract_strided_slice %6 {offsets = [0, 0], sizes = [16, 4], strides = [1, 1]} : vector<18x4xi1> to vector<16x4xi1>
    %cst_11 = arith.constant -3.000000e+38 : f32
    %43 = vector.shape_cast %42 : vector<16x4xi1> to vector<1x1x16x4xi1>
    %44 = vector.broadcast %43 : vector<1x1x16x4xi1> to vector<2x16x16x4xi1>
    %45 = vector.broadcast %cst_11 : f32 to vector<2x16x16x4xf32>
    %46 = arith.select %44, %45, %40 : vector<2x16x16x4xi1>, vector<2x16x16x4xf32>
    %47 = arith.maximumf %39, %46 : vector<2x16x16x4xf32>
    %48 = vector.extract_strided_slice %0 {offsets = [0, 1, 1, 0], sizes = [2, 16, 16, 4], strides = [1, 1, 1, 1]} : vector<2x18x18x4xf32> to vector<2x16x16x4xf32>
    %49 = arith.addf %41, %48 : vector<2x16x16x4xf32>
    %50 = vector.extract_strided_slice %6 {offsets = [1, 0], sizes = [16, 4], strides = [1, 1]} : vector<18x4xi1> to vector<16x4xi1>
    %cst_12 = arith.constant -3.000000e+38 : f32
    %51 = vector.shape_cast %50 : vector<16x4xi1> to vector<1x1x16x4xi1>
    %52 = vector.broadcast %51 : vector<1x1x16x4xi1> to vector<2x16x16x4xi1>
    %53 = vector.broadcast %cst_12 : f32 to vector<2x16x16x4xf32>
    %54 = arith.select %52, %53, %48 : vector<2x16x16x4xi1>, vector<2x16x16x4xf32>
    %55 = arith.maximumf %47, %54 : vector<2x16x16x4xf32>
    %56 = vector.extract_strided_slice %0 {offsets = [0, 1, 2, 0], sizes = [2, 16, 16, 4], strides = [1, 1, 1, 1]} : vector<2x18x18x4xf32> to vector<2x16x16x4xf32>
    %57 = arith.addf %49, %56 : vector<2x16x16x4xf32>
    %58 = vector.extract_strided_slice %6 {offsets = [2, 0], sizes = [16, 4], strides = [1, 1]} : vector<18x4xi1> to vector<16x4xi1>
    %cst_13 = arith.constant -3.000000e+38 : f32
    %59 = vector.shape_cast %58 : vector<16x4xi1> to vector<1x1x16x4xi1>
    %60 = vector.broadcast %59 : vector<1x1x16x4xi1> to vector<2x16x16x4xi1>
    %61 = vector.broadcast %cst_13 : f32 to vector<2x16x16x4xf32>
    %62 = arith.select %60, %61, %56 : vector<2x16x16x4xi1>, vector<2x16x16x4xf32>
    %63 = arith.maximumf %55, %62 : vector<2x16x16x4xf32>
    %64 = arith.maximumf %36, %63 : vector<2x16x16x4xf32>
    %65 = vector.extract_strided_slice %63 {offsets = [0, 0, 0, 0], sizes = [2, 1, 16, 4], strides = [1, 1, 1, 1]} : vector<2x16x16x4xf32> to vector<2x1x16x4xf32>
    %66 = arith.maximumf %9, %65 : vector<2x1x16x4xf32>
    %67 = vector.extract_strided_slice %63 {offsets = [0, 15, 0, 0], sizes = [2, 1, 16, 4], strides = [1, 1, 1, 1]} : vector<2x16x16x4xf32> to vector<2x1x16x4xf32>
    %68 = arith.maximumf %38, %67 : vector<2x1x16x4xf32>
    %cst_14 = arith.constant -3.000000e+38 : f32
    %69 = vector.broadcast %cst_14 : f32 to vector<2x16x16x4xf32>
    %70 = vector.extract_strided_slice %0 {offsets = [0, 2, 0, 0], sizes = [2, 16, 16, 4], strides = [1, 1, 1, 1]} : vector<2x18x18x4xf32> to vector<2x16x16x4xf32>
    %71 = arith.addf %57, %70 : vector<2x16x16x4xf32>
    %72 = vector.extract_strided_slice %6 {offsets = [0, 0], sizes = [16, 4], strides = [1, 1]} : vector<18x4xi1> to vector<16x4xi1>
    %cst_15 = arith.constant -3.000000e+38 : f32
    %73 = vector.shape_cast %72 : vector<16x4xi1> to vector<1x1x16x4xi1>
    %74 = vector.broadcast %73 : vector<1x1x16x4xi1> to vector<2x16x16x4xi1>
    %75 = vector.broadcast %cst_15 : f32 to vector<2x16x16x4xf32>
    %76 = arith.select %74, %75, %70 : vector<2x16x16x4xi1>, vector<2x16x16x4xf32>
    %77 = arith.maximumf %69, %76 : vector<2x16x16x4xf32>
    %78 = vector.extract_strided_slice %0 {offsets = [0, 2, 1, 0], sizes = [2, 16, 16, 4], strides = [1, 1, 1, 1]} : vector<2x18x18x4xf32> to vector<2x16x16x4xf32>
    %79 = arith.addf %71, %78 : vector<2x16x16x4xf32>
    %80 = vector.extract_strided_slice %6 {offsets = [1, 0], sizes = [16, 4], strides = [1, 1]} : vector<18x4xi1> to vector<16x4xi1>
    %cst_16 = arith.constant -3.000000e+38 : f32
    %81 = vector.shape_cast %80 : vector<16x4xi1> to vector<1x1x16x4xi1>
    %82 = vector.broadcast %81 : vector<1x1x16x4xi1> to vector<2x16x16x4xi1>
    %83 = vector.broadcast %cst_16 : f32 to vector<2x16x16x4xf32>
    %84 = arith.select %82, %83, %78 : vector<2x16x16x4xi1>, vector<2x16x16x4xf32>
    %85 = arith.maximumf %77, %84 : vector<2x16x16x4xf32>
    %86 = vector.extract_strided_slice %0 {offsets = [0, 2, 2, 0], sizes = [2, 16, 16, 4], strides = [1, 1, 1, 1]} : vector<2x18x18x4xf32> to vector<2x16x16x4xf32>
    %87 = arith.addf %79, %86 : vector<2x16x16x4xf32>
    %88 = vector.extract_strided_slice %6 {offsets = [2, 0], sizes = [16, 4], strides = [1, 1]} : vector<18x4xi1> to vector<16x4xi1>
    %cst_17 = arith.constant -3.000000e+38 : f32
    %89 = vector.shape_cast %88 : vector<16x4xi1> to vector<1x1x16x4xi1>
    %90 = vector.broadcast %89 : vector<1x1x16x4xi1> to vector<2x16x16x4xi1>
    %91 = vector.broadcast %cst_17 : f32 to vector<2x16x16x4xf32>
    %92 = arith.select %90, %91, %86 : vector<2x16x16x4xi1>, vector<2x16x16x4xf32>
    %93 = arith.maximumf %85, %92 : vector<2x16x16x4xf32>
    %94 = arith.maximumf %64, %93 : vector<2x16x16x4xf32>
    %95 = vector.extract_strided_slice %93 {offsets = [0, 0, 0, 0], sizes = [2, 1, 16, 4], strides = [1, 1, 1, 1]} : vector<2x16x16x4xf32> to vector<2x1x16x4xf32>
    %96 = arith.maximumf %66, %95 : vector<2x1x16x4xf32>
    %97 = vector.extract_strided_slice %94 {offsets = [0, 1, 0, 0], sizes = [2, 14, 16, 4], strides = [1, 1, 1, 1]} : vector<2x16x16x4xf32> to vector<2x14x16x4xf32>
    %98 = tpu.concatenate %96, %97, %68 in 1 : vector<2x1x16x4xf32>, vector<2x14x16x4xf32>, vector<2x1x16x4xf32> -> vector<2x16x16x4xf32>
    %99 = tpu.iota {dimensions = array<i32: 0>} : vector<16x4xi32>
    %c0_i32_18 = arith.constant 0 : i32
    %100 = vector.broadcast %c0_i32_18 : i32 to vector<16x4xi32>
    %101 = arith.cmpi eq, %99, %100 : vector<16x4xi32>
    %102 = arith.extui %101 : vector<16x4xi1> to vector<16x4xi32>
    %103 = arith.sitofp %102 : vector<16x4xi32> to vector<16x4xf32>
    %cst_19 = arith.constant 3.000000e+00 : f32
    %104 = vector.broadcast %cst_19 : f32 to vector<16x4xf32>
    %105 = arith.subf %104, %103 : vector<16x4xf32>
    %c15_i32 = arith.constant 15 : i32
    %106 = vector.broadcast %c15_i32 : i32 to vector<16x4xi32>
    %107 = arith.cmpi eq, %99, %106 : vector<16x4xi32>
    %108 = arith.extui %107 : vector<16x4xi1> to vector<16x4xi32>
    %109 = arith.sitofp %108 : vector<16x4xi32> to vector<16x4xf32>
    %110 = arith.subf %105, %109 : vector<16x4xf32>
    %cst_20 = arith.constant 1.000000e+00 : f32
    %111 = vector.broadcast %cst_20 : f32 to vector<16x4xf32>
    %112 = arith.divf %111, %110 : vector<16x4xf32>
    %113 = vector.shape_cast %112 : vector<16x4xf32> to vector<1x1x16x4xf32>
    %114 = vector.broadcast %113 : vector<1x1x16x4xf32> to vector<2x16x16x4xf32>
    %115 = arith.mulf %87, %114 : vector<2x16x16x4xf32>
    %116 = vector.extract_strided_slice %115 {offsets = [0, 0, 0, 0], sizes = [2, 1, 16, 4], strides = [1, 1, 1, 1]} : vector<2x16x16x4xf32> to vector<2x1x16x4xf32>
    %cst_21 = arith.constant 5.000000e-01 : f32
    %117 = vector.broadcast %cst_21 : f32 to vector<2x1x16x4xf32>
    %118 = arith.mulf %116, %117 : vector<2x1x16x4xf32>
    %119 = vector.extract_strided_slice %115 {offsets = [0, 1, 0, 0], sizes = [2, 14, 16, 4], strides = [1, 1, 1, 1]} : vector<2x16x16x4xf32> to vector<2x14x16x4xf32>
    %cst_22 = arith.constant 0.333333343 : f32
    %120 = vector.broadcast %cst_22 : f32 to vector<2x14x16x4xf32>
    %121 = arith.mulf %119, %120 : vector<2x14x16x4xf32>
    %122 = vector.extract_strided_slice %115 {offsets = [0, 15, 0, 0], sizes = [2, 1, 16, 4], strides = [1, 1, 1, 1]} : vector<2x16x16x4xf32> to vector<2x1x16x4xf32>
    %cst_23 = arith.constant 5.000000e-01 : f32
    %123 = vector.broadcast %cst_23 : f32 to vector<2x1x16x4xf32>
    %124 = arith.mulf %122, %123 : vector<2x1x16x4xf32>
    %125 = tpu.concatenate %118, %121, %124 in 1 : vector<2x1x16x4xf32>, vector<2x14x16x4xf32>, vector<2x1x16x4xf32> -> vector<2x16x16x4xf32>
    %c0_24 = arith.constant 0 : index
    %c0_25 = arith.constant 0 : index
    %c0_26 = arith.constant 0 : index
    %126 = vector.load %arg4[%c0_24, %c0_25, %c0_26] : memref<2x256x4xbf16, #tpu.memory_space<vmem>>, vector<2x256x4xbf16>
    %127 = arith.extf %126 : vector<2x256x4xbf16> to vector<2x256x4xf32>
    %128 = vector.shape_cast %127 : vector<2x256x4xf32> to vector<2x16x16x4xf32>
    %129 = vector.extract_strided_slice %0 {offsets = [0, 1, 1, 0], sizes = [2, 16, 16, 4], strides = [1, 1, 1, 1]} : vector<2x18x18x4xf32> to vector<2x16x16x4xf32>
    %c0_27 = arith.constant 0 : index
    %c0_28 = arith.constant 0 : index
    %130 = vector.load %arg2[%c0_27, %c0_28] : memref<6x4xf32, #tpu.memory_space<vmem>>, vector<6x4xf32>
    %c0_29 = arith.constant 0 : index
    %131 = memref.load %arg1[%c0_29] : memref<4xf32, #tpu.memory_space<smem>>
    %132 = vector.broadcast %131 : f32 to vector<2x16x16x4xf32>
    %133 = arith.mulf %132, %129 : vector<2x16x16x4xf32>
    %c1 = arith.constant 1 : index
    %134 = memref.load %arg1[%c1] : memref<4xf32, #tpu.memory_space<smem>>
    %135 = vector.extract_strided_slice %130 {offsets = [0, 0], sizes = [1, 4], strides = [1, 1]} : vector<6x4xf32> to vector<1x4xf32>
    %cst_30 = arith.constant 0.001953125 : f32
    %136 = vector.broadcast %cst_30 : f32 to vector<1x4xf32>
    %137 = arith.mulf %135, %136 : vector<1x4xf32>
    %138 = vector.extract_strided_slice %130 {offsets = [1, 0], sizes = [1, 4], strides = [1, 1]} : vector<6x4xf32> to vector<1x4xf32>
    %cst_31 = arith.constant 0.001953125 : f32
    %139 = vector.broadcast %cst_31 : f32 to vector<1x4xf32>
    %140 = arith.mulf %138, %139 : vector<1x4xf32>
    %141 = arith.mulf %137, %137 : vector<1x4xf32>
    %142 = arith.subf %140, %141 : vector<1x4xf32>
    %143 = vector.shape_cast %137 : vector<1x4xf32> to vector<1x1x1x4xf32>
    %144 = vector.broadcast %143 : vector<1x1x1x4xf32> to vector<2x16x16x4xf32>
    %145 = arith.subf %98, %144 : vector<2x16x16x4xf32>
    %cst_32 = arith.constant 9.99999974E-6 : f32
    %146 = vector.broadcast %cst_32 : f32 to vector<1x4xf32>
    %147 = arith.addf %142, %146 : vector<1x4xf32>
    %148 = math.rsqrt %147 : vector<1x4xf32>
    %149 = vector.shape_cast %148 : vector<1x4xf32> to vector<1x1x1x4xf32>
    %150 = vector.broadcast %149 : vector<1x1x1x4xf32> to vector<2x16x16x4xf32>
    %151 = arith.mulf %145, %150 : vector<2x16x16x4xf32>
    %152 = vector.broadcast %134 : f32 to vector<2x16x16x4xf32>
    %153 = arith.mulf %152, %151 : vector<2x16x16x4xf32>
    %154 = arith.addf %133, %153 : vector<2x16x16x4xf32>
    %c2 = arith.constant 2 : index
    %155 = memref.load %arg1[%c2] : memref<4xf32, #tpu.memory_space<smem>>
    %156 = vector.extract_strided_slice %130 {offsets = [2, 0], sizes = [1, 4], strides = [1, 1]} : vector<6x4xf32> to vector<1x4xf32>
    %cst_33 = arith.constant 0.001953125 : f32
    %157 = vector.broadcast %cst_33 : f32 to vector<1x4xf32>
    %158 = arith.mulf %156, %157 : vector<1x4xf32>
    %159 = vector.extract_strided_slice %130 {offsets = [3, 0], sizes = [1, 4], strides = [1, 1]} : vector<6x4xf32> to vector<1x4xf32>
    %cst_34 = arith.constant 0.001953125 : f32
    %160 = vector.broadcast %cst_34 : f32 to vector<1x4xf32>
    %161 = arith.mulf %159, %160 : vector<1x4xf32>
    %162 = arith.mulf %158, %158 : vector<1x4xf32>
    %163 = arith.subf %161, %162 : vector<1x4xf32>
    %164 = vector.shape_cast %158 : vector<1x4xf32> to vector<1x1x1x4xf32>
    %165 = vector.broadcast %164 : vector<1x1x1x4xf32> to vector<2x16x16x4xf32>
    %166 = arith.subf %125, %165 : vector<2x16x16x4xf32>
    %cst_35 = arith.constant 9.99999974E-6 : f32
    %167 = vector.broadcast %cst_35 : f32 to vector<1x4xf32>
    %168 = arith.addf %163, %167 : vector<1x4xf32>
    %169 = math.rsqrt %168 : vector<1x4xf32>
    %170 = vector.shape_cast %169 : vector<1x4xf32> to vector<1x1x1x4xf32>
    %171 = vector.broadcast %170 : vector<1x1x1x4xf32> to vector<2x16x16x4xf32>
    %172 = arith.mulf %166, %171 : vector<2x16x16x4xf32>
    %173 = vector.broadcast %155 : f32 to vector<2x16x16x4xf32>
    %174 = arith.mulf %173, %172 : vector<2x16x16x4xf32>
    %175 = arith.addf %154, %174 : vector<2x16x16x4xf32>
    %c3 = arith.constant 3 : index
    %176 = memref.load %arg1[%c3] : memref<4xf32, #tpu.memory_space<smem>>
    %177 = vector.extract_strided_slice %130 {offsets = [4, 0], sizes = [1, 4], strides = [1, 1]} : vector<6x4xf32> to vector<1x4xf32>
    %cst_36 = arith.constant 0.001953125 : f32
    %178 = vector.broadcast %cst_36 : f32 to vector<1x4xf32>
    %179 = arith.mulf %177, %178 : vector<1x4xf32>
    %180 = vector.extract_strided_slice %130 {offsets = [5, 0], sizes = [1, 4], strides = [1, 1]} : vector<6x4xf32> to vector<1x4xf32>
    %cst_37 = arith.constant 0.001953125 : f32
    %181 = vector.broadcast %cst_37 : f32 to vector<1x4xf32>
    %182 = arith.mulf %180, %181 : vector<1x4xf32>
    %183 = arith.mulf %179, %179 : vector<1x4xf32>
    %184 = arith.subf %182, %183 : vector<1x4xf32>
    %185 = vector.shape_cast %179 : vector<1x4xf32> to vector<1x1x1x4xf32>
    %186 = vector.broadcast %185 : vector<1x1x1x4xf32> to vector<2x16x16x4xf32>
    %187 = arith.subf %128, %186 : vector<2x16x16x4xf32>
    %cst_38 = arith.constant 9.99999974E-6 : f32
    %188 = vector.broadcast %cst_38 : f32 to vector<1x4xf32>
    %189 = arith.addf %184, %188 : vector<1x4xf32>
    %190 = math.rsqrt %189 : vector<1x4xf32>
    %191 = vector.shape_cast %190 : vector<1x4xf32> to vector<1x1x1x4xf32>
    %192 = vector.broadcast %191 : vector<1x1x1x4xf32> to vector<2x16x16x4xf32>
    %193 = arith.mulf %187, %192 : vector<2x16x16x4xf32>
    %194 = vector.broadcast %176 : f32 to vector<2x16x16x4xf32>
    %195 = arith.mulf %194, %193 : vector<2x16x16x4xf32>
    %196 = arith.addf %175, %195 : vector<2x16x16x4xf32>
    %197 = vector.shape_cast %196 : vector<2x16x16x4xf32> to vector<2x256x4xf32>
    %198 = vector.extract_strided_slice %197 {offsets = [0, 0, 0], sizes = [1, 256, 4], strides = [1, 1, 1]} : vector<2x256x4xf32> to vector<1x256x4xf32>
    %199 = vector.shape_cast %198 : vector<1x256x4xf32> to vector<256x4xf32>
    %200 = tpu.transpose %199, [1, 0] : vector<256x4xf32> -> vector<4x256xf32>
    %c0_39 = arith.constant 0 : index
    %c0_40 = arith.constant 0 : index
    %c0_41 = arith.constant 0 : index
    %201 = vector.load %arg5[%c0_39, %c0_40, %c0_41] : memref<2x4x256xf32, #tpu.memory_space<vmem>>, vector<1x4x256xf32>
    %202 = vector.shape_cast %201 : vector<1x4x256xf32> to vector<4x256xf32>
    %203 = vector.shape_cast %200 : vector<4x256xf32> to vector<1x4x256xf32>
    tpu.vector_store %arg5[%c0_39, %c0_40, %c0_41], %203 {strides = array<i32>} : memref<2x4x256xf32, #tpu.memory_space<vmem>>, vector<1x4x256xf32>,
    %204 = vector.extract_strided_slice %197 {offsets = [1, 0, 0], sizes = [1, 256, 4], strides = [1, 1, 1]} : vector<2x256x4xf32> to vector<1x256x4xf32>
    %205 = vector.shape_cast %204 : vector<1x256x4xf32> to vector<256x4xf32>
    %206 = tpu.transpose %205, [1, 0] : vector<256x4xf32> -> vector<4x256xf32>
    %c1_42 = arith.constant 1 : index
    %c0_43 = arith.constant 0 : index
    %c0_44 = arith.constant 0 : index
    %207 = vector.load %arg5[%c1_42, %c0_43, %c0_44] : memref<2x4x256xf32, #tpu.memory_space<vmem>>, vector<1x4x256xf32>
    %208 = vector.shape_cast %207 : vector<1x4x256xf32> to vector<4x256xf32>
    %209 = vector.shape_cast %206 : vector<4x256xf32> to vector<1x4x256xf32>
    tpu.vector_store %arg5[%c1_42, %c0_43, %c0_44], %209 {strides = array<i32>} : memref<2x4x256xf32, #tpu.memory_space<vmem>>, vector<1x4x256xf32>,
    return
  }
  func.func @transform_0(%arg0: i32) -> i32 {
    %c0_i32 = arith.constant 0 : i32
    %c0_i32_0 = arith.constant 0 : i32
    return %c0_i32 : i32
  }
  func.func @transform_1(%arg0: i32) -> (i32, i32) {
    %c0_i32 = arith.constant 0 : i32
    %c0_i32_0 = arith.constant 0 : i32
    %c0_i32_1 = arith.constant 0 : i32
    return %c0_i32, %c0_i32_0 : i32, i32
  }
  func.func @transform_2(%arg0: i32) -> (i32, i32, i32, i32) {
    %c0_i32 = arith.constant 0 : i32
    %c0_i32_0 = arith.constant 0 : i32
    %c0_i32_1 = arith.constant 0 : i32
    %c0_i32_2 = arith.constant 0 : i32
    return %arg0, %c0_i32, %c0_i32_0, %c0_i32_1 : i32, i32, i32, i32
  }
  func.func @transform_3(%arg0: i32) -> (i32, i32, i32) {
    %c0_i32 = arith.constant 0 : i32
    %c0_i32_0 = arith.constant 0 : i32
    %c0_i32_1 = arith.constant 0 : i32
    return %arg0, %c0_i32, %c0_i32_0 : i32, i32, i32
  }
  func.func @transform_4(%arg0: i32) -> (i32, i32, i32) {
    %c0_i32 = arith.constant 0 : i32
    %c0_i32_0 = arith.constant 0 : i32
    %c0_i32_1 = arith.constant 0 : i32
    return %arg0, %c0_i32, %c0_i32_0 : i32, i32, i32
  }
}

module attributes {stable_mosaic.version = 11 : i64} {
  func.func @_stats_kernel(%arg0: i32, %arg1: i32, %arg2: memref<2x18x18x4xf32, #tpu.memory_space<vmem>>, %arg3: memref<9x4x4xbf16, #tpu.memory_space<vmem>>, %arg4: memref<1x6x4xf32, #tpu.memory_space<vmem>>, %arg5: memref<2x256x4xbf16, #tpu.memory_space<vmem>>) attributes {dimension_semantics = [#tpu.dimension_semantics<parallel>, #tpu.dimension_semantics<arbitrary>], iteration_bounds = array<i64: 1, 1>, scalar_prefetch = 0 : i64, scratch_operands = 0 : i64, tpu.core_type = #tpu.core_type<tc>, window_params = [{transform_indices = @transform_0, window_bounds = array<i64: 2, 18, 18, 4>}, {pipeline_mode = #tpu.pipeline_mode<synchronous>, transform_indices = @transform_1, window_bounds = array<i64: 9, 4, 4>}, {transform_indices = @transform_2, window_bounds = array<i64: 1, 6, 4>}, {transform_indices = @transform_3, window_bounds = array<i64: 2, 256, 4>}]} {
    %c0_i32 = arith.constant 0 : i32
    %0 = arith.cmpi eq, %arg1, %c0_i32 : i32
    %1 = arith.extui %0 : i1 to i32
    %c0_i32_0 = arith.constant 0 : i32
    %2 = arith.cmpi ne, %1, %c0_i32_0 : i32
    scf.if %2 {
      %cst_82 = arith.constant 0.000000e+00 : f32
      %253 = vector.broadcast %cst_82 : f32 to vector<1x6x4xf32>
      %c0_83 = arith.constant 0 : index
      %c0_84 = arith.constant 0 : index
      %c0_85 = arith.constant 0 : index
      %254 = vector.load %arg4[%c0_83, %c0_84, %c0_85] : memref<1x6x4xf32, #tpu.memory_space<vmem>>, vector<1x6x4xf32>
      tpu.vector_store %arg4[%c0_83, %c0_84, %c0_85], %253 {strides = array<i32>} : memref<1x6x4xf32, #tpu.memory_space<vmem>>, vector<1x6x4xf32>,
    } else {
    }
    %c0 = arith.constant 0 : index
    %c0_1 = arith.constant 0 : index
    %c0_2 = arith.constant 0 : index
    %c0_3 = arith.constant 0 : index
    %3 = vector.load %arg2[%c0, %c0_1, %c0_2, %c0_3] : memref<2x18x18x4xf32, #tpu.memory_space<vmem>>, vector<2x18x18x4xf32>
    %c0_4 = arith.constant 0 : index
    %c0_5 = arith.constant 0 : index
    %c0_6 = arith.constant 0 : index
    %4 = vector.load %arg3[%c0_4, %c0_5, %c0_6] : memref<9x4x4xbf16, #tpu.memory_space<vmem>>, vector<9x4x4xbf16>
    %5 = tpu.iota {dimensions = array<i32: 0>} : vector<18x4xi32>
    %c0_i32_7 = arith.constant 0 : i32
    %6 = vector.broadcast %c0_i32_7 : i32 to vector<18x4xi32>
    %7 = arith.cmpi eq, %5, %6 : vector<18x4xi32>
    %c17_i32 = arith.constant 17 : i32
    %8 = vector.broadcast %c17_i32 : i32 to vector<18x4xi32>
    %9 = arith.cmpi eq, %5, %8 : vector<18x4xi32>
    %10 = arith.ori %7, %9 : vector<18x4xi1>
    %cst = arith.constant 0.000000e+00 : f32
    %11 = vector.broadcast %cst : f32 to vector<2x16x16x4xf32>
    %cst_8 = arith.constant 0.000000e+00 : f32
    %12 = vector.broadcast %cst_8 : f32 to vector<512x4xf32>
    %cst_9 = arith.constant -3.000000e+38 : f32
    %13 = vector.broadcast %cst_9 : f32 to vector<2x16x16x4xf32>
    %cst_10 = arith.constant -3.000000e+38 : f32
    %14 = vector.broadcast %cst_10 : f32 to vector<2x1x16x4xf32>
    %cst_11 = arith.constant -3.000000e+38 : f32
    %15 = vector.broadcast %cst_11 : f32 to vector<2x1x16x4xf32>
    %cst_12 = arith.constant -3.000000e+38 : f32
    %16 = vector.broadcast %cst_12 : f32 to vector<2x16x16x4xf32>
    %17 = vector.extract_strided_slice %3 {offsets = [0, 0, 0, 0], sizes = [2, 16, 16, 4], strides = [1, 1, 1, 1]} : vector<2x18x18x4xf32> to vector<2x16x16x4xf32>
    %18 = arith.addf %11, %17 : vector<2x16x16x4xf32>
    %cst_13 = arith.constant 0.000000e+00 : f32
    %19 = vector.broadcast %cst_13 : f32 to vector<2x16x16x4xf32>
    %20 = arith.maximumf %17, %19 : vector<2x16x16x4xf32>
    %21 = arith.truncf %20 : vector<2x16x16x4xf32> to vector<2x16x16x4xbf16>
    %22 = vector.shape_cast %21 : vector<2x16x16x4xbf16> to vector<512x4xbf16>
    %23 = vector.extract_strided_slice %4 {offsets = [0, 0, 0], sizes = [1, 4, 4], strides = [1, 1, 1]} : vector<9x4x4xbf16> to vector<1x4x4xbf16>
    %24 = vector.shape_cast %23 : vector<1x4x4xbf16> to vector<4x4xbf16>
    %cst_14 = arith.constant dense<0.000000e+00> : vector<512x4xf32>
    %25 = tpu.matmul %22, %24, %cst_14 {dimension_numbers = #tpu.dot_dimension_numbers<[1], [0], [0], [1], [0, 0, 1, 1], [], []>} : vector<512x4xbf16>, vector<4x4xbf16>, vector<512x4xf32> -> vector<512x4xf32>
    %26 = arith.addf %12, %25 : vector<512x4xf32>
    %27 = vector.extract_strided_slice %10 {offsets = [0, 0], sizes = [16, 4], strides = [1, 1]} : vector<18x4xi1> to vector<16x4xi1>
    %cst_15 = arith.constant -3.000000e+38 : f32
    %28 = vector.shape_cast %27 : vector<16x4xi1> to vector<1x1x16x4xi1>
    %29 = vector.broadcast %28 : vector<1x1x16x4xi1> to vector<2x16x16x4xi1>
    %30 = vector.broadcast %cst_15 : f32 to vector<2x16x16x4xf32>
    %31 = arith.select %29, %30, %17 : vector<2x16x16x4xi1>, vector<2x16x16x4xf32>
    %32 = arith.maximumf %16, %31 : vector<2x16x16x4xf32>
    %33 = vector.extract_strided_slice %3 {offsets = [0, 0, 1, 0], sizes = [2, 16, 16, 4], strides = [1, 1, 1, 1]} : vector<2x18x18x4xf32> to vector<2x16x16x4xf32>
    %34 = arith.addf %18, %33 : vector<2x16x16x4xf32>
    %cst_16 = arith.constant 0.000000e+00 : f32
    %35 = vector.broadcast %cst_16 : f32 to vector<2x16x16x4xf32>
    %36 = arith.maximumf %33, %35 : vector<2x16x16x4xf32>
    %37 = arith.truncf %36 : vector<2x16x16x4xf32> to vector<2x16x16x4xbf16>
    %38 = vector.shape_cast %37 : vector<2x16x16x4xbf16> to vector<512x4xbf16>
    %39 = vector.extract_strided_slice %4 {offsets = [1, 0, 0], sizes = [1, 4, 4], strides = [1, 1, 1]} : vector<9x4x4xbf16> to vector<1x4x4xbf16>
    %40 = vector.shape_cast %39 : vector<1x4x4xbf16> to vector<4x4xbf16>
    %cst_17 = arith.constant dense<0.000000e+00> : vector<512x4xf32>
    %41 = tpu.matmul %38, %40, %cst_17 {dimension_numbers = #tpu.dot_dimension_numbers<[1], [0], [0], [1], [0, 0, 1, 1], [], []>} : vector<512x4xbf16>, vector<4x4xbf16>, vector<512x4xf32> -> vector<512x4xf32>
    %42 = arith.addf %26, %41 : vector<512x4xf32>
    %43 = vector.extract_strided_slice %10 {offsets = [1, 0], sizes = [16, 4], strides = [1, 1]} : vector<18x4xi1> to vector<16x4xi1>
    %cst_18 = arith.constant -3.000000e+38 : f32
    %44 = vector.shape_cast %43 : vector<16x4xi1> to vector<1x1x16x4xi1>
    %45 = vector.broadcast %44 : vector<1x1x16x4xi1> to vector<2x16x16x4xi1>
    %46 = vector.broadcast %cst_18 : f32 to vector<2x16x16x4xf32>
    %47 = arith.select %45, %46, %33 : vector<2x16x16x4xi1>, vector<2x16x16x4xf32>
    %48 = arith.maximumf %32, %47 : vector<2x16x16x4xf32>
    %49 = vector.extract_strided_slice %3 {offsets = [0, 0, 2, 0], sizes = [2, 16, 16, 4], strides = [1, 1, 1, 1]} : vector<2x18x18x4xf32> to vector<2x16x16x4xf32>
    %50 = arith.addf %34, %49 : vector<2x16x16x4xf32>
    %cst_19 = arith.constant 0.000000e+00 : f32
    %51 = vector.broadcast %cst_19 : f32 to vector<2x16x16x4xf32>
    %52 = arith.maximumf %49, %51 : vector<2x16x16x4xf32>
    %53 = arith.truncf %52 : vector<2x16x16x4xf32> to vector<2x16x16x4xbf16>
    %54 = vector.shape_cast %53 : vector<2x16x16x4xbf16> to vector<512x4xbf16>
    %55 = vector.extract_strided_slice %4 {offsets = [2, 0, 0], sizes = [1, 4, 4], strides = [1, 1, 1]} : vector<9x4x4xbf16> to vector<1x4x4xbf16>
    %56 = vector.shape_cast %55 : vector<1x4x4xbf16> to vector<4x4xbf16>
    %cst_20 = arith.constant dense<0.000000e+00> : vector<512x4xf32>
    %57 = tpu.matmul %54, %56, %cst_20 {dimension_numbers = #tpu.dot_dimension_numbers<[1], [0], [0], [1], [0, 0, 1, 1], [], []>} : vector<512x4xbf16>, vector<4x4xbf16>, vector<512x4xf32> -> vector<512x4xf32>
    %58 = arith.addf %42, %57 : vector<512x4xf32>
    %59 = vector.extract_strided_slice %10 {offsets = [2, 0], sizes = [16, 4], strides = [1, 1]} : vector<18x4xi1> to vector<16x4xi1>
    %cst_21 = arith.constant -3.000000e+38 : f32
    %60 = vector.shape_cast %59 : vector<16x4xi1> to vector<1x1x16x4xi1>
    %61 = vector.broadcast %60 : vector<1x1x16x4xi1> to vector<2x16x16x4xi1>
    %62 = vector.broadcast %cst_21 : f32 to vector<2x16x16x4xf32>
    %63 = arith.select %61, %62, %49 : vector<2x16x16x4xi1>, vector<2x16x16x4xf32>
    %64 = arith.maximumf %48, %63 : vector<2x16x16x4xf32>
    %65 = arith.maximumf %13, %64 : vector<2x16x16x4xf32>
    %66 = vector.extract_strided_slice %64 {offsets = [0, 15, 0, 0], sizes = [2, 1, 16, 4], strides = [1, 1, 1, 1]} : vector<2x16x16x4xf32> to vector<2x1x16x4xf32>
    %67 = arith.maximumf %15, %66 : vector<2x1x16x4xf32>
    %cst_22 = arith.constant -3.000000e+38 : f32
    %68 = vector.broadcast %cst_22 : f32 to vector<2x16x16x4xf32>
    %69 = vector.extract_strided_slice %3 {offsets = [0, 1, 0, 0], sizes = [2, 16, 16, 4], strides = [1, 1, 1, 1]} : vector<2x18x18x4xf32> to vector<2x16x16x4xf32>
    %70 = arith.addf %50, %69 : vector<2x16x16x4xf32>
    %cst_23 = arith.constant 0.000000e+00 : f32
    %71 = vector.broadcast %cst_23 : f32 to vector<2x16x16x4xf32>
    %72 = arith.maximumf %69, %71 : vector<2x16x16x4xf32>
    %73 = arith.truncf %72 : vector<2x16x16x4xf32> to vector<2x16x16x4xbf16>
    %74 = vector.shape_cast %73 : vector<2x16x16x4xbf16> to vector<512x4xbf16>
    %75 = vector.extract_strided_slice %4 {offsets = [3, 0, 0], sizes = [1, 4, 4], strides = [1, 1, 1]} : vector<9x4x4xbf16> to vector<1x4x4xbf16>
    %76 = vector.shape_cast %75 : vector<1x4x4xbf16> to vector<4x4xbf16>
    %cst_24 = arith.constant dense<0.000000e+00> : vector<512x4xf32>
    %77 = tpu.matmul %74, %76, %cst_24 {dimension_numbers = #tpu.dot_dimension_numbers<[1], [0], [0], [1], [0, 0, 1, 1], [], []>} : vector<512x4xbf16>, vector<4x4xbf16>, vector<512x4xf32> -> vector<512x4xf32>
    %78 = arith.addf %58, %77 : vector<512x4xf32>
    %79 = vector.extract_strided_slice %10 {offsets = [0, 0], sizes = [16, 4], strides = [1, 1]} : vector<18x4xi1> to vector<16x4xi1>
    %cst_25 = arith.constant -3.000000e+38 : f32
    %80 = vector.shape_cast %79 : vector<16x4xi1> to vector<1x1x16x4xi1>
    %81 = vector.broadcast %80 : vector<1x1x16x4xi1> to vector<2x16x16x4xi1>
    %82 = vector.broadcast %cst_25 : f32 to vector<2x16x16x4xf32>
    %83 = arith.select %81, %82, %69 : vector<2x16x16x4xi1>, vector<2x16x16x4xf32>
    %84 = arith.maximumf %68, %83 : vector<2x16x16x4xf32>
    %85 = vector.extract_strided_slice %3 {offsets = [0, 1, 1, 0], sizes = [2, 16, 16, 4], strides = [1, 1, 1, 1]} : vector<2x18x18x4xf32> to vector<2x16x16x4xf32>
    %86 = arith.addf %70, %85 : vector<2x16x16x4xf32>
    %cst_26 = arith.constant 0.000000e+00 : f32
    %87 = vector.broadcast %cst_26 : f32 to vector<2x16x16x4xf32>
    %88 = arith.maximumf %85, %87 : vector<2x16x16x4xf32>
    %89 = arith.truncf %88 : vector<2x16x16x4xf32> to vector<2x16x16x4xbf16>
    %90 = vector.shape_cast %89 : vector<2x16x16x4xbf16> to vector<512x4xbf16>
    %91 = vector.extract_strided_slice %4 {offsets = [4, 0, 0], sizes = [1, 4, 4], strides = [1, 1, 1]} : vector<9x4x4xbf16> to vector<1x4x4xbf16>
    %92 = vector.shape_cast %91 : vector<1x4x4xbf16> to vector<4x4xbf16>
    %cst_27 = arith.constant dense<0.000000e+00> : vector<512x4xf32>
    %93 = tpu.matmul %90, %92, %cst_27 {dimension_numbers = #tpu.dot_dimension_numbers<[1], [0], [0], [1], [0, 0, 1, 1], [], []>} : vector<512x4xbf16>, vector<4x4xbf16>, vector<512x4xf32> -> vector<512x4xf32>
    %94 = arith.addf %78, %93 : vector<512x4xf32>
    %95 = vector.extract_strided_slice %10 {offsets = [1, 0], sizes = [16, 4], strides = [1, 1]} : vector<18x4xi1> to vector<16x4xi1>
    %cst_28 = arith.constant -3.000000e+38 : f32
    %96 = vector.shape_cast %95 : vector<16x4xi1> to vector<1x1x16x4xi1>
    %97 = vector.broadcast %96 : vector<1x1x16x4xi1> to vector<2x16x16x4xi1>
    %98 = vector.broadcast %cst_28 : f32 to vector<2x16x16x4xf32>
    %99 = arith.select %97, %98, %85 : vector<2x16x16x4xi1>, vector<2x16x16x4xf32>
    %100 = arith.maximumf %84, %99 : vector<2x16x16x4xf32>
    %101 = vector.extract_strided_slice %3 {offsets = [0, 1, 2, 0], sizes = [2, 16, 16, 4], strides = [1, 1, 1, 1]} : vector<2x18x18x4xf32> to vector<2x16x16x4xf32>
    %102 = arith.addf %86, %101 : vector<2x16x16x4xf32>
    %cst_29 = arith.constant 0.000000e+00 : f32
    %103 = vector.broadcast %cst_29 : f32 to vector<2x16x16x4xf32>
    %104 = arith.maximumf %101, %103 : vector<2x16x16x4xf32>
    %105 = arith.truncf %104 : vector<2x16x16x4xf32> to vector<2x16x16x4xbf16>
    %106 = vector.shape_cast %105 : vector<2x16x16x4xbf16> to vector<512x4xbf16>
    %107 = vector.extract_strided_slice %4 {offsets = [5, 0, 0], sizes = [1, 4, 4], strides = [1, 1, 1]} : vector<9x4x4xbf16> to vector<1x4x4xbf16>
    %108 = vector.shape_cast %107 : vector<1x4x4xbf16> to vector<4x4xbf16>
    %cst_30 = arith.constant dense<0.000000e+00> : vector<512x4xf32>
    %109 = tpu.matmul %106, %108, %cst_30 {dimension_numbers = #tpu.dot_dimension_numbers<[1], [0], [0], [1], [0, 0, 1, 1], [], []>} : vector<512x4xbf16>, vector<4x4xbf16>, vector<512x4xf32> -> vector<512x4xf32>
    %110 = arith.addf %94, %109 : vector<512x4xf32>
    %111 = vector.extract_strided_slice %10 {offsets = [2, 0], sizes = [16, 4], strides = [1, 1]} : vector<18x4xi1> to vector<16x4xi1>
    %cst_31 = arith.constant -3.000000e+38 : f32
    %112 = vector.shape_cast %111 : vector<16x4xi1> to vector<1x1x16x4xi1>
    %113 = vector.broadcast %112 : vector<1x1x16x4xi1> to vector<2x16x16x4xi1>
    %114 = vector.broadcast %cst_31 : f32 to vector<2x16x16x4xf32>
    %115 = arith.select %113, %114, %101 : vector<2x16x16x4xi1>, vector<2x16x16x4xf32>
    %116 = arith.maximumf %100, %115 : vector<2x16x16x4xf32>
    %117 = arith.maximumf %65, %116 : vector<2x16x16x4xf32>
    %118 = vector.extract_strided_slice %116 {offsets = [0, 0, 0, 0], sizes = [2, 1, 16, 4], strides = [1, 1, 1, 1]} : vector<2x16x16x4xf32> to vector<2x1x16x4xf32>
    %119 = arith.maximumf %14, %118 : vector<2x1x16x4xf32>
    %120 = vector.extract_strided_slice %116 {offsets = [0, 15, 0, 0], sizes = [2, 1, 16, 4], strides = [1, 1, 1, 1]} : vector<2x16x16x4xf32> to vector<2x1x16x4xf32>
    %121 = arith.maximumf %67, %120 : vector<2x1x16x4xf32>
    %cst_32 = arith.constant -3.000000e+38 : f32
    %122 = vector.broadcast %cst_32 : f32 to vector<2x16x16x4xf32>
    %123 = vector.extract_strided_slice %3 {offsets = [0, 2, 0, 0], sizes = [2, 16, 16, 4], strides = [1, 1, 1, 1]} : vector<2x18x18x4xf32> to vector<2x16x16x4xf32>
    %124 = arith.addf %102, %123 : vector<2x16x16x4xf32>
    %cst_33 = arith.constant 0.000000e+00 : f32
    %125 = vector.broadcast %cst_33 : f32 to vector<2x16x16x4xf32>
    %126 = arith.maximumf %123, %125 : vector<2x16x16x4xf32>
    %127 = arith.truncf %126 : vector<2x16x16x4xf32> to vector<2x16x16x4xbf16>
    %128 = vector.shape_cast %127 : vector<2x16x16x4xbf16> to vector<512x4xbf16>
    %129 = vector.extract_strided_slice %4 {offsets = [6, 0, 0], sizes = [1, 4, 4], strides = [1, 1, 1]} : vector<9x4x4xbf16> to vector<1x4x4xbf16>
    %130 = vector.shape_cast %129 : vector<1x4x4xbf16> to vector<4x4xbf16>
    %cst_34 = arith.constant dense<0.000000e+00> : vector<512x4xf32>
    %131 = tpu.matmul %128, %130, %cst_34 {dimension_numbers = #tpu.dot_dimension_numbers<[1], [0], [0], [1], [0, 0, 1, 1], [], []>} : vector<512x4xbf16>, vector<4x4xbf16>, vector<512x4xf32> -> vector<512x4xf32>
    %132 = arith.addf %110, %131 : vector<512x4xf32>
    %133 = vector.extract_strided_slice %10 {offsets = [0, 0], sizes = [16, 4], strides = [1, 1]} : vector<18x4xi1> to vector<16x4xi1>
    %cst_35 = arith.constant -3.000000e+38 : f32
    %134 = vector.shape_cast %133 : vector<16x4xi1> to vector<1x1x16x4xi1>
    %135 = vector.broadcast %134 : vector<1x1x16x4xi1> to vector<2x16x16x4xi1>
    %136 = vector.broadcast %cst_35 : f32 to vector<2x16x16x4xf32>
    %137 = arith.select %135, %136, %123 : vector<2x16x16x4xi1>, vector<2x16x16x4xf32>
    %138 = arith.maximumf %122, %137 : vector<2x16x16x4xf32>
    %139 = vector.extract_strided_slice %3 {offsets = [0, 2, 1, 0], sizes = [2, 16, 16, 4], strides = [1, 1, 1, 1]} : vector<2x18x18x4xf32> to vector<2x16x16x4xf32>
    %140 = arith.addf %124, %139 : vector<2x16x16x4xf32>
    %cst_36 = arith.constant 0.000000e+00 : f32
    %141 = vector.broadcast %cst_36 : f32 to vector<2x16x16x4xf32>
    %142 = arith.maximumf %139, %141 : vector<2x16x16x4xf32>
    %143 = arith.truncf %142 : vector<2x16x16x4xf32> to vector<2x16x16x4xbf16>
    %144 = vector.shape_cast %143 : vector<2x16x16x4xbf16> to vector<512x4xbf16>
    %145 = vector.extract_strided_slice %4 {offsets = [7, 0, 0], sizes = [1, 4, 4], strides = [1, 1, 1]} : vector<9x4x4xbf16> to vector<1x4x4xbf16>
    %146 = vector.shape_cast %145 : vector<1x4x4xbf16> to vector<4x4xbf16>
    %cst_37 = arith.constant dense<0.000000e+00> : vector<512x4xf32>
    %147 = tpu.matmul %144, %146, %cst_37 {dimension_numbers = #tpu.dot_dimension_numbers<[1], [0], [0], [1], [0, 0, 1, 1], [], []>} : vector<512x4xbf16>, vector<4x4xbf16>, vector<512x4xf32> -> vector<512x4xf32>
    %148 = arith.addf %132, %147 : vector<512x4xf32>
    %149 = vector.extract_strided_slice %10 {offsets = [1, 0], sizes = [16, 4], strides = [1, 1]} : vector<18x4xi1> to vector<16x4xi1>
    %cst_38 = arith.constant -3.000000e+38 : f32
    %150 = vector.shape_cast %149 : vector<16x4xi1> to vector<1x1x16x4xi1>
    %151 = vector.broadcast %150 : vector<1x1x16x4xi1> to vector<2x16x16x4xi1>
    %152 = vector.broadcast %cst_38 : f32 to vector<2x16x16x4xf32>
    %153 = arith.select %151, %152, %139 : vector<2x16x16x4xi1>, vector<2x16x16x4xf32>
    %154 = arith.maximumf %138, %153 : vector<2x16x16x4xf32>
    %155 = vector.extract_strided_slice %3 {offsets = [0, 2, 2, 0], sizes = [2, 16, 16, 4], strides = [1, 1, 1, 1]} : vector<2x18x18x4xf32> to vector<2x16x16x4xf32>
    %156 = arith.addf %140, %155 : vector<2x16x16x4xf32>
    %cst_39 = arith.constant 0.000000e+00 : f32
    %157 = vector.broadcast %cst_39 : f32 to vector<2x16x16x4xf32>
    %158 = arith.maximumf %155, %157 : vector<2x16x16x4xf32>
    %159 = arith.truncf %158 : vector<2x16x16x4xf32> to vector<2x16x16x4xbf16>
    %160 = vector.shape_cast %159 : vector<2x16x16x4xbf16> to vector<512x4xbf16>
    %161 = vector.extract_strided_slice %4 {offsets = [8, 0, 0], sizes = [1, 4, 4], strides = [1, 1, 1]} : vector<9x4x4xbf16> to vector<1x4x4xbf16>
    %162 = vector.shape_cast %161 : vector<1x4x4xbf16> to vector<4x4xbf16>
    %cst_40 = arith.constant dense<0.000000e+00> : vector<512x4xf32>
    %163 = tpu.matmul %160, %162, %cst_40 {dimension_numbers = #tpu.dot_dimension_numbers<[1], [0], [0], [1], [0, 0, 1, 1], [], []>} : vector<512x4xbf16>, vector<4x4xbf16>, vector<512x4xf32> -> vector<512x4xf32>
    %164 = arith.addf %148, %163 : vector<512x4xf32>
    %165 = vector.extract_strided_slice %10 {offsets = [2, 0], sizes = [16, 4], strides = [1, 1]} : vector<18x4xi1> to vector<16x4xi1>
    %cst_41 = arith.constant -3.000000e+38 : f32
    %166 = vector.shape_cast %165 : vector<16x4xi1> to vector<1x1x16x4xi1>
    %167 = vector.broadcast %166 : vector<1x1x16x4xi1> to vector<2x16x16x4xi1>
    %168 = vector.broadcast %cst_41 : f32 to vector<2x16x16x4xf32>
    %169 = arith.select %167, %168, %155 : vector<2x16x16x4xi1>, vector<2x16x16x4xf32>
    %170 = arith.maximumf %154, %169 : vector<2x16x16x4xf32>
    %171 = arith.maximumf %117, %170 : vector<2x16x16x4xf32>
    %172 = vector.extract_strided_slice %170 {offsets = [0, 0, 0, 0], sizes = [2, 1, 16, 4], strides = [1, 1, 1, 1]} : vector<2x16x16x4xf32> to vector<2x1x16x4xf32>
    %173 = arith.maximumf %119, %172 : vector<2x1x16x4xf32>
    %174 = vector.extract_strided_slice %171 {offsets = [0, 1, 0, 0], sizes = [2, 14, 16, 4], strides = [1, 1, 1, 1]} : vector<2x16x16x4xf32> to vector<2x14x16x4xf32>
    %175 = tpu.concatenate %173, %174, %121 in 1 : vector<2x1x16x4xf32>, vector<2x14x16x4xf32>, vector<2x1x16x4xf32> -> vector<2x16x16x4xf32>
    %176 = tpu.iota {dimensions = array<i32: 0>} : vector<16x4xi32>
    %c0_i32_42 = arith.constant 0 : i32
    %177 = vector.broadcast %c0_i32_42 : i32 to vector<16x4xi32>
    %178 = arith.cmpi eq, %176, %177 : vector<16x4xi32>
    %179 = arith.extui %178 : vector<16x4xi1> to vector<16x4xi32>
    %180 = arith.sitofp %179 : vector<16x4xi32> to vector<16x4xf32>
    %cst_43 = arith.constant 3.000000e+00 : f32
    %181 = vector.broadcast %cst_43 : f32 to vector<16x4xf32>
    %182 = arith.subf %181, %180 : vector<16x4xf32>
    %c15_i32 = arith.constant 15 : i32
    %183 = vector.broadcast %c15_i32 : i32 to vector<16x4xi32>
    %184 = arith.cmpi eq, %176, %183 : vector<16x4xi32>
    %185 = arith.extui %184 : vector<16x4xi1> to vector<16x4xi32>
    %186 = arith.sitofp %185 : vector<16x4xi32> to vector<16x4xf32>
    %187 = arith.subf %182, %186 : vector<16x4xf32>
    %cst_44 = arith.constant 1.000000e+00 : f32
    %188 = vector.broadcast %cst_44 : f32 to vector<16x4xf32>
    %189 = arith.divf %188, %187 : vector<16x4xf32>
    %190 = vector.shape_cast %189 : vector<16x4xf32> to vector<1x1x16x4xf32>
    %191 = vector.broadcast %190 : vector<1x1x16x4xf32> to vector<2x16x16x4xf32>
    %192 = arith.mulf %156, %191 : vector<2x16x16x4xf32>
    %193 = vector.extract_strided_slice %192 {offsets = [0, 0, 0, 0], sizes = [2, 1, 16, 4], strides = [1, 1, 1, 1]} : vector<2x16x16x4xf32> to vector<2x1x16x4xf32>
    %cst_45 = arith.constant 5.000000e-01 : f32
    %194 = vector.broadcast %cst_45 : f32 to vector<2x1x16x4xf32>
    %195 = arith.mulf %193, %194 : vector<2x1x16x4xf32>
    %196 = vector.extract_strided_slice %192 {offsets = [0, 1, 0, 0], sizes = [2, 14, 16, 4], strides = [1, 1, 1, 1]} : vector<2x16x16x4xf32> to vector<2x14x16x4xf32>
    %cst_46 = arith.constant 0.333333343 : f32
    %197 = vector.broadcast %cst_46 : f32 to vector<2x14x16x4xf32>
    %198 = arith.mulf %196, %197 : vector<2x14x16x4xf32>
    %199 = vector.extract_strided_slice %192 {offsets = [0, 15, 0, 0], sizes = [2, 1, 16, 4], strides = [1, 1, 1, 1]} : vector<2x16x16x4xf32> to vector<2x1x16x4xf32>
    %cst_47 = arith.constant 5.000000e-01 : f32
    %200 = vector.broadcast %cst_47 : f32 to vector<2x1x16x4xf32>
    %201 = arith.mulf %199, %200 : vector<2x1x16x4xf32>
    %202 = tpu.concatenate %195, %198, %201 in 1 : vector<2x1x16x4xf32>, vector<2x14x16x4xf32>, vector<2x1x16x4xf32> -> vector<2x16x16x4xf32>
    %203 = vector.shape_cast %164 : vector<512x4xf32> to vector<2x16x16x4xf32>
    %204 = arith.truncf %203 : vector<2x16x16x4xf32> to vector<2x16x16x4xbf16>
    %205 = vector.shape_cast %204 : vector<2x16x16x4xbf16> to vector<2x256x4xbf16>
    %c0_48 = arith.constant 0 : index
    %c0_49 = arith.constant 0 : index
    %c0_50 = arith.constant 0 : index
    %206 = vector.load %arg5[%c0_48, %c0_49, %c0_50] : memref<2x256x4xbf16, #tpu.memory_space<vmem>>, vector<2x256x4xbf16>
    tpu.vector_store %arg5[%c0_48, %c0_49, %c0_50], %205 {strides = array<i32>} : memref<2x256x4xbf16, #tpu.memory_space<vmem>>, vector<2x256x4xbf16>,
    %c0_51 = arith.constant 0 : index
    %c0_52 = arith.constant 0 : index
    %c0_53 = arith.constant 0 : index
    %207 = vector.load %arg4[%c0_51, %c0_52, %c0_53] : memref<1x6x4xf32, #tpu.memory_space<vmem>>, vector<1x2x4xf32>
    %208 = vector.shape_cast %207 : vector<1x2x4xf32> to vector<2x4xf32>
    %cst_54 = arith.constant dense<0.000000e+00> : vector<2x16x4xf32>
    %209 = vector.multi_reduction <add>, %175, %cst_54 [1] : vector<2x16x16x4xf32> to vector<2x16x4xf32>
    %cst_55 = arith.constant dense<0.000000e+00> : vector<16x4xf32>
    %210 = vector.multi_reduction <add>, %209, %cst_55 [0] : vector<2x16x4xf32> to vector<16x4xf32>
    %211 = arith.mulf %175, %175 : vector<2x16x16x4xf32>
    %cst_56 = arith.constant dense<0.000000e+00> : vector<2x16x4xf32>
    %212 = vector.multi_reduction <add>, %211, %cst_56 [1] : vector<2x16x16x4xf32> to vector<2x16x4xf32>
    %cst_57 = arith.constant dense<0.000000e+00> : vector<16x4xf32>
    %213 = vector.multi_reduction <add>, %212, %cst_57 [0] : vector<2x16x4xf32> to vector<16x4xf32>
    %214 = vector.shape_cast %210 : vector<16x4xf32> to vector<1x16x4xf32>
    %215 = vector.shape_cast %213 : vector<16x4xf32> to vector<1x16x4xf32>
    %216 = tpu.concatenate %214, %215 in 0 : vector<1x16x4xf32>, vector<1x16x4xf32> -> vector<2x16x4xf32>
    %cst_58 = arith.constant dense<0.000000e+00> : vector<2x4xf32>
    %217 = vector.multi_reduction <add>, %216, %cst_58 [1] : vector<2x16x4xf32> to vector<2x4xf32>
    %218 = arith.addf %208, %217 : vector<2x4xf32>
    %c0_59 = arith.constant 0 : index
    %c0_60 = arith.constant 0 : index
    %c0_61 = arith.constant 0 : index
    %219 = vector.load %arg4[%c0_59, %c0_60, %c0_61] : memref<1x6x4xf32, #tpu.memory_space<vmem>>, vector<1x2x4xf32>
    %220 = vector.shape_cast %219 : vector<1x2x4xf32> to vector<2x4xf32>
    %221 = vector.shape_cast %218 : vector<2x4xf32> to vector<1x2x4xf32>
    tpu.vector_store %arg4[%c0_59, %c0_60, %c0_61], %221 {strides = array<i32>} : memref<1x6x4xf32, #tpu.memory_space<vmem>>, vector<1x2x4xf32>,
    %c0_62 = arith.constant 0 : index
    %c2 = arith.constant 2 : index
    %c0_63 = arith.constant 0 : index
    %222 = vector.load %arg4[%c0_62, %c2, %c0_63] : memref<1x6x4xf32, #tpu.memory_space<vmem>>, vector<1x2x4xf32>
    %223 = vector.shape_cast %222 : vector<1x2x4xf32> to vector<2x4xf32>
    %cst_64 = arith.constant dense<0.000000e+00> : vector<2x16x4xf32>
    %224 = vector.multi_reduction <add>, %202, %cst_64 [1] : vector<2x16x16x4xf32> to vector<2x16x4xf32>
    %cst_65 = arith.constant dense<0.000000e+00> : vector<16x4xf32>
    %225 = vector.multi_reduction <add>, %224, %cst_65 [0] : vector<2x16x4xf32> to vector<16x4xf32>
    %226 = arith.mulf %202, %202 : vector<2x16x16x4xf32>
    %cst_66 = arith.constant dense<0.000000e+00> : vector<2x16x4xf32>
    %227 = vector.multi_reduction <add>, %226, %cst_66 [1] : vector<2x16x16x4xf32> to vector<2x16x4xf32>
    %cst_67 = arith.constant dense<0.000000e+00> : vector<16x4xf32>
    %228 = vector.multi_reduction <add>, %227, %cst_67 [0] : vector<2x16x4xf32> to vector<16x4xf32>
    %229 = vector.shape_cast %225 : vector<16x4xf32> to vector<1x16x4xf32>
    %230 = vector.shape_cast %228 : vector<16x4xf32> to vector<1x16x4xf32>
    %231 = tpu.concatenate %229, %230 in 0 : vector<1x16x4xf32>, vector<1x16x4xf32> -> vector<2x16x4xf32>
    %cst_68 = arith.constant dense<0.000000e+00> : vector<2x4xf32>
    %232 = vector.multi_reduction <add>, %231, %cst_68 [1] : vector<2x16x4xf32> to vector<2x4xf32>
    %233 = arith.addf %223, %232 : vector<2x4xf32>
    %c0_69 = arith.constant 0 : index
    %c2_70 = arith.constant 2 : index
    %c0_71 = arith.constant 0 : index
    %234 = vector.load %arg4[%c0_69, %c2_70, %c0_71] : memref<1x6x4xf32, #tpu.memory_space<vmem>>, vector<1x2x4xf32>
    %235 = vector.shape_cast %234 : vector<1x2x4xf32> to vector<2x4xf32>
    %236 = vector.shape_cast %233 : vector<2x4xf32> to vector<1x2x4xf32>
    tpu.vector_store %arg4[%c0_69, %c2_70, %c0_71], %236 {strides = array<i32>} : memref<1x6x4xf32, #tpu.memory_space<vmem>>, vector<1x2x4xf32>,
    %c0_72 = arith.constant 0 : index
    %c4 = arith.constant 4 : index
    %c0_73 = arith.constant 0 : index
    %237 = vector.load %arg4[%c0_72, %c4, %c0_73] : memref<1x6x4xf32, #tpu.memory_space<vmem>>, vector<1x2x4xf32>
    %238 = vector.shape_cast %237 : vector<1x2x4xf32> to vector<2x4xf32>
    %239 = arith.extf %204 : vector<2x16x16x4xbf16> to vector<2x16x16x4xf32>
    %cst_74 = arith.constant dense<0.000000e+00> : vector<2x16x4xf32>
    %240 = vector.multi_reduction <add>, %239, %cst_74 [1] : vector<2x16x16x4xf32> to vector<2x16x4xf32>
    %cst_75 = arith.constant dense<0.000000e+00> : vector<16x4xf32>
    %241 = vector.multi_reduction <add>, %240, %cst_75 [0] : vector<2x16x4xf32> to vector<16x4xf32>
    %242 = arith.mulf %239, %239 : vector<2x16x16x4xf32>
    %cst_76 = arith.constant dense<0.000000e+00> : vector<2x16x4xf32>
    %243 = vector.multi_reduction <add>, %242, %cst_76 [1] : vector<2x16x16x4xf32> to vector<2x16x4xf32>
    %cst_77 = arith.constant dense<0.000000e+00> : vector<16x4xf32>
    %244 = vector.multi_reduction <add>, %243, %cst_77 [0] : vector<2x16x4xf32> to vector<16x4xf32>
    %245 = vector.shape_cast %241 : vector<16x4xf32> to vector<1x16x4xf32>
    %246 = vector.shape_cast %244 : vector<16x4xf32> to vector<1x16x4xf32>
    %247 = tpu.concatenate %245, %246 in 0 : vector<1x16x4xf32>, vector<1x16x4xf32> -> vector<2x16x4xf32>
    %cst_78 = arith.constant dense<0.000000e+00> : vector<2x4xf32>
    %248 = vector.multi_reduction <add>, %247, %cst_78 [1] : vector<2x16x4xf32> to vector<2x4xf32>
    %249 = arith.addf %238, %248 : vector<2x4xf32>
    %c0_79 = arith.constant 0 : index
    %c4_80 = arith.constant 4 : index
    %c0_81 = arith.constant 0 : index
    %250 = vector.load %arg4[%c0_79, %c4_80, %c0_81] : memref<1x6x4xf32, #tpu.memory_space<vmem>>, vector<1x2x4xf32>
    %251 = vector.shape_cast %250 : vector<1x2x4xf32> to vector<2x4xf32>
    %252 = vector.shape_cast %249 : vector<2x4xf32> to vector<1x2x4xf32>
    tpu.vector_store %arg4[%c0_79, %c4_80, %c0_81], %252 {strides = array<i32>} : memref<1x6x4xf32, #tpu.memory_space<vmem>>, vector<1x2x4xf32>,
    return
  }
  func.func @transform_0(%arg0: i32, %arg1: i32) -> (i32, i32, i32, i32) {
    %c1_i32 = arith.constant 1 : i32
    %0 = arith.muli %arg0, %c1_i32 : i32
    %1 = arith.addi %0, %arg1 : i32
    %c0_i32 = arith.constant 0 : i32
    %c0_i32_0 = arith.constant 0 : i32
    %c0_i32_1 = arith.constant 0 : i32
    %c0_i32_2 = arith.constant 0 : i32
    return %1, %c0_i32, %c0_i32_0, %c0_i32_1 : i32, i32, i32, i32
  }
  func.func @transform_1(%arg0: i32, %arg1: i32) -> (i32, i32, i32) {
    %c0_i32 = arith.constant 0 : i32
    %c0_i32_0 = arith.constant 0 : i32
    %c0_i32_1 = arith.constant 0 : i32
    %c0_i32_2 = arith.constant 0 : i32
    return %c0_i32, %c0_i32_0, %c0_i32_1 : i32, i32, i32
  }
  func.func @transform_2(%arg0: i32, %arg1: i32) -> (i32, i32, i32) {
    %c0_i32 = arith.constant 0 : i32
    %c0_i32_0 = arith.constant 0 : i32
    %c0_i32_1 = arith.constant 0 : i32
    return %arg0, %c0_i32, %c0_i32_0 : i32, i32, i32
  }
  func.func @transform_3(%arg0: i32, %arg1: i32) -> (i32, i32, i32) {
    %c1_i32 = arith.constant 1 : i32
    %0 = arith.muli %arg0, %c1_i32 : i32
    %1 = arith.addi %0, %arg1 : i32
    %c0_i32 = arith.constant 0 : i32
    %c0_i32_0 = arith.constant 0 : i32
    %c0_i32_1 = arith.constant 0 : i32
    return %1, %c0_i32, %c0_i32_0 : i32, i32, i32
  }
}

</mosaic_0001>

<llo_original>
// kernel: mixed_op_forward.3
$region0: #{mixed_op_forward.3}
  #allocation0 [shape = 'u32[]', space=smem, size = 0x4, offset = 0x4, fixed_abs, tag = 'smem constant byte address 0x4 - core index']
  #allocation1 [shape = 'u32[144,128]{1,0:T(1,128)}', space=vmem, size = 0x12000, scoped, tag = 'internal scratch']
  %s0 = inlined_call_operand.vmem [shape: f32[4], index: 0, kind: input, shape index: {}]
  %s1 = inlined_call_operand.vmem [shape: f32[6,4], index: 1, kind: input, shape index: {}]
  %s2 = inlined_call_operand.vmem [shape: f32[2,18,18,4], index: 2, kind: input, shape index: {}]
  %s3 = inlined_call_operand.vmem [shape: bf16[2,256,4], index: 3, kind: input, shape index: {}]
  %s4 = inlined_call_operand.vmem [shape: f32[2,4,256], index: 4, kind: output, shape index: {}]
  %s5 = sld [smem:[#allocation0]]
  $region30: #{mixed_op_forward.3} parent=0
    _
  %s7 = ssub.s32 1, %s5
  %s8 = scalar_select 0, %s7, %s5
  $region1: #{mixed_op_forward.3} parent=0
    #allocation2 [shape = 'u8[512]{0}', space=smem, size = 0x200, scoped, tag = 'input window, operand 0, single buffered']
    #allocation3 [shape = 's32[1]{0}', space=sflag, size = 0x4, scoped, tag = 'scoped memory for mixed_op_forward.3']
    %9 = vsyncpa [#allocation3], 0
    // Predicated region
    $region2: #{mixed_op_forward.3} parent=1 // pred_check
      _
    $region3: #{mixed_op_forward.3} parent=1 // pred_check_branch
      %11 = sbr.rel (0) target = $region5
    $region4: #{mixed_op_forward.3} parent=1 // pred_region
      %s13 = ssub.s32 16, 16
      %14 = vsyncadd [#allocation3], %s13
      %s16 = sshll.u32 %s0, 4
      %s17 = int_to_ptr.vmem [resolvable:$true] %s16
      %19 = dma.vmem_to_smem %s17, 16, [#allocation2], [#allocation3]
    $region5: #{mixed_op_forward.3} parent=1 // pred_fallthru
      _
    // Predicated region
    $region6: #{mixed_op_forward.3} parent=1 // pred_check
      _
    $region7: #{mixed_op_forward.3} parent=1 // pred_check_branch
      %21 = sbr.rel (0) target = $region9
    $region8: #{mixed_op_forward.3} parent=1 // pred_region
      _
    $region9: #{mixed_op_forward.3} parent=1 // pred_fallthru
      _
    // Predicated region
    $region10: #{mixed_op_forward.3} parent=1 // pred_check
      _
    $region11: #{mixed_op_forward.3} parent=1 // pred_check_branch
      %23 = sbr.rel (0) target = $region13
    $region12: #{mixed_op_forward.3} parent=1 // pred_region
      _
    $region13: #{mixed_op_forward.3} parent=1 // pred_fallthru
      _
    // Predicated region
    $region14: #{mixed_op_forward.3} parent=1 // pred_check
      _
    $region15: #{mixed_op_forward.3} parent=1 // pred_check_branch
      %25 = sbr.rel (0) target = $region17
    $region16: #{mixed_op_forward.3} parent=1 // pred_region
      _
    $region17: #{mixed_op_forward.3} parent=1 // pred_fallthru
      _
    // Predicated region
    $region18: #{mixed_op_forward.3} parent=1 // pred_check
      _
    $region19: #{mixed_op_forward.3} parent=1 // pred_check_branch
      %27 = sbr.rel (0) target = $region21
    $region20: #{mixed_op_forward.3} parent=1 // pred_region
      %28 = dma.done [#allocation3], 16
    $region21: #{mixed_op_forward.3} parent=1 // pred_fallthru
      _
    %29 = sfence
    %v30 = vld [vmem:[%s2] sm:$0xff]
    %v31 = vld [vmem:[%s2 + $0x8] sm:$0xff]
    %v32 = vld [vmem:[%s2 + $0x10] sm:$0x3]
    %v33 = vld [vmem:[%s2 + $0x18] sm:$0xff]
    %v34 = vld [vmem:[%s2 + $0x20] sm:$0xff]
    %v35 = vld [vmem:[%s2 + $0x28] sm:$0x3]
    %v36 = vld [vmem:[%s2 + $0x30] sm:$0xff]
    %v37 = vld [vmem:[%s2 + $0x38] sm:$0xff]
    %v38 = vld [vmem:[%s2 + $0x40] sm:$0x3]
    %v39 = vld [vmem:[%s2 + $0x48] sm:$0xff]
    %v40 = vld [vmem:[%s2 + $0x50] sm:$0xff]
    %v41 = vld [vmem:[%s2 + $0x58] sm:$0x3]
    %v42 = vld [vmem:[%s2 + $0x60] sm:$0xff]
    %v43 = vld [vmem:[%s2 + $0x68] sm:$0xff]
    %v44 = vld [vmem:[%s2 + $0x70] sm:$0x3]
    %v45 = vld [vmem:[%s2 + $0x78] sm:$0xff]
    %v46 = vld [vmem:[%s2 + $0x80] sm:$0xff]
    %v47 = vld [vmem:[%s2 + $0x88] sm:$0x3]
    %v48 = vld [vmem:[%s2 + $0x90] sm:$0xff]
    %v49 = vld [vmem:[%s2 + $0x98] sm:$0xff]
    %v50 = vld [vmem:[%s2 + $0xa0] sm:$0x3]
    %v51 = vld [vmem:[%s2 + $0xa8] sm:$0xff]
    %v52 = vld [vmem:[%s2 + $0xb0] sm:$0xff]
    %v53 = vld [vmem:[%s2 + $0xb8] sm:$0x3]
    %v54 = vld [vmem:[%s2 + $0xc0] sm:$0xff]
    %v55 = vld [vmem:[%s2 + $0xc8] sm:$0xff]
    %v56 = vld [vmem:[%s2 + $0xd0] sm:$0x3]
    %v57 = vld [vmem:[%s2 + $0xd8] sm:$0xff]
    %v58 = vld [vmem:[%s2 + $0xe0] sm:$0xff]
    %v59 = vld [vmem:[%s2 + $0xe8] sm:$0x3]
    %v60 = vld [vmem:[%s2 + $0xf0] sm:$0xff]
    %v61 = vld [vmem:[%s2 + $0xf8] sm:$0xff]
    %v62 = vld [vmem:[%s2 + $0x100] sm:$0x3]
    %v63 = vld [vmem:[%s2 + $0x108] sm:$0xff]
    %v64 = vld [vmem:[%s2 + $0x110] sm:$0xff]
    %v65 = vld [vmem:[%s2 + $0x118] sm:$0x3]
    %v66 = vld [vmem:[%s2 + $0x120] sm:$0xff]
    %v67 = vld [vmem:[%s2 + $0x128] sm:$0xff]
    %v68 = vld [vmem:[%s2 + $0x130] sm:$0x3]
    %v69 = vld [vmem:[%s2 + $0x138] sm:$0xff]
    %v70 = vld [vmem:[%s2 + $0x140] sm:$0xff]
    %v71 = vld [vmem:[%s2 + $0x148] sm:$0x3]
    %v72 = vld [vmem:[%s2 + $0x150] sm:$0xff]
    %v73 = vld [vmem:[%s2 + $0x158] sm:$0xff]
    %v74 = vld [vmem:[%s2 + $0x160] sm:$0x3]
    %v75 = vld [vmem:[%s2 + $0x168] sm:$0xff]
    %v76 = vld [vmem:[%s2 + $0x170] sm:$0xff]
    %v77 = vld [vmem:[%s2 + $0x178] sm:$0x3]
    %v78 = vld [vmem:[%s2 + $0x180] sm:$0xff]
    %v79 = vld [vmem:[%s2 + $0x188] sm:$0xff]
    %v80 = vld [vmem:[%s2 + $0x190] sm:$0x3]
    %v81 = vld [vmem:[%s2 + $0x198] sm:$0xff]
    %v82 = vld [vmem:[%s2 + $0x1a0] sm:$0xff]
    %v83 = vld [vmem:[%s2 + $0x1a8] sm:$0x3]
    %v84 = vld [vmem:[%s2 + $0x1b0] sm:$0xff]
    %v85 = vld [vmem:[%s2 + $0x1b8] sm:$0xff]
    %v86 = vld [vmem:[%s2 + $0x1c0] sm:$0x3]
    %v87 = vld [vmem:[%s2 + $0x1c8] sm:$0xff]
    %v88 = vld [vmem:[%s2 + $0x1d0] sm:$0xff]
    %v89 = vld [vmem:[%s2 + $0x1d8] sm:$0x3]
    %v90 = vld [vmem:[%s2 + $0x1e0] sm:$0xff]
    %v91 = vld [vmem:[%s2 + $0x1e8] sm:$0xff]
    %v92 = vld [vmem:[%s2 + $0x1f0] sm:$0x3]
    %v93 = vld [vmem:[%s2 + $0x1f8] sm:$0xff]
    %v94 = vld [vmem:[%s2 + $0x200] sm:$0xff]
    %v95 = vld [vmem:[%s2 + $0x208] sm:$0x3]
    %v96 = vld [vmem:[%s2 + $0x210] sm:$0xff]
    %v97 = vld [vmem:[%s2 + $0x218] sm:$0xff]
    %v98 = vld [vmem:[%s2 + $0x220] sm:$0x3]
    %v99 = vld [vmem:[%s2 + $0x228] sm:$0xff]
    %v100 = vld [vmem:[%s2 + $0x230] sm:$0xff]
    %v101 = vld [vmem:[%s2 + $0x238] sm:$0x3]
    %v102 = vld [vmem:[%s2 + $0x240] sm:$0xff]
    %v103 = vld [vmem:[%s2 + $0x248] sm:$0xff]
    %v104 = vld [vmem:[%s2 + $0x250] sm:$0x3]
    %v105 = vld [vmem:[%s2 + $0x258] sm:$0xff]
    %v106 = vld [vmem:[%s2 + $0x260] sm:$0xff]
    %v107 = vld [vmem:[%s2 + $0x268] sm:$0x3]
    %v108 = vld [vmem:[%s2 + $0x270] sm:$0xff]
    %v109 = vld [vmem:[%s2 + $0x278] sm:$0xff]
    %v110 = vld [vmem:[%s2 + $0x280] sm:$0x3]
    %v111 = vld [vmem:[%s2 + $0x288] sm:$0xff]
    %v112 = vld [vmem:[%s2 + $0x290] sm:$0xff]
    %v113 = vld [vmem:[%s2 + $0x298] sm:$0x3]
    %v114 = vld [vmem:[%s2 + $0x2a0] sm:$0xff]
    %v115 = vld [vmem:[%s2 + $0x2a8] sm:$0xff]
    %v116 = vld [vmem:[%s2 + $0x2b0] sm:$0x3]
    %v117 = vld [vmem:[%s2 + $0x2b8] sm:$0xff]
    %v118 = vld [vmem:[%s2 + $0x2c0] sm:$0xff]
    %v119 = vld [vmem:[%s2 + $0x2c8] sm:$0x3]
    %v120 = vld [vmem:[%s2 + $0x2d0] sm:$0xff]
    %v121 = vld [vmem:[%s2 + $0x2d8] sm:$0xff]
    %v122 = vld [vmem:[%s2 + $0x2e0] sm:$0x3]
    %v123 = vld [vmem:[%s2 + $0x2e8] sm:$0xff]
    %v124 = vld [vmem:[%s2 + $0x2f0] sm:$0xff]
    %v125 = vld [vmem:[%s2 + $0x2f8] sm:$0x3]
    %v126 = vld [vmem:[%s2 + $0x300] sm:$0xff]
    %v127 = vld [vmem:[%s2 + $0x308] sm:$0xff]
    %v128 = vld [vmem:[%s2 + $0x310] sm:$0x3]
    %v129 = vld [vmem:[%s2 + $0x318] sm:$0xff]
    %v130 = vld [vmem:[%s2 + $0x320] sm:$0xff]
    %v131 = vld [vmem:[%s2 + $0x328] sm:$0x3]
    %v132 = vld [vmem:[%s2 + $0x330] sm:$0xff]
    %v133 = vld [vmem:[%s2 + $0x338] sm:$0xff]
    %v134 = vld [vmem:[%s2 + $0x340] sm:$0x3]
    %v135 = vld [vmem:[%s2 + $0x348] sm:$0xff]
    %v136 = vld [vmem:[%s2 + $0x350] sm:$0xff]
    %v137 = vld [vmem:[%s2 + $0x358] sm:$0x3]
    %v138 = vlaneseq
    %v139 = vshrl.u32 %v138, 7
    %v140 = vadd.s32 %v139, 8
    %v141 = vadd.s32 %v139, 16
    %vm142 = vcmp.eq.s32.totalorder %v139, 0
    %vm143 = vcmp.eq.s32.totalorder %v140, 0
    %vm144 = vcmp.eq.s32.totalorder %v141, 0
    %vm145 = vcmp.eq.s32.totalorder %v139, 17
    %vm146 = vcmp.eq.s32.totalorder %v140, 17
    %vm147 = vcmp.eq.s32.totalorder %v141, 17
    %vm148 = vmor %vm142, %vm145
    %vm149 = vmor %vm143, %vm146
    %vm150 = vmor %vm144, %vm147
    %v151 = vadd.f32 %v30, 0.0
    %v152 = vadd.f32 %v31, 0.0
    %v153 = vadd.f32 %v33, 0.0
    %v154 = vadd.f32 %v34, 0.0
    %v155 = vadd.f32 %v36, 0.0
    %v156 = vadd.f32 %v37, 0.0
    %v157 = vadd.f32 %v39, 0.0
    %v158 = vadd.f32 %v40, 0.0
    %v159 = vadd.f32 %v42, 0.0
    %v160 = vadd.f32 %v43, 0.0
    %v161 = vadd.f32 %v45, 0.0
    %v162 = vadd.f32 %v46, 0.0
    %v163 = vadd.f32 %v48, 0.0
    %v164 = vadd.f32 %v49, 0.0
    %v165 = vadd.f32 %v51, 0.0
    %v166 = vadd.f32 %v52, 0.0
    %v167 = vadd.f32 %v54, 0.0
    %v168 = vadd.f32 %v55, 0.0
    %v169 = vadd.f32 %v57, 0.0
    %v170 = vadd.f32 %v58, 0.0
    %v171 = vadd.f32 %v60, 0.0
    %v172 = vadd.f32 %v61, 0.0
    %v173 = vadd.f32 %v63, 0.0
    %v174 = vadd.f32 %v64, 0.0
    %v175 = vadd.f32 %v66, 0.0
    %v176 = vadd.f32 %v67, 0.0
    %v177 = vadd.f32 %v69, 0.0
    %v178 = vadd.f32 %v70, 0.0
    %v179 = vadd.f32 %v72, 0.0
    %v180 = vadd.f32 %v73, 0.0
    %v181 = vadd.f32 %v75, 0.0
    %v182 = vadd.f32 %v76, 0.0
    %v183 = vadd.f32 %v84, 0.0
    %v184 = vadd.f32 %v85, 0.0
    %v185 = vadd.f32 %v87, 0.0
    %v186 = vadd.f32 %v88, 0.0
    %v187 = vadd.f32 %v90, 0.0
    %v188 = vadd.f32 %v91, 0.0
    %v189 = vadd.f32 %v93, 0.0
    %v190 = vadd.f32 %v94, 0.0
    %v191 = vadd.f32 %v96, 0.0
    %v192 = vadd.f32 %v97, 0.0
    %v193 = vadd.f32 %v99, 0.0
    %v194 = vadd.f32 %v100, 0.0
    %v195 = vadd.f32 %v102, 0.0
    %v196 = vadd.f32 %v103, 0.0
    %v197 = vadd.f32 %v105, 0.0
    %v198 = vadd.f32 %v106, 0.0
    %v199 = vadd.f32 %v108, 0.0
    %v200 = vadd.f32 %v109, 0.0
    %v201 = vadd.f32 %v111, 0.0
    %v202 = vadd.f32 %v112, 0.0
    %v203 = vadd.f32 %v114, 0.0
    %v204 = vadd.f32 %v115, 0.0
    %v205 = vadd.f32 %v117, 0.0
    %v206 = vadd.f32 %v118, 0.0
    %v207 = vadd.f32 %v120, 0.0
    %v208 = vadd.f32 %v121, 0.0
    %v209 = vadd.f32 %v123, 0.0
    %v210 = vadd.f32 %v124, 0.0
    %v211 = vadd.f32 %v126, 0.0
    %v212 = vadd.f32 %v127, 0.0
    %v213 = vadd.f32 %v129, 0.0
    %v214 = vadd.f32 %v130, 0.0
    %v215 = vsel %vm148, 1, 0
    %v216 = vsel %vm149, 1, 0
    %vm217 = vcmp.eq.s32.totalorder %v215, 1
    %vm218 = vcmp.eq.s32.totalorder %v216, 1
    %v219 = vsel %vm217, -3e+38, %v33
    %v220 = vsel %vm218, -3e+38, %v34
    %v221 = vsel %vm217, -3e+38, %v36
    %v222 = vsel %vm218, -3e+38, %v37
    %v223 = vsel %vm217, -3e+38, %v39
    %v224 = vsel %vm218, -3e+38, %v40
    %v225 = vsel %vm217, -3e+38, %v42
    %v226 = vsel %vm218, -3e+38, %v43
    %v227 = vsel %vm217, -3e+38, %v45
    %v228 = vsel %vm218, -3e+38, %v46
    %v229 = vsel %vm217, -3e+38, %v48
    %v230 = vsel %vm218, -3e+38, %v49
    %v231 = vsel %vm217, -3e+38, %v51
    %v232 = vsel %vm218, -3e+38, %v52
    %v233 = vsel %vm217, -3e+38, %v54
    %v234 = vsel %vm218, -3e+38, %v55
    %v235 = vsel %vm217, -3e+38, %v57
    %v236 = vsel %vm218, -3e+38, %v58
    %v237 = vsel %vm217, -3e+38, %v60
    %v238 = vsel %vm218, -3e+38, %v61
    %v239 = vsel %vm217, -3e+38, %v63
    %v240 = vsel %vm218, -3e+38, %v64
    %v241 = vsel %vm217, -3e+38, %v66
    %v242 = vsel %vm218, -3e+38, %v67
    %v243 = vsel %vm217, -3e+38, %v69
    %v244 = vsel %vm218, -3e+38, %v70
    %v245 = vsel %vm217, -3e+38, %v72
    %v246 = vsel %vm218, -3e+38, %v73
    %v247 = vsel %vm217, -3e+38, %v75
    %v248 = vsel %vm218, -3e+38, %v76
    %v249 = vsel %vm217, -3e+38, %v87
    %v250 = vsel %vm218, -3e+38, %v88
    %v251 = vsel %vm217, -3e+38, %v90
    %v252 = vsel %vm218, -3e+38, %v91
    %v253 = vsel %vm217, -3e+38, %v93
    %v254 = vsel %vm218, -3e+38, %v94
    %v255 = vsel %vm217, -3e+38, %v96
    %v256 = vsel %vm218, -3e+38, %v97
    %v257 = vsel %vm217, -3e+38, %v99
    %v258 = vsel %vm218, -3e+38, %v100
    %v259 = vsel %vm217, -3e+38, %v102
    %v260 = vsel %vm218, -3e+38, %v103
    %v261 = vsel %vm217, -3e+38, %v105
    %v262 = vsel %vm218, -3e+38, %v106
    %v263 = vsel %vm217, -3e+38, %v108
    %v264 = vsel %vm218, -3e+38, %v109
    %v265 = vsel %vm217, -3e+38, %v111
    %v266 = vsel %vm218, -3e+38, %v112
    %v267 = vsel %vm217, -3e+38, %v114
    %v268 = vsel %vm218, -3e+38, %v115
    %v269 = vsel %vm217, -3e+38, %v117
    %v270 = vsel %vm218, -3e+38, %v118
    %v271 = vsel %vm217, -3e+38, %v120
    %v272 = vsel %vm218, -3e+38, %v121
    %v273 = vsel %vm217, -3e+38, %v123
    %v274 = vsel %vm218, -3e+38, %v124
    %v275 = vsel %vm217, -3e+38, %v126
    %v276 = vsel %vm218, -3e+38, %v127
    %v277 = vsel %vm217, -3e+38, %v129
    %v278 = vsel %vm218, -3e+38, %v130
    %v279 = vmax.f32 %v219, -3e+38
    %v280 = vmax.f32 %v220, -3e+38
    %v281 = vmax.f32 %v221, -3e+38
    %v282 = vmax.f32 %v222, -3e+38
    %v283 = vmax.f32 %v223, -3e+38
    %v284 = vmax.f32 %v224, -3e+38
    %v285 = vmax.f32 %v225, -3e+38
    %v286 = vmax.f32 %v226, -3e+38
    %v287 = vmax.f32 %v227, -3e+38
    %v288 = vmax.f32 %v228, -3e+38
    %v289 = vmax.f32 %v229, -3e+38
    %v290 = vmax.f32 %v230, -3e+38
    %v291 = vmax.f32 %v231, -3e+38
    %v292 = vmax.f32 %v232, -3e+38
    %v293 = vmax.f32 %v233, -3e+38
    %v294 = vmax.f32 %v234, -3e+38
    %v295 = vmax.f32 %v235, -3e+38
    %v296 = vmax.f32 %v236, -3e+38
    %v297 = vmax.f32 %v237, -3e+38
    %v298 = vmax.f32 %v238, -3e+38
    %v299 = vmax.f32 %v239, -3e+38
    %v300 = vmax.f32 %v240, -3e+38
    %v301 = vmax.f32 %v241, -3e+38
    %v302 = vmax.f32 %v242, -3e+38
    %v303 = vmax.f32 %v243, -3e+38
    %v304 = vmax.f32 %v244, -3e+38
    %v305 = vmax.f32 %v245, -3e+38
    %v306 = vmax.f32 %v246, -3e+38
    %v307 = vmax.f32 %v247, -3e+38
    %v308 = vmax.f32 %v248, -3e+38
    %v309 = vmax.f32 %v249, -3e+38
    %v310 = vmax.f32 %v250, -3e+38
    %v311 = vmax.f32 %v251, -3e+38
    %v312 = vmax.f32 %v252, -3e+38
    %v313 = vmax.f32 %v253, -3e+38
    %v314 = vmax.f32 %v254, -3e+38
    %v315 = vmax.f32 %v255, -3e+38
    %v316 = vmax.f32 %v256, -3e+38
    %v317 = vmax.f32 %v257, -3e+38
    %v318 = vmax.f32 %v258, -3e+38
    %v319 = vmax.f32 %v259, -3e+38
    %v320 = vmax.f32 %v260, -3e+38
    %v321 = vmax.f32 %v261, -3e+38
    %v322 = vmax.f32 %v262, -3e+38
    %v323 = vmax.f32 %v263, -3e+38
    %v324 = vmax.f32 %v264, -3e+38
    %v325 = vmax.f32 %v265, -3e+38
    %v326 = vmax.f32 %v266, -3e+38
    %v327 = vmax.f32 %v267, -3e+38
    %v328 = vmax.f32 %v268, -3e+38
    %v329 = vmax.f32 %v269, -3e+38
    %v330 = vmax.f32 %v270, -3e+38
    %v331 = vmax.f32 %v271, -3e+38
    %v332 = vmax.f32 %v272, -3e+38
    %v333 = vmax.f32 %v273, -3e+38
    %v334 = vmax.f32 %v274, -3e+38
    %v335 = vmax.f32 %v275, -3e+38
    %v336 = vmax.f32 %v276, -3e+38
    %v337 = vmax.f32 %v277, -3e+38
    %v338 = vmax.f32 %v278, -3e+38
    %vm435 = vcmask 1046528
    %v436 = vrot.slane %v30, 1
    %v437 = vrot.slane %v31, 1
    %v438 = vsel %vm435, %v436, %v437
    %v439 = vrot.slane %v32, 1
    %v440 = vsel %vm435, %v437, %v439
    %v441 = vrot.slane %v33, 1
    %v442 = vrot.slane %v34, 1
    %v443 = vsel %vm435, %v441, %v442
    %v444 = vrot.slane %v35, 1
    %v445 = vsel %vm435, %v442, %v444
    %v446 = vrot.slane %v36, 1
    %v447 = vrot.slane %v37, 1
    %v448 = vsel %vm435, %v446, %v447
    %v449 = vrot.slane %v38, 1
    %v450 = vsel %vm435, %v447, %v449
    %v451 = vrot.slane %v39, 1
    %v452 = vrot.slane %v40, 1
    %v453 = vsel %vm435, %v451, %v452
    %v454 = vrot.slane %v41, 1
    %v455 = vsel %vm435, %v452, %v454
    %v456 = vrot.slane %v42, 1
    %v457 = vrot.slane %v43, 1
    %v458 = vsel %vm435, %v456, %v457
    %v459 = vrot.slane %v44, 1
    %v460 = vsel %vm435, %v457, %v459
    %v461 = vrot.slane %v45, 1
    %v462 = vrot.slane %v46, 1
    %v463 = vsel %vm435, %v461, %v462
    %v464 = vrot.slane %v47, 1
    %v465 = vsel %vm435, %v462, %v464
    %v466 = vrot.slane %v48, 1
    %v467 = vrot.slane %v49, 1
    %v468 = vsel %vm435, %v466, %v467
    %v469 = vrot.slane %v50, 1
    %v470 = vsel %vm435, %v467, %v469
    %v471 = vrot.slane %v51, 1
    %v472 = vrot.slane %v52, 1
    %v473 = vsel %vm435, %v471, %v472
    %v474 = vrot.slane %v53, 1
    %v475 = vsel %vm435, %v472, %v474
    %v476 = vrot.slane %v54, 1
    %v477 = vrot.slane %v55, 1
    %v478 = vsel %vm435, %v476, %v477
    %v479 = vrot.slane %v56, 1
    %v480 = vsel %vm435, %v477, %v479
    %v481 = vrot.slane %v57, 1
    %v482 = vrot.slane %v58, 1
    %v483 = vsel %vm435, %v481, %v482
    %v484 = vrot.slane %v59, 1
    %v485 = vsel %vm435, %v482, %v484
    %v486 = vrot.slane %v60, 1
    %v487 = vrot.slane %v61, 1
    %v488 = vsel %vm435, %v486, %v487
    %v489 = vrot.slane %v62, 1
    %v490 = vsel %vm435, %v487, %v489
    %v491 = vrot.slane %v63, 1
    %v492 = vrot.slane %v64, 1
    %v493 = vsel %vm435, %v491, %v492
    %v494 = vrot.slane %v65, 1
    %v495 = vsel %vm435, %v492, %v494
    %v496 = vrot.slane %v66, 1
    %v497 = vrot.slane %v67, 1
    %v498 = vsel %vm435, %v496, %v497
    %v499 = vrot.slane %v68, 1
    %v500 = vsel %vm435, %v497, %v499
    %v501 = vrot.slane %v69, 1
    %v502 = vrot.slane %v70, 1
    %v503 = vsel %vm435, %v501, %v502
    %v504 = vrot.slane %v71, 1
    %v505 = vsel %vm435, %v502, %v504
    %v506 = vrot.slane %v72, 1
    %v507 = vrot.slane %v73, 1
    %v508 = vsel %vm435, %v506, %v507
    %v509 = vrot.slane %v74, 1
    %v510 = vsel %vm435, %v507, %v509
    %v511 = vrot.slane %v75, 1
    %v512 = vrot.slane %v76, 1
    %v513 = vsel %vm435, %v511, %v512
    %v514 = vrot.slane %v77, 1
    %v515 = vsel %vm435, %v512, %v514
    %v516 = vrot.slane %v84, 1
    %v517 = vrot.slane %v85, 1
    %v518 = vsel %vm435, %v516, %v517
    %v519 = vrot.slane %v86, 1
    %v520 = vsel %vm435, %v517, %v519
    %v521 = vrot.slane %v87, 1
    %v522 = vrot.slane %v88, 1
    %v523 = vsel %vm435, %v521, %v522
    %v524 = vrot.slane %v89, 1
    %v525 = vsel %vm435, %v522, %v524
    %v526 = vrot.slane %v90, 1
    %v527 = vrot.slane %v91, 1
    %v528 = vsel %vm435, %v526, %v527
    %v529 = vrot.slane %v92, 1
    %v530 = vsel %vm435, %v527, %v529
    %v531 = vrot.slane %v93, 1
    %v532 = vrot.slane %v94, 1
    %v533 = vsel %vm435, %v531, %v532
    %v534 = vrot.slane %v95, 1
    %v535 = vsel %vm435, %v532, %v534
    %v536 = vrot.slane %v96, 1
    %v537 = vrot.slane %v97, 1
    %v538 = vsel %vm435, %v536, %v537
    %v539 = vrot.slane %v98, 1
    %v540 = vsel %vm435, %v537, %v539
    %v541 = vrot.slane %v99, 1
    %v542 = vrot.slane %v100, 1
    %v543 = vsel %vm435, %v541, %v542
    %v544 = vrot.slane %v101, 1
    %v545 = vsel %vm435, %v542, %v544
    %v546 = vrot.slane %v102, 1
    %v547 = vrot.slane %v103, 1
    %v548 = vsel %vm435, %v546, %v547
    %v549 = vrot.slane %v104, 1
    %v550 = vsel %vm435, %v547, %v549
    %v551 = vrot.slane %v105, 1
    %v552 = vrot.slane %v106, 1
    %v553 = vsel %vm435, %v551, %v552
    %v554 = vrot.slane %v107, 1
    %v555 = vsel %vm435, %v552, %v554
    %v556 = vrot.slane %v108, 1
    %v557 = vrot.slane %v109, 1
    %v558 = vsel %vm435, %v556, %v557
    %v559 = vrot.slane %v110, 1
    %v560 = vsel %vm435, %v557, %v559
    %v561 = vrot.slane %v111, 1
    %v562 = vrot.slane %v112, 1
    %v563 = vsel %vm435, %v561, %v562
    %v564 = vrot.slane %v113, 1
    %v565 = vsel %vm435, %v562, %v564
    %v566 = vrot.slane %v114, 1
    %v567 = vrot.slane %v115, 1
    %v568 = vsel %vm435, %v566, %v567
    %v569 = vrot.slane %v116, 1
    %v570 = vsel %vm435, %v567, %v569
    %v571 = vrot.slane %v117, 1
    %v572 = vrot.slane %v118, 1
    %v573 = vsel %vm435, %v571, %v572
    %v574 = vrot.slane %v119, 1
    %v575 = vsel %vm435, %v572, %v574
    %v576 = vrot.slane %v120, 1
    %v577 = vrot.slane %v121, 1
    %v578 = vsel %vm435, %v576, %v577
    %v579 = vrot.slane %v122, 1
    %v580 = vsel %vm435, %v577, %v579
    %v581 = vrot.slane %v123, 1
    %v582 = vrot.slane %v124, 1
    %v583 = vsel %vm435, %v581, %v582
    %v584 = vrot.slane %v125, 1
    %v585 = vsel %vm435, %v582, %v584
    %v586 = vrot.slane %v126, 1
    %v587 = vrot.slane %v127, 1
    %v588 = vsel %vm435, %v586, %v587
    %v589 = vrot.slane %v128, 1
    %v590 = vsel %vm435, %v587, %v589
    %v591 = vrot.slane %v129, 1
    %v592 = vrot.slane %v130, 1
    %v593 = vsel %vm435, %v591, %v592
    %v594 = vrot.slane %v131, 1
    %v595 = vsel %vm435, %v592, %v594
    %v660 = vadd.f32 %v151, %v438
    %v661 = vadd.f32 %v152, %v440
    %v662 = vadd.f32 %v153, %v443
    %v663 = vadd.f32 %v154, %v445
    %v664 = vadd.f32 %v155, %v448
    %v665 = vadd.f32 %v156, %v450
    %v666 = vadd.f32 %v157, %v453
    %v667 = vadd.f32 %v158, %v455
    %v668 = vadd.f32 %v159, %v458
    %v669 = vadd.f32 %v160, %v460
    %v670 = vadd.f32 %v161, %v463
    %v671 = vadd.f32 %v162, %v465
    %v672 = vadd.f32 %v163, %v468
    %v673 = vadd.f32 %v164, %v470
    %v674 = vadd.f32 %v165, %v473
    %v675 = vadd.f32 %v166, %v475
    %v676 = vadd.f32 %v167, %v478
    %v677 = vadd.f32 %v168, %v480
    %v678 = vadd.f32 %v169, %v483
    %v679 = vadd.f32 %v170, %v485
    %v680 = vadd.f32 %v171, %v488
    %v681 = vadd.f32 %v172, %v490
    %v682 = vadd.f32 %v173, %v493
    %v683 = vadd.f32 %v174, %v495
    %v684 = vadd.f32 %v175, %v498
    %v685 = vadd.f32 %v176, %v500
    %v686 = vadd.f32 %v177, %v503
    %v687 = vadd.f32 %v178, %v505
    %v688 = vadd.f32 %v179, %v508
    %v689 = vadd.f32 %v180, %v510
    %v690 = vadd.f32 %v181, %v513
    %v691 = vadd.f32 %v182, %v515
    %v692 = vadd.f32 %v183, %v518
    %v693 = vadd.f32 %v184, %v520
    %v694 = vadd.f32 %v185, %v523
    %v695 = vadd.f32 %v186, %v525
    %v696 = vadd.f32 %v187, %v528
    %v697 = vadd.f32 %v188, %v530
    %v698 = vadd.f32 %v189, %v533
    %v699 = vadd.f32 %v190, %v535
    %v700 = vadd.f32 %v191, %v538
    %v701 = vadd.f32 %v192, %v540
    %v702 = vadd.f32 %v193, %v543
    %v703 = vadd.f32 %v194, %v545
    %v704 = vadd.f32 %v195, %v548
    %v705 = vadd.f32 %v196, %v550
    %v706 = vadd.f32 %v197, %v553
    %v707 = vadd.f32 %v198, %v555
    %v708 = vadd.f32 %v199, %v558
    %v709 = vadd.f32 %v200, %v560
    %v710 = vadd.f32 %v201, %v563
    %v711 = vadd.f32 %v202, %v565
    %v712 = vadd.f32 %v203, %v568
    %v713 = vadd.f32 %v204, %v570
    %v714 = vadd.f32 %v205, %v573
    %v715 = vadd.f32 %v206, %v575
    %v716 = vadd.f32 %v207, %v578
    %v717 = vadd.f32 %v208, %v580
    %v718 = vadd.f32 %v209, %v583
    %v719 = vadd.f32 %v210, %v585
    %v720 = vadd.f32 %v211, %v588
    %v721 = vadd.f32 %v212, %v590
    %v722 = vadd.f32 %v213, %v593
    %v723 = vadd.f32 %v214, %v595
    %v724 = vsel %vm150, 1, 0
    %vm725 = vcmp.eq.s32.totalorder %v724, 1
    %v726 = vsel %vm725, -3e+38, %v35
    %v727 = vsel %vm725, -3e+38, %v38
    %v728 = vsel %vm725, -3e+38, %v41
    %v729 = vsel %vm725, -3e+38, %v44
    %v730 = vsel %vm725, -3e+38, %v47
    %v731 = vsel %vm725, -3e+38, %v50
    %v732 = vsel %vm725, -3e+38, %v53
    %v733 = vsel %vm725, -3e+38, %v56
    %v734 = vsel %vm725, -3e+38, %v59
    %v735 = vsel %vm725, -3e+38, %v62
    %v736 = vsel %vm725, -3e+38, %v65
    %v737 = vsel %vm725, -3e+38, %v68
    %v738 = vsel %vm725, -3e+38, %v71
    %v739 = vsel %vm725, -3e+38, %v74
    %v740 = vsel %vm725, -3e+38, %v77
    %v741 = vsel %vm725, -3e+38, %v89
    %v742 = vsel %vm725, -3e+38, %v92
    %v743 = vsel %vm725, -3e+38, %v95
    %v744 = vsel %vm725, -3e+38, %v98
    %v745 = vsel %vm725, -3e+38, %v101
    %v746 = vsel %vm725, -3e+38, %v104
    %v747 = vsel %vm725, -3e+38, %v107
    %v748 = vsel %vm725, -3e+38, %v110
    %v749 = vsel %vm725, -3e+38, %v113
    %v750 = vsel %vm725, -3e+38, %v116
    %v751 = vsel %vm725, -3e+38, %v119
    %v752 = vsel %vm725, -3e+38, %v122
    %v753 = vsel %vm725, -3e+38, %v125
    %v754 = vsel %vm725, -3e+38, %v128
    %v755 = vsel %vm725, -3e+38, %v131
    %v846 = vrot.slane %v219, 1
    %v847 = vrot.slane %v220, 1
    %v848 = vsel %vm435, %v846, %v847
    %v849 = vrot.slane %v726, 1
    %v850 = vsel %vm435, %v847, %v849
    %v851 = vrot.slane %v221, 1
    %v852 = vrot.slane %v222, 1
    %v853 = vsel %vm435, %v851, %v852
    %v854 = vrot.slane %v727, 1
    %v855 = vsel %vm435, %v852, %v854
    %v856 = vrot.slane %v223, 1
    %v857 = vrot.slane %v224, 1
    %v858 = vsel %vm435, %v856, %v857
    %v859 = vrot.slane %v728, 1
    %v860 = vsel %vm435, %v857, %v859
    %v861 = vrot.slane %v225, 1
    %v862 = vrot.slane %v226, 1
    %v863 = vsel %vm435, %v861, %v862
    %v864 = vrot.slane %v729, 1
    %v865 = vsel %vm435, %v862, %v864
    %v866 = vrot.slane %v227, 1
    %v867 = vrot.slane %v228, 1
    %v868 = vsel %vm435, %v866, %v867
    %v869 = vrot.slane %v730, 1
    %v870 = vsel %vm435, %v867, %v869
    %v871 = vrot.slane %v229, 1
    %v872 = vrot.slane %v230, 1
    %v873 = vsel %vm435, %v871, %v872
    %v874 = vrot.slane %v731, 1
    %v875 = vsel %vm435, %v872, %v874
    %v876 = vrot.slane %v231, 1
    %v877 = vrot.slane %v232, 1
    %v878 = vsel %vm435, %v876, %v877
    %v879 = vrot.slane %v732, 1
    %v880 = vsel %vm435, %v877, %v879
    %v881 = vrot.slane %v233, 1
    %v882 = vrot.slane %v234, 1
    %v883 = vsel %vm435, %v881, %v882
    %v884 = vrot.slane %v733, 1
    %v885 = vsel %vm435, %v882, %v884
    %v886 = vrot.slane %v235, 1
    %v887 = vrot.slane %v236, 1
    %v888 = vsel %vm435, %v886, %v887
    %v889 = vrot.slane %v734, 1
    %v890 = vsel %vm435, %v887, %v889
    %v891 = vrot.slane %v237, 1
    %v892 = vrot.slane %v238, 1
    %v893 = vsel %vm435, %v891, %v892
    %v894 = vrot.slane %v735, 1
    %v895 = vsel %vm435, %v892, %v894
    %v896 = vrot.slane %v239, 1
    %v897 = vrot.slane %v240, 1
    %v898 = vsel %vm435, %v896, %v897
    %v899 = vrot.slane %v736, 1
    %v900 = vsel %vm435, %v897, %v899
    %v901 = vrot.slane %v241, 1
    %v902 = vrot.slane %v242, 1
    %v903 = vsel %vm435, %v901, %v902
    %v904 = vrot.slane %v737, 1
    %v905 = vsel %vm435, %v902, %v904
    %v906 = vrot.slane %v243, 1
    %v907 = vrot.slane %v244, 1
    %v908 = vsel %vm435, %v906, %v907
    %v909 = vrot.slane %v738, 1
    %v910 = vsel %vm435, %v907, %v909
    %v911 = vrot.slane %v245, 1
    %v912 = vrot.slane %v246, 1
    %v913 = vsel %vm435, %v911, %v912
    %v914 = vrot.slane %v739, 1
    %v915 = vsel %vm435, %v912, %v914
    %v916 = vrot.slane %v247, 1
    %v917 = vrot.slane %v248, 1
    %v918 = vsel %vm435, %v916, %v917
    %v919 = vrot.slane %v740, 1
    %v920 = vsel %vm435, %v917, %v919
    %v921 = vrot.slane %v249, 1
    %v922 = vrot.slane %v250, 1
    %v923 = vsel %vm435, %v921, %v922
    %v924 = vrot.slane %v741, 1
    %v925 = vsel %vm435, %v922, %v924
    %v926 = vrot.slane %v251, 1
    %v927 = vrot.slane %v252, 1
    %v928 = vsel %vm435, %v926, %v927
    %v929 = vrot.slane %v742, 1
    %v930 = vsel %vm435, %v927, %v929
    %v931 = vrot.slane %v253, 1
    %v932 = vrot.slane %v254, 1
    %v933 = vsel %vm435, %v931, %v932
    %v934 = vrot.slane %v743, 1
    %v935 = vsel %vm435, %v932, %v934
    %v936 = vrot.slane %v255, 1
    %v937 = vrot.slane %v256, 1
    %v938 = vsel %vm435, %v936, %v937
    %v939 = vrot.slane %v744, 1
    %v940 = vsel %vm435, %v937, %v939
    %v941 = vrot.slane %v257, 1
    %v942 = vrot.slane %v258, 1
    %v943 = vsel %vm435, %v941, %v942
    %v944 = vrot.slane %v745, 1
    %v945 = vsel %vm435, %v942, %v944
    %v946 = vrot.slane %v259, 1
    %v947 = vrot.slane %v260, 1
    %v948 = vsel %vm435, %v946, %v947
    %v949 = vrot.slane %v746, 1
    %v950 = vsel %vm435, %v947, %v949
    %v951 = vrot.slane %v261, 1
    %v952 = vrot.slane %v262, 1
    %v953 = vsel %vm435, %v951, %v952
    %v954 = vrot.slane %v747, 1
    %v955 = vsel %vm435, %v952, %v954
    %v956 = vrot.slane %v263, 1
    %v957 = vrot.slane %v264, 1
    %v958 = vsel %vm435, %v956, %v957
    %v959 = vrot.slane %v748, 1
    %v960 = vsel %vm435, %v957, %v959
    %v961 = vrot.slane %v265, 1
    %v962 = vrot.slane %v266, 1
    %v963 = vsel %vm435, %v961, %v962
    %v964 = vrot.slane %v749, 1
    %v965 = vsel %vm435, %v962, %v964
    %v966 = vrot.slane %v267, 1
    %v967 = vrot.slane %v268, 1
    %v968 = vsel %vm435, %v966, %v967
    %v969 = vrot.slane %v750, 1
    %v970 = vsel %vm435, %v967, %v969
    %v971 = vrot.slane %v269, 1
    %v972 = vrot.slane %v270, 1
    %v973 = vsel %vm435, %v971, %v972
    %v974 = vrot.slane %v751, 1
    %v975 = vsel %vm435, %v972, %v974
    %v976 = vrot.slane %v271, 1
    %v977 = vrot.slane %v272, 1
    %v978 = vsel %vm435, %v976, %v977
    %v979 = vrot.slane %v752, 1
    %v980 = vsel %vm435, %v977, %v979
    %v981 = vrot.slane %v273, 1
    %v982 = vrot.slane %v274, 1
    %v983 = vsel %vm435, %v981, %v982
    %v984 = vrot.slane %v753, 1
    %v985 = vsel %vm435, %v982, %v984
    %v986 = vrot.slane %v275, 1
    %v987 = vrot.slane %v276, 1
    %v988 = vsel %vm435, %v986, %v987
    %v989 = vrot.slane %v754, 1
    %v990 = vsel %vm435, %v987, %v989
    %v991 = vrot.slane %v277, 1
    %v992 = vrot.slane %v278, 1
    %v993 = vsel %vm435, %v991, %v992
    %v994 = vrot.slane %v755, 1
    %v995 = vsel %vm435, %v992, %v994
    %v1056 = vmax.f32 %v279, %v848
    %v1057 = vmax.f32 %v280, %v850
    %v1058 = vmax.f32 %v281, %v853
    %v1059 = vmax.f32 %v282, %v855
    %v1060 = vmax.f32 %v283, %v858
    %v1061 = vmax.f32 %v284, %v860
    %v1062 = vmax.f32 %v285, %v863
    %v1063 = vmax.f32 %v286, %v865
    %v1064 = vmax.f32 %v287, %v868
    %v1065 = vmax.f32 %v288, %v870
    %v1066 = vmax.f32 %v289, %v873
    %v1067 = vmax.f32 %v290, %v875
    %v1068 = vmax.f32 %v291, %v878
    %v1069 = vmax.f32 %v292, %v880
    %v1070 = vmax.f32 %v293, %v883
    %v1071 = vmax.f32 %v294, %v885
    %v1072 = vmax.f32 %v295, %v888
    %v1073 = vmax.f32 %v296, %v890
    %v1074 = vmax.f32 %v297, %v893
    %v1075 = vmax.f32 %v298, %v895
    %v1076 = vmax.f32 %v299, %v898
    %v1077 = vmax.f32 %v300, %v900
    %v1078 = vmax.f32 %v301, %v903
    %v1079 = vmax.f32 %v302, %v905
    %v1080 = vmax.f32 %v303, %v908
    %v1081 = vmax.f32 %v304, %v910
    %v1082 = vmax.f32 %v305, %v913
    %v1083 = vmax.f32 %v306, %v915
    %v1084 = vmax.f32 %v307, %v918
    %v1085 = vmax.f32 %v308, %v920
    %v1086 = vmax.f32 %v309, %v923
    %v1087 = vmax.f32 %v310, %v925
    %v1088 = vmax.f32 %v311, %v928
    %v1089 = vmax.f32 %v312, %v930
    %v1090 = vmax.f32 %v313, %v933
    %v1091 = vmax.f32 %v314, %v935
    %v1092 = vmax.f32 %v315, %v938
    %v1093 = vmax.f32 %v316, %v940
    %v1094 = vmax.f32 %v317, %v943
    %v1095 = vmax.f32 %v318, %v945
    %v1096 = vmax.f32 %v319, %v948
    %v1097 = vmax.f32 %v320, %v950
    %v1098 = vmax.f32 %v321, %v953
    %v1099 = vmax.f32 %v322, %v955
    %v1100 = vmax.f32 %v323, %v958
    %v1101 = vmax.f32 %v324, %v960
    %v1102 = vmax.f32 %v325, %v963
    %v1103 = vmax.f32 %v326, %v965
    %v1104 = vmax.f32 %v327, %v968
    %v1105 = vmax.f32 %v328, %v970
    %v1106 = vmax.f32 %v329, %v973
    %v1107 = vmax.f32 %v330, %v975
    %v1108 = vmax.f32 %v331, %v978
    %v1109 = vmax.f32 %v332, %v980
    %v1110 = vmax.f32 %v333, %v983
    %v1111 = vmax.f32 %v334, %v985
    %v1112 = vmax.f32 %v335, %v988
    %v1113 = vmax.f32 %v336, %v990
    %v1114 = vmax.f32 %v337, %v993
    %v1115 = vmax.f32 %v338, %v995
    %vm1116 = vcmask 1045504
    %v1117 = vrot.slane %v30, 2
    %v1118 = vrot.slane %v31, 2
    %v1119 = vsel %vm1116, %v1117, %v1118
    %v1120 = vrot.slane %v32, 2
    %v1121 = vsel %vm1116, %v1118, %v1120
    %v1122 = vrot.slane %v33, 2
    %v1123 = vrot.slane %v34, 2
    %v1124 = vsel %vm1116, %v1122, %v1123
    %v1125 = vrot.slane %v35, 2
    %v1126 = vsel %vm1116, %v1123, %v1125
    %v1127 = vrot.slane %v36, 2
    %v1128 = vrot.slane %v37, 2
    %v1129 = vsel %vm1116, %v1127, %v1128
    %v1130 = vrot.slane %v38, 2
    %v1131 = vsel %vm1116, %v1128, %v1130
    %v1132 = vrot.slane %v39, 2
    %v1133 = vrot.slane %v40, 2
    %v1134 = vsel %vm1116, %v1132, %v1133
    %v1135 = vrot.slane %v41, 2
    %v1136 = vsel %vm1116, %v1133, %v1135
    %v1137 = vrot.slane %v42, 2
    %v1138 = vrot.slane %v43, 2
    %v1139 = vsel %vm1116, %v1137, %v1138
    %v1140 = vrot.slane %v44, 2
    %v1141 = vsel %vm1116, %v1138, %v1140
    %v1142 = vrot.slane %v45, 2
    %v1143 = vrot.slane %v46, 2
    %v1144 = vsel %vm1116, %v1142, %v1143
    %v1145 = vrot.slane %v47, 2
    %v1146 = vsel %vm1116, %v1143, %v1145
    %v1147 = vrot.slane %v48, 2
    %v1148 = vrot.slane %v49, 2
    %v1149 = vsel %vm1116, %v1147, %v1148
    %v1150 = vrot.slane %v50, 2
    %v1151 = vsel %vm1116, %v1148, %v1150
    %v1152 = vrot.slane %v51, 2
    %v1153 = vrot.slane %v52, 2
    %v1154 = vsel %vm1116, %v1152, %v1153
    %v1155 = vrot.slane %v53, 2
    %v1156 = vsel %vm1116, %v1153, %v1155
    %v1157 = vrot.slane %v54, 2
    %v1158 = vrot.slane %v55, 2
    %v1159 = vsel %vm1116, %v1157, %v1158
    %v1160 = vrot.slane %v56, 2
    %v1161 = vsel %vm1116, %v1158, %v1160
    %v1162 = vrot.slane %v57, 2
    %v1163 = vrot.slane %v58, 2
    %v1164 = vsel %vm1116, %v1162, %v1163
    %v1165 = vrot.slane %v59, 2
    %v1166 = vsel %vm1116, %v1163, %v1165
    %v1167 = vrot.slane %v60, 2
    %v1168 = vrot.slane %v61, 2
    %v1169 = vsel %vm1116, %v1167, %v1168
    %v1170 = vrot.slane %v62, 2
    %v1171 = vsel %vm1116, %v1168, %v1170
    %v1172 = vrot.slane %v63, 2
    %v1173 = vrot.slane %v64, 2
    %v1174 = vsel %vm1116, %v1172, %v1173
    %v1175 = vrot.slane %v65, 2
    %v1176 = vsel %vm1116, %v1173, %v1175
    %v1177 = vrot.slane %v66, 2
    %v1178 = vrot.slane %v67, 2
    %v1179 = vsel %vm1116, %v1177, %v1178
    %v1180 = vrot.slane %v68, 2
    %v1181 = vsel %vm1116, %v1178, %v1180
    %v1182 = vrot.slane %v69, 2
    %v1183 = vrot.slane %v70, 2
    %v1184 = vsel %vm1116, %v1182, %v1183
    %v1185 = vrot.slane %v71, 2
    %v1186 = vsel %vm1116, %v1183, %v1185
    %v1187 = vrot.slane %v72, 2
    %v1188 = vrot.slane %v73, 2
    %v1189 = vsel %vm1116, %v1187, %v1188
    %v1190 = vrot.slane %v74, 2
    %v1191 = vsel %vm1116, %v1188, %v1190
    %v1192 = vrot.slane %v75, 2
    %v1193 = vrot.slane %v76, 2
    %v1194 = vsel %vm1116, %v1192, %v1193
    %v1195 = vrot.slane %v77, 2
    %v1196 = vsel %vm1116, %v1193, %v1195
    %v1197 = vrot.slane %v84, 2
    %v1198 = vrot.slane %v85, 2
    %v1199 = vsel %vm1116, %v1197, %v1198
    %v1200 = vrot.slane %v86, 2
    %v1201 = vsel %vm1116, %v1198, %v1200
    %v1202 = vrot.slane %v87, 2
    %v1203 = vrot.slane %v88, 2
    %v1204 = vsel %vm1116, %v1202, %v1203
    %v1205 = vrot.slane %v89, 2
    %v1206 = vsel %vm1116, %v1203, %v1205
    %v1207 = vrot.slane %v90, 2
    %v1208 = vrot.slane %v91, 2
    %v1209 = vsel %vm1116, %v1207, %v1208
    %v1210 = vrot.slane %v92, 2
    %v1211 = vsel %vm1116, %v1208, %v1210
    %v1212 = vrot.slane %v93, 2
    %v1213 = vrot.slane %v94, 2
    %v1214 = vsel %vm1116, %v1212, %v1213
    %v1215 = vrot.slane %v95, 2
    %v1216 = vsel %vm1116, %v1213, %v1215
    %v1217 = vrot.slane %v96, 2
    %v1218 = vrot.slane %v97, 2
    %v1219 = vsel %vm1116, %v1217, %v1218
    %v1220 = vrot.slane %v98, 2
    %v1221 = vsel %vm1116, %v1218, %v1220
    %v1222 = vrot.slane %v99, 2
    %v1223 = vrot.slane %v100, 2
    %v1224 = vsel %vm1116, %v1222, %v1223
    %v1225 = vrot.slane %v101, 2
    %v1226 = vsel %vm1116, %v1223, %v1225
    %v1227 = vrot.slane %v102, 2
    %v1228 = vrot.slane %v103, 2
    %v1229 = vsel %vm1116, %v1227, %v1228
    %v1230 = vrot.slane %v104, 2
    %v1231 = vsel %vm1116, %v1228, %v1230
    %v1232 = vrot.slane %v105, 2
    %v1233 = vrot.slane %v106, 2
    %v1234 = vsel %vm1116, %v1232, %v1233
    %v1235 = vrot.slane %v107, 2
    %v1236 = vsel %vm1116, %v1233, %v1235
    %v1237 = vrot.slane %v108, 2
    %v1238 = vrot.slane %v109, 2
    %v1239 = vsel %vm1116, %v1237, %v1238
    %v1240 = vrot.slane %v110, 2
    %v1241 = vsel %vm1116, %v1238, %v1240
    %v1242 = vrot.slane %v111, 2
    %v1243 = vrot.slane %v112, 2
    %v1244 = vsel %vm1116, %v1242, %v1243
    %v1245 = vrot.slane %v113, 2
    %v1246 = vsel %vm1116, %v1243, %v1245
    %v1247 = vrot.slane %v114, 2
    %v1248 = vrot.slane %v115, 2
    %v1249 = vsel %vm1116, %v1247, %v1248
    %v1250 = vrot.slane %v116, 2
    %v1251 = vsel %vm1116, %v1248, %v1250
    %v1252 = vrot.slane %v117, 2
    %v1253 = vrot.slane %v118, 2
    %v1254 = vsel %vm1116, %v1252, %v1253
    %v1255 = vrot.slane %v119, 2
    %v1256 = vsel %vm1116, %v1253, %v1255
    %v1257 = vrot.slane %v120, 2
    %v1258 = vrot.slane %v121, 2
    %v1259 = vsel %vm1116, %v1257, %v1258
    %v1260 = vrot.slane %v122, 2
    %v1261 = vsel %vm1116, %v1258, %v1260
    %v1262 = vrot.slane %v123, 2
    %v1263 = vrot.slane %v124, 2
    %v1264 = vsel %vm1116, %v1262, %v1263
    %v1265 = vrot.slane %v125, 2
    %v1266 = vsel %vm1116, %v1263, %v1265
    %v1267 = vrot.slane %v126, 2
    %v1268 = vrot.slane %v127, 2
    %v1269 = vsel %vm1116, %v1267, %v1268
    %v1270 = vrot.slane %v128, 2
    %v1271 = vsel %vm1116, %v1268, %v1270
    %v1272 = vrot.slane %v129, 2
    %v1273 = vrot.slane %v130, 2
    %v1274 = vsel %vm1116, %v1272, %v1273
    %v1275 = vrot.slane %v131, 2
    %v1276 = vsel %vm1116, %v1273, %v1275
    %v1341 = vadd.f32 %v660, %v1119
    %v1342 = vadd.f32 %v661, %v1121
    %v1343 = vadd.f32 %v662, %v1124
    %v1344 = vadd.f32 %v663, %v1126
    %v1345 = vadd.f32 %v664, %v1129
    %v1346 = vadd.f32 %v665, %v1131
    %v1347 = vadd.f32 %v666, %v1134
    %v1348 = vadd.f32 %v667, %v1136
    %v1349 = vadd.f32 %v668, %v1139
    %v1350 = vadd.f32 %v669, %v1141
    %v1351 = vadd.f32 %v670, %v1144
    %v1352 = vadd.f32 %v671, %v1146
    %v1353 = vadd.f32 %v672, %v1149
    %v1354 = vadd.f32 %v673, %v1151
    %v1355 = vadd.f32 %v674, %v1154
    %v1356 = vadd.f32 %v675, %v1156
    %v1357 = vadd.f32 %v676, %v1159
    %v1358 = vadd.f32 %v677, %v1161
    %v1359 = vadd.f32 %v678, %v1164
    %v1360 = vadd.f32 %v679, %v1166
    %v1361 = vadd.f32 %v680, %v1169
    %v1362 = vadd.f32 %v681, %v1171
    %v1363 = vadd.f32 %v682, %v1174
    %v1364 = vadd.f32 %v683, %v1176
    %v1365 = vadd.f32 %v684, %v1179
    %v1366 = vadd.f32 %v685, %v1181
    %v1367 = vadd.f32 %v686, %v1184
    %v1368 = vadd.f32 %v687, %v1186
    %v1369 = vadd.f32 %v688, %v1189
    %v1370 = vadd.f32 %v689, %v1191
    %v1371 = vadd.f32 %v690, %v1194
    %v1372 = vadd.f32 %v691, %v1196
    %v1373 = vadd.f32 %v692, %v1199
    %v1374 = vadd.f32 %v693, %v1201
    %v1375 = vadd.f32 %v694, %v1204
    %v1376 = vadd.f32 %v695, %v1206
    %v1377 = vadd.f32 %v696, %v1209
    %v1378 = vadd.f32 %v697, %v1211
    %v1379 = vadd.f32 %v698, %v1214
    %v1380 = vadd.f32 %v699, %v1216
    %v1381 = vadd.f32 %v700, %v1219
    %v1382 = vadd.f32 %v701, %v1221
    %v1383 = vadd.f32 %v702, %v1224
    %v1384 = vadd.f32 %v703, %v1226
    %v1385 = vadd.f32 %v704, %v1229
    %v1386 = vadd.f32 %v705, %v1231
    %v1387 = vadd.f32 %v706, %v1234
    %v1388 = vadd.f32 %v707, %v1236
    %v1389 = vadd.f32 %v708, %v1239
    %v1390 = vadd.f32 %v709, %v1241
    %v1391 = vadd.f32 %v710, %v1244
    %v1392 = vadd.f32 %v711, %v1246
    %v1393 = vadd.f32 %v712, %v1249
    %v1394 = vadd.f32 %v713, %v1251
    %v1395 = vadd.f32 %v714, %v1254
    %v1396 = vadd.f32 %v715, %v1256
    %v1397 = vadd.f32 %v716, %v1259
    %v1398 = vadd.f32 %v717, %v1261
    %v1399 = vadd.f32 %v718, %v1264
    %v1400 = vadd.f32 %v719, %v1266
    %v1401 = vadd.f32 %v720, %v1269
    %v1402 = vadd.f32 %v721, %v1271
    %v1403 = vadd.f32 %v722, %v1274
    %v1404 = vadd.f32 %v723, %v1276
    %v1405 = vrot.slane %v219, 2
    %v1406 = vrot.slane %v220, 2
    %v1407 = vsel %vm1116, %v1405, %v1406
    %v1408 = vrot.slane %v726, 2
    %v1409 = vsel %vm1116, %v1406, %v1408
    %v1410 = vrot.slane %v221, 2
    %v1411 = vrot.slane %v222, 2
    %v1412 = vsel %vm1116, %v1410, %v1411
    %v1413 = vrot.slane %v727, 2
    %v1414 = vsel %vm1116, %v1411, %v1413
    %v1415 = vrot.slane %v223, 2
    %v1416 = vrot.slane %v224, 2
    %v1417 = vsel %vm1116, %v1415, %v1416
    %v1418 = vrot.slane %v728, 2
    %v1419 = vsel %vm1116, %v1416, %v1418
    %v1420 = vrot.slane %v225, 2
    %v1421 = vrot.slane %v226, 2
    %v1422 = vsel %vm1116, %v1420, %v1421
    %v1423 = vrot.slane %v729, 2
    %v1424 = vsel %vm1116, %v1421, %v1423
    %v1425 = vrot.slane %v227, 2
    %v1426 = vrot.slane %v228, 2
    %v1427 = vsel %vm1116, %v1425, %v1426
    %v1428 = vrot.slane %v730, 2
    %v1429 = vsel %vm1116, %v1426, %v1428
    %v1430 = vrot.slane %v229, 2
    %v1431 = vrot.slane %v230, 2
    %v1432 = vsel %vm1116, %v1430, %v1431
    %v1433 = vrot.slane %v731, 2
    %v1434 = vsel %vm1116, %v1431, %v1433
    %v1435 = vrot.slane %v231, 2
    %v1436 = vrot.slane %v232, 2
    %v1437 = vsel %vm1116, %v1435, %v1436
    %v1438 = vrot.slane %v732, 2
    %v1439 = vsel %vm1116, %v1436, %v1438
    %v1440 = vrot.slane %v233, 2
    %v1441 = vrot.slane %v234, 2
    %v1442 = vsel %vm1116, %v1440, %v1441
    %v1443 = vrot.slane %v733, 2
    %v1444 = vsel %vm1116, %v1441, %v1443
    %v1445 = vrot.slane %v235, 2
    %v1446 = vrot.slane %v236, 2
    %v1447 = vsel %vm1116, %v1445, %v1446
    %v1448 = vrot.slane %v734, 2
    %v1449 = vsel %vm1116, %v1446, %v1448
    %v1450 = vrot.slane %v237, 2
    %v1451 = vrot.slane %v238, 2
    %v1452 = vsel %vm1116, %v1450, %v1451
    %v1453 = vrot.slane %v735, 2
    %v1454 = vsel %vm1116, %v1451, %v1453
    %v1455 = vrot.slane %v239, 2
    %v1456 = vrot.slane %v240, 2
    %v1457 = vsel %vm1116, %v1455, %v1456
    %v1458 = vrot.slane %v736, 2
    %v1459 = vsel %vm1116, %v1456, %v1458
    %v1460 = vrot.slane %v241, 2
    %v1461 = vrot.slane %v242, 2
    %v1462 = vsel %vm1116, %v1460, %v1461
    %v1463 = vrot.slane %v737, 2
    %v1464 = vsel %vm1116, %v1461, %v1463
    %v1465 = vrot.slane %v243, 2
    %v1466 = vrot.slane %v244, 2
    %v1467 = vsel %vm1116, %v1465, %v1466
    %v1468 = vrot.slane %v738, 2
    %v1469 = vsel %vm1116, %v1466, %v1468
    %v1470 = vrot.slane %v245, 2
    %v1471 = vrot.slane %v246, 2
    %v1472 = vsel %vm1116, %v1470, %v1471
    %v1473 = vrot.slane %v739, 2
    %v1474 = vsel %vm1116, %v1471, %v1473
    %v1475 = vrot.slane %v247, 2
    %v1476 = vrot.slane %v248, 2
    %v1477 = vsel %vm1116, %v1475, %v1476
    %v1478 = vrot.slane %v740, 2
    %v1479 = vsel %vm1116, %v1476, %v1478
    %v1480 = vrot.slane %v249, 2
    %v1481 = vrot.slane %v250, 2
    %v1482 = vsel %vm1116, %v1480, %v1481
    %v1483 = vrot.slane %v741, 2
    %v1484 = vsel %vm1116, %v1481, %v1483
    %v1485 = vrot.slane %v251, 2
    %v1486 = vrot.slane %v252, 2
    %v1487 = vsel %vm1116, %v1485, %v1486
    %v1488 = vrot.slane %v742, 2
    %v1489 = vsel %vm1116, %v1486, %v1488
    %v1490 = vrot.slane %v253, 2
    %v1491 = vrot.slane %v254, 2
    %v1492 = vsel %vm1116, %v1490, %v1491
    %v1493 = vrot.slane %v743, 2
    %v1494 = vsel %vm1116, %v1491, %v1493
    %v1495 = vrot.slane %v255, 2
    %v1496 = vrot.slane %v256, 2
    %v1497 = vsel %vm1116, %v1495, %v1496
    %v1498 = vrot.slane %v744, 2
    %v1499 = vsel %vm1116, %v1496, %v1498
    %v1500 = vrot.slane %v257, 2
    %v1501 = vrot.slane %v258, 2
    %v1502 = vsel %vm1116, %v1500, %v1501
    %v1503 = vrot.slane %v745, 2
    %v1504 = vsel %vm1116, %v1501, %v1503
    %v1505 = vrot.slane %v259, 2
    %v1506 = vrot.slane %v260, 2
    %v1507 = vsel %vm1116, %v1505, %v1506
    %v1508 = vrot.slane %v746, 2
    %v1509 = vsel %vm1116, %v1506, %v1508
    %v1510 = vrot.slane %v261, 2
    %v1511 = vrot.slane %v262, 2
    %v1512 = vsel %vm1116, %v1510, %v1511
    %v1513 = vrot.slane %v747, 2
    %v1514 = vsel %vm1116, %v1511, %v1513
    %v1515 = vrot.slane %v263, 2
    %v1516 = vrot.slane %v264, 2
    %v1517 = vsel %vm1116, %v1515, %v1516
    %v1518 = vrot.slane %v748, 2
    %v1519 = vsel %vm1116, %v1516, %v1518
    %v1520 = vrot.slane %v265, 2
    %v1521 = vrot.slane %v266, 2
    %v1522 = vsel %vm1116, %v1520, %v1521
    %v1523 = vrot.slane %v749, 2
    %v1524 = vsel %vm1116, %v1521, %v1523
    %v1525 = vrot.slane %v267, 2
    %v1526 = vrot.slane %v268, 2
    %v1527 = vsel %vm1116, %v1525, %v1526
    %v1528 = vrot.slane %v750, 2
    %v1529 = vsel %vm1116, %v1526, %v1528
    %v1530 = vrot.slane %v269, 2
    %v1531 = vrot.slane %v270, 2
    %v1532 = vsel %vm1116, %v1530, %v1531
    %v1533 = vrot.slane %v751, 2
    %v1534 = vsel %vm1116, %v1531, %v1533
    %v1535 = vrot.slane %v271, 2
    %v1536 = vrot.slane %v272, 2
    %v1537 = vsel %vm1116, %v1535, %v1536
    %v1538 = vrot.slane %v752, 2
    %v1539 = vsel %vm1116, %v1536, %v1538
    %v1540 = vrot.slane %v273, 2
    %v1541 = vrot.slane %v274, 2
    %v1542 = vsel %vm1116, %v1540, %v1541
    %v1543 = vrot.slane %v753, 2
    %v1544 = vsel %vm1116, %v1541, %v1543
    %v1545 = vrot.slane %v275, 2
    %v1546 = vrot.slane %v276, 2
    %v1547 = vsel %vm1116, %v1545, %v1546
    %v1548 = vrot.slane %v754, 2
    %v1549 = vsel %vm1116, %v1546, %v1548
    %v1550 = vrot.slane %v277, 2
    %v1551 = vrot.slane %v278, 2
    %v1552 = vsel %vm1116, %v1550, %v1551
    %v1553 = vrot.slane %v755, 2
    %v1554 = vsel %vm1116, %v1551, %v1553
    %v1615 = vmax.f32 %v1056, %v1407
    %v1616 = vmax.f32 %v1057, %v1409
    %v1617 = vmax.f32 %v1058, %v1412
    %v1618 = vmax.f32 %v1059, %v1414
    %v1619 = vmax.f32 %v1060, %v1417
    %v1620 = vmax.f32 %v1061, %v1419
    %v1621 = vmax.f32 %v1062, %v1422
    %v1622 = vmax.f32 %v1063, %v1424
    %v1623 = vmax.f32 %v1064, %v1427
    %v1624 = vmax.f32 %v1065, %v1429
    %v1625 = vmax.f32 %v1066, %v1432
    %v1626 = vmax.f32 %v1067, %v1434
    %v1627 = vmax.f32 %v1068, %v1437
    %v1628 = vmax.f32 %v1069, %v1439
    %v1629 = vmax.f32 %v1070, %v1442
    %v1630 = vmax.f32 %v1071, %v1444
    %v1631 = vmax.f32 %v1072, %v1447
    %v1632 = vmax.f32 %v1073, %v1449
    %v1633 = vmax.f32 %v1074, %v1452
    %v1634 = vmax.f32 %v1075, %v1454
    %v1635 = vmax.f32 %v1076, %v1457
    %v1636 = vmax.f32 %v1077, %v1459
    %v1637 = vmax.f32 %v1078, %v1462
    %v1638 = vmax.f32 %v1079, %v1464
    %v1639 = vmax.f32 %v1080, %v1467
    %v1640 = vmax.f32 %v1081, %v1469
    %v1641 = vmax.f32 %v1082, %v1472
    %v1642 = vmax.f32 %v1083, %v1474
    %v1643 = vmax.f32 %v1084, %v1477
    %v1644 = vmax.f32 %v1085, %v1479
    %v1645 = vmax.f32 %v1086, %v1482
    %v1646 = vmax.f32 %v1087, %v1484
    %v1647 = vmax.f32 %v1088, %v1487
    %v1648 = vmax.f32 %v1089, %v1489
    %v1649 = vmax.f32 %v1090, %v1492
    %v1650 = vmax.f32 %v1091, %v1494
    %v1651 = vmax.f32 %v1092, %v1497
    %v1652 = vmax.f32 %v1093, %v1499
    %v1653 = vmax.f32 %v1094, %v1502
    %v1654 = vmax.f32 %v1095, %v1504
    %v1655 = vmax.f32 %v1096, %v1507
    %v1656 = vmax.f32 %v1097, %v1509
    %v1657 = vmax.f32 %v1098, %v1512
    %v1658 = vmax.f32 %v1099, %v1514
    %v1659 = vmax.f32 %v1100, %v1517
    %v1660 = vmax.f32 %v1101, %v1519
    %v1661 = vmax.f32 %v1102, %v1522
    %v1662 = vmax.f32 %v1103, %v1524
    %v1663 = vmax.f32 %v1104, %v1527
    %v1664 = vmax.f32 %v1105, %v1529
    %v1665 = vmax.f32 %v1106, %v1532
    %v1666 = vmax.f32 %v1107, %v1534
    %v1667 = vmax.f32 %v1108, %v1537
    %v1668 = vmax.f32 %v1109, %v1539
    %v1669 = vmax.f32 %v1110, %v1542
    %v1670 = vmax.f32 %v1111, %v1544
    %v1671 = vmax.f32 %v1112, %v1547
    %v1672 = vmax.f32 %v1113, %v1549
    %v1673 = vmax.f32 %v1114, %v1552
    %v1674 = vmax.f32 %v1115, %v1554
    %v1675 = vmax.f32 %v1615, -3e+38
    %v1676 = vmax.f32 %v1616, -3e+38
    %v1677 = vmax.f32 %v1617, -3e+38
    %v1678 = vmax.f32 %v1618, -3e+38
    %v1679 = vmax.f32 %v1619, -3e+38
    %v1680 = vmax.f32 %v1620, -3e+38
    %v1681 = vmax.f32 %v1621, -3e+38
    %v1682 = vmax.f32 %v1622, -3e+38
    %v1683 = vmax.f32 %v1623, -3e+38
    %v1684 = vmax.f32 %v1624, -3e+38
    %v1685 = vmax.f32 %v1625, -3e+38
    %v1686 = vmax.f32 %v1626, -3e+38
    %v1687 = vmax.f32 %v1627, -3e+38
    %v1688 = vmax.f32 %v1628, -3e+38
    %v1689 = vmax.f32 %v1629, -3e+38
    %v1690 = vmax.f32 %v1630, -3e+38
    %v1691 = vmax.f32 %v1631, -3e+38
    %v1692 = vmax.f32 %v1632, -3e+38
    %v1693 = vmax.f32 %v1633, -3e+38
    %v1694 = vmax.f32 %v1634, -3e+38
    %v1695 = vmax.f32 %v1635, -3e+38
    %v1696 = vmax.f32 %v1636, -3e+38
    %v1697 = vmax.f32 %v1637, -3e+38
    %v1698 = vmax.f32 %v1638, -3e+38
    %v1699 = vmax.f32 %v1639, -3e+38
    %v1700 = vmax.f32 %v1640, -3e+38
    %v1701 = vmax.f32 %v1641, -3e+38
    %v1702 = vmax.f32 %v1642, -3e+38
    %v1703 = vmax.f32 %v1645, -3e+38
    %v1704 = vmax.f32 %v1646, -3e+38
    %v1705 = vmax.f32 %v1647, -3e+38
    %v1706 = vmax.f32 %v1648, -3e+38
    %v1707 = vmax.f32 %v1649, -3e+38
    %v1708 = vmax.f32 %v1650, -3e+38
    %v1709 = vmax.f32 %v1651, -3e+38
    %v1710 = vmax.f32 %v1652, -3e+38
    %v1711 = vmax.f32 %v1653, -3e+38
    %v1712 = vmax.f32 %v1654, -3e+38
    %v1713 = vmax.f32 %v1655, -3e+38
    %v1714 = vmax.f32 %v1656, -3e+38
    %v1715 = vmax.f32 %v1657, -3e+38
    %v1716 = vmax.f32 %v1658, -3e+38
    %v1717 = vmax.f32 %v1659, -3e+38
    %v1718 = vmax.f32 %v1660, -3e+38
    %v1719 = vmax.f32 %v1661, -3e+38
    %v1720 = vmax.f32 %v1662, -3e+38
    %v1721 = vmax.f32 %v1663, -3e+38
    %v1722 = vmax.f32 %v1664, -3e+38
    %v1723 = vmax.f32 %v1665, -3e+38
    %v1724 = vmax.f32 %v1666, -3e+38
    %v1725 = vmax.f32 %v1667, -3e+38
    %v1726 = vmax.f32 %v1668, -3e+38
    %v1727 = vmax.f32 %v1669, -3e+38
    %v1728 = vmax.f32 %v1670, -3e+38
    %v1729 = vmax.f32 %v1671, -3e+38
    %v1730 = vmax.f32 %v1672, -3e+38
    %v1731 = vmax.f32 %v1643, -3e+38
    %v1732 = vmax.f32 %v1644, -3e+38
    %v1733 = vmax.f32 %v1673, -3e+38
    %v1734 = vmax.f32 %v1674, -3e+38
    %v1735 = vadd.f32 %v1341, %v33
    %v1736 = vadd.f32 %v1342, %v34
    %v1737 = vadd.f32 %v1343, %v36
    %v1738 = vadd.f32 %v1344, %v37
    %v1739 = vadd.f32 %v1345, %v39
    %v1740 = vadd.f32 %v1346, %v40
    %v1741 = vadd.f32 %v1347, %v42
    %v1742 = vadd.f32 %v1348, %v43
    %v1743 = vadd.f32 %v1349, %v45
    %v1744 = vadd.f32 %v1350, %v46
    %v1745 = vadd.f32 %v1351, %v48
    %v1746 = vadd.f32 %v1352, %v49
    %v1747 = vadd.f32 %v1353, %v51
    %v1748 = vadd.f32 %v1354, %v52
    %v1749 = vadd.f32 %v1355, %v54
    %v1750 = vadd.f32 %v1356, %v55
    %v1751 = vadd.f32 %v1357, %v57
    %v1752 = vadd.f32 %v1358, %v58
    %v1753 = vadd.f32 %v1359, %v60
    %v1754 = vadd.f32 %v1360, %v61
    %v1755 = vadd.f32 %v1361, %v63
    %v1756 = vadd.f32 %v1362, %v64
    %v1757 = vadd.f32 %v1363, %v66
    %v1758 = vadd.f32 %v1364, %v67
    %v1759 = vadd.f32 %v1365, %v69
    %v1760 = vadd.f32 %v1366, %v70
    %v1761 = vadd.f32 %v1367, %v72
    %v1762 = vadd.f32 %v1368, %v73
    %v1763 = vadd.f32 %v1369, %v75
    %v1764 = vadd.f32 %v1370, %v76
    %v1765 = vadd.f32 %v1371, %v78
    %v1766 = vadd.f32 %v1372, %v79
    %v1767 = vadd.f32 %v1373, %v87
    %v1768 = vadd.f32 %v1374, %v88
    %v1769 = vadd.f32 %v1375, %v90
    %v1770 = vadd.f32 %v1376, %v91
    %v1771 = vadd.f32 %v1377, %v93
    %v1772 = vadd.f32 %v1378, %v94
    %v1773 = vadd.f32 %v1379, %v96
    %v1774 = vadd.f32 %v1380, %v97
    %v1775 = vadd.f32 %v1381, %v99
    %v1776 = vadd.f32 %v1382, %v100
    %v1777 = vadd.f32 %v1383, %v102
    %v1778 = vadd.f32 %v1384, %v103
    %v1779 = vadd.f32 %v1385, %v105
    %v1780 = vadd.f32 %v1386, %v106
    %v1781 = vadd.f32 %v1387, %v108
    %v1782 = vadd.f32 %v1388, %v109
    %v1783 = vadd.f32 %v1389, %v111
    %v1784 = vadd.f32 %v1390, %v112
    %v1785 = vadd.f32 %v1391, %v114
    %v1786 = vadd.f32 %v1392, %v115
    %v1787 = vadd.f32 %v1393, %v117
    %v1788 = vadd.f32 %v1394, %v118
    %v1789 = vadd.f32 %v1395, %v120
    %v1790 = vadd.f32 %v1396, %v121
    %v1791 = vadd.f32 %v1397, %v123
    %v1792 = vadd.f32 %v1398, %v124
    %v1793 = vadd.f32 %v1399, %v126
    %v1794 = vadd.f32 %v1400, %v127
    %v1795 = vadd.f32 %v1401, %v129
    %v1796 = vadd.f32 %v1402, %v130
    %v1797 = vadd.f32 %v1403, %v132
    %v1798 = vadd.f32 %v1404, %v133
    %v1799 = vsel %vm217, -3e+38, %v78
    %v1800 = vsel %vm218, -3e+38, %v79
    %v1801 = vsel %vm217, -3e+38, %v132
    %v1802 = vsel %vm218, -3e+38, %v133
    %v1803 = vmax.f32 %v1799, -3e+38
    %v1804 = vmax.f32 %v1800, -3e+38
    %v1805 = vmax.f32 %v1801, -3e+38
    %v1806 = vmax.f32 %v1802, -3e+38
    %v1813 = vrot.slane %v78, 1
    %v1814 = vrot.slane %v79, 1
    %v1815 = vsel %vm435, %v1813, %v1814
    %v1816 = vrot.slane %v80, 1
    %v1817 = vsel %vm435, %v1814, %v1816
    %v1818 = vrot.slane %v132, 1
    %v1819 = vrot.slane %v133, 1
    %v1820 = vsel %vm435, %v1818, %v1819
    %v1821 = vrot.slane %v134, 1
    %v1822 = vsel %vm435, %v1819, %v1821
    %v1827 = vadd.f32 %v1735, %v443
    %v1828 = vadd.f32 %v1736, %v445
    %v1829 = vadd.f32 %v1737, %v448
    %v1830 = vadd.f32 %v1738, %v450
    %v1831 = vadd.f32 %v1739, %v453
    %v1832 = vadd.f32 %v1740, %v455
    %v1833 = vadd.f32 %v1741, %v458
    %v1834 = vadd.f32 %v1742, %v460
    %v1835 = vadd.f32 %v1743, %v463
    %v1836 = vadd.f32 %v1744, %v465
    %v1837 = vadd.f32 %v1745, %v468
    %v1838 = vadd.f32 %v1746, %v470
    %v1839 = vadd.f32 %v1747, %v473
    %v1840 = vadd.f32 %v1748, %v475
    %v1841 = vadd.f32 %v1749, %v478
    %v1842 = vadd.f32 %v1750, %v480
    %v1843 = vadd.f32 %v1751, %v483
    %v1844 = vadd.f32 %v1752, %v485
    %v1845 = vadd.f32 %v1753, %v488
    %v1846 = vadd.f32 %v1754, %v490
    %v1847 = vadd.f32 %v1755, %v493
    %v1848 = vadd.f32 %v1756, %v495
    %v1849 = vadd.f32 %v1757, %v498
    %v1850 = vadd.f32 %v1758, %v500
    %v1851 = vadd.f32 %v1759, %v503
    %v1852 = vadd.f32 %v1760, %v505
    %v1853 = vadd.f32 %v1761, %v508
    %v1854 = vadd.f32 %v1762, %v510
    %v1855 = vadd.f32 %v1763, %v513
    %v1856 = vadd.f32 %v1764, %v515
    %v1857 = vadd.f32 %v1765, %v1815
    %v1858 = vadd.f32 %v1766, %v1817
    %v1859 = vadd.f32 %v1767, %v523
    %v1860 = vadd.f32 %v1768, %v525
    %v1861 = vadd.f32 %v1769, %v528
    %v1862 = vadd.f32 %v1770, %v530
    %v1863 = vadd.f32 %v1771, %v533
    %v1864 = vadd.f32 %v1772, %v535
    %v1865 = vadd.f32 %v1773, %v538
    %v1866 = vadd.f32 %v1774, %v540
    %v1867 = vadd.f32 %v1775, %v543
    %v1868 = vadd.f32 %v1776, %v545
    %v1869 = vadd.f32 %v1777, %v548
    %v1870 = vadd.f32 %v1778, %v550
    %v1871 = vadd.f32 %v1779, %v553
    %v1872 = vadd.f32 %v1780, %v555
    %v1873 = vadd.f32 %v1781, %v558
    %v1874 = vadd.f32 %v1782, %v560
    %v1875 = vadd.f32 %v1783, %v563
    %v1876 = vadd.f32 %v1784, %v565
    %v1877 = vadd.f32 %v1785, %v568
    %v1878 = vadd.f32 %v1786, %v570
    %v1879 = vadd.f32 %v1787, %v573
    %v1880 = vadd.f32 %v1788, %v575
    %v1881 = vadd.f32 %v1789, %v578
    %v1882 = vadd.f32 %v1790, %v580
    %v1883 = vadd.f32 %v1791, %v583
    %v1884 = vadd.f32 %v1792, %v585
    %v1885 = vadd.f32 %v1793, %v588
    %v1886 = vadd.f32 %v1794, %v590
    %v1887 = vadd.f32 %v1795, %v593
    %v1888 = vadd.f32 %v1796, %v595
    %v1889 = vadd.f32 %v1797, %v1820
    %v1890 = vadd.f32 %v1798, %v1822
    %v1891 = vsel %vm725, -3e+38, %v80
    %v1892 = vsel %vm725, -3e+38, %v134
    %v1899 = vrot.slane %v1799, 1
    %v1900 = vrot.slane %v1800, 1
    %v1901 = vsel %vm435, %v1899, %v1900
    %v1902 = vrot.slane %v1891, 1
    %v1903 = vsel %vm435, %v1900, %v1902
    %v1904 = vrot.slane %v1801, 1
    %v1905 = vrot.slane %v1802, 1
    %v1906 = vsel %vm435, %v1904, %v1905
    %v1907 = vrot.slane %v1892, 1
    %v1908 = vsel %vm435, %v1905, %v1907
    %v1913 = vmax.f32 %v1803, %v1901
    %v1914 = vmax.f32 %v1804, %v1903
    %v1915 = vmax.f32 %v1805, %v1906
    %v1916 = vmax.f32 %v1806, %v1908
    %v1917 = vrot.slane %v78, 2
    %v1918 = vrot.slane %v79, 2
    %v1919 = vsel %vm1116, %v1917, %v1918
    %v1920 = vrot.slane %v80, 2
    %v1921 = vsel %vm1116, %v1918, %v1920
    %v1922 = vrot.slane %v132, 2
    %v1923 = vrot.slane %v133, 2
    %v1924 = vsel %vm1116, %v1922, %v1923
    %v1925 = vrot.slane %v134, 2
    %v1926 = vsel %vm1116, %v1923, %v1925
    %v1931 = vadd.f32 %v1827, %v1124
    %v1932 = vadd.f32 %v1828, %v1126
    %v1933 = vadd.f32 %v1829, %v1129
    %v1934 = vadd.f32 %v1830, %v1131
    %v1935 = vadd.f32 %v1831, %v1134
    %v1936 = vadd.f32 %v1832, %v1136
    %v1937 = vadd.f32 %v1833, %v1139
    %v1938 = vadd.f32 %v1834, %v1141
    %v1939 = vadd.f32 %v1835, %v1144
    %v1940 = vadd.f32 %v1836, %v1146
    %v1941 = vadd.f32 %v1837, %v1149
    %v1942 = vadd.f32 %v1838, %v1151
    %v1943 = vadd.f32 %v1839, %v1154
    %v1944 = vadd.f32 %v1840, %v1156
    %v1945 = vadd.f32 %v1841, %v1159
    %v1946 = vadd.f32 %v1842, %v1161
    %v1947 = vadd.f32 %v1843, %v1164
    %v1948 = vadd.f32 %v1844, %v1166
    %v1949 = vadd.f32 %v1845, %v1169
    %v1950 = vadd.f32 %v1846, %v1171
    %v1951 = vadd.f32 %v1847, %v1174
    %v1952 = vadd.f32 %v1848, %v1176
    %v1953 = vadd.f32 %v1849, %v1179
    %v1954 = vadd.f32 %v1850, %v1181
    %v1955 = vadd.f32 %v1851, %v1184
    %v1956 = vadd.f32 %v1852, %v1186
    %v1957 = vadd.f32 %v1853, %v1189
    %v1958 = vadd.f32 %v1854, %v1191
    %v1959 = vadd.f32 %v1855, %v1194
    %v1960 = vadd.f32 %v1856, %v1196
    %v1961 = vadd.f32 %v1857, %v1919
    %v1962 = vadd.f32 %v1858, %v1921
    %v1963 = vadd.f32 %v1859, %v1204
    %v1964 = vadd.f32 %v1860, %v1206
    %v1965 = vadd.f32 %v1861, %v1209
    %v1966 = vadd.f32 %v1862, %v1211
    %v1967 = vadd.f32 %v1863, %v1214
    %v1968 = vadd.f32 %v1864, %v1216
    %v1969 = vadd.f32 %v1865, %v1219
    %v1970 = vadd.f32 %v1866, %v1221
    %v1971 = vadd.f32 %v1867, %v1224
    %v1972 = vadd.f32 %v1868, %v1226
    %v1973 = vadd.f32 %v1869, %v1229
    %v1974 = vadd.f32 %v1870, %v1231
    %v1975 = vadd.f32 %v1871, %v1234
    %v1976 = vadd.f32 %v1872, %v1236
    %v1977 = vadd.f32 %v1873, %v1239
    %v1978 = vadd.f32 %v1874, %v1241
    %v1979 = vadd.f32 %v1875, %v1244
    %v1980 = vadd.f32 %v1876, %v1246
    %v1981 = vadd.f32 %v1877, %v1249
    %v1982 = vadd.f32 %v1878, %v1251
    %v1983 = vadd.f32 %v1879, %v1254
    %v1984 = vadd.f32 %v1880, %v1256
    %v1985 = vadd.f32 %v1881, %v1259
    %v1986 = vadd.f32 %v1882, %v1261
    %v1987 = vadd.f32 %v1883, %v1264
    %v1988 = vadd.f32 %v1884, %v1266
    %v1989 = vadd.f32 %v1885, %v1269
    %v1990 = vadd.f32 %v1886, %v1271
    %v1991 = vadd.f32 %v1887, %v1274
    %v1992 = vadd.f32 %v1888, %v1276
    %v1993 = vadd.f32 %v1889, %v1924
    %v1994 = vadd.f32 %v1890, %v1926
    %v1995 = vrot.slane %v1799, 2
    %v1996 = vrot.slane %v1800, 2
    %v1997 = vsel %vm1116, %v1995, %v1996
    %v1998 = vrot.slane %v1891, 2
    %v1999 = vsel %vm1116, %v1996, %v1998
    %v2000 = vrot.slane %v1801, 2
    %v2001 = vrot.slane %v1802, 2
    %v2002 = vsel %vm1116, %v2000, %v2001
    %v2003 = vrot.slane %v1892, 2
    %v2004 = vsel %vm1116, %v2001, %v2003
    %v2009 = vmax.f32 %v1913, %v1997
    %v2010 = vmax.f32 %v1914, %v1999
    %v2011 = vmax.f32 %v1915, %v2002
    %v2012 = vmax.f32 %v1916, %v2004
    %v2013 = vmax.f32 %v1675, %v1617
    %v2014 = vmax.f32 %v1676, %v1618
    %v2015 = vmax.f32 %v1677, %v1619
    %v2016 = vmax.f32 %v1678, %v1620
    %v2017 = vmax.f32 %v1679, %v1621
    %v2018 = vmax.f32 %v1680, %v1622
    %v2019 = vmax.f32 %v1681, %v1623
    %v2020 = vmax.f32 %v1682, %v1624
    %v2021 = vmax.f32 %v1683, %v1625
    %v2022 = vmax.f32 %v1684, %v1626
    %v2023 = vmax.f32 %v1685, %v1627
    %v2024 = vmax.f32 %v1686, %v1628
    %v2025 = vmax.f32 %v1687, %v1629
    %v2026 = vmax.f32 %v1688, %v1630
    %v2027 = vmax.f32 %v1689, %v1631
    %v2028 = vmax.f32 %v1690, %v1632
    %v2029 = vmax.f32 %v1691, %v1633
    %v2030 = vmax.f32 %v1692, %v1634
    %v2031 = vmax.f32 %v1693, %v1635
    %v2032 = vmax.f32 %v1694, %v1636
    %v2033 = vmax.f32 %v1695, %v1637
    %v2034 = vmax.f32 %v1696, %v1638
    %v2035 = vmax.f32 %v1697, %v1639
    %v2036 = vmax.f32 %v1698, %v1640
    %v2037 = vmax.f32 %v1699, %v1641
    %v2038 = vmax.f32 %v1700, %v1642
    %v2039 = vmax.f32 %v1701, %v1643
    %v2040 = vmax.f32 %v1702, %v1644
    %v2041 = vmax.f32 %v1703, %v1647
    %v2042 = vmax.f32 %v1704, %v1648
    %v2043 = vmax.f32 %v1705, %v1649
    %v2044 = vmax.f32 %v1706, %v1650
    %v2045 = vmax.f32 %v1707, %v1651
    %v2046 = vmax.f32 %v1708, %v1652
    %v2047 = vmax.f32 %v1709, %v1653
    %v2048 = vmax.f32 %v1710, %v1654
    %v2049 = vmax.f32 %v1711, %v1655
    %v2050 = vmax.f32 %v1712, %v1656
    %v2051 = vmax.f32 %v1713, %v1657
    %v2052 = vmax.f32 %v1714, %v1658
    %v2053 = vmax.f32 %v1715, %v1659
    %v2054 = vmax.f32 %v1716, %v1660
    %v2055 = vmax.f32 %v1717, %v1661
    %v2056 = vmax.f32 %v1718, %v1662
    %v2057 = vmax.f32 %v1719, %v1663
    %v2058 = vmax.f32 %v1720, %v1664
    %v2059 = vmax.f32 %v1721, %v1665
    %v2060 = vmax.f32 %v1722, %v1666
    %v2061 = vmax.f32 %v1723, %v1667
    %v2062 = vmax.f32 %v1724, %v1668
    %v2063 = vmax.f32 %v1725, %v1669
    %v2064 = vmax.f32 %v1726, %v1670
    %v2065 = vmax.f32 %v1727, %v1671
    %v2066 = vmax.f32 %v1728, %v1672
    %v2067 = vmax.f32 %v1729, %v1673
    %v2068 = vmax.f32 %v1730, %v1674
    %v2069 = vmax.f32 %v1731, %v2009
    %v2070 = vmax.f32 %v1732, %v2010
    %v2071 = vmax.f32 %v1733, %v2011
    %v2072 = vmax.f32 %v1734, %v2012
    %v2073 = vadd.f32 %v1931, %v36
    %v2074 = vadd.f32 %v1932, %v37
    %v2075 = vadd.f32 %v1933, %v39
    %v2076 = vadd.f32 %v1934, %v40
    %v2077 = vadd.f32 %v1935, %v42
    %v2078 = vadd.f32 %v1936, %v43
    %v2079 = vadd.f32 %v1937, %v45
    %v2080 = vadd.f32 %v1938, %v46
    %v2081 = vadd.f32 %v1939, %v48
    %v2082 = vadd.f32 %v1940, %v49
    %v2083 = vadd.f32 %v1941, %v51
    %v2084 = vadd.f32 %v1942, %v52
    %v2085 = vadd.f32 %v1943, %v54
    %v2086 = vadd.f32 %v1944, %v55
    %v2087 = vadd.f32 %v1945, %v57
    %v2088 = vadd.f32 %v1946, %v58
    %v2089 = vadd.f32 %v1947, %v60
    %v2090 = vadd.f32 %v1948, %v61
    %v2091 = vadd.f32 %v1949, %v63
    %v2092 = vadd.f32 %v1950, %v64
    %v2093 = vadd.f32 %v1951, %v66
    %v2094 = vadd.f32 %v1952, %v67
    %v2095 = vadd.f32 %v1953, %v69
    %v2096 = vadd.f32 %v1954, %v70
    %v2097 = vadd.f32 %v1955, %v72
    %v2098 = vadd.f32 %v1956, %v73
    %v2099 = vadd.f32 %v1957, %v75
    %v2100 = vadd.f32 %v1958, %v76
    %v2101 = vadd.f32 %v1959, %v78
    %v2102 = vadd.f32 %v1960, %v79
    %v2103 = vadd.f32 %v1961, %v81
    %v2104 = vadd.f32 %v1962, %v82
    %v2105 = vadd.f32 %v1963, %v90
    %v2106 = vadd.f32 %v1964, %v91
    %v2107 = vadd.f32 %v1965, %v93
    %v2108 = vadd.f32 %v1966, %v94
    %v2109 = vadd.f32 %v1967, %v96
    %v2110 = vadd.f32 %v1968, %v97
    %v2111 = vadd.f32 %v1969, %v99
    %v2112 = vadd.f32 %v1970, %v100
    %v2113 = vadd.f32 %v1971, %v102
    %v2114 = vadd.f32 %v1972, %v103
    %v2115 = vadd.f32 %v1973, %v105
    %v2116 = vadd.f32 %v1974, %v106
    %v2117 = vadd.f32 %v1975, %v108
    %v2118 = vadd.f32 %v1976, %v109
    %v2119 = vadd.f32 %v1977, %v111
    %v2120 = vadd.f32 %v1978, %v112
    %v2121 = vadd.f32 %v1979, %v114
    %v2122 = vadd.f32 %v1980, %v115
    %v2123 = vadd.f32 %v1981, %v117
    %v2124 = vadd.f32 %v1982, %v118
    %v2125 = vadd.f32 %v1983, %v120
    %v2126 = vadd.f32 %v1984, %v121
    %v2127 = vadd.f32 %v1985, %v123
    %v2128 = vadd.f32 %v1986, %v124
    %v2129 = vadd.f32 %v1987, %v126
    %v2130 = vadd.f32 %v1988, %v127
    %v2131 = vadd.f32 %v1989, %v129
    %v2132 = vadd.f32 %v1990, %v130
    %v2133 = vadd.f32 %v1991, %v132
    %v2134 = vadd.f32 %v1992, %v133
    %v2135 = vadd.f32 %v1993, %v135
    %v2136 = vadd.f32 %v1994, %v136
    %v2143 = vrot.slane %v81, 1
    %v2144 = vrot.slane %v82, 1
    %v2145 = vsel %vm435, %v2143, %v2144
    %v2146 = vrot.slane %v83, 1
    %v2147 = vsel %vm435, %v2144, %v2146
    %v2148 = vrot.slane %v135, 1
    %v2149 = vrot.slane %v136, 1
    %v2150 = vsel %vm435, %v2148, %v2149
    %v2151 = vrot.slane %v137, 1
    %v2152 = vsel %vm435, %v2149, %v2151
    %v2157 = vadd.f32 %v2073, %v448
    %v2158 = vadd.f32 %v2074, %v450
    %v2159 = vadd.f32 %v2075, %v453
    %v2160 = vadd.f32 %v2076, %v455
    %v2161 = vadd.f32 %v2077, %v458
    %v2162 = vadd.f32 %v2078, %v460
    %v2163 = vadd.f32 %v2079, %v463
    %v2164 = vadd.f32 %v2080, %v465
    %v2165 = vadd.f32 %v2081, %v468
    %v2166 = vadd.f32 %v2082, %v470
    %v2167 = vadd.f32 %v2083, %v473
    %v2168 = vadd.f32 %v2084, %v475
    %v2169 = vadd.f32 %v2085, %v478
    %v2170 = vadd.f32 %v2086, %v480
    %v2171 = vadd.f32 %v2087, %v483
    %v2172 = vadd.f32 %v2088, %v485
    %v2173 = vadd.f32 %v2089, %v488
    %v2174 = vadd.f32 %v2090, %v490
    %v2175 = vadd.f32 %v2091, %v493
    %v2176 = vadd.f32 %v2092, %v495
    %v2177 = vadd.f32 %v2093, %v498
    %v2178 = vadd.f32 %v2094, %v500
    %v2179 = vadd.f32 %v2095, %v503
    %v2180 = vadd.f32 %v2096, %v505
    %v2181 = vadd.f32 %v2097, %v508
    %v2182 = vadd.f32 %v2098, %v510
    %v2183 = vadd.f32 %v2099, %v513
    %v2184 = vadd.f32 %v2100, %v515
    %v2185 = vadd.f32 %v2101, %v1815
    %v2186 = vadd.f32 %v2102, %v1817
    %v2187 = vadd.f32 %v2103, %v2145
    %v2188 = vadd.f32 %v2104, %v2147
    %v2189 = vadd.f32 %v2105, %v528
    %v2190 = vadd.f32 %v2106, %v530
    %v2191 = vadd.f32 %v2107, %v533
    %v2192 = vadd.f32 %v2108, %v535
    %v2193 = vadd.f32 %v2109, %v538
    %v2194 = vadd.f32 %v2110, %v540
    %v2195 = vadd.f32 %v2111, %v543
    %v2196 = vadd.f32 %v2112, %v545
    %v2197 = vadd.f32 %v2113, %v548
    %v2198 = vadd.f32 %v2114, %v550
    %v2199 = vadd.f32 %v2115, %v553
    %v2200 = vadd.f32 %v2116, %v555
    %v2201 = vadd.f32 %v2117, %v558
    %v2202 = vadd.f32 %v2118, %v560
    %v2203 = vadd.f32 %v2119, %v563
    %v2204 = vadd.f32 %v2120, %v565
    %v2205 = vadd.f32 %v2121, %v568
    %v2206 = vadd.f32 %v2122, %v570
    %v2207 = vadd.f32 %v2123, %v573
    %v2208 = vadd.f32 %v2124, %v575
    %v2209 = vadd.f32 %v2125, %v578
    %v2210 = vadd.f32 %v2126, %v580
    %v2211 = vadd.f32 %v2127, %v583
    %v2212 = vadd.f32 %v2128, %v585
    %v2213 = vadd.f32 %v2129, %v588
    %v2214 = vadd.f32 %v2130, %v590
    %v2215 = vadd.f32 %v2131, %v593
    %v2216 = vadd.f32 %v2132, %v595
    %v2217 = vadd.f32 %v2133, %v1820
    %v2218 = vadd.f32 %v2134, %v1822
    %v2219 = vadd.f32 %v2135, %v2150
    %v2220 = vadd.f32 %v2136, %v2152
    %v2221 = vrot.slane %v81, 2
    %v2222 = vrot.slane %v82, 2
    %v2223 = vsel %vm1116, %v2221, %v2222
    %v2224 = vrot.slane %v83, 2
    %v2225 = vsel %vm1116, %v2222, %v2224
    %v2226 = vrot.slane %v135, 2
    %v2227 = vrot.slane %v136, 2
    %v2228 = vsel %vm1116, %v2226, %v2227
    %v2229 = vrot.slane %v137, 2
    %v2230 = vsel %vm1116, %v2227, %v2229
    %v2235 = vadd.f32 %v2157, %v1129
    %v2236 = vadd.f32 %v2158, %v1131
    %v2237 = vadd.f32 %v2159, %v1134
    %v2238 = vadd.f32 %v2160, %v1136
    %v2239 = vadd.f32 %v2161, %v1139
    %v2240 = vadd.f32 %v2162, %v1141
    %v2241 = vadd.f32 %v2163, %v1144
    %v2242 = vadd.f32 %v2164, %v1146
    %v2243 = vadd.f32 %v2165, %v1149
    %v2244 = vadd.f32 %v2166, %v1151
    %v2245 = vadd.f32 %v2167, %v1154
    %v2246 = vadd.f32 %v2168, %v1156
    %v2247 = vadd.f32 %v2169, %v1159
    %v2248 = vadd.f32 %v2170, %v1161
    %v2249 = vadd.f32 %v2171, %v1164
    %v2250 = vadd.f32 %v2172, %v1166
    %v2251 = vadd.f32 %v2173, %v1169
    %v2252 = vadd.f32 %v2174, %v1171
    %v2253 = vadd.f32 %v2175, %v1174
    %v2254 = vadd.f32 %v2176, %v1176
    %v2255 = vadd.f32 %v2177, %v1179
    %v2256 = vadd.f32 %v2178, %v1181
    %v2257 = vadd.f32 %v2179, %v1184
    %v2258 = vadd.f32 %v2180, %v1186
    %v2259 = vadd.f32 %v2181, %v1189
    %v2260 = vadd.f32 %v2182, %v1191
    %v2261 = vadd.f32 %v2183, %v1194
    %v2262 = vadd.f32 %v2184, %v1196
    %v2263 = vadd.f32 %v2185, %v1919
    %v2264 = vadd.f32 %v2186, %v1921
    %v2265 = vadd.f32 %v2187, %v2223
    %v2266 = vadd.f32 %v2188, %v2225
    %v2267 = vadd.f32 %v2189, %v1209
    %v2268 = vadd.f32 %v2190, %v1211
    %v2269 = vadd.f32 %v2191, %v1214
    %v2270 = vadd.f32 %v2192, %v1216
    %v2271 = vadd.f32 %v2193, %v1219
    %v2272 = vadd.f32 %v2194, %v1221
    %v2273 = vadd.f32 %v2195, %v1224
    %v2274 = vadd.f32 %v2196, %v1226
    %v2275 = vadd.f32 %v2197, %v1229
    %v2276 = vadd.f32 %v2198, %v1231
    %v2277 = vadd.f32 %v2199, %v1234
    %v2278 = vadd.f32 %v2200, %v1236
    %v2279 = vadd.f32 %v2201, %v1239
    %v2280 = vadd.f32 %v2202, %v1241
    %v2281 = vadd.f32 %v2203, %v1244
    %v2282 = vadd.f32 %v2204, %v1246
    %v2283 = vadd.f32 %v2205, %v1249
    %v2284 = vadd.f32 %v2206, %v1251
    %v2285 = vadd.f32 %v2207, %v1254
    %v2286 = vadd.f32 %v2208, %v1256
    %v2287 = vadd.f32 %v2209, %v1259
    %v2288 = vadd.f32 %v2210, %v1261
    %v2289 = vadd.f32 %v2211, %v1264
    %v2290 = vadd.f32 %v2212, %v1266
    %v2291 = vadd.f32 %v2213, %v1269
    %v2292 = vadd.f32 %v2214, %v1271
    %v2293 = vadd.f32 %v2215, %v1274
    %v2294 = vadd.f32 %v2216, %v1276
    %v2295 = vadd.f32 %v2217, %v1924
    %v2296 = vadd.f32 %v2218, %v1926
    %v2297 = vadd.f32 %v2219, %v2228
    %v2298 = vadd.f32 %v2220, %v2230
    %v2299 = vmax.f32 %v2013, %v1619
    %v2300 = vmax.f32 %v2014, %v1620
    %v2301 = vmax.f32 %v2015, %v1621
    %v2302 = vmax.f32 %v2016, %v1622
    %v2303 = vmax.f32 %v2017, %v1623
    %v2304 = vmax.f32 %v2018, %v1624
    %v2305 = vmax.f32 %v2019, %v1625
    %v2306 = vmax.f32 %v2020, %v1626
    %v2307 = vmax.f32 %v2021, %v1627
    %v2308 = vmax.f32 %v2022, %v1628
    %v2309 = vmax.f32 %v2023, %v1629
    %v2310 = vmax.f32 %v2024, %v1630
    %v2311 = vmax.f32 %v2025, %v1631
    %v2312 = vmax.f32 %v2026, %v1632
    %v2313 = vmax.f32 %v2027, %v1633
    %v2314 = vmax.f32 %v2028, %v1634
    %v2315 = vmax.f32 %v2029, %v1635
    %v2316 = vmax.f32 %v2030, %v1636
    %v2317 = vmax.f32 %v2031, %v1637
    %v2318 = vmax.f32 %v2032, %v1638
    %v2319 = vmax.f32 %v2033, %v1639
    %v2320 = vmax.f32 %v2034, %v1640
    %v2321 = vmax.f32 %v2035, %v1641
    %v2322 = vmax.f32 %v2036, %v1642
    %v2323 = vmax.f32 %v2037, %v1643
    %v2324 = vmax.f32 %v2038, %v1644
    %v2325 = vmax.f32 %v2039, %v2009
    %v2326 = vmax.f32 %v2040, %v2010
    %v2327 = vmax.f32 %v2041, %v1649
    %v2328 = vmax.f32 %v2042, %v1650
    %v2329 = vmax.f32 %v2043, %v1651
    %v2330 = vmax.f32 %v2044, %v1652
    %v2331 = vmax.f32 %v2045, %v1653
    %v2332 = vmax.f32 %v2046, %v1654
    %v2333 = vmax.f32 %v2047, %v1655
    %v2334 = vmax.f32 %v2048, %v1656
    %v2335 = vmax.f32 %v2049, %v1657
    %v2336 = vmax.f32 %v2050, %v1658
    %v2337 = vmax.f32 %v2051, %v1659
    %v2338 = vmax.f32 %v2052, %v1660
    %v2339 = vmax.f32 %v2053, %v1661
    %v2340 = vmax.f32 %v2054, %v1662
    %v2341 = vmax.f32 %v2055, %v1663
    %v2342 = vmax.f32 %v2056, %v1664
    %v2343 = vmax.f32 %v2057, %v1665
    %v2344 = vmax.f32 %v2058, %v1666
    %v2345 = vmax.f32 %v2059, %v1667
    %v2346 = vmax.f32 %v2060, %v1668
    %v2347 = vmax.f32 %v2061, %v1669
    %v2348 = vmax.f32 %v2062, %v1670
    %v2349 = vmax.f32 %v2063, %v1671
    %v2350 = vmax.f32 %v2064, %v1672
    %v2351 = vmax.f32 %v2065, %v1673
    %v2352 = vmax.f32 %v2066, %v1674
    %v2353 = vmax.f32 %v2067, %v2011
    %v2354 = vmax.f32 %v2068, %v2012
    %v2355 = vsel %vm142, 1, 0
    %v2356 = vsel %vm143, 1, 0
    %v2357 = vcvt.s32.f32 %v2355
    %v2358 = vcvt.s32.f32 %v2356
    %v2359 = vsub.f32 3.0, %v2357
    %v2360 = vsub.f32 3.0, %v2358
    %vm2361 = vcmp.eq.s32.totalorder %v139, 15
    %vm2362 = vcmp.eq.s32.totalorder %v140, 15
    %v2363 = vsel %vm2361, 1, 0
    %v2364 = vsel %vm2362, 1, 0
    %v2365 = vcvt.s32.f32 %v2363
    %v2366 = vcvt.s32.f32 %v2364
    %v2367 = vsub.f32 %v2359, %v2365
    %v2368 = vsub.f32 %v2360, %v2366
    %v2369 = vrcp.pop %v2367
    %v2370 = vmul.f32 1.0, %v2369
    %v2371 = vrcp.pop %v2368
    %v2372 = vmul.f32 1.0, %v2371
    %v2373 = vmul.f32 %v2235, %v2370
    %v2374 = vmul.f32 %v2236, %v2372
    %v2375 = vmul.f32 %v2237, %v2370
    %v2376 = vmul.f32 %v2238, %v2372
    %v2377 = vmul.f32 %v2239, %v2370
    %v2378 = vmul.f32 %v2240, %v2372
    %v2379 = vmul.f32 %v2241, %v2370
    %v2380 = vmul.f32 %v2242, %v2372
    %v2381 = vmul.f32 %v2243, %v2370
    %v2382 = vmul.f32 %v2244, %v2372
    %v2383 = vmul.f32 %v2245, %v2370
    %v2384 = vmul.f32 %v2246, %v2372
    %v2385 = vmul.f32 %v2247, %v2370
    %v2386 = vmul.f32 %v2248, %v2372
    %v2387 = vmul.f32 %v2249, %v2370
    %v2388 = vmul.f32 %v2250, %v2372
    %v2389 = vmul.f32 %v2251, %v2370
    %v2390 = vmul.f32 %v2252, %v2372
    %v2391 = vmul.f32 %v2253, %v2370
    %v2392 = vmul.f32 %v2254, %v2372
    %v2393 = vmul.f32 %v2255, %v2370
    %v2394 = vmul.f32 %v2256, %v2372
    %v2395 = vmul.f32 %v2257, %v2370
    %v2396 = vmul.f32 %v2258, %v2372
    %v2397 = vmul.f32 %v2259, %v2370
    %v2398 = vmul.f32 %v2260, %v2372
    %v2399 = vmul.f32 %v2261, %v2370
    %v2400 = vmul.f32 %v2262, %v2372
    %v2401 = vmul.f32 %v2263, %v2370
    %v2402 = vmul.f32 %v2264, %v2372
    %v2403 = vmul.f32 %v2265, %v2370
    %v2404 = vmul.f32 %v2266, %v2372
    %v2405 = vmul.f32 %v2267, %v2370
    %v2406 = vmul.f32 %v2268, %v2372
    %v2407 = vmul.f32 %v2269, %v2370
    %v2408 = vmul.f32 %v2270, %v2372
    %v2409 = vmul.f32 %v2271, %v2370
    %v2410 = vmul.f32 %v2272, %v2372
    %v2411 = vmul.f32 %v2273, %v2370
    %v2412 = vmul.f32 %v2274, %v2372
    %v2413 = vmul.f32 %v2275, %v2370
    %v2414 = vmul.f32 %v2276, %v2372
    %v2415 = vmul.f32 %v2277, %v2370
    %v2416 = vmul.f32 %v2278, %v2372
    %v2417 = vmul.f32 %v2279, %v2370
    %v2418 = vmul.f32 %v2280, %v2372
    %v2419 = vmul.f32 %v2281, %v2370
    %v2420 = vmul.f32 %v2282, %v2372
    %v2421 = vmul.f32 %v2283, %v2370
    %v2422 = vmul.f32 %v2284, %v2372
    %v2423 = vmul.f32 %v2285, %v2370
    %v2424 = vmul.f32 %v2286, %v2372
    %v2425 = vmul.f32 %v2287, %v2370
    %v2426 = vmul.f32 %v2288, %v2372
    %v2427 = vmul.f32 %v2289, %v2370
    %v2428 = vmul.f32 %v2290, %v2372
    %v2429 = vmul.f32 %v2291, %v2370
    %v2430 = vmul.f32 %v2292, %v2372
    %v2431 = vmul.f32 %v2293, %v2370
    %v2432 = vmul.f32 %v2294, %v2372
    %v2433 = vmul.f32 %v2295, %v2370
    %v2434 = vmul.f32 %v2296, %v2372
    %v2435 = vmul.f32 %v2297, %v2370
    %v2436 = vmul.f32 %v2298, %v2372
    %v2437 = vmul.f32 %v2373, 0.5
    %v2438 = vmul.f32 %v2374, 0.5
    %v2439 = vmul.f32 %v2405, 0.5
    %v2440 = vmul.f32 %v2406, 0.5
    %v2441 = vmul.f32 %v2375, 0.33333334
    %v2442 = vmul.f32 %v2376, 0.33333334
    %v2443 = vmul.f32 %v2377, 0.33333334
    %v2444 = vmul.f32 %v2378, 0.33333334
    %v2445 = vmul.f32 %v2379, 0.33333334
    %v2446 = vmul.f32 %v2380, 0.33333334
    %v2447 = vmul.f32 %v2381, 0.33333334
    %v2448 = vmul.f32 %v2382, 0.33333334
    %v2449 = vmul.f32 %v2383, 0.33333334
    %v2450 = vmul.f32 %v2384, 0.33333334
    %v2451 = vmul.f32 %v2385, 0.33333334
    %v2452 = vmul.f32 %v2386, 0.33333334
    %v2453 = vmul.f32 %v2387, 0.33333334
    %v2454 = vmul.f32 %v2388, 0.33333334
    %v2455 = vmul.f32 %v2389, 0.33333334
    %v2456 = vmul.f32 %v2390, 0.33333334
    %v2457 = vmul.f32 %v2391, 0.33333334
    %v2458 = vmul.f32 %v2392, 0.33333334
    %v2459 = vmul.f32 %v2393, 0.33333334
    %v2460 = vmul.f32 %v2394, 0.33333334
    %v2461 = vmul.f32 %v2395, 0.33333334
    %v2462 = vmul.f32 %v2396, 0.33333334
    %v2463 = vmul.f32 %v2397, 0.33333334
    %v2464 = vmul.f32 %v2398, 0.33333334
    %v2465 = vmul.f32 %v2399, 0.33333334
    %v2466 = vmul.f32 %v2400, 0.33333334
    %v2467 = vmul.f32 %v2401, 0.33333334
    %v2468 = vmul.f32 %v2402, 0.33333334
    %v2469 = vmul.f32 %v2407, 0.33333334
    %v2470 = vmul.f32 %v2408, 0.33333334
    %v2471 = vmul.f32 %v2409, 0.33333334
    %v2472 = vmul.f32 %v2410, 0.33333334
    %v2473 = vmul.f32 %v2411, 0.33333334
    %v2474 = vmul.f32 %v2412, 0.33333334
    %v2475 = vmul.f32 %v2413, 0.33333334
    %v2476 = vmul.f32 %v2414, 0.33333334
    %v2477 = vmul.f32 %v2415, 0.33333334
    %v2478 = vmul.f32 %v2416, 0.33333334
    %v2479 = vmul.f32 %v2417, 0.33333334
    %v2480 = vmul.f32 %v2418, 0.33333334
    %v2481 = vmul.f32 %v2419, 0.33333334
    %v2482 = vmul.f32 %v2420, 0.33333334
    %v2483 = vmul.f32 %v2421, 0.33333334
    %v2484 = vmul.f32 %v2422, 0.33333334
    %v2485 = vmul.f32 %v2423, 0.33333334
    %v2486 = vmul.f32 %v2424, 0.33333334
    %v2487 = vmul.f32 %v2425, 0.33333334
    %v2488 = vmul.f32 %v2426, 0.33333334
    %v2489 = vmul.f32 %v2427, 0.33333334
    %v2490 = vmul.f32 %v2428, 0.33333334
    %v2491 = vmul.f32 %v2429, 0.33333334
    %v2492 = vmul.f32 %v2430, 0.33333334
    %v2493 = vmul.f32 %v2431, 0.33333334
    %v2494 = vmul.f32 %v2432, 0.33333334
    %v2495 = vmul.f32 %v2433, 0.33333334
    %v2496 = vmul.f32 %v2434, 0.33333334
    %v2497 = vmul.f32 %v2403, 0.5
    %v2498 = vmul.f32 %v2404, 0.5
    %v2499 = vmul.f32 %v2435, 0.5
    %v2500 = vmul.f32 %v2436, 0.5
    %v2501 = vld [vmem:[%s3] sm:$0xf]
    %v2502 = vld [vmem:[%s3 + $0x4] sm:$0xf]
    %v2503 = vld [vmem:[%s3 + $0x8] sm:$0xf]
    %v2504 = vld [vmem:[%s3 + $0xc] sm:$0xf]
    %v2505 = vld [vmem:[%s3 + $0x10] sm:$0xf]
    %v2506 = vld [vmem:[%s3 + $0x14] sm:$0xf]
    %v2507 = vld [vmem:[%s3 + $0x18] sm:$0xf]
    %v2508 = vld [vmem:[%s3 + $0x1c] sm:$0xf]
    %v2509 = vld [vmem:[%s3 + $0x20] sm:$0xf]
    %v2510 = vld [vmem:[%s3 + $0x24] sm:$0xf]
    %v2511 = vld [vmem:[%s3 + $0x28] sm:$0xf]
    %v2512 = vld [vmem:[%s3 + $0x2c] sm:$0xf]
    %v2513 = vld [vmem:[%s3 + $0x30] sm:$0xf]
    %v2514 = vld [vmem:[%s3 + $0x34] sm:$0xf]
    %v2515 = vld [vmem:[%s3 + $0x38] sm:$0xf]
    %v2516 = vld [vmem:[%s3 + $0x3c] sm:$0xf]
    %v2517 = vld [vmem:[%s3 + $0x40] sm:$0xf]
    %v2518 = vld [vmem:[%s3 + $0x44] sm:$0xf]
    %v2519 = vld [vmem:[%s3 + $0x48] sm:$0xf]
    %v2520 = vld [vmem:[%s3 + $0x4c] sm:$0xf]
    %v2521 = vld [vmem:[%s3 + $0x50] sm:$0xf]
    %v2522 = vld [vmem:[%s3 + $0x54] sm:$0xf]
    %v2523 = vld [vmem:[%s3 + $0x58] sm:$0xf]
    %v2524 = vld [vmem:[%s3 + $0x5c] sm:$0xf]
    %v2525 = vld [vmem:[%s3 + $0x60] sm:$0xf]
    %v2526 = vld [vmem:[%s3 + $0x64] sm:$0xf]
    %v2527 = vld [vmem:[%s3 + $0x68] sm:$0xf]
    %v2528 = vld [vmem:[%s3 + $0x6c] sm:$0xf]
    %v2529 = vld [vmem:[%s3 + $0x70] sm:$0xf]
    %v2530 = vld [vmem:[%s3 + $0x74] sm:$0xf]
    %v2531 = vld [vmem:[%s3 + $0x78] sm:$0xf]
    %v2532 = vld [vmem:[%s3 + $0x7c] sm:$0xf]
    %v2533 = vld [vmem:[%s3 + $0x80] sm:$0xf]
    %v2534 = vld [vmem:[%s3 + $0x84] sm:$0xf]
    %v2535 = vld [vmem:[%s3 + $0x88] sm:$0xf]
    %v2536 = vld [vmem:[%s3 + $0x8c] sm:$0xf]
    %v2537 = vld [vmem:[%s3 + $0x90] sm:$0xf]
    %v2538 = vld [vmem:[%s3 + $0x94] sm:$0xf]
    %v2539 = vld [vmem:[%s3 + $0x98] sm:$0xf]
    %v2540 = vld [vmem:[%s3 + $0x9c] sm:$0xf]
    %v2541 = vld [vmem:[%s3 + $0xa0] sm:$0xf]
    %v2542 = vld [vmem:[%s3 + $0xa4] sm:$0xf]
    %v2543 = vld [vmem:[%s3 + $0xa8] sm:$0xf]
    %v2544 = vld [vmem:[%s3 + $0xac] sm:$0xf]
    %v2545 = vld [vmem:[%s3 + $0xb0] sm:$0xf]
    %v2546 = vld [vmem:[%s3 + $0xb4] sm:$0xf]
    %v2547 = vld [vmem:[%s3 + $0xb8] sm:$0xf]
    %v2548 = vld [vmem:[%s3 + $0xbc] sm:$0xf]
    %v2549 = vld [vmem:[%s3 + $0xc0] sm:$0xf]
    %v2550 = vld [vmem:[%s3 + $0xc4] sm:$0xf]
    %v2551 = vld [vmem:[%s3 + $0xc8] sm:$0xf]
    %v2552 = vld [vmem:[%s3 + $0xcc] sm:$0xf]
    %v2553 = vld [vmem:[%s3 + $0xd0] sm:$0xf]
    %v2554 = vld [vmem:[%s3 + $0xd4] sm:$0xf]
    %v2555 = vld [vmem:[%s3 + $0xd8] sm:$0xf]
    %v2556 = vld [vmem:[%s3 + $0xdc] sm:$0xf]
    %v2557 = vld [vmem:[%s3 + $0xe0] sm:$0xf]
    %v2558 = vld [vmem:[%s3 + $0xe4] sm:$0xf]
    %v2559 = vld [vmem:[%s3 + $0xe8] sm:$0xf]
    %v2560 = vld [vmem:[%s3 + $0xec] sm:$0xf]
    %v2561 = vld [vmem:[%s3 + $0xf0] sm:$0xf]
    %v2562 = vld [vmem:[%s3 + $0xf4] sm:$0xf]
    %v2563 = vld [vmem:[%s3 + $0xf8] sm:$0xf]
    %v2564 = vld [vmem:[%s3 + $0xfc] sm:$0xf]
    %v2565 = vunpack.c.l.bf16 %v2501
    %v2566 = vunpack.c.l.bf16 %v2502
    %v2567 = vunpack.c.l.bf16 %v2503
    %v2568 = vunpack.c.l.bf16 %v2504
    %v2569 = vunpack.c.l.bf16 %v2505
    %v2570 = vunpack.c.l.bf16 %v2506
    %v2571 = vunpack.c.l.bf16 %v2507
    %v2572 = vunpack.c.l.bf16 %v2508
    %v2573 = vunpack.c.l.bf16 %v2509
    %v2574 = vunpack.c.l.bf16 %v2510
    %v2575 = vunpack.c.l.bf16 %v2511
    %v2576 = vunpack.c.l.bf16 %v2512
    %v2577 = vunpack.c.l.bf16 %v2513
    %v2578 = vunpack.c.l.bf16 %v2514
    %v2579 = vunpack.c.l.bf16 %v2515
    %v2580 = vunpack.c.l.bf16 %v2516
    %v2581 = vunpack.c.l.bf16 %v2517
    %v2582 = vunpack.c.l.bf16 %v2518
    %v2583 = vunpack.c.l.bf16 %v2519
    %v2584 = vunpack.c.l.bf16 %v2520
    %v2585 = vunpack.c.l.bf16 %v2521
    %v2586 = vunpack.c.l.bf16 %v2522
    %v2587 = vunpack.c.l.bf16 %v2523
    %v2588 = vunpack.c.l.bf16 %v2524
    %v2589 = vunpack.c.l.bf16 %v2525
    %v2590 = vunpack.c.l.bf16 %v2526
    %v2591 = vunpack.c.l.bf16 %v2527
    %v2592 = vunpack.c.l.bf16 %v2528
    %v2593 = vunpack.c.l.bf16 %v2529
    %v2594 = vunpack.c.l.bf16 %v2530
    %v2595 = vunpack.c.l.bf16 %v2531
    %v2596 = vunpack.c.l.bf16 %v2532
    %v2597 = vunpack.c.l.bf16 %v2533
    %v2598 = vunpack.c.l.bf16 %v2534
    %v2599 = vunpack.c.l.bf16 %v2535
    %v2600 = vunpack.c.l.bf16 %v2536
    %v2601 = vunpack.c.l.bf16 %v2537
    %v2602 = vunpack.c.l.bf16 %v2538
    %v2603 = vunpack.c.l.bf16 %v2539
    %v2604 = vunpack.c.l.bf16 %v2540
    %v2605 = vunpack.c.l.bf16 %v2541
    %v2606 = vunpack.c.l.bf16 %v2542
    %v2607 = vunpack.c.l.bf16 %v2543
    %v2608 = vunpack.c.l.bf16 %v2544
    %v2609 = vunpack.c.l.bf16 %v2545
    %v2610 = vunpack.c.l.bf16 %v2546
    %v2611 = vunpack.c.l.bf16 %v2547
    %v2612 = vunpack.c.l.bf16 %v2548
    %v2613 = vunpack.c.l.bf16 %v2549
    %v2614 = vunpack.c.l.bf16 %v2550
    %v2615 = vunpack.c.l.bf16 %v2551
    %v2616 = vunpack.c.l.bf16 %v2552
    %v2617 = vunpack.c.l.bf16 %v2553
    %v2618 = vunpack.c.l.bf16 %v2554
    %v2619 = vunpack.c.l.bf16 %v2555
    %v2620 = vunpack.c.l.bf16 %v2556
    %v2621 = vunpack.c.l.bf16 %v2557
    %v2622 = vunpack.c.l.bf16 %v2558
    %v2623 = vunpack.c.l.bf16 %v2559
    %v2624 = vunpack.c.l.bf16 %v2560
    %v2625 = vunpack.c.l.bf16 %v2561
    %v2626 = vunpack.c.l.bf16 %v2562
    %v2627 = vunpack.c.l.bf16 %v2563
    %v2628 = vunpack.c.l.bf16 %v2564
    %v2629 = vld [vmem:[%s1] sm:$0x3f]
    %s2630 = sld [smem:[#allocation2]]
    %v2631 = vstv %s2630
    %v2632 = vmul.f32 %v2631, %v33
    %v2633 = vmul.f32 %v2631, %v34
    %v2634 = vmul.f32 %v2631, %v35
    %v2635 = vmul.f32 %v2631, %v36
    %v2636 = vmul.f32 %v2631, %v37
    %v2637 = vmul.f32 %v2631, %v38
    %v2638 = vmul.f32 %v2631, %v39
    %v2639 = vmul.f32 %v2631, %v40
    %v2640 = vmul.f32 %v2631, %v41
    %v2641 = vmul.f32 %v2631, %v42
    %v2642 = vmul.f32 %v2631, %v43
    %v2643 = vmul.f32 %v2631, %v44
    %v2644 = vmul.f32 %v2631, %v45
    %v2645 = vmul.f32 %v2631, %v46
    %v2646 = vmul.f32 %v2631, %v47
    %v2647 = vmul.f32 %v2631, %v48
    %v2648 = vmul.f32 %v2631, %v49
    %v2649 = vmul.f32 %v2631, %v50
    %v2650 = vmul.f32 %v2631, %v51
    %v2651 = vmul.f32 %v2631, %v52
    %v2652 = vmul.f32 %v2631, %v53
    %v2653 = vmul.f32 %v2631, %v54
    %v2654 = vmul.f32 %v2631, %v55
    %v2655 = vmul.f32 %v2631, %v56
    %v2656 = vmul.f32 %v2631, %v57
    %v2657 = vmul.f32 %v2631, %v58
    %v2658 = vmul.f32 %v2631, %v59
    %v2659 = vmul.f32 %v2631, %v60
    %v2660 = vmul.f32 %v2631, %v61
    %v2661 = vmul.f32 %v2631, %v62
    %v2662 = vmul.f32 %v2631, %v63
    %v2663 = vmul.f32 %v2631, %v64
    %v2664 = vmul.f32 %v2631, %v65
    %v2665 = vmul.f32 %v2631, %v66
    %v2666 = vmul.f32 %v2631, %v67
    %v2667 = vmul.f32 %v2631, %v68
    %v2668 = vmul.f32 %v2631, %v69
    %v2669 = vmul.f32 %v2631, %v70
    %v2670 = vmul.f32 %v2631, %v71
    %v2671 = vmul.f32 %v2631, %v72
    %v2672 = vmul.f32 %v2631, %v73
    %v2673 = vmul.f32 %v2631, %v74
    %v2674 = vmul.f32 %v2631, %v75
    %v2675 = vmul.f32 %v2631, %v76
    %v2676 = vmul.f32 %v2631, %v77
    %v2677 = vmul.f32 %v2631, %v78
    %v2678 = vmul.f32 %v2631, %v79
    %v2679 = vmul.f32 %v2631, %v80
    %v2680 = vmul.f32 %v2631, %v87
    %v2681 = vmul.f32 %v2631, %v88
    %v2682 = vmul.f32 %v2631, %v89
    %v2683 = vmul.f32 %v2631, %v90
    %v2684 = vmul.f32 %v2631, %v91
    %v2685 = vmul.f32 %v2631, %v92
    %v2686 = vmul.f32 %v2631, %v93
    %v2687 = vmul.f32 %v2631, %v94
    %v2688 = vmul.f32 %v2631, %v95
    %v2689 = vmul.f32 %v2631, %v96
    %v2690 = vmul.f32 %v2631, %v97
    %v2691 = vmul.f32 %v2631, %v98
    %v2692 = vmul.f32 %v2631, %v99
    %v2693 = vmul.f32 %v2631, %v100
    %v2694 = vmul.f32 %v2631, %v101
    %v2695 = vmul.f32 %v2631, %v102
    %v2696 = vmul.f32 %v2631, %v103
    %v2697 = vmul.f32 %v2631, %v104
    %v2698 = vmul.f32 %v2631, %v105
    %v2699 = vmul.f32 %v2631, %v106
    %v2700 = vmul.f32 %v2631, %v107
    %v2701 = vmul.f32 %v2631, %v108
    %v2702 = vmul.f32 %v2631, %v109
    %v2703 = vmul.f32 %v2631, %v110
    %v2704 = vmul.f32 %v2631, %v111
    %v2705 = vmul.f32 %v2631, %v112
    %v2706 = vmul.f32 %v2631, %v113
    %v2707 = vmul.f32 %v2631, %v114
    %v2708 = vmul.f32 %v2631, %v115
    %v2709 = vmul.f32 %v2631, %v116
    %v2710 = vmul.f32 %v2631, %v117
    %v2711 = vmul.f32 %v2631, %v118
    %v2712 = vmul.f32 %v2631, %v119
    %v2713 = vmul.f32 %v2631, %v120
    %v2714 = vmul.f32 %v2631, %v121
    %v2715 = vmul.f32 %v2631, %v122
    %v2716 = vmul.f32 %v2631, %v123
    %v2717 = vmul.f32 %v2631, %v124
    %v2718 = vmul.f32 %v2631, %v125
    %v2719 = vmul.f32 %v2631, %v126
    %v2720 = vmul.f32 %v2631, %v127
    %v2721 = vmul.f32 %v2631, %v128
    %v2722 = vmul.f32 %v2631, %v129
    %v2723 = vmul.f32 %v2631, %v130
    %v2724 = vmul.f32 %v2631, %v131
    %v2725 = vmul.f32 %v2631, %v132
    %v2726 = vmul.f32 %v2631, %v133
    %v2727 = vmul.f32 %v2631, %v134
    %s2728 = sld [smem:[#allocation2 + $0x1]]
    %v2729 = vmul.f32 %v2629, 0.001953125
    %v2730 = vmul.f32 %v2729, %v2729
    %v2732 = vrot.slane %v2730, 7
    %v2734 = vsub.f32 %v2729, %v2732
    %v2735 = vlaneseq
    %v2736 = vshrl.u32 %v2735, 7
    %v2737 = vsub.s32 0, %v2736
    %v2738 = vrot.slane %v2729, %v2737
    %v2739 = vsub.f32 %v2013, %v2738
    %v2740 = vsub.f32 %v2014, %v2738
    %v2741 = vsub.f32 %v2299, %v2738
    %v2742 = vsub.f32 %v2300, %v2738
    %v2743 = vsub.f32 %v2301, %v2738
    %v2744 = vsub.f32 %v2302, %v2738
    %v2745 = vsub.f32 %v2303, %v2738
    %v2746 = vsub.f32 %v2304, %v2738
    %v2747 = vsub.f32 %v2305, %v2738
    %v2748 = vsub.f32 %v2306, %v2738
    %v2749 = vsub.f32 %v2307, %v2738
    %v2750 = vsub.f32 %v2308, %v2738
    %v2751 = vsub.f32 %v2309, %v2738
    %v2752 = vsub.f32 %v2310, %v2738
    %v2753 = vsub.f32 %v2311, %v2738
    %v2754 = vsub.f32 %v2312, %v2738
    %v2755 = vsub.f32 %v2313, %v2738
    %v2756 = vsub.f32 %v2314, %v2738
    %v2757 = vsub.f32 %v2315, %v2738
    %v2758 = vsub.f32 %v2316, %v2738
    %v2759 = vsub.f32 %v2317, %v2738
    %v2760 = vsub.f32 %v2318, %v2738
    %v2761 = vsub.f32 %v2319, %v2738
    %v2762 = vsub.f32 %v2320, %v2738
    %v2763 = vsub.f32 %v2321, %v2738
    %v2764 = vsub.f32 %v2322, %v2738
    %v2765 = vsub.f32 %v2323, %v2738
    %v2766 = vsub.f32 %v2324, %v2738
    %v2767 = vsub.f32 %v2325, %v2738
    %v2768 = vsub.f32 %v2326, %v2738
    %v2769 = vsub.f32 %v2069, %v2738
    %v2770 = vsub.f32 %v2070, %v2738
    %v2771 = vsub.f32 %v2041, %v2738
    %v2772 = vsub.f32 %v2042, %v2738
    %v2773 = vsub.f32 %v2327, %v2738
    %v2774 = vsub.f32 %v2328, %v2738
    %v2775 = vsub.f32 %v2329, %v2738
    %v2776 = vsub.f32 %v2330, %v2738
    %v2777 = vsub.f32 %v2331, %v2738
    %v2778 = vsub.f32 %v2332, %v2738
    %v2779 = vsub.f32 %v2333, %v2738
    %v2780 = vsub.f32 %v2334, %v2738
    %v2781 = vsub.f32 %v2335, %v2738
    %v2782 = vsub.f32 %v2336, %v2738
    %v2783 = vsub.f32 %v2337, %v2738
    %v2784 = vsub.f32 %v2338, %v2738
    %v2785 = vsub.f32 %v2339, %v2738
    %v2786 = vsub.f32 %v2340, %v2738
    %v2787 = vsub.f32 %v2341, %v2738
    %v2788 = vsub.f32 %v2342, %v2738
    %v2789 = vsub.f32 %v2343, %v2738
    %v2790 = vsub.f32 %v2344, %v2738
    %v2791 = vsub.f32 %v2345, %v2738
    %v2792 = vsub.f32 %v2346, %v2738
    %v2793 = vsub.f32 %v2347, %v2738
    %v2794 = vsub.f32 %v2348, %v2738
    %v2795 = vsub.f32 %v2349, %v2738
    %v2796 = vsub.f32 %v2350, %v2738
    %v2797 = vsub.f32 %v2351, %v2738
    %v2798 = vsub.f32 %v2352, %v2738
    %v2799 = vsub.f32 %v2353, %v2738
    %v2800 = vsub.f32 %v2354, %v2738
    %v2801 = vsub.f32 %v2071, %v2738
    %v2802 = vsub.f32 %v2072, %v2738
    %v2803 = vadd.f32 %v2734, 1e-05
    %v2804 = vrsqrt.pop %v2803
    %v2805 = vlaneseq
    %v2806 = vshrl.u32 %v2805, 7
    %v2807 = vsub.s32 1, %v2806
    %v2808 = vrot.slane %v2804, %v2807
    %v2809 = vmul.f32 %v2739, %v2808
    %v2810 = vmul.f32 %v2740, %v2808
    %v2811 = vmul.f32 %v2741, %v2808
    %v2812 = vmul.f32 %v2742, %v2808
    %v2813 = vmul.f32 %v2743, %v2808
    %v2814 = vmul.f32 %v2744, %v2808
    %v2815 = vmul.f32 %v2745, %v2808
    %v2816 = vmul.f32 %v2746, %v2808
    %v2817 = vmul.f32 %v2747, %v2808
    %v2818 = vmul.f32 %v2748, %v2808
    %v2819 = vmul.f32 %v2749, %v2808
    %v2820 = vmul.f32 %v2750, %v2808
    %v2821 = vmul.f32 %v2751, %v2808
    %v2822 = vmul.f32 %v2752, %v2808
    %v2823 = vmul.f32 %v2753, %v2808
    %v2824 = vmul.f32 %v2754, %v2808
    %v2825 = vmul.f32 %v2755, %v2808
    %v2826 = vmul.f32 %v2756, %v2808
    %v2827 = vmul.f32 %v2757, %v2808
    %v2828 = vmul.f32 %v2758, %v2808
    %v2829 = vmul.f32 %v2759, %v2808
    %v2830 = vmul.f32 %v2760, %v2808
    %v2831 = vmul.f32 %v2761, %v2808
    %v2832 = vmul.f32 %v2762, %v2808
    %v2833 = vmul.f32 %v2763, %v2808
    %v2834 = vmul.f32 %v2764, %v2808
    %v2835 = vmul.f32 %v2765, %v2808
    %v2836 = vmul.f32 %v2766, %v2808
    %v2837 = vmul.f32 %v2767, %v2808
    %v2838 = vmul.f32 %v2768, %v2808
    %v2839 = vmul.f32 %v2769, %v2808
    %v2840 = vmul.f32 %v2770, %v2808
    %v2841 = vmul.f32 %v2771, %v2808
    %v2842 = vmul.f32 %v2772, %v2808
    %v2843 = vmul.f32 %v2773, %v2808
    %v2844 = vmul.f32 %v2774, %v2808
    %v2845 = vmul.f32 %v2775, %v2808
    %v2846 = vmul.f32 %v2776, %v2808
    %v2847 = vmul.f32 %v2777, %v2808
    %v2848 = vmul.f32 %v2778, %v2808
    %v2849 = vmul.f32 %v2779, %v2808
    %v2850 = vmul.f32 %v2780, %v2808
    %v2851 = vmul.f32 %v2781, %v2808
    %v2852 = vmul.f32 %v2782, %v2808
    %v2853 = vmul.f32 %v2783, %v2808
    %v2854 = vmul.f32 %v2784, %v2808
    %v2855 = vmul.f32 %v2785, %v2808
    %v2856 = vmul.f32 %v2786, %v2808
    %v2857 = vmul.f32 %v2787, %v2808
    %v2858 = vmul.f32 %v2788, %v2808
    %v2859 = vmul.f32 %v2789, %v2808
    %v2860 = vmul.f32 %v2790, %v2808
    %v2861 = vmul.f32 %v2791, %v2808
    %v2862 = vmul.f32 %v2792, %v2808
    %v2863 = vmul.f32 %v2793, %v2808
    %v2864 = vmul.f32 %v2794, %v2808
    %v2865 = vmul.f32 %v2795, %v2808
    %v2866 = vmul.f32 %v2796, %v2808
    %v2867 = vmul.f32 %v2797, %v2808
    %v2868 = vmul.f32 %v2798, %v2808
    %v2869 = vmul.f32 %v2799, %v2808
    %v2870 = vmul.f32 %v2800, %v2808
    %v2871 = vmul.f32 %v2801, %v2808
    %v2872 = vmul.f32 %v2802, %v2808
    %v2873 = vstv %s2728
    %v2874 = vmul.f32 %v2873, %v2809
    %v2875 = vmul.f32 %v2873, %v2810
    %v2876 = vmul.f32 %v2873, %v2811
    %v2877 = vmul.f32 %v2873, %v2812
    %v2878 = vmul.f32 %v2873, %v2813
    %v2879 = vmul.f32 %v2873, %v2814
    %v2880 = vmul.f32 %v2873, %v2815
    %v2881 = vmul.f32 %v2873, %v2816
    %v2882 = vmul.f32 %v2873, %v2817
    %v2883 = vmul.f32 %v2873, %v2818
    %v2884 = vmul.f32 %v2873, %v2819
    %v2885 = vmul.f32 %v2873, %v2820
    %v2886 = vmul.f32 %v2873, %v2821
    %v2887 = vmul.f32 %v2873, %v2822
    %v2888 = vmul.f32 %v2873, %v2823
    %v2889 = vmul.f32 %v2873, %v2824
    %v2890 = vmul.f32 %v2873, %v2825
    %v2891 = vmul.f32 %v2873, %v2826
    %v2892 = vmul.f32 %v2873, %v2827
    %v2893 = vmul.f32 %v2873, %v2828
    %v2894 = vmul.f32 %v2873, %v2829
    %v2895 = vmul.f32 %v2873, %v2830
    %v2896 = vmul.f32 %v2873, %v2831
    %v2897 = vmul.f32 %v2873, %v2832
    %v2898 = vmul.f32 %v2873, %v2833
    %v2899 = vmul.f32 %v2873, %v2834
    %v2900 = vmul.f32 %v2873, %v2835
    %v2901 = vmul.f32 %v2873, %v2836
    %v2902 = vmul.f32 %v2873, %v2837
    %v2903 = vmul.f32 %v2873, %v2838
    %v2904 = vmul.f32 %v2873, %v2839
    %v2905 = vmul.f32 %v2873, %v2840
    %v2906 = vmul.f32 %v2873, %v2841
    %v2907 = vmul.f32 %v2873, %v2842
    %v2908 = vmul.f32 %v2873, %v2843
    %v2909 = vmul.f32 %v2873, %v2844
    %v2910 = vmul.f32 %v2873, %v2845
    %v2911 = vmul.f32 %v2873, %v2846
    %v2912 = vmul.f32 %v2873, %v2847
    %v2913 = vmul.f32 %v2873, %v2848
    %v2914 = vmul.f32 %v2873, %v2849
    %v2915 = vmul.f32 %v2873, %v2850
    %v2916 = vmul.f32 %v2873, %v2851
    %v2917 = vmul.f32 %v2873, %v2852
    %v2918 = vmul.f32 %v2873, %v2853
    %v2919 = vmul.f32 %v2873, %v2854
    %v2920 = vmul.f32 %v2873, %v2855
    %v2921 = vmul.f32 %v2873, %v2856
    %v2922 = vmul.f32 %v2873, %v2857
    %v2923 = vmul.f32 %v2873, %v2858
    %v2924 = vmul.f32 %v2873, %v2859
    %v2925 = vmul.f32 %v2873, %v2860
    %v2926 = vmul.f32 %v2873, %v2861
    %v2927 = vmul.f32 %v2873, %v2862
    %v2928 = vmul.f32 %v2873, %v2863
    %v2929 = vmul.f32 %v2873, %v2864
    %v2930 = vmul.f32 %v2873, %v2865
    %v2931 = vmul.f32 %v2873, %v2866
    %v2932 = vmul.f32 %v2873, %v2867
    %v2933 = vmul.f32 %v2873, %v2868
    %v2934 = vmul.f32 %v2873, %v2869
    %v2935 = vmul.f32 %v2873, %v2870
    %v2936 = vmul.f32 %v2873, %v2871
    %v2937 = vmul.f32 %v2873, %v2872
    %vm3002 = vcmask 1040384
    %v3003 = vrot.slane %v2874, 7
    %v3004 = vrot.slane %v2875, 7
    %v3005 = vsel %vm3002, %v3003, %v3004
    %v3006 = vrot.slane %v2876, 7
    %v3007 = vrot.slane %v2877, 7
    %v3008 = vsel %vm3002, %v3006, %v3007
    %v3009 = vrot.slane %v2878, 7
    %v3010 = vrot.slane %v2879, 7
    %v3011 = vsel %vm3002, %v3009, %v3010
    %v3012 = vrot.slane %v2880, 7
    %v3013 = vrot.slane %v2881, 7
    %v3014 = vsel %vm3002, %v3012, %v3013
    %v3015 = vrot.slane %v2882, 7
    %v3016 = vrot.slane %v2883, 7
    %v3017 = vsel %vm3002, %v3015, %v3016
    %v3018 = vrot.slane %v2884, 7
    %v3019 = vrot.slane %v2885, 7
    %v3020 = vsel %vm3002, %v3018, %v3019
    %v3021 = vrot.slane %v2886, 7
    %v3022 = vrot.slane %v2887, 7
    %v3023 = vsel %vm3002, %v3021, %v3022
    %v3024 = vrot.slane %v2888, 7
    %v3025 = vrot.slane %v2889, 7
    %v3026 = vsel %vm3002, %v3024, %v3025
    %v3027 = vrot.slane %v2890, 7
    %v3028 = vrot.slane %v2891, 7
    %v3029 = vsel %vm3002, %v3027, %v3028
    %v3030 = vrot.slane %v2892, 7
    %v3031 = vrot.slane %v2893, 7
    %v3032 = vsel %vm3002, %v3030, %v3031
    %v3033 = vrot.slane %v2894, 7
    %v3034 = vrot.slane %v2895, 7
    %v3035 = vsel %vm3002, %v3033, %v3034
    %v3036 = vrot.slane %v2896, 7
    %v3037 = vrot.slane %v2897, 7
    %v3038 = vsel %vm3002, %v3036, %v3037
    %v3039 = vrot.slane %v2898, 7
    %v3040 = vrot.slane %v2899, 7
    %v3041 = vsel %vm3002, %v3039, %v3040
    %v3042 = vrot.slane %v2900, 7
    %v3043 = vrot.slane %v2901, 7
    %v3044 = vsel %vm3002, %v3042, %v3043
    %v3045 = vrot.slane %v2902, 7
    %v3046 = vrot.slane %v2903, 7
    %v3047 = vsel %vm3002, %v3045, %v3046
    %v3048 = vrot.slane %v2904, 7
    %v3049 = vrot.slane %v2905, 7
    %v3050 = vsel %vm3002, %v3048, %v3049
    %v3051 = vrot.slane %v2906, 7
    %v3052 = vrot.slane %v2907, 7
    %v3053 = vsel %vm3002, %v3051, %v3052
    %v3054 = vrot.slane %v2908, 7
    %v3055 = vrot.slane %v2909, 7
    %v3056 = vsel %vm3002, %v3054, %v3055
    %v3057 = vrot.slane %v2910, 7
    %v3058 = vrot.slane %v2911, 7
    %v3059 = vsel %vm3002, %v3057, %v3058
    %v3060 = vrot.slane %v2912, 7
    %v3061 = vrot.slane %v2913, 7
    %v3062 = vsel %vm3002, %v3060, %v3061
    %v3063 = vrot.slane %v2914, 7
    %v3064 = vrot.slane %v2915, 7
    %v3065 = vsel %vm3002, %v3063, %v3064
    %v3066 = vrot.slane %v2916, 7
    %v3067 = vrot.slane %v2917, 7
    %v3068 = vsel %vm3002, %v3066, %v3067
    %v3069 = vrot.slane %v2918, 7
    %v3070 = vrot.slane %v2919, 7
    %v3071 = vsel %vm3002, %v3069, %v3070
    %v3072 = vrot.slane %v2920, 7
    %v3073 = vrot.slane %v2921, 7
    %v3074 = vsel %vm3002, %v3072, %v3073
    %v3075 = vrot.slane %v2922, 7
    %v3076 = vrot.slane %v2923, 7
    %v3077 = vsel %vm3002, %v3075, %v3076
    %v3078 = vrot.slane %v2924, 7
    %v3079 = vrot.slane %v2925, 7
    %v3080 = vsel %vm3002, %v3078, %v3079
    %v3081 = vrot.slane %v2926, 7
    %v3082 = vrot.slane %v2927, 7
    %v3083 = vsel %vm3002, %v3081, %v3082
    %v3084 = vrot.slane %v2928, 7
    %v3085 = vrot.slane %v2929, 7
    %v3086 = vsel %vm3002, %v3084, %v3085
    %v3087 = vrot.slane %v2930, 7
    %v3088 = vrot.slane %v2931, 7
    %v3089 = vsel %vm3002, %v3087, %v3088
    %v3090 = vrot.slane %v2932, 7
    %v3091 = vrot.slane %v2933, 7
    %v3092 = vsel %vm3002, %v3090, %v3091
    %v3093 = vrot.slane %v2934, 7
    %v3094 = vrot.slane %v2935, 7
    %v3095 = vsel %vm3002, %v3093, %v3094
    %v3096 = vrot.slane %v2936, 7
    %v3097 = vrot.slane %v2937, 7
    %v3098 = vsel %vm3002, %v3096, %v3097
    %v3195 = vadd.f32 %v2632, %v3003
    %v3196 = vadd.f32 %v2633, %v3005
    %v3197 = vadd.f32 %v2634, %v3004
    %v3198 = vadd.f32 %v2635, %v3006
    %v3199 = vadd.f32 %v2636, %v3008
    %v3200 = vadd.f32 %v2637, %v3007
    %v3201 = vadd.f32 %v2638, %v3009
    %v3202 = vadd.f32 %v2639, %v3011
    %v3203 = vadd.f32 %v2640, %v3010
    %v3204 = vadd.f32 %v2641, %v3012
    %v3205 = vadd.f32 %v2642, %v3014
    %v3206 = vadd.f32 %v2643, %v3013
    %v3207 = vadd.f32 %v2644, %v3015
    %v3208 = vadd.f32 %v2645, %v3017
    %v3209 = vadd.f32 %v2646, %v3016
    %v3210 = vadd.f32 %v2647, %v3018
    %v3211 = vadd.f32 %v2648, %v3020
    %v3212 = vadd.f32 %v2649, %v3019
    %v3213 = vadd.f32 %v2650, %v3021
    %v3214 = vadd.f32 %v2651, %v3023
    %v3215 = vadd.f32 %v2652, %v3022
    %v3216 = vadd.f32 %v2653, %v3024
    %v3217 = vadd.f32 %v2654, %v3026
    %v3218 = vadd.f32 %v2655, %v3025
    %v3219 = vadd.f32 %v2656, %v3027
    %v3220 = vadd.f32 %v2657, %v3029
    %v3221 = vadd.f32 %v2658, %v3028
    %v3222 = vadd.f32 %v2659, %v3030
    %v3223 = vadd.f32 %v2660, %v3032
    %v3224 = vadd.f32 %v2661, %v3031
    %v3225 = vadd.f32 %v2662, %v3033
    %v3226 = vadd.f32 %v2663, %v3035
    %v3227 = vadd.f32 %v2664, %v3034
    %v3228 = vadd.f32 %v2665, %v3036
    %v3229 = vadd.f32 %v2666, %v3038
    %v3230 = vadd.f32 %v2667, %v3037
    %v3231 = vadd.f32 %v2668, %v3039
    %v3232 = vadd.f32 %v2669, %v3041
    %v3233 = vadd.f32 %v2670, %v3040
    %v3234 = vadd.f32 %v2671, %v3042
    %v3235 = vadd.f32 %v2672, %v3044
    %v3236 = vadd.f32 %v2673, %v3043
    %v3237 = vadd.f32 %v2674, %v3045
    %v3238 = vadd.f32 %v2675, %v3047
    %v3239 = vadd.f32 %v2676, %v3046
    %v3240 = vadd.f32 %v2677, %v3048
    %v3241 = vadd.f32 %v2678, %v3050
    %v3242 = vadd.f32 %v2679, %v3049
    %v3243 = vadd.f32 %v2680, %v3051
    %v3244 = vadd.f32 %v2681, %v3053
    %v3245 = vadd.f32 %v2682, %v3052
    %v3246 = vadd.f32 %v2683, %v3054
    %v3247 = vadd.f32 %v2684, %v3056
    %v3248 = vadd.f32 %v2685, %v3055
    %v3249 = vadd.f32 %v2686, %v3057
    %v3250 = vadd.f32 %v2687, %v3059
    %v3251 = vadd.f32 %v2688, %v3058
    %v3252 = vadd.f32 %v2689, %v3060
    %v3253 = vadd.f32 %v2690, %v3062
    %v3254 = vadd.f32 %v2691, %v3061
    %v3255 = vadd.f32 %v2692, %v3063
    %v3256 = vadd.f32 %v2693, %v3065
    %v3257 = vadd.f32 %v2694, %v3064
    %v3258 = vadd.f32 %v2695, %v3066
    %v3259 = vadd.f32 %v2696, %v3068
    %v3260 = vadd.f32 %v2697, %v3067
    %v3261 = vadd.f32 %v2698, %v3069
    %v3262 = vadd.f32 %v2699, %v3071
    %v3263 = vadd.f32 %v2700, %v3070
    %v3264 = vadd.f32 %v2701, %v3072
    %v3265 = vadd.f32 %v2702, %v3074
    %v3266 = vadd.f32 %v2703, %v3073
    %v3267 = vadd.f32 %v2704, %v3075
    %v3268 = vadd.f32 %v2705, %v3077
    %v3269 = vadd.f32 %v2706, %v3076
    %v3270 = vadd.f32 %v2707, %v3078
    %v3271 = vadd.f32 %v2708, %v3080
    %v3272 = vadd.f32 %v2709, %v3079
    %v3273 = vadd.f32 %v2710, %v3081
    %v3274 = vadd.f32 %v2711, %v3083
    %v3275 = vadd.f32 %v2712, %v3082
    %v3276 = vadd.f32 %v2713, %v3084
    %v3277 = vadd.f32 %v2714, %v3086
    %v3278 = vadd.f32 %v2715, %v3085
    %v3279 = vadd.f32 %v2716, %v3087
    %v3280 = vadd.f32 %v2717, %v3089
    %v3281 = vadd.f32 %v2718, %v3088
    %v3282 = vadd.f32 %v2719, %v3090
    %v3283 = vadd.f32 %v2720, %v3092
    %v3284 = vadd.f32 %v2721, %v3091
    %v3285 = vadd.f32 %v2722, %v3093
    %v3286 = vadd.f32 %v2723, %v3095
    %v3287 = vadd.f32 %v2724, %v3094
    %v3288 = vadd.f32 %v2725, %v3096
    %v3289 = vadd.f32 %v2726, %v3098
    %v3290 = vadd.f32 %v2727, %v3097
    %s3291 = sld [smem:[#allocation2 + $0x2]]
    %v3292 = vlaneseq
    %v3293 = vshrl.u32 %v3292, 7
    %v3294 = vsub.s32 2, %v3293
    %v3295 = vrot.slane %v2729, %v3294
    %v3296 = vsub.f32 %v2437, %v3295
    %v3297 = vsub.f32 %v2438, %v3295
    %v3298 = vsub.f32 %v2441, %v3295
    %v3299 = vsub.f32 %v2442, %v3295
    %v3300 = vsub.f32 %v2443, %v3295
    %v3301 = vsub.f32 %v2444, %v3295
    %v3302 = vsub.f32 %v2445, %v3295
    %v3303 = vsub.f32 %v2446, %v3295
    %v3304 = vsub.f32 %v2447, %v3295
    %v3305 = vsub.f32 %v2448, %v3295
    %v3306 = vsub.f32 %v2449, %v3295
    %v3307 = vsub.f32 %v2450, %v3295
    %v3308 = vsub.f32 %v2451, %v3295
    %v3309 = vsub.f32 %v2452, %v3295
    %v3310 = vsub.f32 %v2453, %v3295
    %v3311 = vsub.f32 %v2454, %v3295
    %v3312 = vsub.f32 %v2455, %v3295
    %v3313 = vsub.f32 %v2456, %v3295
    %v3314 = vsub.f32 %v2457, %v3295
    %v3315 = vsub.f32 %v2458, %v3295
    %v3316 = vsub.f32 %v2459, %v3295
    %v3317 = vsub.f32 %v2460, %v3295
    %v3318 = vsub.f32 %v2461, %v3295
    %v3319 = vsub.f32 %v2462, %v3295
    %v3320 = vsub.f32 %v2463, %v3295
    %v3321 = vsub.f32 %v2464, %v3295
    %v3322 = vsub.f32 %v2465, %v3295
    %v3323 = vsub.f32 %v2466, %v3295
    %v3324 = vsub.f32 %v2467, %v3295
    %v3325 = vsub.f32 %v2468, %v3295
    %v3326 = vsub.f32 %v2497, %v3295
    %v3327 = vsub.f32 %v2498, %v3295
    %v3328 = vsub.f32 %v2439, %v3295
    %v3329 = vsub.f32 %v2440, %v3295
    %v3330 = vsub.f32 %v2469, %v3295
    %v3331 = vsub.f32 %v2470, %v3295
    %v3332 = vsub.f32 %v2471, %v3295
    %v3333 = vsub.f32 %v2472, %v3295
    %v3334 = vsub.f32 %v2473, %v3295
    %v3335 = vsub.f32 %v2474, %v3295
    %v3336 = vsub.f32 %v2475, %v3295
    %v3337 = vsub.f32 %v2476, %v3295
    %v3338 = vsub.f32 %v2477, %v3295
    %v3339 = vsub.f32 %v2478, %v3295
    %v3340 = vsub.f32 %v2479, %v3295
    %v3341 = vsub.f32 %v2480, %v3295
    %v3342 = vsub.f32 %v2481, %v3295
    %v3343 = vsub.f32 %v2482, %v3295
    %v3344 = vsub.f32 %v2483, %v3295
    %v3345 = vsub.f32 %v2484, %v3295
    %v3346 = vsub.f32 %v2485, %v3295
    %v3347 = vsub.f32 %v2486, %v3295
    %v3348 = vsub.f32 %v2487, %v3295
    %v3349 = vsub.f32 %v2488, %v3295
    %v3350 = vsub.f32 %v2489, %v3295
    %v3351 = vsub.f32 %v2490, %v3295
    %v3352 = vsub.f32 %v2491, %v3295
    %v3353 = vsub.f32 %v2492, %v3295
    %v3354 = vsub.f32 %v2493, %v3295
    %v3355 = vsub.f32 %v2494, %v3295
    %v3356 = vsub.f32 %v2495, %v3295
    %v3357 = vsub.f32 %v2496, %v3295
    %v3358 = vsub.f32 %v2499, %v3295
    %v3359 = vsub.f32 %v2500, %v3295
    %v3360 = vlaneseq
    %v3361 = vshrl.u32 %v3360, 7
    %v3362 = vsub.s32 3, %v3361
    %v3363 = vrot.slane %v2804, %v3362
    %v3364 = vmul.f32 %v3296, %v3363
    %v3365 = vmul.f32 %v3297, %v3363
    %v3366 = vmul.f32 %v3298, %v3363
    %v3367 = vmul.f32 %v3299, %v3363
    %v3368 = vmul.f32 %v3300, %v3363
    %v3369 = vmul.f32 %v3301, %v3363
    %v3370 = vmul.f32 %v3302, %v3363
    %v3371 = vmul.f32 %v3303, %v3363
    %v3372 = vmul.f32 %v3304, %v3363
    %v3373 = vmul.f32 %v3305, %v3363
    %v3374 = vmul.f32 %v3306, %v3363
    %v3375 = vmul.f32 %v3307, %v3363
    %v3376 = vmul.f32 %v3308, %v3363
    %v3377 = vmul.f32 %v3309, %v3363
    %v3378 = vmul.f32 %v3310, %v3363
    %v3379 = vmul.f32 %v3311, %v3363
    %v3380 = vmul.f32 %v3312, %v3363
    %v3381 = vmul.f32 %v3313, %v3363
    %v3382 = vmul.f32 %v3314, %v3363
    %v3383 = vmul.f32 %v3315, %v3363
    %v3384 = vmul.f32 %v3316, %v3363
    %v3385 = vmul.f32 %v3317, %v3363
    %v3386 = vmul.f32 %v3318, %v3363
    %v3387 = vmul.f32 %v3319, %v3363
    %v3388 = vmul.f32 %v3320, %v3363
    %v3389 = vmul.f32 %v3321, %v3363
    %v3390 = vmul.f32 %v3322, %v3363
    %v3391 = vmul.f32 %v3323, %v3363
    %v3392 = vmul.f32 %v3324, %v3363
    %v3393 = vmul.f32 %v3325, %v3363
    %v3394 = vmul.f32 %v3326, %v3363
    %v3395 = vmul.f32 %v3327, %v3363
    %v3396 = vmul.f32 %v3328, %v3363
    %v3397 = vmul.f32 %v3329, %v3363
    %v3398 = vmul.f32 %v3330, %v3363
    %v3399 = vmul.f32 %v3331, %v3363
    %v3400 = vmul.f32 %v3332, %v3363
    %v3401 = vmul.f32 %v3333, %v3363
    %v3402 = vmul.f32 %v3334, %v3363
    %v3403 = vmul.f32 %v3335, %v3363
    %v3404 = vmul.f32 %v3336, %v3363
    %v3405 = vmul.f32 %v3337, %v3363
    %v3406 = vmul.f32 %v3338, %v3363
    %v3407 = vmul.f32 %v3339, %v3363
    %v3408 = vmul.f32 %v3340, %v3363
    %v3409 = vmul.f32 %v3341, %v3363
    %v3410 = vmul.f32 %v3342, %v3363
    %v3411 = vmul.f32 %v3343, %v3363
    %v3412 = vmul.f32 %v3344, %v3363
    %v3413 = vmul.f32 %v3345, %v3363
    %v3414 = vmul.f32 %v3346, %v3363
    %v3415 = vmul.f32 %v3347, %v3363
    %v3416 = vmul.f32 %v3348, %v3363
    %v3417 = vmul.f32 %v3349, %v3363
    %v3418 = vmul.f32 %v3350, %v3363
    %v3419 = vmul.f32 %v3351, %v3363
    %v3420 = vmul.f32 %v3352, %v3363
    %v3421 = vmul.f32 %v3353, %v3363
    %v3422 = vmul.f32 %v3354, %v3363
    %v3423 = vmul.f32 %v3355, %v3363
    %v3424 = vmul.f32 %v3356, %v3363
    %v3425 = vmul.f32 %v3357, %v3363
    %v3426 = vmul.f32 %v3358, %v3363
    %v3427 = vmul.f32 %v3359, %v3363
    %v3428 = vstv %s3291
    %v3429 = vmul.f32 %v3428, %v3364
    %v3430 = vmul.f32 %v3428, %v3365
    %v3431 = vmul.f32 %v3428, %v3366
    %v3432 = vmul.f32 %v3428, %v3367
    %v3433 = vmul.f32 %v3428, %v3368
    %v3434 = vmul.f32 %v3428, %v3369
    %v3435 = vmul.f32 %v3428, %v3370
    %v3436 = vmul.f32 %v3428, %v3371
    %v3437 = vmul.f32 %v3428, %v3372
    %v3438 = vmul.f32 %v3428, %v3373
    %v3439 = vmul.f32 %v3428, %v3374
    %v3440 = vmul.f32 %v3428, %v3375
    %v3441 = vmul.f32 %v3428, %v3376
    %v3442 = vmul.f32 %v3428, %v3377
    %v3443 = vmul.f32 %v3428, %v3378
    %v3444 = vmul.f32 %v3428, %v3379
    %v3445 = vmul.f32 %v3428, %v3380
    %v3446 = vmul.f32 %v3428, %v3381
    %v3447 = vmul.f32 %v3428, %v3382
    %v3448 = vmul.f32 %v3428, %v3383
    %v3449 = vmul.f32 %v3428, %v3384
    %v3450 = vmul.f32 %v3428, %v3385
    %v3451 = vmul.f32 %v3428, %v3386
    %v3452 = vmul.f32 %v3428, %v3387
    %v3453 = vmul.f32 %v3428, %v3388
    %v3454 = vmul.f32 %v3428, %v3389
    %v3455 = vmul.f32 %v3428, %v3390
    %v3456 = vmul.f32 %v3428, %v3391
    %v3457 = vmul.f32 %v3428, %v3392
    %v3458 = vmul.f32 %v3428, %v3393
    %v3459 = vmul.f32 %v3428, %v3394
    %v3460 = vmul.f32 %v3428, %v3395
    %v3461 = vmul.f32 %v3428, %v3396
    %v3462 = vmul.f32 %v3428, %v3397
    %v3463 = vmul.f32 %v3428, %v3398
    %v3464 = vmul.f32 %v3428, %v3399
    %v3465 = vmul.f32 %v3428, %v3400
    %v3466 = vmul.f32 %v3428, %v3401
    %v3467 = vmul.f32 %v3428, %v3402
    %v3468 = vmul.f32 %v3428, %v3403
    %v3469 = vmul.f32 %v3428, %v3404
    %v3470 = vmul.f32 %v3428, %v3405
    %v3471 = vmul.f32 %v3428, %v3406
    %v3472 = vmul.f32 %v3428, %v3407
    %v3473 = vmul.f32 %v3428, %v3408
    %v3474 = vmul.f32 %v3428, %v3409
    %v3475 = vmul.f32 %v3428, %v3410
    %v3476 = vmul.f32 %v3428, %v3411
    %v3477 = vmul.f32 %v3428, %v3412
    %v3478 = vmul.f32 %v3428, %v3413
    %v3479 = vmul.f32 %v3428, %v3414
    %v3480 = vmul.f32 %v3428, %v3415
    %v3481 = vmul.f32 %v3428, %v3416
    %v3482 = vmul.f32 %v3428, %v3417
    %v3483 = vmul.f32 %v3428, %v3418
    %v3484 = vmul.f32 %v3428, %v3419
    %v3485 = vmul.f32 %v3428, %v3420
    %v3486 = vmul.f32 %v3428, %v3421
    %v3487 = vmul.f32 %v3428, %v3422
    %v3488 = vmul.f32 %v3428, %v3423
    %v3489 = vmul.f32 %v3428, %v3424
    %v3490 = vmul.f32 %v3428, %v3425
    %v3491 = vmul.f32 %v3428, %v3426
    %v3492 = vmul.f32 %v3428, %v3427
    %v3557 = vrot.slane %v3429, 7
    %v3558 = vrot.slane %v3430, 7
    %v3559 = vsel %vm3002, %v3557, %v3558
    %v3560 = vrot.slane %v3431, 7
    %v3561 = vrot.slane %v3432, 7
    %v3562 = vsel %vm3002, %v3560, %v3561
    %v3563 = vrot.slane %v3433, 7
    %v3564 = vrot.slane %v3434, 7
    %v3565 = vsel %vm3002, %v3563, %v3564
    %v3566 = vrot.slane %v3435, 7
    %v3567 = vrot.slane %v3436, 7
    %v3568 = vsel %vm3002, %v3566, %v3567
    %v3569 = vrot.slane %v3437, 7
    %v3570 = vrot.slane %v3438, 7
    %v3571 = vsel %vm3002, %v3569, %v3570
    %v3572 = vrot.slane %v3439, 7
    %v3573 = vrot.slane %v3440, 7
    %v3574 = vsel %vm3002, %v3572, %v3573
    %v3575 = vrot.slane %v3441, 7
    %v3576 = vrot.slane %v3442, 7
    %v3577 = vsel %vm3002, %v3575, %v3576
    %v3578 = vrot.slane %v3443, 7
    %v3579 = vrot.slane %v3444, 7
    %v3580 = vsel %vm3002, %v3578, %v3579
    %v3581 = vrot.slane %v3445, 7
    %v3582 = vrot.slane %v3446, 7
    %v3583 = vsel %vm3002, %v3581, %v3582
    %v3584 = vrot.slane %v3447, 7
    %v3585 = vrot.slane %v3448, 7
    %v3586 = vsel %vm3002, %v3584, %v3585
    %v3587 = vrot.slane %v3449, 7
    %v3588 = vrot.slane %v3450, 7
    %v3589 = vsel %vm3002, %v3587, %v3588
    %v3590 = vrot.slane %v3451, 7
    %v3591 = vrot.slane %v3452, 7
    %v3592 = vsel %vm3002, %v3590, %v3591
    %v3593 = vrot.slane %v3453, 7
    %v3594 = vrot.slane %v3454, 7
    %v3595 = vsel %vm3002, %v3593, %v3594
    %v3596 = vrot.slane %v3455, 7
    %v3597 = vrot.slane %v3456, 7
    %v3598 = vsel %vm3002, %v3596, %v3597
    %v3599 = vrot.slane %v3457, 7
    %v3600 = vrot.slane %v3458, 7
    %v3601 = vsel %vm3002, %v3599, %v3600
    %v3602 = vrot.slane %v3459, 7
    %v3603 = vrot.slane %v3460, 7
    %v3604 = vsel %vm3002, %v3602, %v3603
    %v3605 = vrot.slane %v3461, 7
    %v3606 = vrot.slane %v3462, 7
    %v3607 = vsel %vm3002, %v3605, %v3606
    %v3608 = vrot.slane %v3463, 7
    %v3609 = vrot.slane %v3464, 7
    %v3610 = vsel %vm3002, %v3608, %v3609
    %v3611 = vrot.slane %v3465, 7
    %v3612 = vrot.slane %v3466, 7
    %v3613 = vsel %vm3002, %v3611, %v3612
    %v3614 = vrot.slane %v3467, 7
    %v3615 = vrot.slane %v3468, 7
    %v3616 = vsel %vm3002, %v3614, %v3615
    %v3617 = vrot.slane %v3469, 7
    %v3618 = vrot.slane %v3470, 7
    %v3619 = vsel %vm3002, %v3617, %v3618
    %v3620 = vrot.slane %v3471, 7
    %v3621 = vrot.slane %v3472, 7
    %v3622 = vsel %vm3002, %v3620, %v3621
    %v3623 = vrot.slane %v3473, 7
    %v3624 = vrot.slane %v3474, 7
    %v3625 = vsel %vm3002, %v3623, %v3624
    %v3626 = vrot.slane %v3475, 7
    %v3627 = vrot.slane %v3476, 7
    %v3628 = vsel %vm3002, %v3626, %v3627
    %v3629 = vrot.slane %v3477, 7
    %v3630 = vrot.slane %v3478, 7
    %v3631 = vsel %vm3002, %v3629, %v3630
    %v3632 = vrot.slane %v3479, 7
    %v3633 = vrot.slane %v3480, 7
    %v3634 = vsel %vm3002, %v3632, %v3633
    %v3635 = vrot.slane %v3481, 7
    %v3636 = vrot.slane %v3482, 7
    %v3637 = vsel %vm3002, %v3635, %v3636
    %v3638 = vrot.slane %v3483, 7
    %v3639 = vrot.slane %v3484, 7
    %v3640 = vsel %vm3002, %v3638, %v3639
    %v3641 = vrot.slane %v3485, 7
    %v3642 = vrot.slane %v3486, 7
    %v3643 = vsel %vm3002, %v3641, %v3642
    %v3644 = vrot.slane %v3487, 7
    %v3645 = vrot.slane %v3488, 7
    %v3646 = vsel %vm3002, %v3644, %v3645
    %v3647 = vrot.slane %v3489, 7
    %v3648 = vrot.slane %v3490, 7
    %v3649 = vsel %vm3002, %v3647, %v3648
    %v3650 = vrot.slane %v3491, 7
    %v3651 = vrot.slane %v3492, 7
    %v3652 = vsel %vm3002, %v3650, %v3651
    %v3749 = vadd.f32 %v3195, %v3557
    %v3750 = vadd.f32 %v3196, %v3559
    %v3751 = vadd.f32 %v3197, %v3558
    %v3752 = vadd.f32 %v3198, %v3560
    %v3753 = vadd.f32 %v3199, %v3562
    %v3754 = vadd.f32 %v3200, %v3561
    %v3755 = vadd.f32 %v3201, %v3563
    %v3756 = vadd.f32 %v3202, %v3565
    %v3757 = vadd.f32 %v3203, %v3564
    %v3758 = vadd.f32 %v3204, %v3566
    %v3759 = vadd.f32 %v3205, %v3568
    %v3760 = vadd.f32 %v3206, %v3567
    %v3761 = vadd.f32 %v3207, %v3569
    %v3762 = vadd.f32 %v3208, %v3571
    %v3763 = vadd.f32 %v3209, %v3570
    %v3764 = vadd.f32 %v3210, %v3572
    %v3765 = vadd.f32 %v3211, %v3574
    %v3766 = vadd.f32 %v3212, %v3573
    %v3767 = vadd.f32 %v3213, %v3575
    %v3768 = vadd.f32 %v3214, %v3577
    %v3769 = vadd.f32 %v3215, %v3576
    %v3770 = vadd.f32 %v3216, %v3578
    %v3771 = vadd.f32 %v3217, %v3580
    %v3772 = vadd.f32 %v3218, %v3579
    %v3773 = vadd.f32 %v3219, %v3581
    %v3774 = vadd.f32 %v3220, %v3583
    %v3775 = vadd.f32 %v3221, %v3582
    %v3776 = vadd.f32 %v3222, %v3584
    %v3777 = vadd.f32 %v3223, %v3586
    %v3778 = vadd.f32 %v3224, %v3585
    %v3779 = vadd.f32 %v3225, %v3587
    %v3780 = vadd.f32 %v3226, %v3589
    %v3781 = vadd.f32 %v3227, %v3588
    %v3782 = vadd.f32 %v3228, %v3590
    %v3783 = vadd.f32 %v3229, %v3592
    %v3784 = vadd.f32 %v3230, %v3591
    %v3785 = vadd.f32 %v3231, %v3593
    %v3786 = vadd.f32 %v3232, %v3595
    %v3787 = vadd.f32 %v3233, %v3594
    %v3788 = vadd.f32 %v3234, %v3596
    %v3789 = vadd.f32 %v3235, %v3598
    %v3790 = vadd.f32 %v3236, %v3597
    %v3791 = vadd.f32 %v3237, %v3599
    %v3792 = vadd.f32 %v3238, %v3601
    %v3793 = vadd.f32 %v3239, %v3600
    %v3794 = vadd.f32 %v3240, %v3602
    %v3795 = vadd.f32 %v3241, %v3604
    %v3796 = vadd.f32 %v3242, %v3603
    %v3797 = vadd.f32 %v3243, %v3605
    %v3798 = vadd.f32 %v3244, %v3607
    %v3799 = vadd.f32 %v3245, %v3606
    %v3800 = vadd.f32 %v3246, %v3608
    %v3801 = vadd.f32 %v3247, %v3610
    %v3802 = vadd.f32 %v3248, %v3609
    %v3803 = vadd.f32 %v3249, %v3611
    %v3804 = vadd.f32 %v3250, %v3613
    %v3805 = vadd.f32 %v3251, %v3612
    %v3806 = vadd.f32 %v3252, %v3614
    %v3807 = vadd.f32 %v3253, %v3616
    %v3808 = vadd.f32 %v3254, %v3615
    %v3809 = vadd.f32 %v3255, %v3617
    %v3810 = vadd.f32 %v3256, %v3619
    %v3811 = vadd.f32 %v3257, %v3618
    %v3812 = vadd.f32 %v3258, %v3620
    %v3813 = vadd.f32 %v3259, %v3622
    %v3814 = vadd.f32 %v3260, %v3621
    %v3815 = vadd.f32 %v3261, %v3623
    %v3816 = vadd.f32 %v3262, %v3625
    %v3817 = vadd.f32 %v3263, %v3624
    %v3818 = vadd.f32 %v3264, %v3626
    %v3819 = vadd.f32 %v3265, %v3628
    %v3820 = vadd.f32 %v3266, %v3627
    %v3821 = vadd.f32 %v3267, %v3629
    %v3822 = vadd.f32 %v3268, %v3631
    %v3823 = vadd.f32 %v3269, %v3630
    %v3824 = vadd.f32 %v3270, %v3632
    %v3825 = vadd.f32 %v3271, %v3634
    %v3826 = vadd.f32 %v3272, %v3633
    %v3827 = vadd.f32 %v3273, %v3635
    %v3828 = vadd.f32 %v3274, %v3637
    %v3829 = vadd.f32 %v3275, %v3636
    %v3830 = vadd.f32 %v3276, %v3638
    %v3831 = vadd.f32 %v3277, %v3640
    %v3832 = vadd.f32 %v3278, %v3639
    %v3833 = vadd.f32 %v3279, %v3641
    %v3834 = vadd.f32 %v3280, %v3643
    %v3835 = vadd.f32 %v3281, %v3642
    %v3836 = vadd.f32 %v3282, %v3644
    %v3837 = vadd.f32 %v3283, %v3646
    %v3838 = vadd.f32 %v3284, %v3645
    %v3839 = vadd.f32 %v3285, %v3647
    %v3840 = vadd.f32 %v3286, %v3649
    %v3841 = vadd.f32 %v3287, %v3648
    %v3842 = vadd.f32 %v3288, %v3650
    %v3843 = vadd.f32 %v3289, %v3652
    %v3844 = vadd.f32 %v3290, %v3651
    %s3845 = sld [smem:[#allocation2 + $0x3]]
    %v3846 = vlaneseq
    %v3847 = vshrl.u32 %v3846, 7
    %v3848 = vsub.s32 4, %v3847
    %v3849 = vrot.slane %v2729, %v3848
    %v3850 = vsub.f32 %v2565, %v3849
    %v3851 = vsub.f32 %v2566, %v3849
    %v3852 = vsub.f32 %v2567, %v3849
    %v3853 = vsub.f32 %v2568, %v3849
    %v3854 = vsub.f32 %v2569, %v3849
    %v3855 = vsub.f32 %v2570, %v3849
    %v3856 = vsub.f32 %v2571, %v3849
    %v3857 = vsub.f32 %v2572, %v3849
    %v3858 = vsub.f32 %v2573, %v3849
    %v3859 = vsub.f32 %v2574, %v3849
    %v3860 = vsub.f32 %v2575, %v3849
    %v3861 = vsub.f32 %v2576, %v3849
    %v3862 = vsub.f32 %v2577, %v3849
    %v3863 = vsub.f32 %v2578, %v3849
    %v3864 = vsub.f32 %v2579, %v3849
    %v3865 = vsub.f32 %v2580, %v3849
    %v3866 = vsub.f32 %v2581, %v3849
    %v3867 = vsub.f32 %v2582, %v3849
    %v3868 = vsub.f32 %v2583, %v3849
    %v3869 = vsub.f32 %v2584, %v3849
    %v3870 = vsub.f32 %v2585, %v3849
    %v3871 = vsub.f32 %v2586, %v3849
    %v3872 = vsub.f32 %v2587, %v3849
    %v3873 = vsub.f32 %v2588, %v3849
    %v3874 = vsub.f32 %v2589, %v3849
    %v3875 = vsub.f32 %v2590, %v3849
    %v3876 = vsub.f32 %v2591, %v3849
    %v3877 = vsub.f32 %v2592, %v3849
    %v3878 = vsub.f32 %v2593, %v3849
    %v3879 = vsub.f32 %v2594, %v3849
    %v3880 = vsub.f32 %v2595, %v3849
    %v3881 = vsub.f32 %v2596, %v3849
    %v3882 = vsub.f32 %v2597, %v3849
    %v3883 = vsub.f32 %v2598, %v3849
    %v3884 = vsub.f32 %v2599, %v3849
    %v3885 = vsub.f32 %v2600, %v3849
    %v3886 = vsub.f32 %v2601, %v3849
    %v3887 = vsub.f32 %v2602, %v3849
    %v3888 = vsub.f32 %v2603, %v3849
    %v3889 = vsub.f32 %v2604, %v3849
    %v3890 = vsub.f32 %v2605, %v3849
    %v3891 = vsub.f32 %v2606, %v3849
    %v3892 = vsub.f32 %v2607, %v3849
    %v3893 = vsub.f32 %v2608, %v3849
    %v3894 = vsub.f32 %v2609, %v3849
    %v3895 = vsub.f32 %v2610, %v3849
    %v3896 = vsub.f32 %v2611, %v3849
    %v3897 = vsub.f32 %v2612, %v3849
    %v3898 = vsub.f32 %v2613, %v3849
    %v3899 = vsub.f32 %v2614, %v3849
    %v3900 = vsub.f32 %v2615, %v3849
    %v3901 = vsub.f32 %v2616, %v3849
    %v3902 = vsub.f32 %v2617, %v3849
    %v3903 = vsub.f32 %v2618, %v3849
    %v3904 = vsub.f32 %v2619, %v3849
    %v3905 = vsub.f32 %v2620, %v3849
    %v3906 = vsub.f32 %v2621, %v3849
    %v3907 = vsub.f32 %v2622, %v3849
    %v3908 = vsub.f32 %v2623, %v3849
    %v3909 = vsub.f32 %v2624, %v3849
    %v3910 = vsub.f32 %v2625, %v3849
    %v3911 = vsub.f32 %v2626, %v3849
    %v3912 = vsub.f32 %v2627, %v3849
    %v3913 = vsub.f32 %v2628, %v3849
    %v3914 = vlaneseq
    %v3915 = vshrl.u32 %v3914, 7
    %v3916 = vsub.s32 5, %v3915
    %v3917 = vrot.slane %v2804, %v3916
    %v3918 = vmul.f32 %v3850, %v3917
    %v3919 = vmul.f32 %v3851, %v3917
    %v3920 = vmul.f32 %v3852, %v3917
    %v3921 = vmul.f32 %v3853, %v3917
    %v3922 = vmul.f32 %v3854, %v3917
    %v3923 = vmul.f32 %v3855, %v3917
    %v3924 = vmul.f32 %v3856, %v3917
    %v3925 = vmul.f32 %v3857, %v3917
    %v3926 = vmul.f32 %v3858, %v3917
    %v3927 = vmul.f32 %v3859, %v3917
    %v3928 = vmul.f32 %v3860, %v3917
    %v3929 = vmul.f32 %v3861, %v3917
    %v3930 = vmul.f32 %v3862, %v3917
    %v3931 = vmul.f32 %v3863, %v3917
    %v3932 = vmul.f32 %v3864, %v3917
    %v3933 = vmul.f32 %v3865, %v3917
    %v3934 = vmul.f32 %v3866, %v3917
    %v3935 = vmul.f32 %v3867, %v3917
    %v3936 = vmul.f32 %v3868, %v3917
    %v3937 = vmul.f32 %v3869, %v3917
    %v3938 = vmul.f32 %v3870, %v3917
    %v3939 = vmul.f32 %v3871, %v3917
    %v3940 = vmul.f32 %v3872, %v3917
    %v3941 = vmul.f32 %v3873, %v3917
    %v3942 = vmul.f32 %v3874, %v3917
    %v3943 = vmul.f32 %v3875, %v3917
    %v3944 = vmul.f32 %v3876, %v3917
    %v3945 = vmul.f32 %v3877, %v3917
    %v3946 = vmul.f32 %v3878, %v3917
    %v3947 = vmul.f32 %v3879, %v3917
    %v3948 = vmul.f32 %v3880, %v3917
    %v3949 = vmul.f32 %v3881, %v3917
    %v3950 = vmul.f32 %v3882, %v3917
    %v3951 = vmul.f32 %v3883, %v3917
    %v3952 = vmul.f32 %v3884, %v3917
    %v3953 = vmul.f32 %v3885, %v3917
    %v3954 = vmul.f32 %v3886, %v3917
    %v3955 = vmul.f32 %v3887, %v3917
    %v3956 = vmul.f32 %v3888, %v3917
    %v3957 = vmul.f32 %v3889, %v3917
    %v3958 = vmul.f32 %v3890, %v3917
    %v3959 = vmul.f32 %v3891, %v3917
    %v3960 = vmul.f32 %v3892, %v3917
    %v3961 = vmul.f32 %v3893, %v3917
    %v3962 = vmul.f32 %v3894, %v3917
    %v3963 = vmul.f32 %v3895, %v3917
    %v3964 = vmul.f32 %v3896, %v3917
    %v3965 = vmul.f32 %v3897, %v3917
    %v3966 = vmul.f32 %v3898, %v3917
    %v3967 = vmul.f32 %v3899, %v3917
    %v3968 = vmul.f32 %v3900, %v3917
    %v3969 = vmul.f32 %v3901, %v3917
    %v3970 = vmul.f32 %v3902, %v3917
    %v3971 = vmul.f32 %v3903, %v3917
    %v3972 = vmul.f32 %v3904, %v3917
    %v3973 = vmul.f32 %v3905, %v3917
    %v3974 = vmul.f32 %v3906, %v3917
    %v3975 = vmul.f32 %v3907, %v3917
    %v3976 = vmul.f32 %v3908, %v3917
    %v3977 = vmul.f32 %v3909, %v3917
    %v3978 = vmul.f32 %v3910, %v3917
    %v3979 = vmul.f32 %v3911, %v3917
    %v3980 = vmul.f32 %v3912, %v3917
    %v3981 = vmul.f32 %v3913, %v3917
    %v3982 = vstv %s3845
    %v3983 = vmul.f32 %v3982, %v3918
    %v3984 = vmul.f32 %v3982, %v3919
    %v3985 = vmul.f32 %v3982, %v3920
    %v3986 = vmul.f32 %v3982, %v3921
    %v3987 = vmul.f32 %v3982, %v3922
    %v3988 = vmul.f32 %v3982, %v3923
    %v3989 = vmul.f32 %v3982, %v3924
    %v3990 = vmul.f32 %v3982, %v3925
    %v3991 = vmul.f32 %v3982, %v3926
    %v3992 = vmul.f32 %v3982, %v3927
    %v3993 = vmul.f32 %v3982, %v3928
    %v3994 = vmul.f32 %v3982, %v3929
    %v3995 = vmul.f32 %v3982, %v3930
    %v3996 = vmul.f32 %v3982, %v3931
    %v3997 = vmul.f32 %v3982, %v3932
    %v3998 = vmul.f32 %v3982, %v3933
    %v3999 = vmul.f32 %v3982, %v3934
    %v4000 = vmul.f32 %v3982, %v3935
    %v4001 = vmul.f32 %v3982, %v3936
    %v4002 = vmul.f32 %v3982, %v3937
    %v4003 = vmul.f32 %v3982, %v3938
    %v4004 = vmul.f32 %v3982, %v3939
    %v4005 = vmul.f32 %v3982, %v3940
    %v4006 = vmul.f32 %v3982, %v3941
    %v4007 = vmul.f32 %v3982, %v3942
    %v4008 = vmul.f32 %v3982, %v3943
    %v4009 = vmul.f32 %v3982, %v3944
    %v4010 = vmul.f32 %v3982, %v3945
    %v4011 = vmul.f32 %v3982, %v3946
    %v4012 = vmul.f32 %v3982, %v3947
    %v4013 = vmul.f32 %v3982, %v3948
    %v4014 = vmul.f32 %v3982, %v3949
    %v4015 = vmul.f32 %v3982, %v3950
    %v4016 = vmul.f32 %v3982, %v3951
    %v4017 = vmul.f32 %v3982, %v3952
    %v4018 = vmul.f32 %v3982, %v3953
    %v4019 = vmul.f32 %v3982, %v3954
    %v4020 = vmul.f32 %v3982, %v3955
    %v4021 = vmul.f32 %v3982, %v3956
    %v4022 = vmul.f32 %v3982, %v3957
    %v4023 = vmul.f32 %v3982, %v3958
    %v4024 = vmul.f32 %v3982, %v3959
    %v4025 = vmul.f32 %v3982, %v3960
    %v4026 = vmul.f32 %v3982, %v3961
    %v4027 = vmul.f32 %v3982, %v3962
    %v4028 = vmul.f32 %v3982, %v3963
    %v4029 = vmul.f32 %v3982, %v3964
    %v4030 = vmul.f32 %v3982, %v3965
    %v4031 = vmul.f32 %v3982, %v3966
    %v4032 = vmul.f32 %v3982, %v3967
    %v4033 = vmul.f32 %v3982, %v3968
    %v4034 = vmul.f32 %v3982, %v3969
    %v4035 = vmul.f32 %v3982, %v3970
    %v4036 = vmul.f32 %v3982, %v3971
    %v4037 = vmul.f32 %v3982, %v3972
    %v4038 = vmul.f32 %v3982, %v3973
    %v4039 = vmul.f32 %v3982, %v3974
    %v4040 = vmul.f32 %v3982, %v3975
    %v4041 = vmul.f32 %v3982, %v3976
    %v4042 = vmul.f32 %v3982, %v3977
    %v4043 = vmul.f32 %v3982, %v3978
    %v4044 = vmul.f32 %v3982, %v3979
    %v4045 = vmul.f32 %v3982, %v3980
    %v4046 = vmul.f32 %v3982, %v3981
    %v4111 = vrot.slane %v3983, 7
    %v4112 = vrot.slane %v3984, 7
    %v4113 = vsel %vm3002, %v4111, %v4112
    %v4114 = vrot.slane %v3985, 7
    %v4115 = vrot.slane %v3986, 7
    %v4116 = vsel %vm3002, %v4114, %v4115
    %v4117 = vrot.slane %v3987, 7
    %v4118 = vrot.slane %v3988, 7
    %v4119 = vsel %vm3002, %v4117, %v4118
    %v4120 = vrot.slane %v3989, 7
    %v4121 = vrot.slane %v3990, 7
    %v4122 = vsel %vm3002, %v4120, %v4121
    %v4123 = vrot.slane %v3991, 7
    %v4124 = vrot.slane %v3992, 7
    %v4125 = vsel %vm3002, %v4123, %v4124
    %v4126 = vrot.slane %v3993, 7
    %v4127 = vrot.slane %v3994, 7
    %v4128 = vsel %vm3002, %v4126, %v4127
    %v4129 = vrot.slane %v3995, 7
    %v4130 = vrot.slane %v3996, 7
    %v4131 = vsel %vm3002, %v4129, %v4130
    %v4132 = vrot.slane %v3997, 7
    %v4133 = vrot.slane %v3998, 7
    %v4134 = vsel %vm3002, %v4132, %v4133
    %v4135 = vrot.slane %v3999, 7
    %v4136 = vrot.slane %v4000, 7
    %v4137 = vsel %vm3002, %v4135, %v4136
    %v4138 = vrot.slane %v4001, 7
    %v4139 = vrot.slane %v4002, 7
    %v4140 = vsel %vm3002, %v4138, %v4139
    %v4141 = vrot.slane %v4003, 7
    %v4142 = vrot.slane %v4004, 7
    %v4143 = vsel %vm3002, %v4141, %v4142
    %v4144 = vrot.slane %v4005, 7
    %v4145 = vrot.slane %v4006, 7
    %v4146 = vsel %vm3002, %v4144, %v4145
    %v4147 = vrot.slane %v4007, 7
    %v4148 = vrot.slane %v4008, 7
    %v4149 = vsel %vm3002, %v4147, %v4148
    %v4150 = vrot.slane %v4009, 7
    %v4151 = vrot.slane %v4010, 7
    %v4152 = vsel %vm3002, %v4150, %v4151
    %v4153 = vrot.slane %v4011, 7
    %v4154 = vrot.slane %v4012, 7
    %v4155 = vsel %vm3002, %v4153, %v4154
    %v4156 = vrot.slane %v4013, 7
    %v4157 = vrot.slane %v4014, 7
    %v4158 = vsel %vm3002, %v4156, %v4157
    %v4159 = vrot.slane %v4015, 7
    %v4160 = vrot.slane %v4016, 7
    %v4161 = vsel %vm3002, %v4159, %v4160
    %v4162 = vrot.slane %v4017, 7
    %v4163 = vrot.slane %v4018, 7
    %v4164 = vsel %vm3002, %v4162, %v4163
    %v4165 = vrot.slane %v4019, 7
    %v4166 = vrot.slane %v4020, 7
    %v4167 = vsel %vm3002, %v4165, %v4166
    %v4168 = vrot.slane %v4021, 7
    %v4169 = vrot.slane %v4022, 7
    %v4170 = vsel %vm3002, %v4168, %v4169
    %v4171 = vrot.slane %v4023, 7
    %v4172 = vrot.slane %v4024, 7
    %v4173 = vsel %vm3002, %v4171, %v4172
    %v4174 = vrot.slane %v4025, 7
    %v4175 = vrot.slane %v4026, 7
    %v4176 = vsel %vm3002, %v4174, %v4175
    %v4177 = vrot.slane %v4027, 7
    %v4178 = vrot.slane %v4028, 7
    %v4179 = vsel %vm3002, %v4177, %v4178
    %v4180 = vrot.slane %v4029, 7
    %v4181 = vrot.slane %v4030, 7
    %v4182 = vsel %vm3002, %v4180, %v4181
    %v4183 = vrot.slane %v4031, 7
    %v4184 = vrot.slane %v4032, 7
    %v4185 = vsel %vm3002, %v4183, %v4184
    %v4186 = vrot.slane %v4033, 7
    %v4187 = vrot.slane %v4034, 7
    %v4188 = vsel %vm3002, %v4186, %v4187
    %v4189 = vrot.slane %v4035, 7
    %v4190 = vrot.slane %v4036, 7
    %v4191 = vsel %vm3002, %v4189, %v4190
    %v4192 = vrot.slane %v4037, 7
    %v4193 = vrot.slane %v4038, 7
    %v4194 = vsel %vm3002, %v4192, %v4193
    %v4195 = vrot.slane %v4039, 7
    %v4196 = vrot.slane %v4040, 7
    %v4197 = vsel %vm3002, %v4195, %v4196
    %v4198 = vrot.slane %v4041, 7
    %v4199 = vrot.slane %v4042, 7
    %v4200 = vsel %vm3002, %v4198, %v4199
    %v4201 = vrot.slane %v4043, 7
    %v4202 = vrot.slane %v4044, 7
    %v4203 = vsel %vm3002, %v4201, %v4202
    %v4204 = vrot.slane %v4045, 7
    %v4205 = vrot.slane %v4046, 7
    %v4206 = vsel %vm3002, %v4204, %v4205
    %v4303 = vadd.f32 %v3749, %v4111
    %v4304 = vadd.f32 %v3750, %v4113
    %v4305 = vadd.f32 %v3751, %v4112
    %v4306 = vadd.f32 %v3752, %v4114
    %v4307 = vadd.f32 %v3753, %v4116
    %v4308 = vadd.f32 %v3754, %v4115
    %v4309 = vadd.f32 %v3755, %v4117
    %v4310 = vadd.f32 %v3756, %v4119
    %v4311 = vadd.f32 %v3757, %v4118
    %v4312 = vadd.f32 %v3758, %v4120
    %v4313 = vadd.f32 %v3759, %v4122
    %v4314 = vadd.f32 %v3760, %v4121
    %v4315 = vadd.f32 %v3761, %v4123
    %v4316 = vadd.f32 %v3762, %v4125
    %v4317 = vadd.f32 %v3763, %v4124
    %v4318 = vadd.f32 %v3764, %v4126
    %v4319 = vadd.f32 %v3765, %v4128
    %v4320 = vadd.f32 %v3766, %v4127
    %v4321 = vadd.f32 %v3767, %v4129
    %v4322 = vadd.f32 %v3768, %v4131
    %v4323 = vadd.f32 %v3769, %v4130
    %v4324 = vadd.f32 %v3770, %v4132
    %v4325 = vadd.f32 %v3771, %v4134
    %v4326 = vadd.f32 %v3772, %v4133
    %v4327 = vadd.f32 %v3773, %v4135
    %v4328 = vadd.f32 %v3774, %v4137
    %v4329 = vadd.f32 %v3775, %v4136
    %v4330 = vadd.f32 %v3776, %v4138
    %v4331 = vadd.f32 %v3777, %v4140
    %v4332 = vadd.f32 %v3778, %v4139
    %v4333 = vadd.f32 %v3779, %v4141
    %v4334 = vadd.f32 %v3780, %v4143
    %v4335 = vadd.f32 %v3781, %v4142
    %v4336 = vadd.f32 %v3782, %v4144
    %v4337 = vadd.f32 %v3783, %v4146
    %v4338 = vadd.f32 %v3784, %v4145
    %v4339 = vadd.f32 %v3785, %v4147
    %v4340 = vadd.f32 %v3786, %v4149
    %v4341 = vadd.f32 %v3787, %v4148
    %v4342 = vadd.f32 %v3788, %v4150
    %v4343 = vadd.f32 %v3789, %v4152
    %v4344 = vadd.f32 %v3790, %v4151
    %v4345 = vadd.f32 %v3791, %v4153
    %v4346 = vadd.f32 %v3792, %v4155
    %v4347 = vadd.f32 %v3793, %v4154
    %v4348 = vadd.f32 %v3794, %v4156
    %v4349 = vadd.f32 %v3795, %v4158
    %v4350 = vadd.f32 %v3796, %v4157
    %v4351 = vadd.f32 %v3797, %v4159
    %v4352 = vadd.f32 %v3798, %v4161
    %v4353 = vadd.f32 %v3799, %v4160
    %v4354 = vadd.f32 %v3800, %v4162
    %v4355 = vadd.f32 %v3801, %v4164
    %v4356 = vadd.f32 %v3802, %v4163
    %v4357 = vadd.f32 %v3803, %v4165
    %v4358 = vadd.f32 %v3804, %v4167
    %v4359 = vadd.f32 %v3805, %v4166
    %v4360 = vadd.f32 %v3806, %v4168
    %v4361 = vadd.f32 %v3807, %v4170
    %v4362 = vadd.f32 %v3808, %v4169
    %v4363 = vadd.f32 %v3809, %v4171
    %v4364 = vadd.f32 %v3810, %v4173
    %v4365 = vadd.f32 %v3811, %v4172
    %v4366 = vadd.f32 %v3812, %v4174
    %v4367 = vadd.f32 %v3813, %v4176
    %v4368 = vadd.f32 %v3814, %v4175
    %v4369 = vadd.f32 %v3815, %v4177
    %v4370 = vadd.f32 %v3816, %v4179
    %v4371 = vadd.f32 %v3817, %v4178
    %v4372 = vadd.f32 %v3818, %v4180
    %v4373 = vadd.f32 %v3819, %v4182
    %v4374 = vadd.f32 %v3820, %v4181
    %v4375 = vadd.f32 %v3821, %v4183
    %v4376 = vadd.f32 %v3822, %v4185
    %v4377 = vadd.f32 %v3823, %v4184
    %v4378 = vadd.f32 %v3824, %v4186
    %v4379 = vadd.f32 %v3825, %v4188
    %v4380 = vadd.f32 %v3826, %v4187
    %v4381 = vadd.f32 %v3827, %v4189
    %v4382 = vadd.f32 %v3828, %v4191
    %v4383 = vadd.f32 %v3829, %v4190
    %v4384 = vadd.f32 %v3830, %v4192
    %v4385 = vadd.f32 %v3831, %v4194
    %v4386 = vadd.f32 %v3832, %v4193
    %v4387 = vadd.f32 %v3833, %v4195
    %v4388 = vadd.f32 %v3834, %v4197
    %v4389 = vadd.f32 %v3835, %v4196
    %v4390 = vadd.f32 %v3836, %v4198
    %v4391 = vadd.f32 %v3837, %v4200
    %v4392 = vadd.f32 %v3838, %v4199
    %v4393 = vadd.f32 %v3839, %v4201
    %v4394 = vadd.f32 %v3840, %v4203
    %v4395 = vadd.f32 %v3841, %v4202
    %v4396 = vadd.f32 %v3842, %v4204
    %v4397 = vadd.f32 %v3843, %v4206
    %v4398 = vadd.f32 %v3844, %v4205
    %v4495 = vrot.slane %v4303, 1
    %v4496 = vrot.slane %v4304, 1
    %v4497 = vsel %vm435, %v4495, %v4496
    %v4498 = vrot.slane %v4305, 1
    %v4499 = vsel %vm435, %v4496, %v4498
    %v4500 = vrot.slane %v4306, 1
    %v4501 = vrot.slane %v4307, 1
    %v4502 = vsel %vm435, %v4500, %v4501
    %v4503 = vrot.slane %v4308, 1
    %v4504 = vsel %vm435, %v4501, %v4503
    %v4505 = vrot.slane %v4309, 1
    %v4506 = vrot.slane %v4310, 1
    %v4507 = vsel %vm435, %v4505, %v4506
    %v4508 = vrot.slane %v4311, 1
    %v4509 = vsel %vm435, %v4506, %v4508
    %v4510 = vrot.slane %v4312, 1
    %v4511 = vrot.slane %v4313, 1
    %v4512 = vsel %vm435, %v4510, %v4511
    %v4513 = vrot.slane %v4314, 1
    %v4514 = vsel %vm435, %v4511, %v4513
    %v4515 = vrot.slane %v4315, 1
    %v4516 = vrot.slane %v4316, 1
    %v4517 = vsel %vm435, %v4515, %v4516
    %v4518 = vrot.slane %v4317, 1
    %v4519 = vsel %vm435, %v4516, %v4518
    %v4520 = vrot.slane %v4318, 1
    %v4521 = vrot.slane %v4319, 1
    %v4522 = vsel %vm435, %v4520, %v4521
    %v4523 = vrot.slane %v4320, 1
    %v4524 = vsel %vm435, %v4521, %v4523
    %v4525 = vrot.slane %v4321, 1
    %v4526 = vrot.slane %v4322, 1
    %v4527 = vsel %vm435, %v4525, %v4526
    %v4528 = vrot.slane %v4323, 1
    %v4529 = vsel %vm435, %v4526, %v4528
    %v4530 = vrot.slane %v4324, 1
    %v4531 = vrot.slane %v4325, 1
    %v4532 = vsel %vm435, %v4530, %v4531
    %v4533 = vrot.slane %v4326, 1
    %v4534 = vsel %vm435, %v4531, %v4533
    %v4535 = vrot.slane %v4327, 1
    %v4536 = vrot.slane %v4328, 1
    %v4537 = vsel %vm435, %v4535, %v4536
    %v4538 = vrot.slane %v4329, 1
    %v4539 = vsel %vm435, %v4536, %v4538
    %v4540 = vrot.slane %v4330, 1
    %v4541 = vrot.slane %v4331, 1
    %v4542 = vsel %vm435, %v4540, %v4541
    %v4543 = vrot.slane %v4332, 1
    %v4544 = vsel %vm435, %v4541, %v4543
    %v4545 = vrot.slane %v4333, 1
    %v4546 = vrot.slane %v4334, 1
    %v4547 = vsel %vm435, %v4545, %v4546
    %v4548 = vrot.slane %v4335, 1
    %v4549 = vsel %vm435, %v4546, %v4548
    %v4550 = vrot.slane %v4336, 1
    %v4551 = vrot.slane %v4337, 1
    %v4552 = vsel %vm435, %v4550, %v4551
    %v4553 = vrot.slane %v4338, 1
    %v4554 = vsel %vm435, %v4551, %v4553
    %v4555 = vrot.slane %v4339, 1
    %v4556 = vrot.slane %v4340, 1
    %v4557 = vsel %vm435, %v4555, %v4556
    %v4558 = vrot.slane %v4341, 1
    %v4559 = vsel %vm435, %v4556, %v4558
    %v4560 = vrot.slane %v4342, 1
    %v4561 = vrot.slane %v4343, 1
    %v4562 = vsel %vm435, %v4560, %v4561
    %v4563 = vrot.slane %v4344, 1
    %v4564 = vsel %vm435, %v4561, %v4563
    %v4565 = vrot.slane %v4345, 1
    %v4566 = vrot.slane %v4346, 1
    %v4567 = vsel %vm435, %v4565, %v4566
    %v4568 = vrot.slane %v4347, 1
    %v4569 = vsel %vm435, %v4566, %v4568
    %v4570 = vrot.slane %v4348, 1
    %v4571 = vrot.slane %v4349, 1
    %v4572 = vsel %vm435, %v4570, %v4571
    %v4573 = vrot.slane %v4350, 1
    %v4574 = vsel %vm435, %v4571, %v4573
    %v4575 = vrot.slane %v4351, 1
    %v4576 = vrot.slane %v4352, 1
    %v4577 = vsel %vm435, %v4575, %v4576
    %v4578 = vrot.slane %v4353, 1
    %v4579 = vsel %vm435, %v4576, %v4578
    %v4580 = vrot.slane %v4354, 1
    %v4581 = vrot.slane %v4355, 1
    %v4582 = vsel %vm435, %v4580, %v4581
    %v4583 = vrot.slane %v4356, 1
    %v4584 = vsel %vm435, %v4581, %v4583
    %v4585 = vrot.slane %v4357, 1
    %v4586 = vrot.slane %v4358, 1
    %v4587 = vsel %vm435, %v4585, %v4586
    %v4588 = vrot.slane %v4359, 1
    %v4589 = vsel %vm435, %v4586, %v4588
    %v4590 = vrot.slane %v4360, 1
    %v4591 = vrot.slane %v4361, 1
    %v4592 = vsel %vm435, %v4590, %v4591
    %v4593 = vrot.slane %v4362, 1
    %v4594 = vsel %vm435, %v4591, %v4593
    %v4595 = vrot.slane %v4363, 1
    %v4596 = vrot.slane %v4364, 1
    %v4597 = vsel %vm435, %v4595, %v4596
    %v4598 = vrot.slane %v4365, 1
    %v4599 = vsel %vm435, %v4596, %v4598
    %v4600 = vrot.slane %v4366, 1
    %v4601 = vrot.slane %v4367, 1
    %v4602 = vsel %vm435, %v4600, %v4601
    %v4603 = vrot.slane %v4368, 1
    %v4604 = vsel %vm435, %v4601, %v4603
    %v4605 = vrot.slane %v4369, 1
    %v4606 = vrot.slane %v4370, 1
    %v4607 = vsel %vm435, %v4605, %v4606
    %v4608 = vrot.slane %v4371, 1
    %v4609 = vsel %vm435, %v4606, %v4608
    %v4610 = vrot.slane %v4372, 1
    %v4611 = vrot.slane %v4373, 1
    %v4612 = vsel %vm435, %v4610, %v4611
    %v4613 = vrot.slane %v4374, 1
    %v4614 = vsel %vm435, %v4611, %v4613
    %v4615 = vrot.slane %v4375, 1
    %v4616 = vrot.slane %v4376, 1
    %v4617 = vsel %vm435, %v4615, %v4616
    %v4618 = vrot.slane %v4377, 1
    %v4619 = vsel %vm435, %v4616, %v4618
    %v4620 = vrot.slane %v4378, 1
    %v4621 = vrot.slane %v4379, 1
    %v4622 = vsel %vm435, %v4620, %v4621
    %v4623 = vrot.slane %v4380, 1
    %v4624 = vsel %vm435, %v4621, %v4623
    %v4625 = vrot.slane %v4381, 1
    %v4626 = vrot.slane %v4382, 1
    %v4627 = vsel %vm435, %v4625, %v4626
    %v4628 = vrot.slane %v4383, 1
    %v4629 = vsel %vm435, %v4626, %v4628
    %v4630 = vrot.slane %v4384, 1
    %v4631 = vrot.slane %v4385, 1
    %v4632 = vsel %vm435, %v4630, %v4631
    %v4633 = vrot.slane %v4386, 1
    %v4634 = vsel %vm435, %v4631, %v4633
    %v4635 = vrot.slane %v4387, 1
    %v4636 = vrot.slane %v4388, 1
    %v4637 = vsel %vm435, %v4635, %v4636
    %v4638 = vrot.slane %v4389, 1
    %v4639 = vsel %vm435, %v4636, %v4638
    %v4640 = vrot.slane %v4390, 1
    %v4641 = vrot.slane %v4391, 1
    %v4642 = vsel %vm435, %v4640, %v4641
    %v4643 = vrot.slane %v4392, 1
    %v4644 = vsel %vm435, %v4641, %v4643
    %v4645 = vrot.slane %v4393, 1
    %v4646 = vrot.slane %v4394, 1
    %v4647 = vsel %vm435, %v4645, %v4646
    %v4648 = vrot.slane %v4395, 1
    %v4649 = vsel %vm435, %v4646, %v4648
    %v4650 = vrot.slane %v4396, 1
    %v4651 = vrot.slane %v4397, 1
    %v4652 = vsel %vm435, %v4650, %v4651
    %v4653 = vrot.slane %v4398, 1
    %v4654 = vsel %vm435, %v4651, %v4653
    %4719 = vxpose.xlu0.b32.start [1/16] %v4497, 128
    %4720 = vxpose.xlu0.b32.cont [2/16] %v4499, 128
    %4721 = vxpose.xlu0.b32.cont [3/16] %v4502, 128
    %4722 = vxpose.xlu0.b32.cont [4/16] %v4504, 128
    %4723 = vxpose.xlu0.b32.cont [5/16] %v4507, 128
    %4724 = vxpose.xlu0.b32.cont [6/16] %v4509, 128
    %4725 = vxpose.xlu0.b32.cont [7/16] %v4512, 128
    %4726 = vxpose.xlu0.b32.cont [8/16] %v4514, 128
    %4727 = vxpose.xlu0.b32.cont [9/16] %v4517, 128
    %4728 = vxpose.xlu0.b32.cont [10/16] %v4519, 128
    %4729 = vxpose.xlu0.b32.cont [11/16] %v4522, 128
    %4730 = vxpose.xlu0.b32.cont [12/16] %v4524, 128
    %4731 = vxpose.xlu0.b32.cont [13/16] %v4527, 128
    %4732 = vxpose.xlu0.b32.cont [14/16] %v4529, 128
    %4733 = vxpose.xlu0.b32.cont [15/16] %v4532, 128
    %4734 = vxpose.xlu0.b32.end [16/16] %v4534, 128
    %v4735 = vpop.trf.xlu0
    %v4736 = vpop.trf.xlu0
    %v4737 = vpop.trf.xlu0
    %v4738 = vpop.trf.xlu0
    %v4739 = vpop.trf.xlu0
    %v4740 = vpop.trf.xlu0
    %v4741 = vpop.trf.xlu0
    %v4742 = vpop.trf.xlu0
    %v4743 = vpop.trf.xlu0
    %v4744 = vpop.trf.xlu0
    %v4745 = vpop.trf.xlu0
    %v4746 = vpop.trf.xlu0
    %v4747 = vpop.trf.xlu0
    %v4748 = vpop.trf.xlu0
    %v4749 = vpop.trf.xlu0
    %v4750 = vpop.trf.xlu0
    %4751 = vxpose.xlu0.b32.start [1/16] %v4537, 128
    %4752 = vxpose.xlu0.b32.cont [2/16] %v4539, 128
    %4753 = vxpose.xlu0.b32.cont [3/16] %v4542, 128
    %4754 = vxpose.xlu0.b32.cont [4/16] %v4544, 128
    %4755 = vxpose.xlu0.b32.cont [5/16] %v4547, 128
    %4756 = vxpose.xlu0.b32.cont [6/16] %v4549, 128
    %4757 = vxpose.xlu0.b32.cont [7/16] %v4552, 128
    %4758 = vxpose.xlu0.b32.cont [8/16] %v4554, 128
    %4759 = vxpose.xlu0.b32.cont [9/16] %v4557, 128
    %4760 = vxpose.xlu0.b32.cont [10/16] %v4559, 128
    %4761 = vxpose.xlu0.b32.cont [11/16] %v4562, 128
    %4762 = vxpose.xlu0.b32.cont [12/16] %v4564, 128
    %4763 = vxpose.xlu0.b32.cont [13/16] %v4567, 128
    %4764 = vxpose.xlu0.b32.cont [14/16] %v4569, 128
    %4765 = vxpose.xlu0.b32.cont [15/16] %v4572, 128
    %4766 = vxpose.xlu0.b32.end [16/16] %v4574, 128
    %v4767 = vpop.trf.xlu0
    %v4768 = vpop.trf.xlu0
    %v4769 = vpop.trf.xlu0
    %v4770 = vpop.trf.xlu0
    %v4771 = vpop.trf.xlu0
    %v4772 = vpop.trf.xlu0
    %v4773 = vpop.trf.xlu0
    %v4774 = vpop.trf.xlu0
    %v4775 = vpop.trf.xlu0
    %v4776 = vpop.trf.xlu0
    %v4777 = vpop.trf.xlu0
    %v4778 = vpop.trf.xlu0
    %v4779 = vpop.trf.xlu0
    %v4780 = vpop.trf.xlu0
    %v4781 = vpop.trf.xlu0
    %v4782 = vpop.trf.xlu0
    %v4785 = vcombine.low %v4735, %v4767
    %4787 = vst [vmem:[%s4] sm:$0xff] %v4785
    %4788 = vxpose.xlu0.b32.start [1/16] %v4577, 128
    %4789 = vxpose.xlu0.b32.cont [2/16] %v4579, 128
    %4790 = vxpose.xlu0.b32.cont [3/16] %v4582, 128
    %4791 = vxpose.xlu0.b32.cont [4/16] %v4584, 128
    %4792 = vxpose.xlu0.b32.cont [5/16] %v4587, 128
    %4793 = vxpose.xlu0.b32.cont [6/16] %v4589, 128
    %4794 = vxpose.xlu0.b32.cont [7/16] %v4592, 128
    %4795 = vxpose.xlu0.b32.cont [8/16] %v4594, 128
    %4796 = vxpose.xlu0.b32.cont [9/16] %v4597, 128
    %4797 = vxpose.xlu0.b32.cont [10/16] %v4599, 128
    %4798 = vxpose.xlu0.b32.cont [11/16] %v4602, 128
    %4799 = vxpose.xlu0.b32.cont [12/16] %v4604, 128
    %4800 = vxpose.xlu0.b32.cont [13/16] %v4607, 128
    %4801 = vxpose.xlu0.b32.cont [14/16] %v4609, 128
    %4802 = vxpose.xlu0.b32.cont [15/16] %v4612, 128
    %4803 = vxpose.xlu0.b32.end [16/16] %v4614, 128
    %v4804 = vpop.trf.xlu0
    %v4805 = vpop.trf.xlu0
    %v4806 = vpop.trf.xlu0
    %v4807 = vpop.trf.xlu0
    %v4808 = vpop.trf.xlu0
    %v4809 = vpop.trf.xlu0
    %v4810 = vpop.trf.xlu0
    %v4811 = vpop.trf.xlu0
    %v4812 = vpop.trf.xlu0
    %v4813 = vpop.trf.xlu0
    %v4814 = vpop.trf.xlu0
    %v4815 = vpop.trf.xlu0
    %v4816 = vpop.trf.xlu0
    %v4817 = vpop.trf.xlu0
    %v4818 = vpop.trf.xlu0
    %v4819 = vpop.trf.xlu0
    %4820 = vxpose.xlu0.b32.start [1/16] %v4617, 128
    %4821 = vxpose.xlu0.b32.cont [2/16] %v4619, 128
    %4822 = vxpose.xlu0.b32.cont [3/16] %v4622, 128
    %4823 = vxpose.xlu0.b32.cont [4/16] %v4624, 128
    %4824 = vxpose.xlu0.b32.cont [5/16] %v4627, 128
    %4825 = vxpose.xlu0.b32.cont [6/16] %v4629, 128
    %4826 = vxpose.xlu0.b32.cont [7/16] %v4632, 128
    %4827 = vxpose.xlu0.b32.cont [8/16] %v4634, 128
    %4828 = vxpose.xlu0.b32.cont [9/16] %v4637, 128
    %4829 = vxpose.xlu0.b32.cont [10/16] %v4639, 128
    %4830 = vxpose.xlu0.b32.cont [11/16] %v4642, 128
    %4831 = vxpose.xlu0.b32.cont [12/16] %v4644, 128
    %4832 = vxpose.xlu0.b32.cont [13/16] %v4647, 128
    %4833 = vxpose.xlu0.b32.cont [14/16] %v4649, 128
    %4834 = vxpose.xlu0.b32.cont [15/16] %v4652, 128
    %4835 = vxpose.xlu0.b32.end [16/16] %v4654, 128
    %v4836 = vpop.trf.xlu0
    %v4837 = vpop.trf.xlu0
    %v4838 = vpop.trf.xlu0
    %v4839 = vpop.trf.xlu0
    %v4840 = vpop.trf.xlu0
    %v4841 = vpop.trf.xlu0
    %v4842 = vpop.trf.xlu0
    %v4843 = vpop.trf.xlu0
    %v4844 = vpop.trf.xlu0
    %v4845 = vpop.trf.xlu0
    %v4846 = vpop.trf.xlu0
    %v4847 = vpop.trf.xlu0
    %v4848 = vpop.trf.xlu0
    %v4849 = vpop.trf.xlu0
    %v4850 = vpop.trf.xlu0
    %v4851 = vpop.trf.xlu0
    %v4854 = vcombine.low %v4804, %v4836
    %s4856 = scalar_lea.vmem %s4, 8
    %4857 = vst [vmem:[%s4856] sm:$0xff] %v4854
    // Predicated region
    $region22: #{mixed_op_forward.3} parent=1 // pred_check
      _
    $region23: #{mixed_op_forward.3} parent=1 // pred_check_branch
      %4859 = sbr.rel (0) target = $region25
    $region24: #{mixed_op_forward.3} parent=1 // pred_region
      _
    $region25: #{mixed_op_forward.3} parent=1 // pred_fallthru
      _
    // Predicated region
    $region26: #{mixed_op_forward.3} parent=1 // pred_check
      _
    $region27: #{mixed_op_forward.3} parent=1 // pred_check_branch
      %4861 = sbr.rel (0) target = $region29
    $region28: #{mixed_op_forward.3} parent=1 // pred_region
      _
    $region29: #{mixed_op_forward.3} parent=1 // pred_fallthru
      _
    %4862 = vsyncpa [#allocation3], 1

// kernel: mixed_op_forward.2
$region0: #{mixed_op_forward.2}
  #allocation0 [shape = 'u32[]', space=smem, size = 0x4, offset = 0x4, fixed_abs, tag = 'smem constant byte address 0x4 - core index']
  #allocation1 [shape = 'u32[144,128]{1,0:T(1,128)}', space=vmem, size = 0x12000, scoped, tag = 'internal scratch']
  %s0 = inlined_call_operand.vmem [shape: f32[2,18,18,4], index: 0, kind: input, shape index: {}]
  %s1 = inlined_call_operand.vmem [shape: bf16[9,4,4], index: 1, kind: input, shape index: {}]
  %s2 = inlined_call_operand.vmem [shape: f32[1,6,4], index: 2, kind: output, shape index: {0}]
  %s3 = inlined_call_operand.vmem [shape: bf16[2,256,4], index: 3, kind: output, shape index: {1}]
  %4 = xla_tuple %s2, %s3
  %s5 = sld [smem:[#allocation0]]
  $region30: #{mixed_op_forward.2} parent=0
    _
  %s7 = ssub.s32 1, %s5
  %s8 = scalar_select 0, %s7, %s5
  // Predicated region
  $region2: #{mixed_op_forward.2} parent=0 // pred_check
    _
  $region3: #{mixed_op_forward.2} parent=0 // pred_check_branch
    %10 = sbr.rel (0) target = $region5
  $region4: #{mixed_op_forward.2} parent=0 // pred_region
    %s11 = sadd.s32 0, 0
    %s12 = smul.u32 2, %s11
    %p13 = scmp.lt.s32.totalorder %s12, 1
    %s14 = scalar_select %p13, %s12, 1
    %s15 = smul.addr %s14, 54
    %s16 = smul.addr %s15, 8
    %s17 = scalar_lea.vmem %s0, %s16
    %s18 = sadd.s32 0, 0
    %s19 = smul.u32 2, %s18
  $region5: #{mixed_op_forward.2} parent=0 // pred_fallthru
    _
  // Predicated region
  $region6: #{mixed_op_forward.2} parent=0 // pred_check
    _
  $region7: #{mixed_op_forward.2} parent=0 // pred_check_branch
    %21 = sbr.rel (0) target = $region9
  $region8: #{mixed_op_forward.2} parent=0 // pred_region
    _
  $region9: #{mixed_op_forward.2} parent=0 // pred_fallthru
    _
  %s22 = sadd.s32 0, 0
  %s23 = smul.u32 2, %s22
  %p24 = scmp.lt.s32.totalorder %s23, 1
  %s25 = scalar_select %p24, %s23, 1
  %s26 = smul.addr %s25, 54
  %s27 = smul.addr %s26, 8
  %s28 = scalar_lea.vmem %s0, %s27
  %s29 = sadd.s32 0, 0
  %s30 = smul.u32 2, %s29
  %p31 = scmp.lt.s32.totalorder %s30, 1
  %s32 = scalar_select %p31, %s30, 1
  %s33 = smul.addr %s32, 32
  %s34 = smul.addr %s33, 4
  %s35 = scalar_lea.vmem %s3, %s34
  %s36 = sadd.s32 0, 0
  %s37 = smul.u32 2, %s36
  %p38 = scmp.lt.s32.totalorder %s37, 1
  %s39 = scalar_select %p38, %s37, 1
  %s40 = smul.addr %s39, 54
  %s41 = smul.addr %s40, 8
  %s42 = scalar_lea.vmem %s0, %s41
  %s43 = sadd.s32 0, 0
  %s44 = smul.u32 2, %s43
  %s45 = sadd.s32 0, 0
  %s46 = smul.u32 2, %s45
  %p47 = scmp.lt.s32.totalorder %s46, 1
  %s48 = scalar_select %p47, %s46, 1
  %s49 = smul.addr %s48, 32
  %s50 = smul.addr %s49, 4
  %s51 = scalar_lea.vmem %s3, %s50
  %s52 = sadd.s32 0, 0
  %s53 = smul.u32 2, %s52
  %p55 = scmp.eq.s32.totalorder 0, 0
  // Predicated region
  $region10: #{mixed_op_forward.2} parent=0 // pred_check
    %p56 = pneg %p55
  $region11: #{mixed_op_forward.2} parent=0 // pred_check_branch
    %58 = sbr.rel (%p56) target = $region13
  $region12: #{mixed_op_forward.2} parent=0 // pred_region
    %vm59 = vcmask 29696
    %60 = vst.msk [vmem:[%s2] sm:$0x3f] %vm59, 0.0
  $region13: #{mixed_op_forward.2} parent=0 // pred_fallthru
    _
  %v61 = vld [vmem:[%s42] sm:$0xff]
  %v62 = vld [vmem:[%s42 + $0x8] sm:$0xff]
  %v63 = vld [vmem:[%s42 + $0x10] sm:$0x3]
  %v64 = vld [vmem:[%s42 + $0x18] sm:$0xff]
  %v65 = vld [vmem:[%s42 + $0x20] sm:$0xff]
  %v66 = vld [vmem:[%s42 + $0x28] sm:$0x3]
  %v67 = vld [vmem:[%s42 + $0x30] sm:$0xff]
  %v68 = vld [vmem:[%s42 + $0x38] sm:$0xff]
  %v69 = vld [vmem:[%s42 + $0x40] sm:$0x3]
  %v70 = vld [vmem:[%s42 + $0x48] sm:$0xff]
  %v71 = vld [vmem:[%s42 + $0x50] sm:$0xff]
  %v72 = vld [vmem:[%s42 + $0x58] sm:$0x3]
  %v73 = vld [vmem:[%s42 + $0x60] sm:$0xff]
  %v74 = vld [vmem:[%s42 + $0x68] sm:$0xff]
  %v75 = vld [vmem:[%s42 + $0x70] sm:$0x3]
  %v76 = vld [vmem:[%s42 + $0x78] sm:$0xff]
  %v77 = vld [vmem:[%s42 + $0x80] sm:$0xff]
  %v78 = vld [vmem:[%s42 + $0x88] sm:$0x3]
  %v79 = vld [vmem:[%s42 + $0x90] sm:$0xff]
  %v80 = vld [vmem:[%s42 + $0x98] sm:$0xff]
  %v81 = vld [vmem:[%s42 + $0xa0] sm:$0x3]
  %v82 = vld [vmem:[%s42 + $0xa8] sm:$0xff]
  %v83 = vld [vmem:[%s42 + $0xb0] sm:$0xff]
  %v84 = vld [vmem:[%s42 + $0xb8] sm:$0x3]
  %v85 = vld [vmem:[%s42 + $0xc0] sm:$0xff]
  %v86 = vld [vmem:[%s42 + $0xc8] sm:$0xff]
  %v87 = vld [vmem:[%s42 + $0xd0] sm:$0x3]
  %v88 = vld [vmem:[%s42 + $0xd8] sm:$0xff]
  %v89 = vld [vmem:[%s42 + $0xe0] sm:$0xff]
  %v90 = vld [vmem:[%s42 + $0xe8] sm:$0x3]
  %v91 = vld [vmem:[%s42 + $0xf0] sm:$0xff]
  %v92 = vld [vmem:[%s42 + $0xf8] sm:$0xff]
  %v93 = vld [vmem:[%s42 + $0x100] sm:$0x3]
  %v94 = vld [vmem:[%s42 + $0x108] sm:$0xff]
  %v95 = vld [vmem:[%s42 + $0x110] sm:$0xff]
  %v96 = vld [vmem:[%s42 + $0x118] sm:$0x3]
  %v97 = vld [vmem:[%s42 + $0x120] sm:$0xff]
  %v98 = vld [vmem:[%s42 + $0x128] sm:$0xff]
  %v99 = vld [vmem:[%s42 + $0x130] sm:$0x3]
  %v100 = vld [vmem:[%s42 + $0x138] sm:$0xff]
  %v101 = vld [vmem:[%s42 + $0x140] sm:$0xff]
  %v102 = vld [vmem:[%s42 + $0x148] sm:$0x3]
  %v103 = vld [vmem:[%s42 + $0x150] sm:$0xff]
  %v104 = vld [vmem:[%s42 + $0x158] sm:$0xff]
  %v105 = vld [vmem:[%s42 + $0x160] sm:$0x3]
  %v106 = vld [vmem:[%s42 + $0x168] sm:$0xff]
  %v107 = vld [vmem:[%s42 + $0x170] sm:$0xff]
  %v108 = vld [vmem:[%s42 + $0x178] sm:$0x3]
  %v109 = vld [vmem:[%s42 + $0x180] sm:$0xff]
  %v110 = vld [vmem:[%s42 + $0x188] sm:$0xff]
  %v111 = vld [vmem:[%s42 + $0x190] sm:$0x3]
  %v112 = vld [vmem:[%s42 + $0x198] sm:$0xff]
  %v113 = vld [vmem:[%s42 + $0x1a0] sm:$0xff]
  %v114 = vld [vmem:[%s42 + $0x1a8] sm:$0x3]
  %v115 = vld [vmem:[%s42 + $0x1b0] sm:$0xff]
  %v116 = vld [vmem:[%s42 + $0x1b8] sm:$0xff]
  %v117 = vld [vmem:[%s42 + $0x1c0] sm:$0x3]
  %v118 = vld [vmem:[%s42 + $0x1c8] sm:$0xff]
  %v119 = vld [vmem:[%s42 + $0x1d0] sm:$0xff]
  %v120 = vld [vmem:[%s42 + $0x1d8] sm:$0x3]
  %v121 = vld [vmem:[%s42 + $0x1e0] sm:$0xff]
  %v122 = vld [vmem:[%s42 + $0x1e8] sm:$0xff]
  %v123 = vld [vmem:[%s42 + $0x1f0] sm:$0x3]
  %v124 = vld [vmem:[%s42 + $0x1f8] sm:$0xff]
  %v125 = vld [vmem:[%s42 + $0x200] sm:$0xff]
  %v126 = vld [vmem:[%s42 + $0x208] sm:$0x3]
  %v127 = vld [vmem:[%s42 + $0x210] sm:$0xff]
  %v128 = vld [vmem:[%s42 + $0x218] sm:$0xff]
  %v129 = vld [vmem:[%s42 + $0x220] sm:$0x3]
  %v130 = vld [vmem:[%s42 + $0x228] sm:$0xff]
  %v131 = vld [vmem:[%s42 + $0x230] sm:$0xff]
  %v132 = vld [vmem:[%s42 + $0x238] sm:$0x3]
  %v133 = vld [vmem:[%s42 + $0x240] sm:$0xff]
  %v134 = vld [vmem:[%s42 + $0x248] sm:$0xff]
  %v135 = vld [vmem:[%s42 + $0x250] sm:$0x3]
  %v136 = vld [vmem:[%s42 + $0x258] sm:$0xff]
  %v137 = vld [vmem:[%s42 + $0x260] sm:$0xff]
  %v138 = vld [vmem:[%s42 + $0x268] sm:$0x3]
  %v139 = vld [vmem:[%s42 + $0x270] sm:$0xff]
  %v140 = vld [vmem:[%s42 + $0x278] sm:$0xff]
  %v141 = vld [vmem:[%s42 + $0x280] sm:$0x3]
  %v142 = vld [vmem:[%s42 + $0x288] sm:$0xff]
  %v143 = vld [vmem:[%s42 + $0x290] sm:$0xff]
  %v144 = vld [vmem:[%s42 + $0x298] sm:$0x3]
  %v145 = vld [vmem:[%s42 + $0x2a0] sm:$0xff]
  %v146 = vld [vmem:[%s42 + $0x2a8] sm:$0xff]
  %v147 = vld [vmem:[%s42 + $0x2b0] sm:$0x3]
  %v148 = vld [vmem:[%s42 + $0x2b8] sm:$0xff]
  %v149 = vld [vmem:[%s42 + $0x2c0] sm:$0xff]
  %v150 = vld [vmem:[%s42 + $0x2c8] sm:$0x3]
  %v151 = vld [vmem:[%s42 + $0x2d0] sm:$0xff]
  %v152 = vld [vmem:[%s42 + $0x2d8] sm:$0xff]
  %v153 = vld [vmem:[%s42 + $0x2e0] sm:$0x3]
  %v154 = vld [vmem:[%s42 + $0x2e8] sm:$0xff]
  %v155 = vld [vmem:[%s42 + $0x2f0] sm:$0xff]
  %v156 = vld [vmem:[%s42 + $0x2f8] sm:$0x3]
  %v157 = vld [vmem:[%s42 + $0x300] sm:$0xff]
  %v158 = vld [vmem:[%s42 + $0x308] sm:$0xff]
  %v159 = vld [vmem:[%s42 + $0x310] sm:$0x3]
  %v160 = vld [vmem:[%s42 + $0x318] sm:$0xff]
  %v161 = vld [vmem:[%s42 + $0x320] sm:$0xff]
  %v162 = vld [vmem:[%s42 + $0x328] sm:$0x3]
  %v163 = vld [vmem:[%s42 + $0x330] sm:$0xff]
  %v164 = vld [vmem:[%s42 + $0x338] sm:$0xff]
  %v165 = vld [vmem:[%s42 + $0x340] sm:$0x3]
  %v166 = vld [vmem:[%s42 + $0x348] sm:$0xff]
  %v167 = vld [vmem:[%s42 + $0x350] sm:$0xff]
  %v168 = vld [vmem:[%s42 + $0x358] sm:$0x3]
  %v169 = vld [vmem:[%s1] sm:$0x3]
  %v170 = vld [vmem:[%s1 + $0x2] sm:$0x3]
  %v171 = vld [vmem:[%s1 + $0x4] sm:$0x3]
  %v172 = vld [vmem:[%s1 + $0x6] sm:$0x3]
  %v173 = vld [vmem:[%s1 + $0x8] sm:$0x3]
  %v174 = vld [vmem:[%s1 + $0xa] sm:$0x3]
  %v175 = vld [vmem:[%s1 + $0xc] sm:$0x3]
  %v176 = vld [vmem:[%s1 + $0xe] sm:$0x3]
  %v177 = vld [vmem:[%s1 + $0x10] sm:$0x3]
  %v178 = vlaneseq
  %v179 = vshrl.u32 %v178, 7
  %v180 = vadd.s32 %v179, 8
  %v181 = vadd.s32 %v179, 16
  %vm182 = vcmp.eq.s32.totalorder %v179, 0
  %vm183 = vcmp.eq.s32.totalorder %v180, 0
  %vm184 = vcmp.eq.s32.totalorder %v181, 0
  %vm185 = vcmp.eq.s32.totalorder %v179, 17
  %vm186 = vcmp.eq.s32.totalorder %v180, 17
  %vm187 = vcmp.eq.s32.totalorder %v181, 17
  %vm188 = vmor %vm182, %vm185
  %vm189 = vmor %vm183, %vm186
  %vm190 = vmor %vm184, %vm187
  %v191 = vadd.f32 %v61, 0.0
  %v192 = vadd.f32 %v62, 0.0
  %v193 = vadd.f32 %v64, 0.0
  %v194 = vadd.f32 %v65, 0.0
  %v195 = vadd.f32 %v67, 0.0
  %v196 = vadd.f32 %v68, 0.0
  %v197 = vadd.f32 %v70, 0.0
  %v198 = vadd.f32 %v71, 0.0
  %v199 = vadd.f32 %v73, 0.0
  %v200 = vadd.f32 %v74, 0.0
  %v201 = vadd.f32 %v76, 0.0
  %v202 = vadd.f32 %v77, 0.0
  %v203 = vadd.f32 %v79, 0.0
  %v204 = vadd.f32 %v80, 0.0
  %v205 = vadd.f32 %v82, 0.0
  %v206 = vadd.f32 %v83, 0.0
  %v207 = vadd.f32 %v85, 0.0
  %v208 = vadd.f32 %v86, 0.0
  %v209 = vadd.f32 %v88, 0.0
  %v210 = vadd.f32 %v89, 0.0
  %v211 = vadd.f32 %v91, 0.0
  %v212 = vadd.f32 %v92, 0.0
  %v213 = vadd.f32 %v94, 0.0
  %v214 = vadd.f32 %v95, 0.0
  %v215 = vadd.f32 %v97, 0.0
  %v216 = vadd.f32 %v98, 0.0
  %v217 = vadd.f32 %v100, 0.0
  %v218 = vadd.f32 %v101, 0.0
  %v219 = vadd.f32 %v103, 0.0
  %v220 = vadd.f32 %v104, 0.0
  %v221 = vadd.f32 %v106, 0.0
  %v222 = vadd.f32 %v107, 0.0
  %v223 = vadd.f32 %v115, 0.0
  %v224 = vadd.f32 %v116, 0.0
  %v225 = vadd.f32 %v118, 0.0
  %v226 = vadd.f32 %v119, 0.0
  %v227 = vadd.f32 %v121, 0.0
  %v228 = vadd.f32 %v122, 0.0
  %v229 = vadd.f32 %v124, 0.0
  %v230 = vadd.f32 %v125, 0.0
  %v231 = vadd.f32 %v127, 0.0
  %v232 = vadd.f32 %v128, 0.0
  %v233 = vadd.f32 %v130, 0.0
  %v234 = vadd.f32 %v131, 0.0
  %v235 = vadd.f32 %v133, 0.0
  %v236 = vadd.f32 %v134, 0.0
  %v237 = vadd.f32 %v136, 0.0
  %v238 = vadd.f32 %v137, 0.0
  %v239 = vadd.f32 %v139, 0.0
  %v240 = vadd.f32 %v140, 0.0
  %v241 = vadd.f32 %v142, 0.0
  %v242 = vadd.f32 %v143, 0.0
  %v243 = vadd.f32 %v145, 0.0
  %v244 = vadd.f32 %v146, 0.0
  %v245 = vadd.f32 %v148, 0.0
  %v246 = vadd.f32 %v149, 0.0
  %v247 = vadd.f32 %v151, 0.0
  %v248 = vadd.f32 %v152, 0.0
  %v249 = vadd.f32 %v154, 0.0
  %v250 = vadd.f32 %v155, 0.0
  %v251 = vadd.f32 %v157, 0.0
  %v252 = vadd.f32 %v158, 0.0
  %v253 = vadd.f32 %v160, 0.0
  %v254 = vadd.f32 %v161, 0.0
  %v255 = vmax.f32 %v61, 0.0
  %v256 = vmax.f32 %v62, 0.0
  %v257 = vmax.f32 %v64, 0.0
  %v258 = vmax.f32 %v65, 0.0
  %v259 = vmax.f32 %v67, 0.0
  %v260 = vmax.f32 %v68, 0.0
  %v261 = vmax.f32 %v70, 0.0
  %v262 = vmax.f32 %v71, 0.0
  %v263 = vmax.f32 %v73, 0.0
  %v264 = vmax.f32 %v74, 0.0
  %v265 = vmax.f32 %v76, 0.0
  %v266 = vmax.f32 %v77, 0.0
  %v267 = vmax.f32 %v79, 0.0
  %v268 = vmax.f32 %v80, 0.0
  %v269 = vmax.f32 %v82, 0.0
  %v270 = vmax.f32 %v83, 0.0
  %v271 = vmax.f32 %v85, 0.0
  %v272 = vmax.f32 %v86, 0.0
  %v273 = vmax.f32 %v88, 0.0
  %v274 = vmax.f32 %v89, 0.0
  %v275 = vmax.f32 %v91, 0.0
  %v276 = vmax.f32 %v92, 0.0
  %v277 = vmax.f32 %v94, 0.0
  %v278 = vmax.f32 %v95, 0.0
  %v279 = vmax.f32 %v97, 0.0
  %v280 = vmax.f32 %v98, 0.0
  %v281 = vmax.f32 %v100, 0.0
  %v282 = vmax.f32 %v101, 0.0
  %v283 = vmax.f32 %v103, 0.0
  %v284 = vmax.f32 %v104, 0.0
  %v285 = vmax.f32 %v106, 0.0
  %v286 = vmax.f32 %v107, 0.0
  %v287 = vmax.f32 %v115, 0.0
  %v288 = vmax.f32 %v116, 0.0
  %v289 = vmax.f32 %v118, 0.0
  %v290 = vmax.f32 %v119, 0.0
  %v291 = vmax.f32 %v121, 0.0
  %v292 = vmax.f32 %v122, 0.0
  %v293 = vmax.f32 %v124, 0.0
  %v294 = vmax.f32 %v125, 0.0
  %v295 = vmax.f32 %v127, 0.0
  %v296 = vmax.f32 %v128, 0.0
  %v297 = vmax.f32 %v130, 0.0
  %v298 = vmax.f32 %v131, 0.0
  %v299 = vmax.f32 %v133, 0.0
  %v300 = vmax.f32 %v134, 0.0
  %v301 = vmax.f32 %v136, 0.0
  %v302 = vmax.f32 %v137, 0.0
  %v303 = vmax.f32 %v139, 0.0
  %v304 = vmax.f32 %v140, 0.0
  %v305 = vmax.f32 %v142, 0.0
  %v306 = vmax.f32 %v143, 0.0
  %v307 = vmax.f32 %v145, 0.0
  %v308 = vmax.f32 %v146, 0.0
  %v309 = vmax.f32 %v148, 0.0
  %v310 = vmax.f32 %v149, 0.0
  %v311 = vmax.f32 %v151, 0.0
  %v312 = vmax.f32 %v152, 0.0
  %v313 = vmax.f32 %v154, 0.0
  %v314 = vmax.f32 %v155, 0.0
  %v315 = vmax.f32 %v157, 0.0
  %v316 = vmax.f32 %v158, 0.0
  %v317 = vmax.f32 %v160, 0.0
  %v318 = vmax.f32 %v161, 0.0
  %v319 = vpack.c.bf16 %v256, %v255
  %v320 = vpack.c.bf16 %v258, %v257
  %v321 = vpack.c.bf16 %v260, %v259
  %v322 = vpack.c.bf16 %v262, %v261
  %v323 = vpack.c.bf16 %v264, %v263
  %v324 = vpack.c.bf16 %v266, %v265
  %v325 = vpack.c.bf16 %v268, %v267
  %v326 = vpack.c.bf16 %v270, %v269
  %v327 = vpack.c.bf16 %v272, %v271
  %v328 = vpack.c.bf16 %v274, %v273
  %v329 = vpack.c.bf16 %v276, %v275
  %v330 = vpack.c.bf16 %v278, %v277
  %v331 = vpack.c.bf16 %v280, %v279
  %v332 = vpack.c.bf16 %v282, %v281
  %v333 = vpack.c.bf16 %v284, %v283
  %v334 = vpack.c.bf16 %v286, %v285
  %v335 = vpack.c.bf16 %v288, %v287
  %v336 = vpack.c.bf16 %v290, %v289
  %v337 = vpack.c.bf16 %v292, %v291
  %v338 = vpack.c.bf16 %v294, %v293
  %v339 = vpack.c.bf16 %v296, %v295
  %v340 = vpack.c.bf16 %v298, %v297
  %v341 = vpack.c.bf16 %v300, %v299
  %v342 = vpack.c.bf16 %v302, %v301
  %v343 = vpack.c.bf16 %v304, %v303
  %v344 = vpack.c.bf16 %v306, %v305
  %v345 = vpack.c.bf16 %v308, %v307
  %v346 = vpack.c.bf16 %v310, %v309
  %v347 = vpack.c.bf16 %v312, %v311
  %v348 = vpack.c.bf16 %v314, %v313
  %v349 = vpack.c.bf16 %v316, %v315
  %v350 = vpack.c.bf16 %v318, %v317
  %v351 = vsel %vm188, 1, 0
  %v352 = vsel %vm189, 1, 0
  %vm353 = vcmp.eq.s32.totalorder %v351, 1
  %vm354 = vcmp.eq.s32.totalorder %v352, 1
  %v355 = vsel %vm353, -3e+38, %v64
  %v356 = vsel %vm354, -3e+38, %v65
  %v357 = vsel %vm353, -3e+38, %v67
  %v358 = vsel %vm354, -3e+38, %v68
  %v359 = vsel %vm353, -3e+38, %v70
  %v360 = vsel %vm354, -3e+38, %v71
  %v361 = vsel %vm353, -3e+38, %v73
  %v362 = vsel %vm354, -3e+38, %v74
  %v363 = vsel %vm353, -3e+38, %v76
  %v364 = vsel %vm354, -3e+38, %v77
  %v365 = vsel %vm353, -3e+38, %v79
  %v366 = vsel %vm354, -3e+38, %v80
  %v367 = vsel %vm353, -3e+38, %v82
  %v368 = vsel %vm354, -3e+38, %v83
  %v369 = vsel %vm353, -3e+38, %v85
  %v370 = vsel %vm354, -3e+38, %v86
  %v371 = vsel %vm353, -3e+38, %v88
  %v372 = vsel %vm354, -3e+38, %v89
  %v373 = vsel %vm353, -3e+38, %v91
  %v374 = vsel %vm354, -3e+38, %v92
  %v375 = vsel %vm353, -3e+38, %v94
  %v376 = vsel %vm354, -3e+38, %v95
  %v377 = vsel %vm353, -3e+38, %v97
  %v378 = vsel %vm354, -3e+38, %v98
  %v379 = vsel %vm353, -3e+38, %v100
  %v380 = vsel %vm354, -3e+38, %v101
  %v381 = vsel %vm353, -3e+38, %v103
  %v382 = vsel %vm354, -3e+38, %v104
  %v383 = vsel %vm353, -3e+38, %v106
  %v384 = vsel %vm354, -3e+38, %v107
  %v385 = vsel %vm353, -3e+38, %v118
  %v386 = vsel %vm354, -3e+38, %v119
  %v387 = vsel %vm353, -3e+38, %v121
  %v388 = vsel %vm354, -3e+38, %v122
  %v389 = vsel %vm353, -3e+38, %v124
  %v390 = vsel %vm354, -3e+38, %v125
  %v391 = vsel %vm353, -3e+38, %v127
  %v392 = vsel %vm354, -3e+38, %v128
  %v393 = vsel %vm353, -3e+38, %v130
  %v394 = vsel %vm354, -3e+38, %v131
  %v395 = vsel %vm353, -3e+38, %v133
  %v396 = vsel %vm354, -3e+38, %v134
  %v397 = vsel %vm353, -3e+38, %v136
  %v398 = vsel %vm354, -3e+38, %v137
  %v399 = vsel %vm353, -3e+38, %v139
  %v400 = vsel %vm354, -3e+38, %v140
  %v401 = vsel %vm353, -3e+38, %v142
  %v402 = vsel %vm354, -3e+38, %v143
  %v403 = vsel %vm353, -3e+38, %v145
  %v404 = vsel %vm354, -3e+38, %v146
  %v405 = vsel %vm353, -3e+38, %v148
  %v406 = vsel %vm354, -3e+38, %v149
  %v407 = vsel %vm353, -3e+38, %v151
  %v408 = vsel %vm354, -3e+38, %v152
  %v409 = vsel %vm353, -3e+38, %v154
  %v410 = vsel %vm354, -3e+38, %v155
  %v411 = vsel %vm353, -3e+38, %v157
  %v412 = vsel %vm354, -3e+38, %v158
  %v413 = vsel %vm353, -3e+38, %v160
  %v414 = vsel %vm354, -3e+38, %v161
  %v415 = vmax.f32 %v355, -3e+38
  %v416 = vmax.f32 %v356, -3e+38
  %v417 = vmax.f32 %v357, -3e+38
  %v418 = vmax.f32 %v358, -3e+38
  %v419 = vmax.f32 %v359, -3e+38
  %v420 = vmax.f32 %v360, -3e+38
  %v421 = vmax.f32 %v361, -3e+38
  %v422 = vmax.f32 %v362, -3e+38
  %v423 = vmax.f32 %v363, -3e+38
  %v424 = vmax.f32 %v364, -3e+38
  %v425 = vmax.f32 %v365, -3e+38
  %v426 = vmax.f32 %v366, -3e+38
  %v427 = vmax.f32 %v367, -3e+38
  %v428 = vmax.f32 %v368, -3e+38
  %v429 = vmax.f32 %v369, -3e+38
  %v430 = vmax.f32 %v370, -3e+38
  %v431 = vmax.f32 %v371, -3e+38
  %v432 = vmax.f32 %v372, -3e+38
  %v433 = vmax.f32 %v373, -3e+38
  %v434 = vmax.f32 %v374, -3e+38
  %v435 = vmax.f32 %v375, -3e+38
  %v436 = vmax.f32 %v376, -3e+38
  %v437 = vmax.f32 %v377, -3e+38
  %v438 = vmax.f32 %v378, -3e+38
  %v439 = vmax.f32 %v379, -3e+38
  %v440 = vmax.f32 %v380, -3e+38
  %v441 = vmax.f32 %v381, -3e+38
  %v442 = vmax.f32 %v382, -3e+38
  %v443 = vmax.f32 %v383, -3e+38
  %v444 = vmax.f32 %v384, -3e+38
  %v445 = vmax.f32 %v385, -3e+38
  %v446 = vmax.f32 %v386, -3e+38
  %v447 = vmax.f32 %v387, -3e+38
  %v448 = vmax.f32 %v388, -3e+38
  %v449 = vmax.f32 %v389, -3e+38
  %v450 = vmax.f32 %v390, -3e+38
  %v451 = vmax.f32 %v391, -3e+38
  %v452 = vmax.f32 %v392, -3e+38
  %v453 = vmax.f32 %v393, -3e+38
  %v454 = vmax.f32 %v394, -3e+38
  %v455 = vmax.f32 %v395, -3e+38
  %v456 = vmax.f32 %v396, -3e+38
  %v457 = vmax.f32 %v397, -3e+38
  %v458 = vmax.f32 %v398, -3e+38
  %v459 = vmax.f32 %v399, -3e+38
  %v460 = vmax.f32 %v400, -3e+38
  %v461 = vmax.f32 %v401, -3e+38
  %v462 = vmax.f32 %v402, -3e+38
  %v463 = vmax.f32 %v403, -3e+38
  %v464 = vmax.f32 %v404, -3e+38
  %v465 = vmax.f32 %v405, -3e+38
  %v466 = vmax.f32 %v406, -3e+38
  %v467 = vmax.f32 %v407, -3e+38
  %v468 = vmax.f32 %v408, -3e+38
  %v469 = vmax.f32 %v409, -3e+38
  %v470 = vmax.f32 %v410, -3e+38
  %v471 = vmax.f32 %v411, -3e+38
  %v472 = vmax.f32 %v412, -3e+38
  %v473 = vmax.f32 %v413, -3e+38
  %v474 = vmax.f32 %v414, -3e+38
  %vm571 = vcmask 1046528
  %v572 = vrot.slane %v61, 1
  %v573 = vrot.slane %v62, 1
  %v574 = vsel %vm571, %v572, %v573
  %v575 = vrot.slane %v63, 1
  %v576 = vsel %vm571, %v573, %v575
  %v577 = vrot.slane %v64, 1
  %v578 = vrot.slane %v65, 1
  %v579 = vsel %vm571, %v577, %v578
  %v580 = vrot.slane %v66, 1
  %v581 = vsel %vm571, %v578, %v580
  %v582 = vrot.slane %v67, 1
  %v583 = vrot.slane %v68, 1
  %v584 = vsel %vm571, %v582, %v583
  %v585 = vrot.slane %v69, 1
  %v586 = vsel %vm571, %v583, %v585
  %v587 = vrot.slane %v70, 1
  %v588 = vrot.slane %v71, 1
  %v589 = vsel %vm571, %v587, %v588
  %v590 = vrot.slane %v72, 1
  %v591 = vsel %vm571, %v588, %v590
  %v592 = vrot.slane %v73, 1
  %v593 = vrot.slane %v74, 1
  %v594 = vsel %vm571, %v592, %v593
  %v595 = vrot.slane %v75, 1
  %v596 = vsel %vm571, %v593, %v595
  %v597 = vrot.slane %v76, 1
  %v598 = vrot.slane %v77, 1
  %v599 = vsel %vm571, %v597, %v598
  %v600 = vrot.slane %v78, 1
  %v601 = vsel %vm571, %v598, %v600
  %v602 = vrot.slane %v79, 1
  %v603 = vrot.slane %v80, 1
  %v604 = vsel %vm571, %v602, %v603
  %v605 = vrot.slane %v81, 1
  %v606 = vsel %vm571, %v603, %v605
  %v607 = vrot.slane %v82, 1
  %v608 = vrot.slane %v83, 1
  %v609 = vsel %vm571, %v607, %v608
  %v610 = vrot.slane %v84, 1
  %v611 = vsel %vm571, %v608, %v610
  %v612 = vrot.slane %v85, 1
  %v613 = vrot.slane %v86, 1
  %v614 = vsel %vm571, %v612, %v613
  %v615 = vrot.slane %v87, 1
  %v616 = vsel %vm571, %v613, %v615
  %v617 = vrot.slane %v88, 1
  %v618 = vrot.slane %v89, 1
  %v619 = vsel %vm571, %v617, %v618
  %v620 = vrot.slane %v90, 1
  %v621 = vsel %vm571, %v618, %v620
  %v622 = vrot.slane %v91, 1
  %v623 = vrot.slane %v92, 1
  %v624 = vsel %vm571, %v622, %v623
  %v625 = vrot.slane %v93, 1
  %v626 = vsel %vm571, %v623, %v625
  %v627 = vrot.slane %v94, 1
  %v628 = vrot.slane %v95, 1
  %v629 = vsel %vm571, %v627, %v628
  %v630 = vrot.slane %v96, 1
  %v631 = vsel %vm571, %v628, %v630
  %v632 = vrot.slane %v97, 1
  %v633 = vrot.slane %v98, 1
  %v634 = vsel %vm571, %v632, %v633
  %v635 = vrot.slane %v99, 1
  %v636 = vsel %vm571, %v633, %v635
  %v637 = vrot.slane %v100, 1
  %v638 = vrot.slane %v101, 1
  %v639 = vsel %vm571, %v637, %v638
  %v640 = vrot.slane %v102, 1
  %v641 = vsel %vm571, %v638, %v640
  %v642 = vrot.slane %v103, 1
  %v643 = vrot.slane %v104, 1
  %v644 = vsel %vm571, %v642, %v643
  %v645 = vrot.slane %v105, 1
  %v646 = vsel %vm571, %v643, %v645
  %v647 = vrot.slane %v106, 1
  %v648 = vrot.slane %v107, 1
  %v649 = vsel %vm571, %v647, %v648
  %v650 = vrot.slane %v108, 1
  %v651 = vsel %vm571, %v648, %v650
  %v652 = vrot.slane %v115, 1
  %v653 = vrot.slane %v116, 1
  %v654 = vsel %vm571, %v652, %v653
  %v655 = vrot.slane %v117, 1
  %v656 = vsel %vm571, %v653, %v655
  %v657 = vrot.slane %v118, 1
  %v658 = vrot.slane %v119, 1
  %v659 = vsel %vm571, %v657, %v658
  %v660 = vrot.slane %v120, 1
  %v661 = vsel %vm571, %v658, %v660
  %v662 = vrot.slane %v121, 1
  %v663 = vrot.slane %v122, 1
  %v664 = vsel %vm571, %v662, %v663
  %v665 = vrot.slane %v123, 1
  %v666 = vsel %vm571, %v663, %v665
  %v667 = vrot.slane %v124, 1
  %v668 = vrot.slane %v125, 1
  %v669 = vsel %vm571, %v667, %v668
  %v670 = vrot.slane %v126, 1
  %v671 = vsel %vm571, %v668, %v670
  %v672 = vrot.slane %v127, 1
  %v673 = vrot.slane %v128, 1
  %v674 = vsel %vm571, %v672, %v673
  %v675 = vrot.slane %v129, 1
  %v676 = vsel %vm571, %v673, %v675
  %v677 = vrot.slane %v130, 1
  %v678 = vrot.slane %v131, 1
  %v679 = vsel %vm571, %v677, %v678
  %v680 = vrot.slane %v132, 1
  %v681 = vsel %vm571, %v678, %v680
  %v682 = vrot.slane %v133, 1
  %v683 = vrot.slane %v134, 1
  %v684 = vsel %vm571, %v682, %v683
  %v685 = vrot.slane %v135, 1
  %v686 = vsel %vm571, %v683, %v685
  %v687 = vrot.slane %v136, 1
  %v688 = vrot.slane %v137, 1
  %v689 = vsel %vm571, %v687, %v688
  %v690 = vrot.slane %v138, 1
  %v691 = vsel %vm571, %v688, %v690
  %v692 = vrot.slane %v139, 1
  %v693 = vrot.slane %v140, 1
  %v694 = vsel %vm571, %v692, %v693
  %v695 = vrot.slane %v141, 1
  %v696 = vsel %vm571, %v693, %v695
  %v697 = vrot.slane %v142, 1
  %v698 = vrot.slane %v143, 1
  %v699 = vsel %vm571, %v697, %v698
  %v700 = vrot.slane %v144, 1
  %v701 = vsel %vm571, %v698, %v700
  %v702 = vrot.slane %v145, 1
  %v703 = vrot.slane %v146, 1
  %v704 = vsel %vm571, %v702, %v703
  %v705 = vrot.slane %v147, 1
  %v706 = vsel %vm571, %v703, %v705
  %v707 = vrot.slane %v148, 1
  %v708 = vrot.slane %v149, 1
  %v709 = vsel %vm571, %v707, %v708
  %v710 = vrot.slane %v150, 1
  %v711 = vsel %vm571, %v708, %v710
  %v712 = vrot.slane %v151, 1
  %v713 = vrot.slane %v152, 1
  %v714 = vsel %vm571, %v712, %v713
  %v715 = vrot.slane %v153, 1
  %v716 = vsel %vm571, %v713, %v715
  %v717 = vrot.slane %v154, 1
  %v718 = vrot.slane %v155, 1
  %v719 = vsel %vm571, %v717, %v718
  %v720 = vrot.slane %v156, 1
  %v721 = vsel %vm571, %v718, %v720
  %v722 = vrot.slane %v157, 1
  %v723 = vrot.slane %v158, 1
  %v724 = vsel %vm571, %v722, %v723
  %v725 = vrot.slane %v159, 1
  %v726 = vsel %vm571, %v723, %v725
  %v727 = vrot.slane %v160, 1
  %v728 = vrot.slane %v161, 1
  %v729 = vsel %vm571, %v727, %v728
  %v730 = vrot.slane %v162, 1
  %v731 = vsel %vm571, %v728, %v730
  %v796 = vadd.f32 %v191, %v574
  %v797 = vadd.f32 %v192, %v576
  %v798 = vadd.f32 %v193, %v579
  %v799 = vadd.f32 %v194, %v581
  %v800 = vadd.f32 %v195, %v584
  %v801 = vadd.f32 %v196, %v586
  %v802 = vadd.f32 %v197, %v589
  %v803 = vadd.f32 %v198, %v591
  %v804 = vadd.f32 %v199, %v594
  %v805 = vadd.f32 %v200, %v596
  %v806 = vadd.f32 %v201, %v599
  %v807 = vadd.f32 %v202, %v601
  %v808 = vadd.f32 %v203, %v604
  %v809 = vadd.f32 %v204, %v606
  %v810 = vadd.f32 %v205, %v609
  %v811 = vadd.f32 %v206, %v611
  %v812 = vadd.f32 %v207, %v614
  %v813 = vadd.f32 %v208, %v616
  %v814 = vadd.f32 %v209, %v619
  %v815 = vadd.f32 %v210, %v621
  %v816 = vadd.f32 %v211, %v624
  %v817 = vadd.f32 %v212, %v626
  %v818 = vadd.f32 %v213, %v629
  %v819 = vadd.f32 %v214, %v631
  %v820 = vadd.f32 %v215, %v634
  %v821 = vadd.f32 %v216, %v636
  %v822 = vadd.f32 %v217, %v639
  %v823 = vadd.f32 %v218, %v641
  %v824 = vadd.f32 %v219, %v644
  %v825 = vadd.f32 %v220, %v646
  %v826 = vadd.f32 %v221, %v649
  %v827 = vadd.f32 %v222, %v651
  %v828 = vadd.f32 %v223, %v654
  %v829 = vadd.f32 %v224, %v656
  %v830 = vadd.f32 %v225, %v659
  %v831 = vadd.f32 %v226, %v661
  %v832 = vadd.f32 %v227, %v664
  %v833 = vadd.f32 %v228, %v666
  %v834 = vadd.f32 %v229, %v669
  %v835 = vadd.f32 %v230, %v671
  %v836 = vadd.f32 %v231, %v674
  %v837 = vadd.f32 %v232, %v676
  %v838 = vadd.f32 %v233, %v679
  %v839 = vadd.f32 %v234, %v681
  %v840 = vadd.f32 %v235, %v684
  %v841 = vadd.f32 %v236, %v686
  %v842 = vadd.f32 %v237, %v689
  %v843 = vadd.f32 %v238, %v691
  %v844 = vadd.f32 %v239, %v694
  %v845 = vadd.f32 %v240, %v696
  %v846 = vadd.f32 %v241, %v699
  %v847 = vadd.f32 %v242, %v701
  %v848 = vadd.f32 %v243, %v704
  %v849 = vadd.f32 %v244, %v706
  %v850 = vadd.f32 %v245, %v709
  %v851 = vadd.f32 %v246, %v711
  %v852 = vadd.f32 %v247, %v714
  %v853 = vadd.f32 %v248, %v716
  %v854 = vadd.f32 %v249, %v719
  %v855 = vadd.f32 %v250, %v721
  %v856 = vadd.f32 %v251, %v724
  %v857 = vadd.f32 %v252, %v726
  %v858 = vadd.f32 %v253, %v729
  %v859 = vadd.f32 %v254, %v731
  %v860 = vmax.f32 %v63, 0.0
  %v861 = vmax.f32 %v66, 0.0
  %v862 = vmax.f32 %v69, 0.0
  %v863 = vmax.f32 %v72, 0.0
  %v864 = vmax.f32 %v75, 0.0
  %v865 = vmax.f32 %v78, 0.0
  %v866 = vmax.f32 %v81, 0.0
  %v867 = vmax.f32 %v84, 0.0
  %v868 = vmax.f32 %v87, 0.0
  %v869 = vmax.f32 %v90, 0.0
  %v870 = vmax.f32 %v93, 0.0
  %v871 = vmax.f32 %v96, 0.0
  %v872 = vmax.f32 %v99, 0.0
  %v873 = vmax.f32 %v102, 0.0
  %v874 = vmax.f32 %v105, 0.0
  %v875 = vmax.f32 %v108, 0.0
  %v876 = vmax.f32 %v117, 0.0
  %v877 = vmax.f32 %v120, 0.0
  %v878 = vmax.f32 %v123, 0.0
  %v879 = vmax.f32 %v126, 0.0
  %v880 = vmax.f32 %v129, 0.0
  %v881 = vmax.f32 %v132, 0.0
  %v882 = vmax.f32 %v135, 0.0
  %v883 = vmax.f32 %v138, 0.0
  %v884 = vmax.f32 %v141, 0.0
  %v885 = vmax.f32 %v144, 0.0
  %v886 = vmax.f32 %v147, 0.0
  %v887 = vmax.f32 %v150, 0.0
  %v888 = vmax.f32 %v153, 0.0
  %v889 = vmax.f32 %v156, 0.0
  %v890 = vmax.f32 %v159, 0.0
  %v891 = vmax.f32 %v162, 0.0
  %v892 = vpack.c.bf16 %v860, %v860
  %v893 = vpack.c.bf16 %v861, %v861
  %v894 = vpack.c.bf16 %v862, %v862
  %v895 = vpack.c.bf16 %v863, %v863
  %v896 = vpack.c.bf16 %v864, %v864
  %v897 = vpack.c.bf16 %v865, %v865
  %v898 = vpack.c.bf16 %v866, %v866
  %v899 = vpack.c.bf16 %v867, %v867
  %v900 = vpack.c.bf16 %v868, %v868
  %v901 = vpack.c.bf16 %v869, %v869
  %v902 = vpack.c.bf16 %v870, %v870
  %v903 = vpack.c.bf16 %v871, %v871
  %v904 = vpack.c.bf16 %v872, %v872
  %v905 = vpack.c.bf16 %v873, %v873
  %v906 = vpack.c.bf16 %v874, %v874
  %v907 = vpack.c.bf16 %v875, %v875
  %v908 = vpack.c.bf16 %v876, %v876
  %v909 = vpack.c.bf16 %v877, %v877
  %v910 = vpack.c.bf16 %v878, %v878
  %v911 = vpack.c.bf16 %v879, %v879
  %v912 = vpack.c.bf16 %v880, %v880
  %v913 = vpack.c.bf16 %v881, %v881
  %v914 = vpack.c.bf16 %v882, %v882
  %v915 = vpack.c.bf16 %v883, %v883
  %v916 = vpack.c.bf16 %v884, %v884
  %v917 = vpack.c.bf16 %v885, %v885
  %v918 = vpack.c.bf16 %v886, %v886
  %v919 = vpack.c.bf16 %v887, %v887
  %v920 = vpack.c.bf16 %v888, %v888
  %v921 = vpack.c.bf16 %v889, %v889
  %v922 = vpack.c.bf16 %v890, %v890
  %v923 = vpack.c.bf16 %v891, %v891
  %vm924 = vsmask.f32 7424
  %v926 = vshrl.u32 %v319, 16
  %v928 = vshll.u32 %v319, 16
  %v930 = vrot.slane %v928, 1
  %v931 = vor.u32 %v926, %v930
  %v933 = vshll.u32 %v892, 16
  %v935 = vrot.slane %v933, 1
  %v936 = vsel %vm924, %v931, %v935
  %v938 = vshrl.u32 %v320, 16
  %v940 = vshll.u32 %v320, 16
  %v942 = vrot.slane %v940, 1
  %v943 = vor.u32 %v938, %v942
  %v945 = vshll.u32 %v893, 16
  %v947 = vrot.slane %v945, 1
  %v948 = vsel %vm924, %v943, %v947
  %v950 = vshrl.u32 %v321, 16
  %v952 = vshll.u32 %v321, 16
  %v954 = vrot.slane %v952, 1
  %v955 = vor.u32 %v950, %v954
  %v957 = vshll.u32 %v894, 16
  %v959 = vrot.slane %v957, 1
  %v960 = vsel %vm924, %v955, %v959
  %v962 = vshrl.u32 %v322, 16
  %v964 = vshll.u32 %v322, 16
  %v966 = vrot.slane %v964, 1
  %v967 = vor.u32 %v962, %v966
  %v969 = vshll.u32 %v895, 16
  %v971 = vrot.slane %v969, 1
  %v972 = vsel %vm924, %v967, %v971
  %v974 = vshrl.u32 %v323, 16
  %v976 = vshll.u32 %v323, 16
  %v978 = vrot.slane %v976, 1
  %v979 = vor.u32 %v974, %v978
  %v981 = vshll.u32 %v896, 16
  %v983 = vrot.slane %v981, 1
  %v984 = vsel %vm924, %v979, %v983
  %v986 = vshrl.u32 %v324, 16
  %v988 = vshll.u32 %v324, 16
  %v990 = vrot.slane %v988, 1
  %v991 = vor.u32 %v986, %v990
  %v993 = vshll.u32 %v897, 16
  %v995 = vrot.slane %v993, 1
  %v996 = vsel %vm924, %v991, %v995
  %v998 = vshrl.u32 %v325, 16
  %v1000 = vshll.u32 %v325, 16
  %v1002 = vrot.slane %v1000, 1
  %v1003 = vor.u32 %v998, %v1002
  %v1005 = vshll.u32 %v898, 16
  %v1007 = vrot.slane %v1005, 1
  %v1008 = vsel %vm924, %v1003, %v1007
  %v1010 = vshrl.u32 %v326, 16
  %v1012 = vshll.u32 %v326, 16
  %v1014 = vrot.slane %v1012, 1
  %v1015 = vor.u32 %v1010, %v1014
  %v1017 = vshll.u32 %v899, 16
  %v1019 = vrot.slane %v1017, 1
  %v1020 = vsel %vm924, %v1015, %v1019
  %v1022 = vshrl.u32 %v327, 16
  %v1024 = vshll.u32 %v327, 16
  %v1026 = vrot.slane %v1024, 1
  %v1027 = vor.u32 %v1022, %v1026
  %v1029 = vshll.u32 %v900, 16
  %v1031 = vrot.slane %v1029, 1
  %v1032 = vsel %vm924, %v1027, %v1031
  %v1034 = vshrl.u32 %v328, 16
  %v1036 = vshll.u32 %v328, 16
  %v1038 = vrot.slane %v1036, 1
  %v1039 = vor.u32 %v1034, %v1038
  %v1041 = vshll.u32 %v901, 16
  %v1043 = vrot.slane %v1041, 1
  %v1044 = vsel %vm924, %v1039, %v1043
  %v1046 = vshrl.u32 %v329, 16
  %v1048 = vshll.u32 %v329, 16
  %v1050 = vrot.slane %v1048, 1
  %v1051 = vor.u32 %v1046, %v1050
  %v1053 = vshll.u32 %v902, 16
  %v1055 = vrot.slane %v1053, 1
  %v1056 = vsel %vm924, %v1051, %v1055
  %v1058 = vshrl.u32 %v330, 16
  %v1060 = vshll.u32 %v330, 16
  %v1062 = vrot.slane %v1060, 1
  %v1063 = vor.u32 %v1058, %v1062
  %v1065 = vshll.u32 %v903, 16
  %v1067 = vrot.slane %v1065, 1
  %v1068 = vsel %vm924, %v1063, %v1067
  %v1070 = vshrl.u32 %v331, 16
  %v1072 = vshll.u32 %v331, 16
  %v1074 = vrot.slane %v1072, 1
  %v1075 = vor.u32 %v1070, %v1074
  %v1077 = vshll.u32 %v904, 16
  %v1079 = vrot.slane %v1077, 1
  %v1080 = vsel %vm924, %v1075, %v1079
  %v1082 = vshrl.u32 %v332, 16
  %v1084 = vshll.u32 %v332, 16
  %v1086 = vrot.slane %v1084, 1
  %v1087 = vor.u32 %v1082, %v1086
  %v1089 = vshll.u32 %v905, 16
  %v1091 = vrot.slane %v1089, 1
  %v1092 = vsel %vm924, %v1087, %v1091
  %v1094 = vshrl.u32 %v333, 16
  %v1096 = vshll.u32 %v333, 16
  %v1098 = vrot.slane %v1096, 1
  %v1099 = vor.u32 %v1094, %v1098
  %v1101 = vshll.u32 %v906, 16
  %v1103 = vrot.slane %v1101, 1
  %v1104 = vsel %vm924, %v1099, %v1103
  %v1106 = vshrl.u32 %v334, 16
  %v1108 = vshll.u32 %v334, 16
  %v1110 = vrot.slane %v1108, 1
  %v1111 = vor.u32 %v1106, %v1110
  %v1113 = vshll.u32 %v907, 16
  %v1115 = vrot.slane %v1113, 1
  %v1116 = vsel %vm924, %v1111, %v1115
  %v1118 = vshrl.u32 %v335, 16
  %v1120 = vshll.u32 %v335, 16
  %v1122 = vrot.slane %v1120, 1
  %v1123 = vor.u32 %v1118, %v1122
  %v1125 = vshll.u32 %v908, 16
  %v1127 = vrot.slane %v1125, 1
  %v1128 = vsel %vm924, %v1123, %v1127
  %v1130 = vshrl.u32 %v336, 16
  %v1132 = vshll.u32 %v336, 16
  %v1134 = vrot.slane %v1132, 1
  %v1135 = vor.u32 %v1130, %v1134
  %v1137 = vshll.u32 %v909, 16
  %v1139 = vrot.slane %v1137, 1
  %v1140 = vsel %vm924, %v1135, %v1139
  %v1142 = vshrl.u32 %v337, 16
  %v1144 = vshll.u32 %v337, 16
  %v1146 = vrot.slane %v1144, 1
  %v1147 = vor.u32 %v1142, %v1146
  %v1149 = vshll.u32 %v910, 16
  %v1151 = vrot.slane %v1149, 1
  %v1152 = vsel %vm924, %v1147, %v1151
  %v1154 = vshrl.u32 %v338, 16
  %v1156 = vshll.u32 %v338, 16
  %v1158 = vrot.slane %v1156, 1
  %v1159 = vor.u32 %v1154, %v1158
  %v1161 = vshll.u32 %v911, 16
  %v1163 = vrot.slane %v1161, 1
  %v1164 = vsel %vm924, %v1159, %v1163
  %v1166 = vshrl.u32 %v339, 16
  %v1168 = vshll.u32 %v339, 16
  %v1170 = vrot.slane %v1168, 1
  %v1171 = vor.u32 %v1166, %v1170
  %v1173 = vshll.u32 %v912, 16
  %v1175 = vrot.slane %v1173, 1
  %v1176 = vsel %vm924, %v1171, %v1175
  %v1178 = vshrl.u32 %v340, 16
  %v1180 = vshll.u32 %v340, 16
  %v1182 = vrot.slane %v1180, 1
  %v1183 = vor.u32 %v1178, %v1182
  %v1185 = vshll.u32 %v913, 16
  %v1187 = vrot.slane %v1185, 1
  %v1188 = vsel %vm924, %v1183, %v1187
  %v1190 = vshrl.u32 %v341, 16
  %v1192 = vshll.u32 %v341, 16
  %v1194 = vrot.slane %v1192, 1
  %v1195 = vor.u32 %v1190, %v1194
  %v1197 = vshll.u32 %v914, 16
  %v1199 = vrot.slane %v1197, 1
  %v1200 = vsel %vm924, %v1195, %v1199
  %v1202 = vshrl.u32 %v342, 16
  %v1204 = vshll.u32 %v342, 16
  %v1206 = vrot.slane %v1204, 1
  %v1207 = vor.u32 %v1202, %v1206
  %v1209 = vshll.u32 %v915, 16
  %v1211 = vrot.slane %v1209, 1
  %v1212 = vsel %vm924, %v1207, %v1211
  %v1214 = vshrl.u32 %v343, 16
  %v1216 = vshll.u32 %v343, 16
  %v1218 = vrot.slane %v1216, 1
  %v1219 = vor.u32 %v1214, %v1218
  %v1221 = vshll.u32 %v916, 16
  %v1223 = vrot.slane %v1221, 1
  %v1224 = vsel %vm924, %v1219, %v1223
  %v1226 = vshrl.u32 %v344, 16
  %v1228 = vshll.u32 %v344, 16
  %v1230 = vrot.slane %v1228, 1
  %v1231 = vor.u32 %v1226, %v1230
  %v1233 = vshll.u32 %v917, 16
  %v1235 = vrot.slane %v1233, 1
  %v1236 = vsel %vm924, %v1231, %v1235
  %v1238 = vshrl.u32 %v345, 16
  %v1240 = vshll.u32 %v345, 16
  %v1242 = vrot.slane %v1240, 1
  %v1243 = vor.u32 %v1238, %v1242
  %v1245 = vshll.u32 %v918, 16
  %v1247 = vrot.slane %v1245, 1
  %v1248 = vsel %vm924, %v1243, %v1247
  %v1250 = vshrl.u32 %v346, 16
  %v1252 = vshll.u32 %v346, 16
  %v1254 = vrot.slane %v1252, 1
  %v1255 = vor.u32 %v1250, %v1254
  %v1257 = vshll.u32 %v919, 16
  %v1259 = vrot.slane %v1257, 1
  %v1260 = vsel %vm924, %v1255, %v1259
  %v1262 = vshrl.u32 %v347, 16
  %v1264 = vshll.u32 %v347, 16
  %v1266 = vrot.slane %v1264, 1
  %v1267 = vor.u32 %v1262, %v1266
  %v1269 = vshll.u32 %v920, 16
  %v1271 = vrot.slane %v1269, 1
  %v1272 = vsel %vm924, %v1267, %v1271
  %v1274 = vshrl.u32 %v348, 16
  %v1276 = vshll.u32 %v348, 16
  %v1278 = vrot.slane %v1276, 1
  %v1279 = vor.u32 %v1274, %v1278
  %v1281 = vshll.u32 %v921, 16
  %v1283 = vrot.slane %v1281, 1
  %v1284 = vsel %vm924, %v1279, %v1283
  %v1286 = vshrl.u32 %v349, 16
  %v1288 = vshll.u32 %v349, 16
  %v1290 = vrot.slane %v1288, 1
  %v1291 = vor.u32 %v1286, %v1290
  %v1293 = vshll.u32 %v922, 16
  %v1295 = vrot.slane %v1293, 1
  %v1296 = vsel %vm924, %v1291, %v1295
  %v1298 = vshrl.u32 %v350, 16
  %v1300 = vshll.u32 %v350, 16
  %v1302 = vrot.slane %v1300, 1
  %v1303 = vor.u32 %v1298, %v1302
  %v1305 = vshll.u32 %v923, 16
  %v1307 = vrot.slane %v1305, 1
  %v1308 = vsel %vm924, %v1303, %v1307
  %vm1309 = vcmask 31744
  %v1311 = vsel %vm1309, %v936, 0
  %v1314 = vsel %vm1309, %v948, 0
  %v1317 = vsel %vm1309, %v960, 0
  %v1320 = vsel %vm1309, %v972, 0
  %v1323 = vsel %vm1309, %v984, 0
  %v1326 = vsel %vm1309, %v996, 0
  %v1329 = vsel %vm1309, %v1008, 0
  %v1332 = vsel %vm1309, %v1020, 0
  %v1335 = vsel %vm1309, %v1032, 0
  %v1338 = vsel %vm1309, %v1044, 0
  %v1341 = vsel %vm1309, %v1056, 0
  %v1344 = vsel %vm1309, %v1068, 0
  %v1347 = vsel %vm1309, %v1080, 0
  %v1350 = vsel %vm1309, %v1092, 0
  %v1353 = vsel %vm1309, %v1104, 0
  %v1356 = vsel %vm1309, %v1116, 0
  %v1359 = vsel %vm1309, %v1128, 0
  %v1362 = vsel %vm1309, %v1140, 0
  %v1365 = vsel %vm1309, %v1152, 0
  %v1368 = vsel %vm1309, %v1164, 0
  %v1371 = vsel %vm1309, %v1176, 0
  %v1374 = vsel %vm1309, %v1188, 0
  %v1377 = vsel %vm1309, %v1200, 0
  %v1380 = vsel %vm1309, %v1212, 0
  %v1383 = vsel %vm1309, %v1224, 0
  %v1386 = vsel %vm1309, %v1236, 0
  %v1389 = vsel %vm1309, %v1248, 0
  %v1392 = vsel %vm1309, %v1260, 0
  %v1395 = vsel %vm1309, %v1272, 0
  %v1398 = vsel %vm1309, %v1284, 0
  %v1401 = vsel %vm1309, %v1296, 0
  %v1404 = vsel %vm1309, %v1308, 0
  %vm1406 = vcmask 1041408
  %v1408 = vsel %vm1406, %v170, 0
  %1410 = vmatprep.subr.bf16.mxu0 0
  %1411 = vmatpush1.bf16.msra.mxu0 %v1408
  %1412 = vmatprep.subr.bf16.mxu0 0
  %1413 = vmatpush1.bf16.msra.mxu0 0
  %1414 = vmatprep.subr.bf16.mxu0 0
  %1415 = vmatpush1.bf16.msra.mxu0 0
  %1416 = vmatprep.subr.bf16.mxu0 0
  %1417 = vmatpush1.bf16.msra.mxu0 0
  %1418 = vmatprep.subr.bf16.mxu0 0
  %1419 = vmatpush1.bf16.msra.mxu0 0
  %1420 = vmatprep.subr.bf16.mxu0 0
  %1421 = vmatpush1.bf16.msra.mxu0 0
  %1422 = vmatprep.subr.bf16.mxu0 0
  %1423 = vmatpush1.bf16.msra.mxu0 0
  %1424 = vmatprep.subr.bf16.mxu0 0
  %1425 = vmatpush1.bf16.msra.mxu0 0
  %1426 = vmatprep.subr.bf16.mxu0 0
  %1427 = vmatpush1.bf16.msra.mxu0 0
  %1428 = vmatprep.subr.bf16.mxu0 0
  %1429 = vmatpush1.bf16.msra.mxu0 0
  %1430 = vmatprep.subr.bf16.mxu0 0
  %1431 = vmatpush1.bf16.msra.mxu0 0
  %1432 = vmatprep.subr.bf16.mxu0 0
  %1433 = vmatpush1.bf16.msra.mxu0 0
  %1434 = vmatprep.subr.bf16.mxu0 0
  %1435 = vmatpush1.bf16.msra.mxu0 0
  %1436 = vmatprep.subr.bf16.mxu0 0
  %1437 = vmatpush1.bf16.msra.mxu0 0
  %1438 = vmatprep.subr.bf16.mxu0 0
  %1439 = vmatpush1.bf16.msra.mxu0 0
  %1440 = vmatprep.subr.bf16.mxu0 0
  %1441 = vmatpush1.bf16.msra.mxu0 0
  %1442 = vmatprep.mubr.bf16.mxu0 0
  %1443 = vmatmul.mubr.bf16.gmra.mrb[0].mxu0 %v1311
  %v1444 = vpop.f32.mrb[0].mxu0
  %v1445 = vadd.f32 0.0, %v1444
  %v1446 = vpop.f32.mrb[0].mxu0
  %v1447 = vpop.f32.mrb[0].mxu0
  %v1448 = vadd.f32 0.0, %v1447
  %v1449 = vpop.f32.mrb[0].mxu0
  %1450 = vmatprep.mubr.bf16.mxu0 0
  %1451 = vmatmul.mubr.bf16.gmra.mrb[0].mxu0 %v1314
  %v1452 = vpop.f32.mrb[0].mxu0
  %v1453 = vadd.f32 0.0, %v1452
  %v1454 = vpop.f32.mrb[0].mxu0
  %v1455 = vpop.f32.mrb[0].mxu0
  %v1456 = vadd.f32 0.0, %v1455
  %v1457 = vpop.f32.mrb[0].mxu0
  %1458 = vmatprep.mubr.bf16.mxu0 0
  %1459 = vmatmul.mubr.bf16.gmra.mrb[0].mxu0 %v1317
  %v1460 = vpop.f32.mrb[0].mxu0
  %v1461 = vadd.f32 0.0, %v1460
  %v1462 = vpop.f32.mrb[0].mxu0
  %v1463 = vpop.f32.mrb[0].mxu0
  %v1464 = vadd.f32 0.0, %v1463
  %v1465 = vpop.f32.mrb[0].mxu0
  %1466 = vmatprep.mubr.bf16.mxu0 0
  %1467 = vmatmul.mubr.bf16.gmra.mrb[0].mxu0 %v1320
  %v1468 = vpop.f32.mrb[0].mxu0
  %v1469 = vadd.f32 0.0, %v1468
  %v1470 = vpop.f32.mrb[0].mxu0
  %v1471 = vpop.f32.mrb[0].mxu0
  %v1472 = vadd.f32 0.0, %v1471
  %v1473 = vpop.f32.mrb[0].mxu0
  %1474 = vmatprep.mubr.bf16.mxu0 0
  %1475 = vmatmul.mubr.bf16.gmra.mrb[0].mxu0 %v1323
  %v1476 = vpop.f32.mrb[0].mxu0
  %v1477 = vadd.f32 0.0, %v1476
  %v1478 = vpop.f32.mrb[0].mxu0
  %v1479 = vpop.f32.mrb[0].mxu0
  %v1480 = vadd.f32 0.0, %v1479
  %v1481 = vpop.f32.mrb[0].mxu0
  %1482 = vmatprep.mubr.bf16.mxu0 0
  %1483 = vmatmul.mubr.bf16.gmra.mrb[0].mxu0 %v1326
  %v1484 = vpop.f32.mrb[0].mxu0
  %v1485 = vadd.f32 0.0, %v1484
  %v1486 = vpop.f32.mrb[0].mxu0
  %v1487 = vpop.f32.mrb[0].mxu0
  %v1488 = vadd.f32 0.0, %v1487
  %v1489 = vpop.f32.mrb[0].mxu0
  %1490 = vmatprep.mubr.bf16.mxu0 0
  %1491 = vmatmul.mubr.bf16.gmra.mrb[0].mxu0 %v1329
  %v1492 = vpop.f32.mrb[0].mxu0
  %v1493 = vadd.f32 0.0, %v1492
  %v1494 = vpop.f32.mrb[0].mxu0
  %v1495 = vpop.f32.mrb[0].mxu0
  %v1496 = vadd.f32 0.0, %v1495
  %v1497 = vpop.f32.mrb[0].mxu0
  %1498 = vmatprep.mubr.bf16.mxu0 0
  %1499 = vmatmul.mubr.bf16.gmra.mrb[0].mxu0 %v1332
  %v1500 = vpop.f32.mrb[0].mxu0
  %v1501 = vadd.f32 0.0, %v1500
  %v1502 = vpop.f32.mrb[0].mxu0
  %v1503 = vpop.f32.mrb[0].mxu0
  %v1504 = vadd.f32 0.0, %v1503
  %v1505 = vpop.f32.mrb[0].mxu0
  %1506 = vmatprep.mubr.bf16.mxu0 0
  %1507 = vmatmul.mubr.bf16.gmra.mrb[0].mxu0 %v1335
  %v1508 = vpop.f32.mrb[0].mxu0
  %v1509 = vadd.f32 0.0, %v1508
  %v1510 = vpop.f32.mrb[0].mxu0
  %v1511 = vpop.f32.mrb[0].mxu0
  %v1512 = vadd.f32 0.0, %v1511
  %v1513 = vpop.f32.mrb[0].mxu0
  %1514 = vmatprep.mubr.bf16.mxu0 0
  %1515 = vmatmul.mubr.bf16.gmra.mrb[0].mxu0 %v1338
  %v1516 = vpop.f32.mrb[0].mxu0
  %v1517 = vadd.f32 0.0, %v1516
  %v1518 = vpop.f32.mrb[0].mxu0
  %v1519 = vpop.f32.mrb[0].mxu0
  %v1520 = vadd.f32 0.0, %v1519
  %v1521 = vpop.f32.mrb[0].mxu0
  %1522 = vmatprep.mubr.bf16.mxu0 0
  %1523 = vmatmul.mubr.bf16.gmra.mrb[0].mxu0 %v1341
  %v1524 = vpop.f32.mrb[0].mxu0
  %v1525 = vadd.f32 0.0, %v1524
  %v1526 = vpop.f32.mrb[0].mxu0
  %v1527 = vpop.f32.mrb[0].mxu0
  %v1528 = vadd.f32 0.0, %v1527
  %v1529 = vpop.f32.mrb[0].mxu0
  %1530 = vmatprep.mubr.bf16.mxu0 0
  %1531 = vmatmul.mubr.bf16.gmra.mrb[0].mxu0 %v1344
  %v1532 = vpop.f32.mrb[0].mxu0
  %v1533 = vadd.f32 0.0, %v1532
  %v1534 = vpop.f32.mrb[0].mxu0
  %v1535 = vpop.f32.mrb[0].mxu0
  %v1536 = vadd.f32 0.0, %v1535
  %v1537 = vpop.f32.mrb[0].mxu0
  %1538 = vmatprep.mubr.bf16.mxu0 0
  %1539 = vmatmul.mubr.bf16.gmra.mrb[0].mxu0 %v1347
  %v1540 = vpop.f32.mrb[0].mxu0
  %v1541 = vadd.f32 0.0, %v1540
  %v1542 = vpop.f32.mrb[0].mxu0
  %v1543 = vpop.f32.mrb[0].mxu0
  %v1544 = vadd.f32 0.0, %v1543
  %v1545 = vpop.f32.mrb[0].mxu0
  %1546 = vmatprep.mubr.bf16.mxu0 0
  %1547 = vmatmul.mubr.bf16.gmra.mrb[0].mxu0 %v1350
  %v1548 = vpop.f32.mrb[0].mxu0
  %v1549 = vadd.f32 0.0, %v1548
  %v1550 = vpop.f32.mrb[0].mxu0
  %v1551 = vpop.f32.mrb[0].mxu0
  %v1552 = vadd.f32 0.0, %v1551
  %v1553 = vpop.f32.mrb[0].mxu0
  %1554 = vmatprep.mubr.bf16.mxu0 0
  %1555 = vmatmul.mubr.bf16.gmra.mrb[0].mxu0 %v1353
  %v1556 = vpop.f32.mrb[0].mxu0
  %v1557 = vadd.f32 0.0, %v1556
  %v1558 = vpop.f32.mrb[0].mxu0
  %v1559 = vpop.f32.mrb[0].mxu0
  %v1560 = vadd.f32 0.0, %v1559
  %v1561 = vpop.f32.mrb[0].mxu0
  %1562 = vmatprep.mubr.bf16.mxu0 0
  %1563 = vmatmul.mubr.bf16.gmra.mrb[0].mxu0 %v1356
  %v1564 = vpop.f32.mrb[0].mxu0
  %v1565 = vadd.f32 0.0, %v1564
  %v1566 = vpop.f32.mrb[0].mxu0
  %v1567 = vpop.f32.mrb[0].mxu0
  %v1568 = vadd.f32 0.0, %v1567
  %v1569 = vpop.f32.mrb[0].mxu0
  %1570 = vmatprep.mubr.bf16.mxu0 0
  %1571 = vmatmul.mubr.bf16.gmra.mrb[0].mxu0 %v1359
  %v1572 = vpop.f32.mrb[0].mxu0
  %v1573 = vadd.f32 0.0, %v1572
  %v1574 = vpop.f32.mrb[0].mxu0
  %v1575 = vpop.f32.mrb[0].mxu0
  %v1576 = vadd.f32 0.0, %v1575
  %v1577 = vpop.f32.mrb[0].mxu0
  %1578 = vmatprep.mubr.bf16.mxu0 0
  %1579 = vmatmul.mubr.bf16.gmra.mrb[0].mxu0 %v1362
  %v1580 = vpop.f32.mrb[0].mxu0
  %v1581 = vadd.f32 0.0, %v1580
  %v1582 = vpop.f32.mrb[0].mxu0
  %v1583 = vpop.f32.mrb[0].mxu0
  %v1584 = vadd.f32 0.0, %v1583
  %v1585 = vpop.f32.mrb[0].mxu0
  %1586 = vmatprep.mubr.bf16.mxu0 0
  %1587 = vmatmul.mubr.bf16.gmra.mrb[0].mxu0 %v1365
  %v1588 = vpop.f32.mrb[0].mxu0
  %v1589 = vadd.f32 0.0, %v1588
  %v1590 = vpop.f32.mrb[0].mxu0
  %v1591 = vpop.f32.mrb[0].mxu0
  %v1592 = vadd.f32 0.0, %v1591
  %v1593 = vpop.f32.mrb[0].mxu0
  %1594 = vmatprep.mubr.bf16.mxu0 0
  %1595 = vmatmul.mubr.bf16.gmra.mrb[0].mxu0 %v1368
  %v1596 = vpop.f32.mrb[0].mxu0
  %v1597 = vadd.f32 0.0, %v1596
  %v1598 = vpop.f32.mrb[0].mxu0
  %v1599 = vpop.f32.mrb[0].mxu0
  %v1600 = vadd.f32 0.0, %v1599
  %v1601 = vpop.f32.mrb[0].mxu0
  %1602 = vmatprep.mubr.bf16.mxu0 0
  %1603 = vmatmul.mubr.bf16.gmra.mrb[0].mxu0 %v1371
  %v1604 = vpop.f32.mrb[0].mxu0
  %v1605 = vadd.f32 0.0, %v1604
  %v1606 = vpop.f32.mrb[0].mxu0
  %v1607 = vpop.f32.mrb[0].mxu0
  %v1608 = vadd.f32 0.0, %v1607
  %v1609 = vpop.f32.mrb[0].mxu0
  %1610 = vmatprep.mubr.bf16.mxu0 0
  %1611 = vmatmul.mubr.bf16.gmra.mrb[0].mxu0 %v1374
  %v1612 = vpop.f32.mrb[0].mxu0
  %v1613 = vadd.f32 0.0, %v1612
  %v1614 = vpop.f32.mrb[0].mxu0
  %v1615 = vpop.f32.mrb[0].mxu0
  %v1616 = vadd.f32 0.0, %v1615
  %v1617 = vpop.f32.mrb[0].mxu0
  %1618 = vmatprep.mubr.bf16.mxu0 0
  %1619 = vmatmul.mubr.bf16.gmra.mrb[0].mxu0 %v1377
  %v1620 = vpop.f32.mrb[0].mxu0
  %v1621 = vadd.f32 0.0, %v1620
  %v1622 = vpop.f32.mrb[0].mxu0
  %v1623 = vpop.f32.mrb[0].mxu0
  %v1624 = vadd.f32 0.0, %v1623
  %v1625 = vpop.f32.mrb[0].mxu0
  %1626 = vmatprep.mubr.bf16.mxu0 0
  %1627 = vmatmul.mubr.bf16.gmra.mrb[0].mxu0 %v1380
  %v1628 = vpop.f32.mrb[0].mxu0
  %v1629 = vadd.f32 0.0, %v1628
  %v1630 = vpop.f32.mrb[0].mxu0
  %v1631 = vpop.f32.mrb[0].mxu0
  %v1632 = vadd.f32 0.0, %v1631
  %v1633 = vpop.f32.mrb[0].mxu0
  %1634 = vmatprep.mubr.bf16.mxu0 0
  %1635 = vmatmul.mubr.bf16.gmra.mrb[0].mxu0 %v1383
  %v1636 = vpop.f32.mrb[0].mxu0
  %v1637 = vadd.f32 0.0, %v1636
  %v1638 = vpop.f32.mrb[0].mxu0
  %v1639 = vpop.f32.mrb[0].mxu0
  %v1640 = vadd.f32 0.0, %v1639
  %v1641 = vpop.f32.mrb[0].mxu0
  %1642 = vmatprep.mubr.bf16.mxu0 0
  %1643 = vmatmul.mubr.bf16.gmra.mrb[0].mxu0 %v1386
  %v1644 = vpop.f32.mrb[0].mxu0
  %v1645 = vadd.f32 0.0, %v1644
  %v1646 = vpop.f32.mrb[0].mxu0
  %v1647 = vpop.f32.mrb[0].mxu0
  %v1648 = vadd.f32 0.0, %v1647
  %v1649 = vpop.f32.mrb[0].mxu0
  %1650 = vmatprep.mubr.bf16.mxu0 0
  %1651 = vmatmul.mubr.bf16.gmra.mrb[0].mxu0 %v1389
  %v1652 = vpop.f32.mrb[0].mxu0
  %v1653 = vadd.f32 0.0, %v1652
  %v1654 = vpop.f32.mrb[0].mxu0
  %v1655 = vpop.f32.mrb[0].mxu0
  %v1656 = vadd.f32 0.0, %v1655
  %v1657 = vpop.f32.mrb[0].mxu0
  %1658 = vmatprep.mubr.bf16.mxu0 0
  %1659 = vmatmul.mubr.bf16.gmra.mrb[0].mxu0 %v1392
  %v1660 = vpop.f32.mrb[0].mxu0
  %v1661 = vadd.f32 0.0, %v1660
  %v1662 = vpop.f32.mrb[0].mxu0
  %v1663 = vpop.f32.mrb[0].mxu0
  %v1664 = vadd.f32 0.0, %v1663
  %v1665 = vpop.f32.mrb[0].mxu0
  %1666 = vmatprep.mubr.bf16.mxu0 0
  %1667 = vmatmul.mubr.bf16.gmra.mrb[0].mxu0 %v1395
  %v1668 = vpop.f32.mrb[0].mxu0
  %v1669 = vadd.f32 0.0, %v1668
  %v1670 = vpop.f32.mrb[0].mxu0
  %v1671 = vpop.f32.mrb[0].mxu0
  %v1672 = vadd.f32 0.0, %v1671
  %v1673 = vpop.f32.mrb[0].mxu0
  %1674 = vmatprep.mubr.bf16.mxu0 0
  %1675 = vmatmul.mubr.bf16.gmra.mrb[0].mxu0 %v1398
  %v1676 = vpop.f32.mrb[0].mxu0
  %v1677 = vadd.f32 0.0, %v1676
  %v1678 = vpop.f32.mrb[0].mxu0
  %v1679 = vpop.f32.mrb[0].mxu0
  %v1680 = vadd.f32 0.0, %v1679
  %v1681 = vpop.f32.mrb[0].mxu0
  %1682 = vmatprep.mubr.bf16.mxu0 0
  %1683 = vmatmul.mubr.bf16.gmra.mrb[0].mxu0 %v1401
  %v1684 = vpop.f32.mrb[0].mxu0
  %v1685 = vadd.f32 0.0, %v1684
  %v1686 = vpop.f32.mrb[0].mxu0
  %v1687 = vpop.f32.mrb[0].mxu0
  %v1688 = vadd.f32 0.0, %v1687
  %v1689 = vpop.f32.mrb[0].mxu0
  %1690 = vmatprep.mubr.bf16.mxu0 0
  %1691 = vmatmul.mubr.bf16.gmra.mrb[0].mxu0 %v1404
  %v1692 = vpop.f32.mrb[0].mxu0
  %v1693 = vadd.f32 0.0, %v1692
  %v1694 = vpop.f32.mrb[0].mxu0
  %v1695 = vpop.f32.mrb[0].mxu0
  %v1696 = vadd.f32 0.0, %v1695
  %v1697 = vpop.f32.mrb[0].mxu0
  %1698 = vdwg.mxu0
  %v1699 = vsel %vm1309, %v319, 0
  %v1701 = vsel %vm1309, %v320, 0
  %v1703 = vsel %vm1309, %v321, 0
  %v1705 = vsel %vm1309, %v322, 0
  %v1707 = vsel %vm1309, %v323, 0
  %v1709 = vsel %vm1309, %v324, 0
  %v1711 = vsel %vm1309, %v325, 0
  %v1713 = vsel %vm1309, %v326, 0
  %v1715 = vsel %vm1309, %v327, 0
  %v1717 = vsel %vm1309, %v328, 0
  %v1719 = vsel %vm1309, %v329, 0
  %v1721 = vsel %vm1309, %v330, 0
  %v1723 = vsel %vm1309, %v331, 0
  %v1725 = vsel %vm1309, %v332, 0
  %v1727 = vsel %vm1309, %v333, 0
  %v1729 = vsel %vm1309, %v334, 0
  %v1731 = vsel %vm1309, %v335, 0
  %v1733 = vsel %vm1309, %v336, 0
  %v1735 = vsel %vm1309, %v337, 0
  %v1737 = vsel %vm1309, %v338, 0
  %v1739 = vsel %vm1309, %v339, 0
  %v1741 = vsel %vm1309, %v340, 0
  %v1743 = vsel %vm1309, %v341, 0
  %v1745 = vsel %vm1309, %v342, 0
  %v1747 = vsel %vm1309, %v343, 0
  %v1749 = vsel %vm1309, %v344, 0
  %v1751 = vsel %vm1309, %v345, 0
  %v1753 = vsel %vm1309, %v346, 0
  %v1755 = vsel %vm1309, %v347, 0
  %v1757 = vsel %vm1309, %v348, 0
  %v1759 = vsel %vm1309, %v349, 0
  %v1761 = vsel %vm1309, %v350, 0
  %v1764 = vsel %vm1406, %v169, 0
  %1766 = vmatprep.subr.bf16.mxu0 0
  %1767 = vmatpush1.bf16.msra.mxu0 %v1764
  %1768 = vmatprep.subr.bf16.mxu0 0
  %1769 = vmatpush1.bf16.msra.mxu0 0
  %1770 = vmatprep.subr.bf16.mxu0 0
  %1771 = vmatpush1.bf16.msra.mxu0 0
  %1772 = vmatprep.subr.bf16.mxu0 0
  %1773 = vmatpush1.bf16.msra.mxu0 0
  %1774 = vmatprep.subr.bf16.mxu0 0
  %1775 = vmatpush1.bf16.msra.mxu0 0
  %1776 = vmatprep.subr.bf16.mxu0 0
  %1777 = vmatpush1.bf16.msra.mxu0 0
  %1778 = vmatprep.subr.bf16.mxu0 0
  %1779 = vmatpush1.bf16.msra.mxu0 0
  %1780 = vmatprep.subr.bf16.mxu0 0
  %1781 = vmatpush1.bf16.msra.mxu0 0
  %1782 = vmatprep.subr.bf16.mxu0 0
  %1783 = vmatpush1.bf16.msra.mxu0 0
  %1784 = vmatprep.subr.bf16.mxu0 0
  %1785 = vmatpush1.bf16.msra.mxu0 0
  %1786 = vmatprep.subr.bf16.mxu0 0
  %1787 = vmatpush1.bf16.msra.mxu0 0
  %1788 = vmatprep.subr.bf16.mxu0 0
  %1789 = vmatpush1.bf16.msra.mxu0 0
  %1790 = vmatprep.subr.bf16.mxu0 0
  %1791 = vmatpush1.bf16.msra.mxu0 0
  %1792 = vmatprep.subr.bf16.mxu0 0
  %1793 = vmatpush1.bf16.msra.mxu0 0
  %1794 = vmatprep.subr.bf16.mxu0 0
  %1795 = vmatpush1.bf16.msra.mxu0 0
  %1796 = vmatprep.subr.bf16.mxu0 0
  %1797 = vmatpush1.bf16.msra.mxu0 0
  %1798 = vmatprep.mubr.bf16.mxu0 0
  %1799 = vmatmul.mubr.bf16.gmra.mrb[0].mxu0 %v1699
  %v1800 = vpop.f32.mrb[0].mxu0
  %v1801 = vadd.f32 %v1445, %v1800
  %v1802 = vpop.f32.mrb[0].mxu0
  %v1803 = vpop.f32.mrb[0].mxu0
  %v1804 = vadd.f32 %v1448, %v1803
  %v1805 = vpop.f32.mrb[0].mxu0
  %1806 = vmatprep.mubr.bf16.mxu0 0
  %1807 = vmatmul.mubr.bf16.gmra.mrb[0].mxu0 %v1701
  %v1808 = vpop.f32.mrb[0].mxu0
  %v1809 = vadd.f32 %v1453, %v1808
  %v1810 = vpop.f32.mrb[0].mxu0
  %v1811 = vpop.f32.mrb[0].mxu0
  %v1812 = vadd.f32 %v1456, %v1811
  %v1813 = vpop.f32.mrb[0].mxu0
  %1814 = vmatprep.mubr.bf16.mxu0 0
  %1815 = vmatmul.mubr.bf16.gmra.mrb[0].mxu0 %v1703
  %v1816 = vpop.f32.mrb[0].mxu0
  %v1817 = vadd.f32 %v1461, %v1816
  %v1818 = vpop.f32.mrb[0].mxu0
  %v1819 = vpop.f32.mrb[0].mxu0
  %v1820 = vadd.f32 %v1464, %v1819
  %v1821 = vpop.f32.mrb[0].mxu0
  %1822 = vmatprep.mubr.bf16.mxu0 0
  %1823 = vmatmul.mubr.bf16.gmra.mrb[0].mxu0 %v1705
  %v1824 = vpop.f32.mrb[0].mxu0
  %v1825 = vadd.f32 %v1469, %v1824
  %v1826 = vpop.f32.mrb[0].mxu0
  %v1827 = vpop.f32.mrb[0].mxu0
  %v1828 = vadd.f32 %v1472, %v1827
  %v1829 = vpop.f32.mrb[0].mxu0
  %1830 = vmatprep.mubr.bf16.mxu0 0
  %1831 = vmatmul.mubr.bf16.gmra.mrb[0].mxu0 %v1707
  %v1832 = vpop.f32.mrb[0].mxu0
  %v1833 = vadd.f32 %v1477, %v1832
  %v1834 = vpop.f32.mrb[0].mxu0
  %v1835 = vpop.f32.mrb[0].mxu0
  %v1836 = vadd.f32 %v1480, %v1835
  %v1837 = vpop.f32.mrb[0].mxu0
  %1838 = vmatprep.mubr.bf16.mxu0 0
  %1839 = vmatmul.mubr.bf16.gmra.mrb[0].mxu0 %v1709
  %v1840 = vpop.f32.mrb[0].mxu0
  %v1841 = vadd.f32 %v1485, %v1840
  %v1842 = vpop.f32.mrb[0].mxu0
  %v1843 = vpop.f32.mrb[0].mxu0
  %v1844 = vadd.f32 %v1488, %v1843
  %v1845 = vpop.f32.mrb[0].mxu0
  %1846 = vmatprep.mubr.bf16.mxu0 0
  %1847 = vmatmul.mubr.bf16.gmra.mrb[0].mxu0 %v1711
  %v1848 = vpop.f32.mrb[0].mxu0
  %v1849 = vadd.f32 %v1493, %v1848
  %v1850 = vpop.f32.mrb[0].mxu0
  %v1851 = vpop.f32.mrb[0].mxu0
  %v1852 = vadd.f32 %v1496, %v1851
  %v1853 = vpop.f32.mrb[0].mxu0
  %1854 = vmatprep.mubr.bf16.mxu0 0
  %1855 = vmatmul.mubr.bf16.gmra.mrb[0].mxu0 %v1713
  %v1856 = vpop.f32.mrb[0].mxu0
  %v1857 = vadd.f32 %v1501, %v1856
  %v1858 = vpop.f32.mrb[0].mxu0
  %v1859 = vpop.f32.mrb[0].mxu0
  %v1860 = vadd.f32 %v1504, %v1859
  %v1861 = vpop.f32.mrb[0].mxu0
  %1862 = vmatprep.mubr.bf16.mxu0 0
  %1863 = vmatmul.mubr.bf16.gmra.mrb[0].mxu0 %v1715
  %v1864 = vpop.f32.mrb[0].mxu0
  %v1865 = vadd.f32 %v1509, %v1864
  %v1866 = vpop.f32.mrb[0].mxu0
  %v1867 = vpop.f32.mrb[0].mxu0
  %v1868 = vadd.f32 %v1512, %v1867
  %v1869 = vpop.f32.mrb[0].mxu0
  %1870 = vmatprep.mubr.bf16.mxu0 0
  %1871 = vmatmul.mubr.bf16.gmra.mrb[0].mxu0 %v1717
  %v1872 = vpop.f32.mrb[0].mxu0
  %v1873 = vadd.f32 %v1517, %v1872
  %v1874 = vpop.f32.mrb[0].mxu0
  %v1875 = vpop.f32.mrb[0].mxu0
  %v1876 = vadd.f32 %v1520, %v1875
  %v1877 = vpop.f32.mrb[0].mxu0
  %1878 = vmatprep.mubr.bf16.mxu0 0
  %1879 = vmatmul.mubr.bf16.gmra.mrb[0].mxu0 %v1719
  %v1880 = vpop.f32.mrb[0].mxu0
  %v1881 = vadd.f32 %v1525, %v1880
  %v1882 = vpop.f32.mrb[0].mxu0
  %v1883 = vpop.f32.mrb[0].mxu0
  %v1884 = vadd.f32 %v1528, %v1883
  %v1885 = vpop.f32.mrb[0].mxu0
  %1886 = vmatprep.mubr.bf16.mxu0 0
  %1887 = vmatmul.mubr.bf16.gmra.mrb[0].mxu0 %v1721
  %v1888 = vpop.f32.mrb[0].mxu0
  %v1889 = vadd.f32 %v1533, %v1888
  %v1890 = vpop.f32.mrb[0].mxu0
  %v1891 = vpop.f32.mrb[0].mxu0
  %v1892 = vadd.f32 %v1536, %v1891
  %v1893 = vpop.f32.mrb[0].mxu0
  %1894 = vmatprep.mubr.bf16.mxu0 0
  %1895 = vmatmul.mubr.bf16.gmra.mrb[0].mxu0 %v1723
  %v1896 = vpop.f32.mrb[0].mxu0
  %v1897 = vadd.f32 %v1541, %v1896
  %v1898 = vpop.f32.mrb[0].mxu0
  %v1899 = vpop.f32.mrb[0].mxu0
  %v1900 = vadd.f32 %v1544, %v1899
  %v1901 = vpop.f32.mrb[0].mxu0
  %1902 = vmatprep.mubr.bf16.mxu0 0
  %1903 = vmatmul.mubr.bf16.gmra.mrb[0].mxu0 %v1725
  %v1904 = vpop.f32.mrb[0].mxu0
  %v1905 = vadd.f32 %v1549, %v1904
  %v1906 = vpop.f32.mrb[0].mxu0
  %v1907 = vpop.f32.mrb[0].mxu0
  %v1908 = vadd.f32 %v1552, %v1907
  %v1909 = vpop.f32.mrb[0].mxu0
  %1910 = vmatprep.mubr.bf16.mxu0 0
  %1911 = vmatmul.mubr.bf16.gmra.mrb[0].mxu0 %v1727
  %v1912 = vpop.f32.mrb[0].mxu0
  %v1913 = vadd.f32 %v1557, %v1912
  %v1914 = vpop.f32.mrb[0].mxu0
  %v1915 = vpop.f32.mrb[0].mxu0
  %v1916 = vadd.f32 %v1560, %v1915
  %v1917 = vpop.f32.mrb[0].mxu0
  %1918 = vmatprep.mubr.bf16.mxu0 0
  %1919 = vmatmul.mubr.bf16.gmra.mrb[0].mxu0 %v1729
  %v1920 = vpop.f32.mrb[0].mxu0
  %v1921 = vadd.f32 %v1565, %v1920
  %v1922 = vpop.f32.mrb[0].mxu0
  %v1923 = vpop.f32.mrb[0].mxu0
  %v1924 = vadd.f32 %v1568, %v1923
  %v1925 = vpop.f32.mrb[0].mxu0
  %1926 = vmatprep.mubr.bf16.mxu0 0
  %1927 = vmatmul.mubr.bf16.gmra.mrb[0].mxu0 %v1731
  %v1928 = vpop.f32.mrb[0].mxu0
  %v1929 = vadd.f32 %v1573, %v1928
  %v1930 = vpop.f32.mrb[0].mxu0
  %v1931 = vpop.f32.mrb[0].mxu0
  %v1932 = vadd.f32 %v1576, %v1931
  %v1933 = vpop.f32.mrb[0].mxu0
  %1934 = vmatprep.mubr.bf16.mxu0 0
  %1935 = vmatmul.mubr.bf16.gmra.mrb[0].mxu0 %v1733
  %v1936 = vpop.f32.mrb[0].mxu0
  %v1937 = vadd.f32 %v1581, %v1936
  %v1938 = vpop.f32.mrb[0].mxu0
  %v1939 = vpop.f32.mrb[0].mxu0
  %v1940 = vadd.f32 %v1584, %v1939
  %v1941 = vpop.f32.mrb[0].mxu0
  %1942 = vmatprep.mubr.bf16.mxu0 0
  %1943 = vmatmul.mubr.bf16.gmra.mrb[0].mxu0 %v1735
  %v1944 = vpop.f32.mrb[0].mxu0
  %v1945 = vadd.f32 %v1589, %v1944
  %v1946 = vpop.f32.mrb[0].mxu0
  %v1947 = vpop.f32.mrb[0].mxu0
  %v1948 = vadd.f32 %v1592, %v1947
  %v1949 = vpop.f32.mrb[0].mxu0
  %1950 = vmatprep.mubr.bf16.mxu0 0
  %1951 = vmatmul.mubr.bf16.gmra.mrb[0].mxu0 %v1737
  %v1952 = vpop.f32.mrb[0].mxu0
  %v1953 = vadd.f32 %v1597, %v1952
  %v1954 = vpop.f32.mrb[0].mxu0
  %v1955 = vpop.f32.mrb[0].mxu0
  %v1956 = vadd.f32 %v1600, %v1955
  %v1957 = vpop.f32.mrb[0].mxu0
  %1958 = vmatprep.mubr.bf16.mxu0 0
  %1959 = vmatmul.mubr.bf16.gmra.mrb[0].mxu0 %v1739
  %v1960 = vpop.f32.mrb[0].mxu0
  %v1961 = vadd.f32 %v1605, %v1960
  %v1962 = vpop.f32.mrb[0].mxu0
  %v1963 = vpop.f32.mrb[0].mxu0
  %v1964 = vadd.f32 %v1608, %v1963
  %v1965 = vpop.f32.mrb[0].mxu0
  %1966 = vmatprep.mubr.bf16.mxu0 0
  %1967 = vmatmul.mubr.bf16.gmra.mrb[0].mxu0 %v1741
  %v1968 = vpop.f32.mrb[0].mxu0
  %v1969 = vadd.f32 %v1613, %v1968
  %v1970 = vpop.f32.mrb[0].mxu0
  %v1971 = vpop.f32.mrb[0].mxu0
  %v1972 = vadd.f32 %v1616, %v1971
  %v1973 = vpop.f32.mrb[0].mxu0
  %1974 = vmatprep.mubr.bf16.mxu0 0
  %1975 = vmatmul.mubr.bf16.gmra.mrb[0].mxu0 %v1743
  %v1976 = vpop.f32.mrb[0].mxu0
  %v1977 = vadd.f32 %v1621, %v1976
  %v1978 = vpop.f32.mrb[0].mxu0
  %v1979 = vpop.f32.mrb[0].mxu0
  %v1980 = vadd.f32 %v1624, %v1979
  %v1981 = vpop.f32.mrb[0].mxu0
  %1982 = vmatprep.mubr.bf16.mxu0 0
  %1983 = vmatmul.mubr.bf16.gmra.mrb[0].mxu0 %v1745
  %v1984 = vpop.f32.mrb[0].mxu0
  %v1985 = vadd.f32 %v1629, %v1984
  %v1986 = vpop.f32.mrb[0].mxu0
  %v1987 = vpop.f32.mrb[0].mxu0
  %v1988 = vadd.f32 %v1632, %v1987
  %v1989 = vpop.f32.mrb[0].mxu0
  %1990 = vmatprep.mubr.bf16.mxu0 0
  %1991 = vmatmul.mubr.bf16.gmra.mrb[0].mxu0 %v1747
  %v1992 = vpop.f32.mrb[0].mxu0
  %v1993 = vadd.f32 %v1637, %v1992
  %v1994 = vpop.f32.mrb[0].mxu0
  %v1995 = vpop.f32.mrb[0].mxu0
  %v1996 = vadd.f32 %v1640, %v1995
  %v1997 = vpop.f32.mrb[0].mxu0
  %1998 = vmatprep.mubr.bf16.mxu0 0
  %1999 = vmatmul.mubr.bf16.gmra.mrb[0].mxu0 %v1749
  %v2000 = vpop.f32.mrb[0].mxu0
  %v2001 = vadd.f32 %v1645, %v2000
  %v2002 = vpop.f32.mrb[0].mxu0
  %v2003 = vpop.f32.mrb[0].mxu0
  %v2004 = vadd.f32 %v1648, %v2003
  %v2005 = vpop.f32.mrb[0].mxu0
  %2006 = vmatprep.mubr.bf16.mxu0 0
  %2007 = vmatmul.mubr.bf16.gmra.mrb[0].mxu0 %v1751
  %v2008 = vpop.f32.mrb[0].mxu0
  %v2009 = vadd.f32 %v1653, %v2008
  %v2010 = vpop.f32.mrb[0].mxu0
  %v2011 = vpop.f32.mrb[0].mxu0
  %v2012 = vadd.f32 %v1656, %v2011
  %v2013 = vpop.f32.mrb[0].mxu0
  %2014 = vmatprep.mubr.bf16.mxu0 0
  %2015 = vmatmul.mubr.bf16.gmra.mrb[0].mxu0 %v1753
  %v2016 = vpop.f32.mrb[0].mxu0
  %v2017 = vadd.f32 %v1661, %v2016
  %v2018 = vpop.f32.mrb[0].mxu0
  %v2019 = vpop.f32.mrb[0].mxu0
  %v2020 = vadd.f32 %v1664, %v2019
  %v2021 = vpop.f32.mrb[0].mxu0
  %2022 = vmatprep.mubr.bf16.mxu0 0
  %2023 = vmatmul.mubr.bf16.gmra.mrb[0].mxu0 %v1755
  %v2024 = vpop.f32.mrb[0].mxu0
  %v2025 = vadd.f32 %v1669, %v2024
  %v2026 = vpop.f32.mrb[0].mxu0
  %v2027 = vpop.f32.mrb[0].mxu0
  %v2028 = vadd.f32 %v1672, %v2027
  %v2029 = vpop.f32.mrb[0].mxu0
  %2030 = vmatprep.mubr.bf16.mxu0 0
  %2031 = vmatmul.mubr.bf16.gmra.mrb[0].mxu0 %v1757
  %v2032 = vpop.f32.mrb[0].mxu0
  %v2033 = vadd.f32 %v1677, %v2032
  %v2034 = vpop.f32.mrb[0].mxu0
  %v2035 = vpop.f32.mrb[0].mxu0
  %v2036 = vadd.f32 %v1680, %v2035
  %v2037 = vpop.f32.mrb[0].mxu0
  %2038 = vmatprep.mubr.bf16.mxu0 0
  %2039 = vmatmul.mubr.bf16.gmra.mrb[0].mxu0 %v1759
  %v2040 = vpop.f32.mrb[0].mxu0
  %v2041 = vadd.f32 %v1685, %v2040
  %v2042 = vpop.f32.mrb[0].mxu0
  %v2043 = vpop.f32.mrb[0].mxu0
  %v2044 = vadd.f32 %v1688, %v2043
  %v2045 = vpop.f32.mrb[0].mxu0
  %2046 = vmatprep.mubr.bf16.mxu0 0
  %2047 = vmatmul.mubr.bf16.gmra.mrb[0].mxu0 %v1761
  %v2048 = vpop.f32.mrb[0].mxu0
  %v2049 = vadd.f32 %v1693, %v2048
  %v2050 = vpop.f32.mrb[0].mxu0
  %v2051 = vpop.f32.mrb[0].mxu0
  %v2052 = vadd.f32 %v1696, %v2051
  %v2053 = vpop.f32.mrb[0].mxu0
  %2054 = vdwg.mxu0
  %v2055 = vsel %vm190, 1, 0
  %vm2056 = vcmp.eq.s32.totalorder %v2055, 1
  %v2057 = vsel %vm2056, -3e+38, %v66
  %v2058 = vsel %vm2056, -3e+38, %v69
  %v2059 = vsel %vm2056, -3e+38, %v72
  %v2060 = vsel %vm2056, -3e+38, %v75
  %v2061 = vsel %vm2056, -3e+38, %v78
  %v2062 = vsel %vm2056, -3e+38, %v81
  %v2063 = vsel %vm2056, -3e+38, %v84
  %v2064 = vsel %vm2056, -3e+38, %v87
  %v2065 = vsel %vm2056, -3e+38, %v90
  %v2066 = vsel %vm2056, -3e+38, %v93
  %v2067 = vsel %vm2056, -3e+38, %v96
  %v2068 = vsel %vm2056, -3e+38, %v99
  %v2069 = vsel %vm2056, -3e+38, %v102
  %v2070 = vsel %vm2056, -3e+38, %v105
  %v2071 = vsel %vm2056, -3e+38, %v108
  %v2072 = vsel %vm2056, -3e+38, %v120
  %v2073 = vsel %vm2056, -3e+38, %v123
  %v2074 = vsel %vm2056, -3e+38, %v126
  %v2075 = vsel %vm2056, -3e+38, %v129
  %v2076 = vsel %vm2056, -3e+38, %v132
  %v2077 = vsel %vm2056, -3e+38, %v135
  %v2078 = vsel %vm2056, -3e+38, %v138
  %v2079 = vsel %vm2056, -3e+38, %v141
  %v2080 = vsel %vm2056, -3e+38, %v144
  %v2081 = vsel %vm2056, -3e+38, %v147
  %v2082 = vsel %vm2056, -3e+38, %v150
  %v2083 = vsel %vm2056, -3e+38, %v153
  %v2084 = vsel %vm2056, -3e+38, %v156
  %v2085 = vsel %vm2056, -3e+38, %v159
  %v2086 = vsel %vm2056, -3e+38, %v162
  %v2177 = vrot.slane %v355, 1
  %v2178 = vrot.slane %v356, 1
  %v2179 = vsel %vm571, %v2177, %v2178
  %v2180 = vrot.slane %v2057, 1
  %v2181 = vsel %vm571, %v2178, %v2180
  %v2182 = vrot.slane %v357, 1
  %v2183 = vrot.slane %v358, 1
  %v2184 = vsel %vm571, %v2182, %v2183
  %v2185 = vrot.slane %v2058, 1
  %v2186 = vsel %vm571, %v2183, %v2185
  %v2187 = vrot.slane %v359, 1
  %v2188 = vrot.slane %v360, 1
  %v2189 = vsel %vm571, %v2187, %v2188
  %v2190 = vrot.slane %v2059, 1
  %v2191 = vsel %vm571, %v2188, %v2190
  %v2192 = vrot.slane %v361, 1
  %v2193 = vrot.slane %v362, 1
  %v2194 = vsel %vm571, %v2192, %v2193
  %v2195 = vrot.slane %v2060, 1
  %v2196 = vsel %vm571, %v2193, %v2195
  %v2197 = vrot.slane %v363, 1
  %v2198 = vrot.slane %v364, 1
  %v2199 = vsel %vm571, %v2197, %v2198
  %v2200 = vrot.slane %v2061, 1
  %v2201 = vsel %vm571, %v2198, %v2200
  %v2202 = vrot.slane %v365, 1
  %v2203 = vrot.slane %v366, 1
  %v2204 = vsel %vm571, %v2202, %v2203
  %v2205 = vrot.slane %v2062, 1
  %v2206 = vsel %vm571, %v2203, %v2205
  %v2207 = vrot.slane %v367, 1
  %v2208 = vrot.slane %v368, 1
  %v2209 = vsel %vm571, %v2207, %v2208
  %v2210 = vrot.slane %v2063, 1
  %v2211 = vsel %vm571, %v2208, %v2210
  %v2212 = vrot.slane %v369, 1
  %v2213 = vrot.slane %v370, 1
  %v2214 = vsel %vm571, %v2212, %v2213
  %v2215 = vrot.slane %v2064, 1
  %v2216 = vsel %vm571, %v2213, %v2215
  %v2217 = vrot.slane %v371, 1
  %v2218 = vrot.slane %v372, 1
  %v2219 = vsel %vm571, %v2217, %v2218
  %v2220 = vrot.slane %v2065, 1
  %v2221 = vsel %vm571, %v2218, %v2220
  %v2222 = vrot.slane %v373, 1
  %v2223 = vrot.slane %v374, 1
  %v2224 = vsel %vm571, %v2222, %v2223
  %v2225 = vrot.slane %v2066, 1
  %v2226 = vsel %vm571, %v2223, %v2225
  %v2227 = vrot.slane %v375, 1
  %v2228 = vrot.slane %v376, 1
  %v2229 = vsel %vm571, %v2227, %v2228
  %v2230 = vrot.slane %v2067, 1
  %v2231 = vsel %vm571, %v2228, %v2230
  %v2232 = vrot.slane %v377, 1
  %v2233 = vrot.slane %v378, 1
  %v2234 = vsel %vm571, %v2232, %v2233
  %v2235 = vrot.slane %v2068, 1
  %v2236 = vsel %vm571, %v2233, %v2235
  %v2237 = vrot.slane %v379, 1
  %v2238 = vrot.slane %v380, 1
  %v2239 = vsel %vm571, %v2237, %v2238
  %v2240 = vrot.slane %v2069, 1
  %v2241 = vsel %vm571, %v2238, %v2240
  %v2242 = vrot.slane %v381, 1
  %v2243 = vrot.slane %v382, 1
  %v2244 = vsel %vm571, %v2242, %v2243
  %v2245 = vrot.slane %v2070, 1
  %v2246 = vsel %vm571, %v2243, %v2245
  %v2247 = vrot.slane %v383, 1
  %v2248 = vrot.slane %v384, 1
  %v2249 = vsel %vm571, %v2247, %v2248
  %v2250 = vrot.slane %v2071, 1
  %v2251 = vsel %vm571, %v2248, %v2250
  %v2252 = vrot.slane %v385, 1
  %v2253 = vrot.slane %v386, 1
  %v2254 = vsel %vm571, %v2252, %v2253
  %v2255 = vrot.slane %v2072, 1
  %v2256 = vsel %vm571, %v2253, %v2255
  %v2257 = vrot.slane %v387, 1
  %v2258 = vrot.slane %v388, 1
  %v2259 = vsel %vm571, %v2257, %v2258
  %v2260 = vrot.slane %v2073, 1
  %v2261 = vsel %vm571, %v2258, %v2260
  %v2262 = vrot.slane %v389, 1
  %v2263 = vrot.slane %v390, 1
  %v2264 = vsel %vm571, %v2262, %v2263
  %v2265 = vrot.slane %v2074, 1
  %v2266 = vsel %vm571, %v2263, %v2265
  %v2267 = vrot.slane %v391, 1
  %v2268 = vrot.slane %v392, 1
  %v2269 = vsel %vm571, %v2267, %v2268
  %v2270 = vrot.slane %v2075, 1
  %v2271 = vsel %vm571, %v2268, %v2270
  %v2272 = vrot.slane %v393, 1
  %v2273 = vrot.slane %v394, 1
  %v2274 = vsel %vm571, %v2272, %v2273
  %v2275 = vrot.slane %v2076, 1
  %v2276 = vsel %vm571, %v2273, %v2275
  %v2277 = vrot.slane %v395, 1
  %v2278 = vrot.slane %v396, 1
  %v2279 = vsel %vm571, %v2277, %v2278
  %v2280 = vrot.slane %v2077, 1
  %v2281 = vsel %vm571, %v2278, %v2280
  %v2282 = vrot.slane %v397, 1
  %v2283 = vrot.slane %v398, 1
  %v2284 = vsel %vm571, %v2282, %v2283
  %v2285 = vrot.slane %v2078, 1
  %v2286 = vsel %vm571, %v2283, %v2285
  %v2287 = vrot.slane %v399, 1
  %v2288 = vrot.slane %v400, 1
  %v2289 = vsel %vm571, %v2287, %v2288
  %v2290 = vrot.slane %v2079, 1
  %v2291 = vsel %vm571, %v2288, %v2290
  %v2292 = vrot.slane %v401, 1
  %v2293 = vrot.slane %v402, 1
  %v2294 = vsel %vm571, %v2292, %v2293
  %v2295 = vrot.slane %v2080, 1
  %v2296 = vsel %vm571, %v2293, %v2295
  %v2297 = vrot.slane %v403, 1
  %v2298 = vrot.slane %v404, 1
  %v2299 = vsel %vm571, %v2297, %v2298
  %v2300 = vrot.slane %v2081, 1
  %v2301 = vsel %vm571, %v2298, %v2300
  %v2302 = vrot.slane %v405, 1
  %v2303 = vrot.slane %v406, 1
  %v2304 = vsel %vm571, %v2302, %v2303
  %v2305 = vrot.slane %v2082, 1
  %v2306 = vsel %vm571, %v2303, %v2305
  %v2307 = vrot.slane %v407, 1
  %v2308 = vrot.slane %v408, 1
  %v2309 = vsel %vm571, %v2307, %v2308
  %v2310 = vrot.slane %v2083, 1
  %v2311 = vsel %vm571, %v2308, %v2310
  %v2312 = vrot.slane %v409, 1
  %v2313 = vrot.slane %v410, 1
  %v2314 = vsel %vm571, %v2312, %v2313
  %v2315 = vrot.slane %v2084, 1
  %v2316 = vsel %vm571, %v2313, %v2315
  %v2317 = vrot.slane %v411, 1
  %v2318 = vrot.slane %v412, 1
  %v2319 = vsel %vm571, %v2317, %v2318
  %v2320 = vrot.slane %v2085, 1
  %v2321 = vsel %vm571, %v2318, %v2320
  %v2322 = vrot.slane %v413, 1
  %v2323 = vrot.slane %v414, 1
  %v2324 = vsel %vm571, %v2322, %v2323
  %v2325 = vrot.slane %v2086, 1
  %v2326 = vsel %vm571, %v2323, %v2325
  %v2387 = vmax.f32 %v415, %v2179
  %v2388 = vmax.f32 %v416, %v2181
  %v2389 = vmax.f32 %v417, %v2184
  %v2390 = vmax.f32 %v418, %v2186
  %v2391 = vmax.f32 %v419, %v2189
  %v2392 = vmax.f32 %v420, %v2191
  %v2393 = vmax.f32 %v421, %v2194
  %v2394 = vmax.f32 %v422, %v2196
  %v2395 = vmax.f32 %v423, %v2199
  %v2396 = vmax.f32 %v424, %v2201
  %v2397 = vmax.f32 %v425, %v2204
  %v2398 = vmax.f32 %v426, %v2206
  %v2399 = vmax.f32 %v427, %v2209
  %v2400 = vmax.f32 %v428, %v2211
  %v2401 = vmax.f32 %v429, %v2214
  %v2402 = vmax.f32 %v430, %v2216
  %v2403 = vmax.f32 %v431, %v2219
  %v2404 = vmax.f32 %v432, %v2221
  %v2405 = vmax.f32 %v433, %v2224
  %v2406 = vmax.f32 %v434, %v2226
  %v2407 = vmax.f32 %v435, %v2229
  %v2408 = vmax.f32 %v436, %v2231
  %v2409 = vmax.f32 %v437, %v2234
  %v2410 = vmax.f32 %v438, %v2236
  %v2411 = vmax.f32 %v439, %v2239
  %v2412 = vmax.f32 %v440, %v2241
  %v2413 = vmax.f32 %v441, %v2244
  %v2414 = vmax.f32 %v442, %v2246
  %v2415 = vmax.f32 %v443, %v2249
  %v2416 = vmax.f32 %v444, %v2251
  %v2417 = vmax.f32 %v445, %v2254
  %v2418 = vmax.f32 %v446, %v2256
  %v2419 = vmax.f32 %v447, %v2259
  %v2420 = vmax.f32 %v448, %v2261
  %v2421 = vmax.f32 %v449, %v2264
  %v2422 = vmax.f32 %v450, %v2266
  %v2423 = vmax.f32 %v451, %v2269
  %v2424 = vmax.f32 %v452, %v2271
  %v2425 = vmax.f32 %v453, %v2274
  %v2426 = vmax.f32 %v454, %v2276
  %v2427 = vmax.f32 %v455, %v2279
  %v2428 = vmax.f32 %v456, %v2281
  %v2429 = vmax.f32 %v457, %v2284
  %v2430 = vmax.f32 %v458, %v2286
  %v2431 = vmax.f32 %v459, %v2289
  %v2432 = vmax.f32 %v460, %v2291
  %v2433 = vmax.f32 %v461, %v2294
  %v2434 = vmax.f32 %v462, %v2296
  %v2435 = vmax.f32 %v463, %v2299
  %v2436 = vmax.f32 %v464, %v2301
  %v2437 = vmax.f32 %v465, %v2304
  %v2438 = vmax.f32 %v466, %v2306
  %v2439 = vmax.f32 %v467, %v2309
  %v2440 = vmax.f32 %v468, %v2311
  %v2441 = vmax.f32 %v469, %v2314
  %v2442 = vmax.f32 %v470, %v2316
  %v2443 = vmax.f32 %v471, %v2319
  %v2444 = vmax.f32 %v472, %v2321
  %v2445 = vmax.f32 %v473, %v2324
  %v2446 = vmax.f32 %v474, %v2326
  %vm2447 = vcmask 1045504
  %v2448 = vrot.slane %v61, 2
  %v2449 = vrot.slane %v62, 2
  %v2450 = vsel %vm2447, %v2448, %v2449
  %v2451 = vrot.slane %v63, 2
  %v2452 = vsel %vm2447, %v2449, %v2451
  %v2453 = vrot.slane %v64, 2
  %v2454 = vrot.slane %v65, 2
  %v2455 = vsel %vm2447, %v2453, %v2454
  %v2456 = vrot.slane %v66, 2
  %v2457 = vsel %vm2447, %v2454, %v2456
  %v2458 = vrot.slane %v67, 2
  %v2459 = vrot.slane %v68, 2
  %v2460 = vsel %vm2447, %v2458, %v2459
  %v2461 = vrot.slane %v69, 2
  %v2462 = vsel %vm2447, %v2459, %v2461
  %v2463 = vrot.slane %v70, 2
  %v2464 = vrot.slane %v71, 2
  %v2465 = vsel %vm2447, %v2463, %v2464
  %v2466 = vrot.slane %v72, 2
  %v2467 = vsel %vm2447, %v2464, %v2466
  %v2468 = vrot.slane %v73, 2
  %v2469 = vrot.slane %v74, 2
  %v2470 = vsel %vm2447, %v2468, %v2469
  %v2471 = vrot.slane %v75, 2
  %v2472 = vsel %vm2447, %v2469, %v2471
  %v2473 = vrot.slane %v76, 2
  %v2474 = vrot.slane %v77, 2
  %v2475 = vsel %vm2447, %v2473, %v2474
  %v2476 = vrot.slane %v78, 2
  %v2477 = vsel %vm2447, %v2474, %v2476
  %v2478 = vrot.slane %v79, 2
  %v2479 = vrot.slane %v80, 2
  %v2480 = vsel %vm2447, %v2478, %v2479
  %v2481 = vrot.slane %v81, 2
  %v2482 = vsel %vm2447, %v2479, %v2481
  %v2483 = vrot.slane %v82, 2
  %v2484 = vrot.slane %v83, 2
  %v2485 = vsel %vm2447, %v2483, %v2484
  %v2486 = vrot.slane %v84, 2
  %v2487 = vsel %vm2447, %v2484, %v2486
  %v2488 = vrot.slane %v85, 2
  %v2489 = vrot.slane %v86, 2
  %v2490 = vsel %vm2447, %v2488, %v2489
  %v2491 = vrot.slane %v87, 2
  %v2492 = vsel %vm2447, %v2489, %v2491
  %v2493 = vrot.slane %v88, 2
  %v2494 = vrot.slane %v89, 2
  %v2495 = vsel %vm2447, %v2493, %v2494
  %v2496 = vrot.slane %v90, 2
  %v2497 = vsel %vm2447, %v2494, %v2496
  %v2498 = vrot.slane %v91, 2
  %v2499 = vrot.slane %v92, 2
  %v2500 = vsel %vm2447, %v2498, %v2499
  %v2501 = vrot.slane %v93, 2
  %v2502 = vsel %vm2447, %v2499, %v2501
  %v2503 = vrot.slane %v94, 2
  %v2504 = vrot.slane %v95, 2
  %v2505 = vsel %vm2447, %v2503, %v2504
  %v2506 = vrot.slane %v96, 2
  %v2507 = vsel %vm2447, %v2504, %v2506
  %v2508 = vrot.slane %v97, 2
  %v2509 = vrot.slane %v98, 2
  %v2510 = vsel %vm2447, %v2508, %v2509
  %v2511 = vrot.slane %v99, 2
  %v2512 = vsel %vm2447, %v2509, %v2511
  %v2513 = vrot.slane %v100, 2
  %v2514 = vrot.slane %v101, 2
  %v2515 = vsel %vm2447, %v2513, %v2514
  %v2516 = vrot.slane %v102, 2
  %v2517 = vsel %vm2447, %v2514, %v2516
  %v2518 = vrot.slane %v103, 2
  %v2519 = vrot.slane %v104, 2
  %v2520 = vsel %vm2447, %v2518, %v2519
  %v2521 = vrot.slane %v105, 2
  %v2522 = vsel %vm2447, %v2519, %v2521
  %v2523 = vrot.slane %v106, 2
  %v2524 = vrot.slane %v107, 2
  %v2525 = vsel %vm2447, %v2523, %v2524
  %v2526 = vrot.slane %v108, 2
  %v2527 = vsel %vm2447, %v2524, %v2526
  %v2528 = vrot.slane %v115, 2
  %v2529 = vrot.slane %v116, 2
  %v2530 = vsel %vm2447, %v2528, %v2529
  %v2531 = vrot.slane %v117, 2
  %v2532 = vsel %vm2447, %v2529, %v2531
  %v2533 = vrot.slane %v118, 2
  %v2534 = vrot.slane %v119, 2
  %v2535 = vsel %vm2447, %v2533, %v2534
  %v2536 = vrot.slane %v120, 2
  %v2537 = vsel %vm2447, %v2534, %v2536
  %v2538 = vrot.slane %v121, 2
  %v2539 = vrot.slane %v122, 2
  %v2540 = vsel %vm2447, %v2538, %v2539
  %v2541 = vrot.slane %v123, 2
  %v2542 = vsel %vm2447, %v2539, %v2541
  %v2543 = vrot.slane %v124, 2
  %v2544 = vrot.slane %v125, 2
  %v2545 = vsel %vm2447, %v2543, %v2544
  %v2546 = vrot.slane %v126, 2
  %v2547 = vsel %vm2447, %v2544, %v2546
  %v2548 = vrot.slane %v127, 2
  %v2549 = vrot.slane %v128, 2
  %v2550 = vsel %vm2447, %v2548, %v2549
  %v2551 = vrot.slane %v129, 2
  %v2552 = vsel %vm2447, %v2549, %v2551
  %v2553 = vrot.slane %v130, 2
  %v2554 = vrot.slane %v131, 2
  %v2555 = vsel %vm2447, %v2553, %v2554
  %v2556 = vrot.slane %v132, 2
  %v2557 = vsel %vm2447, %v2554, %v2556
  %v2558 = vrot.slane %v133, 2
  %v2559 = vrot.slane %v134, 2
  %v2560 = vsel %vm2447, %v2558, %v2559
  %v2561 = vrot.slane %v135, 2
  %v2562 = vsel %vm2447, %v2559, %v2561
  %v2563 = vrot.slane %v136, 2
  %v2564 = vrot.slane %v137, 2
  %v2565 = vsel %vm2447, %v2563, %v2564
  %v2566 = vrot.slane %v138, 2
  %v2567 = vsel %vm2447, %v2564, %v2566
  %v2568 = vrot.slane %v139, 2
  %v2569 = vrot.slane %v140, 2
  %v2570 = vsel %vm2447, %v2568, %v2569
  %v2571 = vrot.slane %v141, 2
  %v2572 = vsel %vm2447, %v2569, %v2571
  %v2573 = vrot.slane %v142, 2
  %v2574 = vrot.slane %v143, 2
  %v2575 = vsel %vm2447, %v2573, %v2574
  %v2576 = vrot.slane %v144, 2
  %v2577 = vsel %vm2447, %v2574, %v2576
  %v2578 = vrot.slane %v145, 2
  %v2579 = vrot.slane %v146, 2
  %v2580 = vsel %vm2447, %v2578, %v2579
  %v2581 = vrot.slane %v147, 2
  %v2582 = vsel %vm2447, %v2579, %v2581
  %v2583 = vrot.slane %v148, 2
  %v2584 = vrot.slane %v149, 2
  %v2585 = vsel %vm2447, %v2583, %v2584
  %v2586 = vrot.slane %v150, 2
  %v2587 = vsel %vm2447, %v2584, %v2586
  %v2588 = vrot.slane %v151, 2
  %v2589 = vrot.slane %v152, 2
  %v2590 = vsel %vm2447, %v2588, %v2589
  %v2591 = vrot.slane %v153, 2
  %v2592 = vsel %vm2447, %v2589, %v2591
  %v2593 = vrot.slane %v154, 2
  %v2594 = vrot.slane %v155, 2
  %v2595 = vsel %vm2447, %v2593, %v2594
  %v2596 = vrot.slane %v156, 2
  %v2597 = vsel %vm2447, %v2594, %v2596
  %v2598 = vrot.slane %v157, 2
  %v2599 = vrot.slane %v158, 2
  %v2600 = vsel %vm2447, %v2598, %v2599
  %v2601 = vrot.slane %v159, 2
  %v2602 = vsel %vm2447, %v2599, %v2601
  %v2603 = vrot.slane %v160, 2
  %v2604 = vrot.slane %v161, 2
  %v2605 = vsel %vm2447, %v2603, %v2604
  %v2606 = vrot.slane %v162, 2
  %v2607 = vsel %vm2447, %v2604, %v2606
  %v2672 = vadd.f32 %v796, %v2450
  %v2673 = vadd.f32 %v797, %v2452
  %v2674 = vadd.f32 %v798, %v2455
  %v2675 = vadd.f32 %v799, %v2457
  %v2676 = vadd.f32 %v800, %v2460
  %v2677 = vadd.f32 %v801, %v2462
  %v2678 = vadd.f32 %v802, %v2465
  %v2679 = vadd.f32 %v803, %v2467
  %v2680 = vadd.f32 %v804, %v2470
  %v2681 = vadd.f32 %v805, %v2472
  %v2682 = vadd.f32 %v806, %v2475
  %v2683 = vadd.f32 %v807, %v2477
  %v2684 = vadd.f32 %v808, %v2480
  %v2685 = vadd.f32 %v809, %v2482
  %v2686 = vadd.f32 %v810, %v2485
  %v2687 = vadd.f32 %v811, %v2487
  %v2688 = vadd.f32 %v812, %v2490
  %v2689 = vadd.f32 %v813, %v2492
  %v2690 = vadd.f32 %v814, %v2495
  %v2691 = vadd.f32 %v815, %v2497
  %v2692 = vadd.f32 %v816, %v2500
  %v2693 = vadd.f32 %v817, %v2502
  %v2694 = vadd.f32 %v818, %v2505
  %v2695 = vadd.f32 %v819, %v2507
  %v2696 = vadd.f32 %v820, %v2510
  %v2697 = vadd.f32 %v821, %v2512
  %v2698 = vadd.f32 %v822, %v2515
  %v2699 = vadd.f32 %v823, %v2517
  %v2700 = vadd.f32 %v824, %v2520
  %v2701 = vadd.f32 %v825, %v2522
  %v2702 = vadd.f32 %v826, %v2525
  %v2703 = vadd.f32 %v827, %v2527
  %v2704 = vadd.f32 %v828, %v2530
  %v2705 = vadd.f32 %v829, %v2532
  %v2706 = vadd.f32 %v830, %v2535
  %v2707 = vadd.f32 %v831, %v2537
  %v2708 = vadd.f32 %v832, %v2540
  %v2709 = vadd.f32 %v833, %v2542
  %v2710 = vadd.f32 %v834, %v2545
  %v2711 = vadd.f32 %v835, %v2547
  %v2712 = vadd.f32 %v836, %v2550
  %v2713 = vadd.f32 %v837, %v2552
  %v2714 = vadd.f32 %v838, %v2555
  %v2715 = vadd.f32 %v839, %v2557
  %v2716 = vadd.f32 %v840, %v2560
  %v2717 = vadd.f32 %v841, %v2562
  %v2718 = vadd.f32 %v842, %v2565
  %v2719 = vadd.f32 %v843, %v2567
  %v2720 = vadd.f32 %v844, %v2570
  %v2721 = vadd.f32 %v845, %v2572
  %v2722 = vadd.f32 %v846, %v2575
  %v2723 = vadd.f32 %v847, %v2577
  %v2724 = vadd.f32 %v848, %v2580
  %v2725 = vadd.f32 %v849, %v2582
  %v2726 = vadd.f32 %v850, %v2585
  %v2727 = vadd.f32 %v851, %v2587
  %v2728 = vadd.f32 %v852, %v2590
  %v2729 = vadd.f32 %v853, %v2592
  %v2730 = vadd.f32 %v854, %v2595
  %v2731 = vadd.f32 %v855, %v2597
  %v2732 = vadd.f32 %v856, %v2600
  %v2733 = vadd.f32 %v857, %v2602
  %v2734 = vadd.f32 %v858, %v2605
  %v2735 = vadd.f32 %v859, %v2607
  %vm2800 = vcmask 1046528
  %v2801 = vrot.slane %v319, 1
  %v2802 = vrot.slane %v892, 1
  %v2803 = vsel %vm2800, %v2801, %v2802
  %v2804 = vrot.slane %v320, 1
  %v2805 = vrot.slane %v893, 1
  %v2806 = vsel %vm2800, %v2804, %v2805
  %v2807 = vrot.slane %v321, 1
  %v2808 = vrot.slane %v894, 1
  %v2809 = vsel %vm2800, %v2807, %v2808
  %v2810 = vrot.slane %v322, 1
  %v2811 = vrot.slane %v895, 1
  %v2812 = vsel %vm2800, %v2810, %v2811
  %v2813 = vrot.slane %v323, 1
  %v2814 = vrot.slane %v896, 1
  %v2815 = vsel %vm2800, %v2813, %v2814
  %v2816 = vrot.slane %v324, 1
  %v2817 = vrot.slane %v897, 1
  %v2818 = vsel %vm2800, %v2816, %v2817
  %v2819 = vrot.slane %v325, 1
  %v2820 = vrot.slane %v898, 1
  %v2821 = vsel %vm2800, %v2819, %v2820
  %v2822 = vrot.slane %v326, 1
  %v2823 = vrot.slane %v899, 1
  %v2824 = vsel %vm2800, %v2822, %v2823
  %v2825 = vrot.slane %v327, 1
  %v2826 = vrot.slane %v900, 1
  %v2827 = vsel %vm2800, %v2825, %v2826
  %v2828 = vrot.slane %v328, 1
  %v2829 = vrot.slane %v901, 1
  %v2830 = vsel %vm2800, %v2828, %v2829
  %v2831 = vrot.slane %v329, 1
  %v2832 = vrot.slane %v902, 1
  %v2833 = vsel %vm2800, %v2831, %v2832
  %v2834 = vrot.slane %v330, 1
  %v2835 = vrot.slane %v903, 1
  %v2836 = vsel %vm2800, %v2834, %v2835
  %v2837 = vrot.slane %v331, 1
  %v2838 = vrot.slane %v904, 1
  %v2839 = vsel %vm2800, %v2837, %v2838
  %v2840 = vrot.slane %v332, 1
  %v2841 = vrot.slane %v905, 1
  %v2842 = vsel %vm2800, %v2840, %v2841
  %v2843 = vrot.slane %v333, 1
  %v2844 = vrot.slane %v906, 1
  %v2845 = vsel %vm2800, %v2843, %v2844
  %v2846 = vrot.slane %v334, 1
  %v2847 = vrot.slane %v907, 1
  %v2848 = vsel %vm2800, %v2846, %v2847
  %v2849 = vrot.slane %v335, 1
  %v2850 = vrot.slane %v908, 1
  %v2851 = vsel %vm2800, %v2849, %v2850
  %v2852 = vrot.slane %v336, 1
  %v2853 = vrot.slane %v909, 1
  %v2854 = vsel %vm2800, %v2852, %v2853
  %v2855 = vrot.slane %v337, 1
  %v2856 = vrot.slane %v910, 1
  %v2857 = vsel %vm2800, %v2855, %v2856
  %v2858 = vrot.slane %v338, 1
  %v2859 = vrot.slane %v911, 1
  %v2860 = vsel %vm2800, %v2858, %v2859
  %v2861 = vrot.slane %v339, 1
  %v2862 = vrot.slane %v912, 1
  %v2863 = vsel %vm2800, %v2861, %v2862
  %v2864 = vrot.slane %v340, 1
  %v2865 = vrot.slane %v913, 1
  %v2866 = vsel %vm2800, %v2864, %v2865
  %v2867 = vrot.slane %v341, 1
  %v2868 = vrot.slane %v914, 1
  %v2869 = vsel %vm2800, %v2867, %v2868
  %v2870 = vrot.slane %v342, 1
  %v2871 = vrot.slane %v915, 1
  %v2872 = vsel %vm2800, %v2870, %v2871
  %v2873 = vrot.slane %v343, 1
  %v2874 = vrot.slane %v916, 1
  %v2875 = vsel %vm2800, %v2873, %v2874
  %v2876 = vrot.slane %v344, 1
  %v2877 = vrot.slane %v917, 1
  %v2878 = vsel %vm2800, %v2876, %v2877
  %v2879 = vrot.slane %v345, 1
  %v2880 = vrot.slane %v918, 1
  %v2881 = vsel %vm2800, %v2879, %v2880
  %v2882 = vrot.slane %v346, 1
  %v2883 = vrot.slane %v919, 1
  %v2884 = vsel %vm2800, %v2882, %v2883
  %v2885 = vrot.slane %v347, 1
  %v2886 = vrot.slane %v920, 1
  %v2887 = vsel %vm2800, %v2885, %v2886
  %v2888 = vrot.slane %v348, 1
  %v2889 = vrot.slane %v921, 1
  %v2890 = vsel %vm2800, %v2888, %v2889
  %v2891 = vrot.slane %v349, 1
  %v2892 = vrot.slane %v922, 1
  %v2893 = vsel %vm2800, %v2891, %v2892
  %v2894 = vrot.slane %v350, 1
  %v2895 = vrot.slane %v923, 1
  %v2896 = vsel %vm2800, %v2894, %v2895
  %v2898 = vsel %vm1309, %v2803, 0
  %v2901 = vsel %vm1309, %v2806, 0
  %v2904 = vsel %vm1309, %v2809, 0
  %v2907 = vsel %vm1309, %v2812, 0
  %v2910 = vsel %vm1309, %v2815, 0
  %v2913 = vsel %vm1309, %v2818, 0
  %v2916 = vsel %vm1309, %v2821, 0
  %v2919 = vsel %vm1309, %v2824, 0
  %v2922 = vsel %vm1309, %v2827, 0
  %v2925 = vsel %vm1309, %v2830, 0
  %v2928 = vsel %vm1309, %v2833, 0
  %v2931 = vsel %vm1309, %v2836, 0
  %v2934 = vsel %vm1309, %v2839, 0
  %v2937 = vsel %vm1309, %v2842, 0
  %v2940 = vsel %vm1309, %v2845, 0
  %v2943 = vsel %vm1309, %v2848, 0
  %v2946 = vsel %vm1309, %v2851, 0
  %v2949 = vsel %vm1309, %v2854, 0
  %v2952 = vsel %vm1309, %v2857, 0
  %v2955 = vsel %vm1309, %v2860, 0
  %v2958 = vsel %vm1309, %v2863, 0
  %v2961 = vsel %vm1309, %v2866, 0
  %v2964 = vsel %vm1309, %v2869, 0
  %v2967 = vsel %vm1309, %v2872, 0
  %v2970 = vsel %vm1309, %v2875, 0
  %v2973 = vsel %vm1309, %v2878, 0
  %v2976 = vsel %vm1309, %v2881, 0
  %v2979 = vsel %vm1309, %v2884, 0
  %v2982 = vsel %vm1309, %v2887, 0
  %v2985 = vsel %vm1309, %v2890, 0
  %v2988 = vsel %vm1309, %v2893, 0
  %v2991 = vsel %vm1309, %v2896, 0
  %v2994 = vsel %vm1406, %v171, 0
  %2996 = vmatprep.subr.bf16.mxu0 0
  %2997 = vmatpush1.bf16.msra.mxu0 %v2994
  %2998 = vmatprep.subr.bf16.mxu0 0
  %2999 = vmatpush1.bf16.msra.mxu0 0
  %3000 = vmatprep.subr.bf16.mxu0 0
  %3001 = vmatpush1.bf16.msra.mxu0 0
  %3002 = vmatprep.subr.bf16.mxu0 0
  %3003 = vmatpush1.bf16.msra.mxu0 0
  %3004 = vmatprep.subr.bf16.mxu0 0
  %3005 = vmatpush1.bf16.msra.mxu0 0
  %3006 = vmatprep.subr.bf16.mxu0 0
  %3007 = vmatpush1.bf16.msra.mxu0 0
  %3008 = vmatprep.subr.bf16.mxu0 0
  %3009 = vmatpush1.bf16.msra.mxu0 0
  %3010 = vmatprep.subr.bf16.mxu0 0
  %3011 = vmatpush1.bf16.msra.mxu0 0
  %3012 = vmatprep.subr.bf16.mxu0 0
  %3013 = vmatpush1.bf16.msra.mxu0 0
  %3014 = vmatprep.subr.bf16.mxu0 0
  %3015 = vmatpush1.bf16.msra.mxu0 0
  %3016 = vmatprep.subr.bf16.mxu0 0
  %3017 = vmatpush1.bf16.msra.mxu0 0
  %3018 = vmatprep.subr.bf16.mxu0 0
  %3019 = vmatpush1.bf16.msra.mxu0 0
  %3020 = vmatprep.subr.bf16.mxu0 0
  %3021 = vmatpush1.bf16.msra.mxu0 0
  %3022 = vmatprep.subr.bf16.mxu0 0
  %3023 = vmatpush1.bf16.msra.mxu0 0
  %3024 = vmatprep.subr.bf16.mxu0 0
  %3025 = vmatpush1.bf16.msra.mxu0 0
  %3026 = vmatprep.subr.bf16.mxu0 0
  %3027 = vmatpush1.bf16.msra.mxu0 0
  %3028 = vmatprep.mubr.bf16.mxu0 0
  %3029 = vmatmul.mubr.bf16.gmra.mrb[0].mxu0 %v2898
  %v3030 = vpop.f32.mrb[0].mxu0
  %v3031 = vadd.f32 0.0, %v3030
  %v3032 = vpop.f32.mrb[0].mxu0
  %v3033 = vpop.f32.mrb[0].mxu0
  %v3034 = vadd.f32 0.0, %v3033
  %v3035 = vpop.f32.mrb[0].mxu0
  %3036 = vmatprep.mubr.bf16.mxu0 0
  %3037 = vmatmul.mubr.bf16.gmra.mrb[0].mxu0 %v2901
  %v3038 = vpop.f32.mrb[0].mxu0
  %v3039 = vadd.f32 0.0, %v3038
  %v3040 = vpop.f32.mrb[0].mxu0
  %v3041 = vpop.f32.mrb[0].mxu0
  %v3042 = vadd.f32 0.0, %v3041
  %v3043 = vpop.f32.mrb[0].mxu0
  %3044 = vmatprep.mubr.bf16.mxu0 0
  %3045 = vmatmul.mubr.bf16.gmra.mrb[0].mxu0 %v2904
  %v3046 = vpop.f32.mrb[0].mxu0
  %v3047 = vadd.f32 0.0, %v3046
  %v3048 = vpop.f32.mrb[0].mxu0
  %v3049 = vpop.f32.mrb[0].mxu0
  %v3050 = vadd.f32 0.0, %v3049
  %v3051 = vpop.f32.mrb[0].mxu0
  %3052 = vmatprep.mubr.bf16.mxu0 0
  %3053 = vmatmul.mubr.bf16.gmra.mrb[0].mxu0 %v2907
  %v3054 = vpop.f32.mrb[0].mxu0
  %v3055 = vadd.f32 0.0, %v3054
  %v3056 = vpop.f32.mrb[0].mxu0
  %v3057 = vpop.f32.mrb[0].mxu0
  %v3058 = vadd.f32 0.0, %v3057
  %v3059 = vpop.f32.mrb[0].mxu0
  %3060 = vmatprep.mubr.bf16.mxu0 0
  %3061 = vmatmul.mubr.bf16.gmra.mrb[0].mxu0 %v2910
  %v3062 = vpop.f32.mrb[0].mxu0
  %v3063 = vadd.f32 0.0, %v3062
  %v3064 = vpop.f32.mrb[0].mxu0
  %v3065 = vpop.f32.mrb[0].mxu0
  %v3066 = vadd.f32 0.0, %v3065
  %v3067 = vpop.f32.mrb[0].mxu0
  %3068 = vmatprep.mubr.bf16.mxu0 0
  %3069 = vmatmul.mubr.bf16.gmra.mrb[0].mxu0 %v2913
  %v3070 = vpop.f32.mrb[0].mxu0
  %v3071 = vadd.f32 0.0, %v3070
  %v3072 = vpop.f32.mrb[0].mxu0
  %v3073 = vpop.f32.mrb[0].mxu0
  %v3074 = vadd.f32 0.0, %v3073
  %v3075 = vpop.f32.mrb[0].mxu0
  %3076 = vmatprep.mubr.bf16.mxu0 0
  %3077 = vmatmul.mubr.bf16.gmra.mrb[0].mxu0 %v2916
  %v3078 = vpop.f32.mrb[0].mxu0
  %v3079 = vadd.f32 0.0, %v3078
  %v3080 = vpop.f32.mrb[0].mxu0
  %v3081 = vpop.f32.mrb[0].mxu0
  %v3082 = vadd.f32 0.0, %v3081
  %v3083 = vpop.f32.mrb[0].mxu0
  %3084 = vmatprep.mubr.bf16.mxu0 0
  %3085 = vmatmul.mubr.bf16.gmra.mrb[0].mxu0 %v2919
  %v3086 = vpop.f32.mrb[0].mxu0
  %v3087 = vadd.f32 0.0, %v3086
  %v3088 = vpop.f32.mrb[0].mxu0
  %v3089 = vpop.f32.mrb[0].mxu0
  %v3090 = vadd.f32 0.0, %v3089
  %v3091 = vpop.f32.mrb[0].mxu0
  %3092 = vmatprep.mubr.bf16.mxu0 0
  %3093 = vmatmul.mubr.bf16.gmra.mrb[0].mxu0 %v2922
  %v3094 = vpop.f32.mrb[0].mxu0
  %v3095 = vadd.f32 0.0, %v3094
  %v3096 = vpop.f32.mrb[0].mxu0
  %v3097 = vpop.f32.mrb[0].mxu0
  %v3098 = vadd.f32 0.0, %v3097
  %v3099 = vpop.f32.mrb[0].mxu0
  %3100 = vmatprep.mubr.bf16.mxu0 0
  %3101 = vmatmul.mubr.bf16.gmra.mrb[0].mxu0 %v2925
  %v3102 = vpop.f32.mrb[0].mxu0
  %v3103 = vadd.f32 0.0, %v3102
  %v3104 = vpop.f32.mrb[0].mxu0
  %v3105 = vpop.f32.mrb[0].mxu0
  %v3106 = vadd.f32 0.0, %v3105
  %v3107 = vpop.f32.mrb[0].mxu0
  %3108 = vmatprep.mubr.bf16.mxu0 0
  %3109 = vmatmul.mubr.bf16.gmra.mrb[0].mxu0 %v2928
  %v3110 = vpop.f32.mrb[0].mxu0
  %v3111 = vadd.f32 0.0, %v3110
  %v3112 = vpop.f32.mrb[0].mxu0
  %v3113 = vpop.f32.mrb[0].mxu0
  %v3114 = vadd.f32 0.0, %v3113
  %v3115 = vpop.f32.mrb[0].mxu0
  %3116 = vmatprep.mubr.bf16.mxu0 0
  %3117 = vmatmul.mubr.bf16.gmra.mrb[0].mxu0 %v2931
  %v3118 = vpop.f32.mrb[0].mxu0
  %v3119 = vadd.f32 0.0, %v3118
  %v3120 = vpop.f32.mrb[0].mxu0
  %v3121 = vpop.f32.mrb[0].mxu0
  %v3122 = vadd.f32 0.0, %v3121
  %v3123 = vpop.f32.mrb[0].mxu0
  %3124 = vmatprep.mubr.bf16.mxu0 0
  %3125 = vmatmul.mubr.bf16.gmra.mrb[0].mxu0 %v2934
  %v3126 = vpop.f32.mrb[0].mxu0
  %v3127 = vadd.f32 0.0, %v3126
  %v3128 = vpop.f32.mrb[0].mxu0
  %v3129 = vpop.f32.mrb[0].mxu0
  %v3130 = vadd.f32 0.0, %v3129
  %v3131 = vpop.f32.mrb[0].mxu0
  %3132 = vmatprep.mubr.bf16.mxu0 0
  %3133 = vmatmul.mubr.bf16.gmra.mrb[0].mxu0 %v2937
  %v3134 = vpop.f32.mrb[0].mxu0
  %v3135 = vadd.f32 0.0, %v3134
  %v3136 = vpop.f32.mrb[0].mxu0
  %v3137 = vpop.f32.mrb[0].mxu0
  %v3138 = vadd.f32 0.0, %v3137
  %v3139 = vpop.f32.mrb[0].mxu0
  %3140 = vmatprep.mubr.bf16.mxu0 0
  %3141 = vmatmul.mubr.bf16.gmra.mrb[0].mxu0 %v2940
  %v3142 = vpop.f32.mrb[0].mxu0
  %v3143 = vadd.f32 0.0, %v3142
  %v3144 = vpop.f32.mrb[0].mxu0
  %v3145 = vpop.f32.mrb[0].mxu0
  %v3146 = vadd.f32 0.0, %v3145
  %v3147 = vpop.f32.mrb[0].mxu0
  %3148 = vmatprep.mubr.bf16.mxu0 0
  %3149 = vmatmul.mubr.bf16.gmra.mrb[0].mxu0 %v2943
  %v3150 = vpop.f32.mrb[0].mxu0
  %v3151 = vadd.f32 0.0, %v3150
  %v3152 = vpop.f32.mrb[0].mxu0
  %v3153 = vpop.f32.mrb[0].mxu0
  %v3154 = vadd.f32 0.0, %v3153
  %v3155 = vpop.f32.mrb[0].mxu0
  %3156 = vmatprep.mubr.bf16.mxu0 0
  %3157 = vmatmul.mubr.bf16.gmra.mrb[0].mxu0 %v2946
  %v3158 = vpop.f32.mrb[0].mxu0
  %v3159 = vadd.f32 0.0, %v3158
  %v3160 = vpop.f32.mrb[0].mxu0
  %v3161 = vpop.f32.mrb[0].mxu0
  %v3162 = vadd.f32 0.0, %v3161
  %v3163 = vpop.f32.mrb[0].mxu0
  %3164 = vmatprep.mubr.bf16.mxu0 0
  %3165 = vmatmul.mubr.bf16.gmra.mrb[0].mxu0 %v2949
  %v3166 = vpop.f32.mrb[0].mxu0
  %v3167 = vadd.f32 0.0, %v3166
  %v3168 = vpop.f32.mrb[0].mxu0
  %v3169 = vpop.f32.mrb[0].mxu0
  %v3170 = vadd.f32 0.0, %v3169
  %v3171 = vpop.f32.mrb[0].mxu0
  %3172 = vmatprep.mubr.bf16.mxu0 0
  %3173 = vmatmul.mubr.bf16.gmra.mrb[0].mxu0 %v2952
  %v3174 = vpop.f32.mrb[0].mxu0
  %v3175 = vadd.f32 0.0, %v3174
  %v3176 = vpop.f32.mrb[0].mxu0
  %v3177 = vpop.f32.mrb[0].mxu0
  %v3178 = vadd.f32 0.0, %v3177
  %v3179 = vpop.f32.mrb[0].mxu0
  %3180 = vmatprep.mubr.bf16.mxu0 0
  %3181 = vmatmul.mubr.bf16.gmra.mrb[0].mxu0 %v2955
  %v3182 = vpop.f32.mrb[0].mxu0
  %v3183 = vadd.f32 0.0, %v3182
  %v3184 = vpop.f32.mrb[0].mxu0
  %v3185 = vpop.f32.mrb[0].mxu0
  %v3186 = vadd.f32 0.0, %v3185
  %v3187 = vpop.f32.mrb[0].mxu0
  %3188 = vmatprep.mubr.bf16.mxu0 0
  %3189 = vmatmul.mubr.bf16.gmra.mrb[0].mxu0 %v2958
  %v3190 = vpop.f32.mrb[0].mxu0
  %v3191 = vadd.f32 0.0, %v3190
  %v3192 = vpop.f32.mrb[0].mxu0
  %v3193 = vpop.f32.mrb[0].mxu0
  %v3194 = vadd.f32 0.0, %v3193
  %v3195 = vpop.f32.mrb[0].mxu0
  %3196 = vmatprep.mubr.bf16.mxu0 0
  %3197 = vmatmul.mubr.bf16.gmra.mrb[0].mxu0 %v2961
  %v3198 = vpop.f32.mrb[0].mxu0
  %v3199 = vadd.f32 0.0, %v3198
  %v3200 = vpop.f32.mrb[0].mxu0
  %v3201 = vpop.f32.mrb[0].mxu0
  %v3202 = vadd.f32 0.0, %v3201
  %v3203 = vpop.f32.mrb[0].mxu0
  %3204 = vmatprep.mubr.bf16.mxu0 0
  %3205 = vmatmul.mubr.bf16.gmra.mrb[0].mxu0 %v2964
  %v3206 = vpop.f32.mrb[0].mxu0
  %v3207 = vadd.f32 0.0, %v3206
  %v3208 = vpop.f32.mrb[0].mxu0
  %v3209 = vpop.f32.mrb[0].mxu0
  %v3210 = vadd.f32 0.0, %v3209
  %v3211 = vpop.f32.mrb[0].mxu0
  %3212 = vmatprep.mubr.bf16.mxu0 0
  %3213 = vmatmul.mubr.bf16.gmra.mrb[0].mxu0 %v2967
  %v3214 = vpop.f32.mrb[0].mxu0
  %v3215 = vadd.f32 0.0, %v3214
  %v3216 = vpop.f32.mrb[0].mxu0
  %v3217 = vpop.f32.mrb[0].mxu0
  %v3218 = vadd.f32 0.0, %v3217
  %v3219 = vpop.f32.mrb[0].mxu0
  %3220 = vmatprep.mubr.bf16.mxu0 0
  %3221 = vmatmul.mubr.bf16.gmra.mrb[0].mxu0 %v2970
  %v3222 = vpop.f32.mrb[0].mxu0
  %v3223 = vadd.f32 0.0, %v3222
  %v3224 = vpop.f32.mrb[0].mxu0
  %v3225 = vpop.f32.mrb[0].mxu0
  %v3226 = vadd.f32 0.0, %v3225
  %v3227 = vpop.f32.mrb[0].mxu0
  %3228 = vmatprep.mubr.bf16.mxu0 0
  %3229 = vmatmul.mubr.bf16.gmra.mrb[0].mxu0 %v2973
  %v3230 = vpop.f32.mrb[0].mxu0
  %v3231 = vadd.f32 0.0, %v3230
  %v3232 = vpop.f32.mrb[0].mxu0
  %v3233 = vpop.f32.mrb[0].mxu0
  %v3234 = vadd.f32 0.0, %v3233
  %v3235 = vpop.f32.mrb[0].mxu0
  %3236 = vmatprep.mubr.bf16.mxu0 0
  %3237 = vmatmul.mubr.bf16.gmra.mrb[0].mxu0 %v2976
  %v3238 = vpop.f32.mrb[0].mxu0
  %v3239 = vadd.f32 0.0, %v3238
  %v3240 = vpop.f32.mrb[0].mxu0
  %v3241 = vpop.f32.mrb[0].mxu0
  %v3242 = vadd.f32 0.0, %v3241
  %v3243 = vpop.f32.mrb[0].mxu0
  %3244 = vmatprep.mubr.bf16.mxu0 0
  %3245 = vmatmul.mubr.bf16.gmra.mrb[0].mxu0 %v2979
  %v3246 = vpop.f32.mrb[0].mxu0
  %v3247 = vadd.f32 0.0, %v3246
  %v3248 = vpop.f32.mrb[0].mxu0
  %v3249 = vpop.f32.mrb[0].mxu0
  %v3250 = vadd.f32 0.0, %v3249
  %v3251 = vpop.f32.mrb[0].mxu0
  %3252 = vmatprep.mubr.bf16.mxu0 0
  %3253 = vmatmul.mubr.bf16.gmra.mrb[0].mxu0 %v2982
  %v3254 = vpop.f32.mrb[0].mxu0
  %v3255 = vadd.f32 0.0, %v3254
  %v3256 = vpop.f32.mrb[0].mxu0
  %v3257 = vpop.f32.mrb[0].mxu0
  %v3258 = vadd.f32 0.0, %v3257
  %v3259 = vpop.f32.mrb[0].mxu0
  %3260 = vmatprep.mubr.bf16.mxu0 0
  %3261 = vmatmul.mubr.bf16.gmra.mrb[0].mxu0 %v2985
  %v3262 = vpop.f32.mrb[0].mxu0
  %v3263 = vadd.f32 0.0, %v3262
  %v3264 = vpop.f32.mrb[0].mxu0
  %v3265 = vpop.f32.mrb[0].mxu0
  %v3266 = vadd.f32 0.0, %v3265
  %v3267 = vpop.f32.mrb[0].mxu0
  %3268 = vmatprep.mubr.bf16.mxu0 0
  %3269 = vmatmul.mubr.bf16.gmra.mrb[0].mxu0 %v2988
  %v3270 = vpop.f32.mrb[0].mxu0
  %v3271 = vadd.f32 0.0, %v3270
  %v3272 = vpop.f32.mrb[0].mxu0
  %v3273 = vpop.f32.mrb[0].mxu0
  %v3274 = vadd.f32 0.0, %v3273
  %v3275 = vpop.f32.mrb[0].mxu0
  %3276 = vmatprep.mubr.bf16.mxu0 0
  %3277 = vmatmul.mubr.bf16.gmra.mrb[0].mxu0 %v2991
  %v3278 = vpop.f32.mrb[0].mxu0
  %v3279 = vadd.f32 0.0, %v3278
  %v3280 = vpop.f32.mrb[0].mxu0
  %v3281 = vpop.f32.mrb[0].mxu0
  %v3282 = vadd.f32 0.0, %v3281
  %v3283 = vpop.f32.mrb[0].mxu0
  %3284 = vdwg.mxu0
  %v3285 = vadd.f32 %v1801, %v3031
  %v3286 = vadd.f32 %v1804, %v3034
  %v3287 = vadd.f32 %v1809, %v3039
  %v3288 = vadd.f32 %v1812, %v3042
  %v3289 = vadd.f32 %v1817, %v3047
  %v3290 = vadd.f32 %v1820, %v3050
  %v3291 = vadd.f32 %v1825, %v3055
  %v3292 = vadd.f32 %v1828, %v3058
  %v3293 = vadd.f32 %v1833, %v3063
  %v3294 = vadd.f32 %v1836, %v3066
  %v3295 = vadd.f32 %v1841, %v3071
  %v3296 = vadd.f32 %v1844, %v3074
  %v3297 = vadd.f32 %v1849, %v3079
  %v3298 = vadd.f32 %v1852, %v3082
  %v3299 = vadd.f32 %v1857, %v3087
  %v3300 = vadd.f32 %v1860, %v3090
  %v3301 = vadd.f32 %v1865, %v3095
  %v3302 = vadd.f32 %v1868, %v3098
  %v3303 = vadd.f32 %v1873, %v3103
  %v3304 = vadd.f32 %v1876, %v3106
  %v3305 = vadd.f32 %v1881, %v3111
  %v3306 = vadd.f32 %v1884, %v3114
  %v3307 = vadd.f32 %v1889, %v3119
  %v3308 = vadd.f32 %v1892, %v3122
  %v3309 = vadd.f32 %v1897, %v3127
  %v3310 = vadd.f32 %v1900, %v3130
  %v3311 = vadd.f32 %v1905, %v3135
  %v3312 = vadd.f32 %v1908, %v3138
  %v3313 = vadd.f32 %v1913, %v3143
  %v3314 = vadd.f32 %v1916, %v3146
  %v3315 = vadd.f32 %v1921, %v3151
  %v3316 = vadd.f32 %v1924, %v3154
  %v3317 = vadd.f32 %v1929, %v3159
  %v3318 = vadd.f32 %v1932, %v3162
  %v3319 = vadd.f32 %v1937, %v3167
  %v3320 = vadd.f32 %v1940, %v3170
  %v3321 = vadd.f32 %v1945, %v3175
  %v3322 = vadd.f32 %v1948, %v3178
  %v3323 = vadd.f32 %v1953, %v3183
  %v3324 = vadd.f32 %v1956, %v3186
  %v3325 = vadd.f32 %v1961, %v3191
  %v3326 = vadd.f32 %v1964, %v3194
  %v3327 = vadd.f32 %v1969, %v3199
  %v3328 = vadd.f32 %v1972, %v3202
  %v3329 = vadd.f32 %v1977, %v3207
  %v3330 = vadd.f32 %v1980, %v3210
  %v3331 = vadd.f32 %v1985, %v3215
  %v3332 = vadd.f32 %v1988, %v3218
  %v3333 = vadd.f32 %v1993, %v3223
  %v3334 = vadd.f32 %v1996, %v3226
  %v3335 = vadd.f32 %v2001, %v3231
  %v3336 = vadd.f32 %v2004, %v3234
  %v3337 = vadd.f32 %v2009, %v3239
  %v3338 = vadd.f32 %v2012, %v3242
  %v3339 = vadd.f32 %v2017, %v3247
  %v3340 = vadd.f32 %v2020, %v3250
  %v3341 = vadd.f32 %v2025, %v3255
  %v3342 = vadd.f32 %v2028, %v3258
  %v3343 = vadd.f32 %v2033, %v3263
  %v3344 = vadd.f32 %v2036, %v3266
  %v3345 = vadd.f32 %v2041, %v3271
  %v3346 = vadd.f32 %v2044, %v3274
  %v3347 = vadd.f32 %v2049, %v3279
  %v3348 = vadd.f32 %v2052, %v3282
  %v3349 = vrot.slane %v355, 2
  %v3350 = vrot.slane %v356, 2
  %v3351 = vsel %vm2447, %v3349, %v3350
  %v3352 = vrot.slane %v2057, 2
  %v3353 = vsel %vm2447, %v3350, %v3352
  %v3354 = vrot.slane %v357, 2
  %v3355 = vrot.slane %v358, 2
  %v3356 = vsel %vm2447, %v3354, %v3355
  %v3357 = vrot.slane %v2058, 2
  %v3358 = vsel %vm2447, %v3355, %v3357
  %v3359 = vrot.slane %v359, 2
  %v3360 = vrot.slane %v360, 2
  %v3361 = vsel %vm2447, %v3359, %v3360
  %v3362 = vrot.slane %v2059, 2
  %v3363 = vsel %vm2447, %v3360, %v3362
  %v3364 = vrot.slane %v361, 2
  %v3365 = vrot.slane %v362, 2
  %v3366 = vsel %vm2447, %v3364, %v3365
  %v3367 = vrot.slane %v2060, 2
  %v3368 = vsel %vm2447, %v3365, %v3367
  %v3369 = vrot.slane %v363, 2
  %v3370 = vrot.slane %v364, 2
  %v3371 = vsel %vm2447, %v3369, %v3370
  %v3372 = vrot.slane %v2061, 2
  %v3373 = vsel %vm2447, %v3370, %v3372
  %v3374 = vrot.slane %v365, 2
  %v3375 = vrot.slane %v366, 2
  %v3376 = vsel %vm2447, %v3374, %v3375
  %v3377 = vrot.slane %v2062, 2
  %v3378 = vsel %vm2447, %v3375, %v3377
  %v3379 = vrot.slane %v367, 2
  %v3380 = vrot.slane %v368, 2
  %v3381 = vsel %vm2447, %v3379, %v3380
  %v3382 = vrot.slane %v2063, 2
  %v3383 = vsel %vm2447, %v3380, %v3382
  %v3384 = vrot.slane %v369, 2
  %v3385 = vrot.slane %v370, 2
  %v3386 = vsel %vm2447, %v3384, %v3385
  %v3387 = vrot.slane %v2064, 2
  %v3388 = vsel %vm2447, %v3385, %v3387
  %v3389 = vrot.slane %v371, 2
  %v3390 = vrot.slane %v372, 2
  %v3391 = vsel %vm2447, %v3389, %v3390
  %v3392 = vrot.slane %v2065, 2
  %v3393 = vsel %vm2447, %v3390, %v3392
  %v3394 = vrot.slane %v373, 2
  %v3395 = vrot.slane %v374, 2
  %v3396 = vsel %vm2447, %v3394, %v3395
  %v3397 = vrot.slane %v2066, 2
  %v3398 = vsel %vm2447, %v3395, %v3397
  %v3399 = vrot.slane %v375, 2
  %v3400 = vrot.slane %v376, 2
  %v3401 = vsel %vm2447, %v3399, %v3400
  %v3402 = vrot.slane %v2067, 2
  %v3403 = vsel %vm2447, %v3400, %v3402
  %v3404 = vrot.slane %v377, 2
  %v3405 = vrot.slane %v378, 2
  %v3406 = vsel %vm2447, %v3404, %v3405
  %v3407 = vrot.slane %v2068, 2
  %v3408 = vsel %vm2447, %v3405, %v3407
  %v3409 = vrot.slane %v379, 2
  %v3410 = vrot.slane %v380, 2
  %v3411 = vsel %vm2447, %v3409, %v3410
  %v3412 = vrot.slane %v2069, 2
  %v3413 = vsel %vm2447, %v3410, %v3412
  %v3414 = vrot.slane %v381, 2
  %v3415 = vrot.slane %v382, 2
  %v3416 = vsel %vm2447, %v3414, %v3415
  %v3417 = vrot.slane %v2070, 2
  %v3418 = vsel %vm2447, %v3415, %v3417
  %v3419 = vrot.slane %v383, 2
  %v3420 = vrot.slane %v384, 2
  %v3421 = vsel %vm2447, %v3419, %v3420
  %v3422 = vrot.slane %v2071, 2
  %v3423 = vsel %vm2447, %v3420, %v3422
  %v3424 = vrot.slane %v385, 2
  %v3425 = vrot.slane %v386, 2
  %v3426 = vsel %vm2447, %v3424, %v3425
  %v3427 = vrot.slane %v2072, 2
  %v3428 = vsel %vm2447, %v3425, %v3427
  %v3429 = vrot.slane %v387, 2
  %v3430 = vrot.slane %v388, 2
  %v3431 = vsel %vm2447, %v3429, %v3430
  %v3432 = vrot.slane %v2073, 2
  %v3433 = vsel %vm2447, %v3430, %v3432
  %v3434 = vrot.slane %v389, 2
  %v3435 = vrot.slane %v390, 2
  %v3436 = vsel %vm2447, %v3434, %v3435
  %v3437 = vrot.slane %v2074, 2
  %v3438 = vsel %vm2447, %v3435, %v3437
  %v3439 = vrot.slane %v391, 2
  %v3440 = vrot.slane %v392, 2
  %v3441 = vsel %vm2447, %v3439, %v3440
  %v3442 = vrot.slane %v2075, 2
  %v3443 = vsel %vm2447, %v3440, %v3442
  %v3444 = vrot.slane %v393, 2
  %v3445 = vrot.slane %v394, 2
  %v3446 = vsel %vm2447, %v3444, %v3445
  %v3447 = vrot.slane %v2076, 2
  %v3448 = vsel %vm2447, %v3445, %v3447
  %v3449 = vrot.slane %v395, 2
  %v3450 = vrot.slane %v396, 2
  %v3451 = vsel %vm2447, %v3449, %v3450
  %v3452 = vrot.slane %v2077, 2
  %v3453 = vsel %vm2447, %v3450, %v3452
  %v3454 = vrot.slane %v397, 2
  %v3455 = vrot.slane %v398, 2
  %v3456 = vsel %vm2447, %v3454, %v3455
  %v3457 = vrot.slane %v2078, 2
  %v3458 = vsel %vm2447, %v3455, %v3457
  %v3459 = vrot.slane %v399, 2
  %v3460 = vrot.slane %v400, 2
  %v3461 = vsel %vm2447, %v3459, %v3460
  %v3462 = vrot.slane %v2079, 2
  %v3463 = vsel %vm2447, %v3460, %v3462
  %v3464 = vrot.slane %v401, 2
  %v3465 = vrot.slane %v402, 2
  %v3466 = vsel %vm2447, %v3464, %v3465
  %v3467 = vrot.slane %v2080, 2
  %v3468 = vsel %vm2447, %v3465, %v3467
  %v3469 = vrot.slane %v403, 2
  %v3470 = vrot.slane %v404, 2
  %v3471 = vsel %vm2447, %v3469, %v3470
  %v3472 = vrot.slane %v2081, 2
  %v3473 = vsel %vm2447, %v3470, %v3472
  %v3474 = vrot.slane %v405, 2
  %v3475 = vrot.slane %v406, 2
  %v3476 = vsel %vm2447, %v3474, %v3475
  %v3477 = vrot.slane %v2082, 2
  %v3478 = vsel %vm2447, %v3475, %v3477
  %v3479 = vrot.slane %v407, 2
  %v3480 = vrot.slane %v408, 2
  %v3481 = vsel %vm2447, %v3479, %v3480
  %v3482 = vrot.slane %v2083, 2
  %v3483 = vsel %vm2447, %v3480, %v3482
  %v3484 = vrot.slane %v409, 2
  %v3485 = vrot.slane %v410, 2
  %v3486 = vsel %vm2447, %v3484, %v3485
  %v3487 = vrot.slane %v2084, 2
  %v3488 = vsel %vm2447, %v3485, %v3487
  %v3489 = vrot.slane %v411, 2
  %v3490 = vrot.slane %v412, 2
  %v3491 = vsel %vm2447, %v3489, %v3490
  %v3492 = vrot.slane %v2085, 2
  %v3493 = vsel %vm2447, %v3490, %v3492
  %v3494 = vrot.slane %v413, 2
  %v3495 = vrot.slane %v414, 2
  %v3496 = vsel %vm2447, %v3494, %v3495
  %v3497 = vrot.slane %v2086, 2
  %v3498 = vsel %vm2447, %v3495, %v3497
  %v3559 = vmax.f32 %v2387, %v3351
  %v3560 = vmax.f32 %v2388, %v3353
  %v3561 = vmax.f32 %v2389, %v3356
  %v3562 = vmax.f32 %v2390, %v3358
  %v3563 = vmax.f32 %v2391, %v3361
  %v3564 = vmax.f32 %v2392, %v3363
  %v3565 = vmax.f32 %v2393, %v3366
  %v3566 = vmax.f32 %v2394, %v3368
  %v3567 = vmax.f32 %v2395, %v3371
  %v3568 = vmax.f32 %v2396, %v3373
  %v3569 = vmax.f32 %v2397, %v3376
  %v3570 = vmax.f32 %v2398, %v3378
  %v3571 = vmax.f32 %v2399, %v3381
  %v3572 = vmax.f32 %v2400, %v3383
  %v3573 = vmax.f32 %v2401, %v3386
  %v3574 = vmax.f32 %v2402, %v3388
  %v3575 = vmax.f32 %v2403, %v3391
  %v3576 = vmax.f32 %v2404, %v3393
  %v3577 = vmax.f32 %v2405, %v3396
  %v3578 = vmax.f32 %v2406, %v3398
  %v3579 = vmax.f32 %v2407, %v3401
  %v3580 = vmax.f32 %v2408, %v3403
  %v3581 = vmax.f32 %v2409, %v3406
  %v3582 = vmax.f32 %v2410, %v3408
  %v3583 = vmax.f32 %v2411, %v3411
  %v3584 = vmax.f32 %v2412, %v3413
  %v3585 = vmax.f32 %v2413, %v3416
  %v3586 = vmax.f32 %v2414, %v3418
  %v3587 = vmax.f32 %v2415, %v3421
  %v3588 = vmax.f32 %v2416, %v3423
  %v3589 = vmax.f32 %v2417, %v3426
  %v3590 = vmax.f32 %v2418, %v3428
  %v3591 = vmax.f32 %v2419, %v3431
  %v3592 = vmax.f32 %v2420, %v3433
  %v3593 = vmax.f32 %v2421, %v3436
  %v3594 = vmax.f32 %v2422, %v3438
  %v3595 = vmax.f32 %v2423, %v3441
  %v3596 = vmax.f32 %v2424, %v3443
  %v3597 = vmax.f32 %v2425, %v3446
  %v3598 = vmax.f32 %v2426, %v3448
  %v3599 = vmax.f32 %v2427, %v3451
  %v3600 = vmax.f32 %v2428, %v3453
  %v3601 = vmax.f32 %v2429, %v3456
  %v3602 = vmax.f32 %v2430, %v3458
  %v3603 = vmax.f32 %v2431, %v3461
  %v3604 = vmax.f32 %v2432, %v3463
  %v3605 = vmax.f32 %v2433, %v3466
  %v3606 = vmax.f32 %v2434, %v3468
  %v3607 = vmax.f32 %v2435, %v3471
  %v3608 = vmax.f32 %v2436, %v3473
  %v3609 = vmax.f32 %v2437, %v3476
  %v3610 = vmax.f32 %v2438, %v3478
  %v3611 = vmax.f32 %v2439, %v3481
  %v3612 = vmax.f32 %v2440, %v3483
  %v3613 = vmax.f32 %v2441, %v3486
  %v3614 = vmax.f32 %v2442, %v3488
  %v3615 = vmax.f32 %v2443, %v3491
  %v3616 = vmax.f32 %v2444, %v3493
  %v3617 = vmax.f32 %v2445, %v3496
  %v3618 = vmax.f32 %v2446, %v3498
  %v3619 = vmax.f32 %v3559, -3e+38
  %v3620 = vmax.f32 %v3560, -3e+38
  %v3621 = vmax.f32 %v3561, -3e+38
  %v3622 = vmax.f32 %v3562, -3e+38
  %v3623 = vmax.f32 %v3563, -3e+38
  %v3624 = vmax.f32 %v3564, -3e+38
  %v3625 = vmax.f32 %v3565, -3e+38
  %v3626 = vmax.f32 %v3566, -3e+38
  %v3627 = vmax.f32 %v3567, -3e+38
  %v3628 = vmax.f32 %v3568, -3e+38
  %v3629 = vmax.f32 %v3569, -3e+38
  %v3630 = vmax.f32 %v3570, -3e+38
  %v3631 = vmax.f32 %v3571, -3e+38
  %v3632 = vmax.f32 %v3572, -3e+38
  %v3633 = vmax.f32 %v3573, -3e+38
  %v3634 = vmax.f32 %v3574, -3e+38
  %v3635 = vmax.f32 %v3575, -3e+38
  %v3636 = vmax.f32 %v3576, -3e+38
  %v3637 = vmax.f32 %v3577, -3e+38
  %v3638 = vmax.f32 %v3578, -3e+38
  %v3639 = vmax.f32 %v3579, -3e+38
  %v3640 = vmax.f32 %v3580, -3e+38
  %v3641 = vmax.f32 %v3581, -3e+38
  %v3642 = vmax.f32 %v3582, -3e+38
  %v3643 = vmax.f32 %v3583, -3e+38
  %v3644 = vmax.f32 %v3584, -3e+38
  %v3645 = vmax.f32 %v3585, -3e+38
  %v3646 = vmax.f32 %v3586, -3e+38
  %v3647 = vmax.f32 %v3589, -3e+38
  %v3648 = vmax.f32 %v3590, -3e+38
  %v3649 = vmax.f32 %v3591, -3e+38
  %v3650 = vmax.f32 %v3592, -3e+38
  %v3651 = vmax.f32 %v3593, -3e+38
  %v3652 = vmax.f32 %v3594, -3e+38
  %v3653 = vmax.f32 %v3595, -3e+38
  %v3654 = vmax.f32 %v3596, -3e+38
  %v3655 = vmax.f32 %v3597, -3e+38
  %v3656 = vmax.f32 %v3598, -3e+38
  %v3657 = vmax.f32 %v3599, -3e+38
  %v3658 = vmax.f32 %v3600, -3e+38
  %v3659 = vmax.f32 %v3601, -3e+38
  %v3660 = vmax.f32 %v3602, -3e+38
  %v3661 = vmax.f32 %v3603, -3e+38
  %v3662 = vmax.f32 %v3604, -3e+38
  %v3663 = vmax.f32 %v3605, -3e+38
  %v3664 = vmax.f32 %v3606, -3e+38
  %v3665 = vmax.f32 %v3607, -3e+38
  %v3666 = vmax.f32 %v3608, -3e+38
  %v3667 = vmax.f32 %v3609, -3e+38
  %v3668 = vmax.f32 %v3610, -3e+38
  %v3669 = vmax.f32 %v3611, -3e+38
  %v3670 = vmax.f32 %v3612, -3e+38
  %v3671 = vmax.f32 %v3613, -3e+38
  %v3672 = vmax.f32 %v3614, -3e+38
  %v3673 = vmax.f32 %v3615, -3e+38
  %v3674 = vmax.f32 %v3616, -3e+38
  %v3675 = vmax.f32 %v3587, -3e+38
  %v3676 = vmax.f32 %v3588, -3e+38
  %v3677 = vmax.f32 %v3617, -3e+38
  %v3678 = vmax.f32 %v3618, -3e+38
  %v3679 = vadd.f32 %v2672, %v64
  %v3680 = vadd.f32 %v2673, %v65
  %v3681 = vadd.f32 %v2674, %v67
  %v3682 = vadd.f32 %v2675, %v68
  %v3683 = vadd.f32 %v2676, %v70
  %v3684 = vadd.f32 %v2677, %v71
  %v3685 = vadd.f32 %v2678, %v73
  %v3686 = vadd.f32 %v2679, %v74
  %v3687 = vadd.f32 %v2680, %v76
  %v3688 = vadd.f32 %v2681, %v77
  %v3689 = vadd.f32 %v2682, %v79
  %v3690 = vadd.f32 %v2683, %v80
  %v3691 = vadd.f32 %v2684, %v82
  %v3692 = vadd.f32 %v2685, %v83
  %v3693 = vadd.f32 %v2686, %v85
  %v3694 = vadd.f32 %v2687, %v86
  %v3695 = vadd.f32 %v2688, %v88
  %v3696 = vadd.f32 %v2689, %v89
  %v3697 = vadd.f32 %v2690, %v91
  %v3698 = vadd.f32 %v2691, %v92
  %v3699 = vadd.f32 %v2692, %v94
  %v3700 = vadd.f32 %v2693, %v95
  %v3701 = vadd.f32 %v2694, %v97
  %v3702 = vadd.f32 %v2695, %v98
  %v3703 = vadd.f32 %v2696, %v100
  %v3704 = vadd.f32 %v2697, %v101
  %v3705 = vadd.f32 %v2698, %v103
  %v3706 = vadd.f32 %v2699, %v104
  %v3707 = vadd.f32 %v2700, %v106
  %v3708 = vadd.f32 %v2701, %v107
  %v3709 = vadd.f32 %v2702, %v109
  %v3710 = vadd.f32 %v2703, %v110
  %v3711 = vadd.f32 %v2704, %v118
  %v3712 = vadd.f32 %v2705, %v119
  %v3713 = vadd.f32 %v2706, %v121
  %v3714 = vadd.f32 %v2707, %v122
  %v3715 = vadd.f32 %v2708, %v124
  %v3716 = vadd.f32 %v2709, %v125
  %v3717 = vadd.f32 %v2710, %v127
  %v3718 = vadd.f32 %v2711, %v128
  %v3719 = vadd.f32 %v2712, %v130
  %v3720 = vadd.f32 %v2713, %v131
  %v3721 = vadd.f32 %v2714, %v133
  %v3722 = vadd.f32 %v2715, %v134
  %v3723 = vadd.f32 %v2716, %v136
  %v3724 = vadd.f32 %v2717, %v137
  %v3725 = vadd.f32 %v2718, %v139
  %v3726 = vadd.f32 %v2719, %v140
  %v3727 = vadd.f32 %v2720, %v142
  %v3728 = vadd.f32 %v2721, %v143
  %v3729 = vadd.f32 %v2722, %v145
  %v3730 = vadd.f32 %v2723, %v146
  %v3731 = vadd.f32 %v2724, %v148
  %v3732 = vadd.f32 %v2725, %v149
  %v3733 = vadd.f32 %v2726, %v151
  %v3734 = vadd.f32 %v2727, %v152
  %v3735 = vadd.f32 %v2728, %v154
  %v3736 = vadd.f32 %v2729, %v155
  %v3737 = vadd.f32 %v2730, %v157
  %v3738 = vadd.f32 %v2731, %v158
  %v3739 = vadd.f32 %v2732, %v160
  %v3740 = vadd.f32 %v2733, %v161
  %v3741 = vadd.f32 %v2734, %v163
  %v3742 = vadd.f32 %v2735, %v164
  %v3743 = vmax.f32 %v109, 0.0
  %v3744 = vmax.f32 %v110, 0.0
  %v3745 = vmax.f32 %v163, 0.0
  %v3746 = vmax.f32 %v164, 0.0
  %v3747 = vpack.c.bf16 %v3744, %v3743
  %v3748 = vpack.c.bf16 %v3746, %v3745
  %v3750 = vsel %vm1309, %v3747, 0
  %v3753 = vsel %vm1309, %v3748, 0
  %v3756 = vsel %vm1406, %v172, 0
  %3758 = vmatprep.subr.bf16.mxu0 0
  %3759 = vmatpush1.bf16.msra.mxu0 %v3756
  %3760 = vmatprep.subr.bf16.mxu0 0
  %3761 = vmatpush1.bf16.msra.mxu0 0
  %3762 = vmatprep.subr.bf16.mxu0 0
  %3763 = vmatpush1.bf16.msra.mxu0 0
  %3764 = vmatprep.subr.bf16.mxu0 0
  %3765 = vmatpush1.bf16.msra.mxu0 0
  %3766 = vmatprep.subr.bf16.mxu0 0
  %3767 = vmatpush1.bf16.msra.mxu0 0
  %3768 = vmatprep.subr.bf16.mxu0 0
  %3769 = vmatpush1.bf16.msra.mxu0 0
  %3770 = vmatprep.subr.bf16.mxu0 0
  %3771 = vmatpush1.bf16.msra.mxu0 0
  %3772 = vmatprep.subr.bf16.mxu0 0
  %3773 = vmatpush1.bf16.msra.mxu0 0
  %3774 = vmatprep.subr.bf16.mxu0 0
  %3775 = vmatpush1.bf16.msra.mxu0 0
  %3776 = vmatprep.subr.bf16.mxu0 0
  %3777 = vmatpush1.bf16.msra.mxu0 0
  %3778 = vmatprep.subr.bf16.mxu0 0
  %3779 = vmatpush1.bf16.msra.mxu0 0
  %3780 = vmatprep.subr.bf16.mxu0 0
  %3781 = vmatpush1.bf16.msra.mxu0 0
  %3782 = vmatprep.subr.bf16.mxu0 0
  %3783 = vmatpush1.bf16.msra.mxu0 0
  %3784 = vmatprep.subr.bf16.mxu0 0
  %3785 = vmatpush1.bf16.msra.mxu0 0
  %3786 = vmatprep.subr.bf16.mxu0 0
  %3787 = vmatpush1.bf16.msra.mxu0 0
  %3788 = vmatprep.subr.bf16.mxu0 0
  %3789 = vmatpush1.bf16.msra.mxu0 0
  %3790 = vmatprep.mubr.bf16.mxu0 0
  %3791 = vmatmul.mubr.bf16.gmra.mrb[0].mxu0 %v1701
  %v3792 = vpop.f32.mrb[0].mxu0
  %v3793 = vadd.f32 0.0, %v3792
  %v3794 = vpop.f32.mrb[0].mxu0
  %v3795 = vpop.f32.mrb[0].mxu0
  %v3796 = vadd.f32 0.0, %v3795
  %v3797 = vpop.f32.mrb[0].mxu0
  %3798 = vmatprep.mubr.bf16.mxu0 0
  %3799 = vmatmul.mubr.bf16.gmra.mrb[0].mxu0 %v1703
  %v3800 = vpop.f32.mrb[0].mxu0
  %v3801 = vadd.f32 0.0, %v3800
  %v3802 = vpop.f32.mrb[0].mxu0
  %v3803 = vpop.f32.mrb[0].mxu0
  %v3804 = vadd.f32 0.0, %v3803
  %v3805 = vpop.f32.mrb[0].mxu0
  %3806 = vmatprep.mubr.bf16.mxu0 0
  %3807 = vmatmul.mubr.bf16.gmra.mrb[0].mxu0 %v1705
  %v3808 = vpop.f32.mrb[0].mxu0
  %v3809 = vadd.f32 0.0, %v3808
  %v3810 = vpop.f32.mrb[0].mxu0
  %v3811 = vpop.f32.mrb[0].mxu0
  %v3812 = vadd.f32 0.0, %v3811
  %v3813 = vpop.f32.mrb[0].mxu0
  %3814 = vmatprep.mubr.bf16.mxu0 0
  %3815 = vmatmul.mubr.bf16.gmra.mrb[0].mxu0 %v1707
  %v3816 = vpop.f32.mrb[0].mxu0
  %v3817 = vadd.f32 0.0, %v3816
  %v3818 = vpop.f32.mrb[0].mxu0
  %v3819 = vpop.f32.mrb[0].mxu0
  %v3820 = vadd.f32 0.0, %v3819
  %v3821 = vpop.f32.mrb[0].mxu0
  %3822 = vmatprep.mubr.bf16.mxu0 0
  %3823 = vmatmul.mubr.bf16.gmra.mrb[0].mxu0 %v1709
  %v3824 = vpop.f32.mrb[0].mxu0
  %v3825 = vadd.f32 0.0, %v3824
  %v3826 = vpop.f32.mrb[0].mxu0
  %v3827 = vpop.f32.mrb[0].mxu0
  %v3828 = vadd.f32 0.0, %v3827
  %v3829 = vpop.f32.mrb[0].mxu0
  %3830 = vmatprep.mubr.bf16.mxu0 0
  %3831 = vmatmul.mubr.bf16.gmra.mrb[0].mxu0 %v1711
  %v3832 = vpop.f32.mrb[0].mxu0
  %v3833 = vadd.f32 0.0, %v3832
  %v3834 = vpop.f32.mrb[0].mxu0
  %v3835 = vpop.f32.mrb[0].mxu0
  %v3836 = vadd.f32 0.0, %v3835
  %v3837 = vpop.f32.mrb[0].mxu0
  %3838 = vmatprep.mubr.bf16.mxu0 0
  %3839 = vmatmul.mubr.bf16.gmra.mrb[0].mxu0 %v1713
  %v3840 = vpop.f32.mrb[0].mxu0
  %v3841 = vadd.f32 0.0, %v3840
  %v3842 = vpop.f32.mrb[0].mxu0
  %v3843 = vpop.f32.mrb[0].mxu0
  %v3844 = vadd.f32 0.0, %v3843
  %v3845 = vpop.f32.mrb[0].mxu0
  %3846 = vmatprep.mubr.bf16.mxu0 0
  %3847 = vmatmul.mubr.bf16.gmra.mrb[0].mxu0 %v1715
  %v3848 = vpop.f32.mrb[0].mxu0
  %v3849 = vadd.f32 0.0, %v3848
  %v3850 = vpop.f32.mrb[0].mxu0
  %v3851 = vpop.f32.mrb[0].mxu0
  %v3852 = vadd.f32 0.0, %v3851
  %v3853 = vpop.f32.mrb[0].mxu0
  %3854 = vmatprep.mubr.bf16.mxu0 0
  %3855 = vmatmul.mubr.bf16.gmra.mrb[0].mxu0 %v1717
  %v3856 = vpop.f32.mrb[0].mxu0
  %v3857 = vadd.f32 0.0, %v3856
  %v3858 = vpop.f32.mrb[0].mxu0
  %v3859 = vpop.f32.mrb[0].mxu0
  %v3860 = vadd.f32 0.0, %v3859
  %v3861 = vpop.f32.mrb[0].mxu0
  %3862 = vmatprep.mubr.bf16.mxu0 0
  %3863 = vmatmul.mubr.bf16.gmra.mrb[0].mxu0 %v1719
  %v3864 = vpop.f32.mrb[0].mxu0
  %v3865 = vadd.f32 0.0, %v3864
  %v3866 = vpop.f32.mrb[0].mxu0
  %v3867 = vpop.f32.mrb[0].mxu0
  %v3868 = vadd.f32 0.0, %v3867
  %v3869 = vpop.f32.mrb[0].mxu0
  %3870 = vmatprep.mubr.bf16.mxu0 0
  %3871 = vmatmul.mubr.bf16.gmra.mrb[0].mxu0 %v1721
  %v3872 = vpop.f32.mrb[0].mxu0
  %v3873 = vadd.f32 0.0, %v3872
  %v3874 = vpop.f32.mrb[0].mxu0
  %v3875 = vpop.f32.mrb[0].mxu0
  %v3876 = vadd.f32 0.0, %v3875
  %v3877 = vpop.f32.mrb[0].mxu0
  %3878 = vmatprep.mubr.bf16.mxu0 0
  %3879 = vmatmul.mubr.bf16.gmra.mrb[0].mxu0 %v1723
  %v3880 = vpop.f32.mrb[0].mxu0
  %v3881 = vadd.f32 0.0, %v3880
  %v3882 = vpop.f32.mrb[0].mxu0
  %v3883 = vpop.f32.mrb[0].mxu0
  %v3884 = vadd.f32 0.0, %v3883
  %v3885 = vpop.f32.mrb[0].mxu0
  %3886 = vmatprep.mubr.bf16.mxu0 0
  %3887 = vmatmul.mubr.bf16.gmra.mrb[0].mxu0 %v1725
  %v3888 = vpop.f32.mrb[0].mxu0
  %v3889 = vadd.f32 0.0, %v3888
  %v3890 = vpop.f32.mrb[0].mxu0
  %v3891 = vpop.f32.mrb[0].mxu0
  %v3892 = vadd.f32 0.0, %v3891
  %v3893 = vpop.f32.mrb[0].mxu0
  %3894 = vmatprep.mubr.bf16.mxu0 0
  %3895 = vmatmul.mubr.bf16.gmra.mrb[0].mxu0 %v1727
  %v3896 = vpop.f32.mrb[0].mxu0
  %v3897 = vadd.f32 0.0, %v3896
  %v3898 = vpop.f32.mrb[0].mxu0
  %v3899 = vpop.f32.mrb[0].mxu0
  %v3900 = vadd.f32 0.0, %v3899
  %v3901 = vpop.f32.mrb[0].mxu0
  %3902 = vmatprep.mubr.bf16.mxu0 0
  %3903 = vmatmul.mubr.bf16.gmra.mrb[0].mxu0 %v1729
  %v3904 = vpop.f32.mrb[0].mxu0
  %v3905 = vadd.f32 0.0, %v3904
  %v3906 = vpop.f32.mrb[0].mxu0
  %v3907 = vpop.f32.mrb[0].mxu0
  %v3908 = vadd.f32 0.0, %v3907
  %v3909 = vpop.f32.mrb[0].mxu0
  %3910 = vmatprep.mubr.bf16.mxu0 0
  %3911 = vmatmul.mubr.bf16.gmra.mrb[0].mxu0 %v3750
  %v3912 = vpop.f32.mrb[0].mxu0
  %v3913 = vadd.f32 0.0, %v3912
  %v3914 = vpop.f32.mrb[0].mxu0
  %v3915 = vpop.f32.mrb[0].mxu0
  %v3916 = vadd.f32 0.0, %v3915
  %v3917 = vpop.f32.mrb[0].mxu0
  %3918 = vmatprep.mubr.bf16.mxu0 0
  %3919 = vmatmul.mubr.bf16.gmra.mrb[0].mxu0 %v1733
  %v3920 = vpop.f32.mrb[0].mxu0
  %v3921 = vadd.f32 0.0, %v3920
  %v3922 = vpop.f32.mrb[0].mxu0
  %v3923 = vpop.f32.mrb[0].mxu0
  %v3924 = vadd.f32 0.0, %v3923
  %v3925 = vpop.f32.mrb[0].mxu0
  %3926 = vmatprep.mubr.bf16.mxu0 0
  %3927 = vmatmul.mubr.bf16.gmra.mrb[0].mxu0 %v1735
  %v3928 = vpop.f32.mrb[0].mxu0
  %v3929 = vadd.f32 0.0, %v3928
  %v3930 = vpop.f32.mrb[0].mxu0
  %v3931 = vpop.f32.mrb[0].mxu0
  %v3932 = vadd.f32 0.0, %v3931
  %v3933 = vpop.f32.mrb[0].mxu0
  %3934 = vmatprep.mubr.bf16.mxu0 0
  %3935 = vmatmul.mubr.bf16.gmra.mrb[0].mxu0 %v1737
  %v3936 = vpop.f32.mrb[0].mxu0
  %v3937 = vadd.f32 0.0, %v3936
  %v3938 = vpop.f32.mrb[0].mxu0
  %v3939 = vpop.f32.mrb[0].mxu0
  %v3940 = vadd.f32 0.0, %v3939
  %v3941 = vpop.f32.mrb[0].mxu0
  %3942 = vmatprep.mubr.bf16.mxu0 0
  %3943 = vmatmul.mubr.bf16.gmra.mrb[0].mxu0 %v1739
  %v3944 = vpop.f32.mrb[0].mxu0
  %v3945 = vadd.f32 0.0, %v3944
  %v3946 = vpop.f32.mrb[0].mxu0
  %v3947 = vpop.f32.mrb[0].mxu0
  %v3948 = vadd.f32 0.0, %v3947
  %v3949 = vpop.f32.mrb[0].mxu0
  %3950 = vmatprep.mubr.bf16.mxu0 0
  %3951 = vmatmul.mubr.bf16.gmra.mrb[0].mxu0 %v1741
  %v3952 = vpop.f32.mrb[0].mxu0
  %v3953 = vadd.f32 0.0, %v3952
  %v3954 = vpop.f32.mrb[0].mxu0
  %v3955 = vpop.f32.mrb[0].mxu0
  %v3956 = vadd.f32 0.0, %v3955
  %v3957 = vpop.f32.mrb[0].mxu0
  %3958 = vmatprep.mubr.bf16.mxu0 0
  %3959 = vmatmul.mubr.bf16.gmra.mrb[0].mxu0 %v1743
  %v3960 = vpop.f32.mrb[0].mxu0
  %v3961 = vadd.f32 0.0, %v3960
  %v3962 = vpop.f32.mrb[0].mxu0
  %v3963 = vpop.f32.mrb[0].mxu0
  %v3964 = vadd.f32 0.0, %v3963
  %v3965 = vpop.f32.mrb[0].mxu0
  %3966 = vmatprep.mubr.bf16.mxu0 0
  %3967 = vmatmul.mubr.bf16.gmra.mrb[0].mxu0 %v1745
  %v3968 = vpop.f32.mrb[0].mxu0
  %v3969 = vadd.f32 0.0, %v3968
  %v3970 = vpop.f32.mrb[0].mxu0
  %v3971 = vpop.f32.mrb[0].mxu0
  %v3972 = vadd.f32 0.0, %v3971
  %v3973 = vpop.f32.mrb[0].mxu0
  %3974 = vmatprep.mubr.bf16.mxu0 0
  %3975 = vmatmul.mubr.bf16.gmra.mrb[0].mxu0 %v1747
  %v3976 = vpop.f32.mrb[0].mxu0
  %v3977 = vadd.f32 0.0, %v3976
  %v3978 = vpop.f32.mrb[0].mxu0
  %v3979 = vpop.f32.mrb[0].mxu0
  %v3980 = vadd.f32 0.0, %v3979
  %v3981 = vpop.f32.mrb[0].mxu0
  %3982 = vmatprep.mubr.bf16.mxu0 0
  %3983 = vmatmul.mubr.bf16.gmra.mrb[0].mxu0 %v1749
  %v3984 = vpop.f32.mrb[0].mxu0
  %v3985 = vadd.f32 0.0, %v3984
  %v3986 = vpop.f32.mrb[0].mxu0
  %v3987 = vpop.f32.mrb[0].mxu0
  %v3988 = vadd.f32 0.0, %v3987
  %v3989 = vpop.f32.mrb[0].mxu0
  %3990 = vmatprep.mubr.bf16.mxu0 0
  %3991 = vmatmul.mubr.bf16.gmra.mrb[0].mxu0 %v1751
  %v3992 = vpop.f32.mrb[0].mxu0
  %v3993 = vadd.f32 0.0, %v3992
  %v3994 = vpop.f32.mrb[0].mxu0
  %v3995 = vpop.f32.mrb[0].mxu0
  %v3996 = vadd.f32 0.0, %v3995
  %v3997 = vpop.f32.mrb[0].mxu0
  %3998 = vmatprep.mubr.bf16.mxu0 0
  %3999 = vmatmul.mubr.bf16.gmra.mrb[0].mxu0 %v1753
  %v4000 = vpop.f32.mrb[0].mxu0
  %v4001 = vadd.f32 0.0, %v4000
  %v4002 = vpop.f32.mrb[0].mxu0
  %v4003 = vpop.f32.mrb[0].mxu0
  %v4004 = vadd.f32 0.0, %v4003
  %v4005 = vpop.f32.mrb[0].mxu0
  %4006 = vmatprep.mubr.bf16.mxu0 0
  %4007 = vmatmul.mubr.bf16.gmra.mrb[0].mxu0 %v1755
  %v4008 = vpop.f32.mrb[0].mxu0
  %v4009 = vadd.f32 0.0, %v4008
  %v4010 = vpop.f32.mrb[0].mxu0
  %v4011 = vpop.f32.mrb[0].mxu0
  %v4012 = vadd.f32 0.0, %v4011
  %v4013 = vpop.f32.mrb[0].mxu0
  %4014 = vmatprep.mubr.bf16.mxu0 0
  %4015 = vmatmul.mubr.bf16.gmra.mrb[0].mxu0 %v1757
  %v4016 = vpop.f32.mrb[0].mxu0
  %v4017 = vadd.f32 0.0, %v4016
  %v4018 = vpop.f32.mrb[0].mxu0
  %v4019 = vpop.f32.mrb[0].mxu0
  %v4020 = vadd.f32 0.0, %v4019
  %v4021 = vpop.f32.mrb[0].mxu0
  %4022 = vmatprep.mubr.bf16.mxu0 0
  %4023 = vmatmul.mubr.bf16.gmra.mrb[0].mxu0 %v1759
  %v4024 = vpop.f32.mrb[0].mxu0
  %v4025 = vadd.f32 0.0, %v4024
  %v4026 = vpop.f32.mrb[0].mxu0
  %v4027 = vpop.f32.mrb[0].mxu0
  %v4028 = vadd.f32 0.0, %v4027
  %v4029 = vpop.f32.mrb[0].mxu0
  %4030 = vmatprep.mubr.bf16.mxu0 0
  %4031 = vmatmul.mubr.bf16.gmra.mrb[0].mxu0 %v1761
  %v4032 = vpop.f32.mrb[0].mxu0
  %v4033 = vadd.f32 0.0, %v4032
  %v4034 = vpop.f32.mrb[0].mxu0
  %v4035 = vpop.f32.mrb[0].mxu0
  %v4036 = vadd.f32 0.0, %v4035
  %v4037 = vpop.f32.mrb[0].mxu0
  %4038 = vmatprep.mubr.bf16.mxu0 0
  %4039 = vmatmul.mubr.bf16.gmra.mrb[0].mxu0 %v3753
  %v4040 = vpop.f32.mrb[0].mxu0
  %v4041 = vadd.f32 0.0, %v4040
  %v4042 = vpop.f32.mrb[0].mxu0
  %v4043 = vpop.f32.mrb[0].mxu0
  %v4044 = vadd.f32 0.0, %v4043
  %v4045 = vpop.f32.mrb[0].mxu0
  %4046 = vdwg.mxu0
  %v4047 = vadd.f32 %v3285, %v3793
  %v4048 = vadd.f32 %v3286, %v3796
  %v4049 = vadd.f32 %v3287, %v3801
  %v4050 = vadd.f32 %v3288, %v3804
  %v4051 = vadd.f32 %v3289, %v3809
  %v4052 = vadd.f32 %v3290, %v3812
  %v4053 = vadd.f32 %v3291, %v3817
  %v4054 = vadd.f32 %v3292, %v3820
  %v4055 = vadd.f32 %v3293, %v3825
  %v4056 = vadd.f32 %v3294, %v3828
  %v4057 = vadd.f32 %v3295, %v3833
  %v4058 = vadd.f32 %v3296, %v3836
  %v4059 = vadd.f32 %v3297, %v3841
  %v4060 = vadd.f32 %v3298, %v3844
  %v4061 = vadd.f32 %v3299, %v3849
  %v4062 = vadd.f32 %v3300, %v3852
  %v4063 = vadd.f32 %v3301, %v3857
  %v4064 = vadd.f32 %v3302, %v3860
  %v4065 = vadd.f32 %v3303, %v3865
  %v4066 = vadd.f32 %v3304, %v3868
  %v4067 = vadd.f32 %v3305, %v3873
  %v4068 = vadd.f32 %v3306, %v3876
  %v4069 = vadd.f32 %v3307, %v3881
  %v4070 = vadd.f32 %v3308, %v3884
  %v4071 = vadd.f32 %v3309, %v3889
  %v4072 = vadd.f32 %v3310, %v3892
  %v4073 = vadd.f32 %v3311, %v3897
  %v4074 = vadd.f32 %v3312, %v3900
  %v4075 = vadd.f32 %v3313, %v3905
  %v4076 = vadd.f32 %v3314, %v3908
  %v4077 = vadd.f32 %v3315, %v3913
  %v4078 = vadd.f32 %v3316, %v3916
  %v4079 = vadd.f32 %v3317, %v3921
  %v4080 = vadd.f32 %v3318, %v3924
  %v4081 = vadd.f32 %v3319, %v3929
  %v4082 = vadd.f32 %v3320, %v3932
  %v4083 = vadd.f32 %v3321, %v3937
  %v4084 = vadd.f32 %v3322, %v3940
  %v4085 = vadd.f32 %v3323, %v3945
  %v4086 = vadd.f32 %v3324, %v3948
  %v4087 = vadd.f32 %v3325, %v3953
  %v4088 = vadd.f32 %v3326, %v3956
  %v4089 = vadd.f32 %v3327, %v3961
  %v4090 = vadd.f32 %v3328, %v3964
  %v4091 = vadd.f32 %v3329, %v3969
  %v4092 = vadd.f32 %v3330, %v3972
  %v4093 = vadd.f32 %v3331, %v3977
  %v4094 = vadd.f32 %v3332, %v3980
  %v4095 = vadd.f32 %v3333, %v3985
  %v4096 = vadd.f32 %v3334, %v3988
  %v4097 = vadd.f32 %v3335, %v3993
  %v4098 = vadd.f32 %v3336, %v3996
  %v4099 = vadd.f32 %v3337, %v4001
  %v4100 = vadd.f32 %v3338, %v4004
  %v4101 = vadd.f32 %v3339, %v4009
  %v4102 = vadd.f32 %v3340, %v4012
  %v4103 = vadd.f32 %v3341, %v4017
  %v4104 = vadd.f32 %v3342, %v4020
  %v4105 = vadd.f32 %v3343, %v4025
  %v4106 = vadd.f32 %v3344, %v4028
  %v4107 = vadd.f32 %v3345, %v4033
  %v4108 = vadd.f32 %v3346, %v4036
  %v4109 = vadd.f32 %v3347, %v4041
  %v4110 = vadd.f32 %v3348, %v4044
  %v4111 = vsel %vm353, -3e+38, %v109
  %v4112 = vsel %vm354, -3e+38, %v110
  %v4113 = vsel %vm353, -3e+38, %v163
  %v4114 = vsel %vm354, -3e+38, %v164
  %v4115 = vmax.f32 %v4111, -3e+38
  %v4116 = vmax.f32 %v4112, -3e+38
  %v4117 = vmax.f32 %v4113, -3e+38
  %v4118 = vmax.f32 %v4114, -3e+38
  %v4125 = vrot.slane %v109, 1
  %v4126 = vrot.slane %v110, 1
  %v4127 = vsel %vm571, %v4125, %v4126
  %v4128 = vrot.slane %v111, 1
  %v4129 = vsel %vm571, %v4126, %v4128
  %v4130 = vrot.slane %v163, 1
  %v4131 = vrot.slane %v164, 1
  %v4132 = vsel %vm571, %v4130, %v4131
  %v4133 = vrot.slane %v165, 1
  %v4134 = vsel %vm571, %v4131, %v4133
  %v4139 = vadd.f32 %v3679, %v579
  %v4140 = vadd.f32 %v3680, %v581
  %v4141 = vadd.f32 %v3681, %v584
  %v4142 = vadd.f32 %v3682, %v586
  %v4143 = vadd.f32 %v3683, %v589
  %v4144 = vadd.f32 %v3684, %v591
  %v4145 = vadd.f32 %v3685, %v594
  %v4146 = vadd.f32 %v3686, %v596
  %v4147 = vadd.f32 %v3687, %v599
  %v4148 = vadd.f32 %v3688, %v601
  %v4149 = vadd.f32 %v3689, %v604
  %v4150 = vadd.f32 %v3690, %v606
  %v4151 = vadd.f32 %v3691, %v609
  %v4152 = vadd.f32 %v3692, %v611
  %v4153 = vadd.f32 %v3693, %v614
  %v4154 = vadd.f32 %v3694, %v616
  %v4155 = vadd.f32 %v3695, %v619
  %v4156 = vadd.f32 %v3696, %v621
  %v4157 = vadd.f32 %v3697, %v624
  %v4158 = vadd.f32 %v3698, %v626
  %v4159 = vadd.f32 %v3699, %v629
  %v4160 = vadd.f32 %v3700, %v631
  %v4161 = vadd.f32 %v3701, %v634
  %v4162 = vadd.f32 %v3702, %v636
  %v4163 = vadd.f32 %v3703, %v639
  %v4164 = vadd.f32 %v3704, %v641
  %v4165 = vadd.f32 %v3705, %v644
  %v4166 = vadd.f32 %v3706, %v646
  %v4167 = vadd.f32 %v3707, %v649
  %v4168 = vadd.f32 %v3708, %v651
  %v4169 = vadd.f32 %v3709, %v4127
  %v4170 = vadd.f32 %v3710, %v4129
  %v4171 = vadd.f32 %v3711, %v659
  %v4172 = vadd.f32 %v3712, %v661
  %v4173 = vadd.f32 %v3713, %v664
  %v4174 = vadd.f32 %v3714, %v666
  %v4175 = vadd.f32 %v3715, %v669
  %v4176 = vadd.f32 %v3716, %v671
  %v4177 = vadd.f32 %v3717, %v674
  %v4178 = vadd.f32 %v3718, %v676
  %v4179 = vadd.f32 %v3719, %v679
  %v4180 = vadd.f32 %v3720, %v681
  %v4181 = vadd.f32 %v3721, %v684
  %v4182 = vadd.f32 %v3722, %v686
  %v4183 = vadd.f32 %v3723, %v689
  %v4184 = vadd.f32 %v3724, %v691
  %v4185 = vadd.f32 %v3725, %v694
  %v4186 = vadd.f32 %v3726, %v696
  %v4187 = vadd.f32 %v3727, %v699
  %v4188 = vadd.f32 %v3728, %v701
  %v4189 = vadd.f32 %v3729, %v704
  %v4190 = vadd.f32 %v3730, %v706
  %v4191 = vadd.f32 %v3731, %v709
  %v4192 = vadd.f32 %v3732, %v711
  %v4193 = vadd.f32 %v3733, %v714
  %v4194 = vadd.f32 %v3734, %v716
  %v4195 = vadd.f32 %v3735, %v719
  %v4196 = vadd.f32 %v3736, %v721
  %v4197 = vadd.f32 %v3737, %v724
  %v4198 = vadd.f32 %v3738, %v726
  %v4199 = vadd.f32 %v3739, %v729
  %v4200 = vadd.f32 %v3740, %v731
  %v4201 = vadd.f32 %v3741, %v4132
  %v4202 = vadd.f32 %v3742, %v4134
  %v4203 = vmax.f32 %v111, 0.0
  %v4204 = vmax.f32 %v165, 0.0
  %v4205 = vpack.c.bf16 %v4203, %v4203
  %v4206 = vpack.c.bf16 %v4204, %v4204
  %v4207 = vshrl.u32 %v3747, 16
  %v4209 = vshll.u32 %v3747, 16
  %v4211 = vrot.slane %v4209, 1
  %v4212 = vor.u32 %v4207, %v4211
  %v4214 = vshll.u32 %v4205, 16
  %v4216 = vrot.slane %v4214, 1
  %v4217 = vsel %vm924, %v4212, %v4216
  %v4218 = vshrl.u32 %v3748, 16
  %v4220 = vshll.u32 %v3748, 16
  %v4222 = vrot.slane %v4220, 1
  %v4223 = vor.u32 %v4218, %v4222
  %v4225 = vshll.u32 %v4206, 16
  %v4227 = vrot.slane %v4225, 1
  %v4228 = vsel %vm924, %v4223, %v4227
  %v4230 = vsel %vm1309, %v4217, 0
  %v4233 = vsel %vm1309, %v4228, 0
  %v4236 = vsel %vm1406, %v173, 0
  %4238 = vmatprep.subr.bf16.mxu0 0
  %4239 = vmatpush1.bf16.msra.mxu0 %v4236
  %4240 = vmatprep.subr.bf16.mxu0 0
  %4241 = vmatpush1.bf16.msra.mxu0 0
  %4242 = vmatprep.subr.bf16.mxu0 0
  %4243 = vmatpush1.bf16.msra.mxu0 0
  %4244 = vmatprep.subr.bf16.mxu0 0
  %4245 = vmatpush1.bf16.msra.mxu0 0
  %4246 = vmatprep.subr.bf16.mxu0 0
  %4247 = vmatpush1.bf16.msra.mxu0 0
  %4248 = vmatprep.subr.bf16.mxu0 0
  %4249 = vmatpush1.bf16.msra.mxu0 0
  %4250 = vmatprep.subr.bf16.mxu0 0
  %4251 = vmatpush1.bf16.msra.mxu0 0
  %4252 = vmatprep.subr.bf16.mxu0 0
  %4253 = vmatpush1.bf16.msra.mxu0 0
  %4254 = vmatprep.subr.bf16.mxu0 0
  %4255 = vmatpush1.bf16.msra.mxu0 0
  %4256 = vmatprep.subr.bf16.mxu0 0
  %4257 = vmatpush1.bf16.msra.mxu0 0
  %4258 = vmatprep.subr.bf16.mxu0 0
  %4259 = vmatpush1.bf16.msra.mxu0 0
  %4260 = vmatprep.subr.bf16.mxu0 0
  %4261 = vmatpush1.bf16.msra.mxu0 0
  %4262 = vmatprep.subr.bf16.mxu0 0
  %4263 = vmatpush1.bf16.msra.mxu0 0
  %4264 = vmatprep.subr.bf16.mxu0 0
  %4265 = vmatpush1.bf16.msra.mxu0 0
  %4266 = vmatprep.subr.bf16.mxu0 0
  %4267 = vmatpush1.bf16.msra.mxu0 0
  %4268 = vmatprep.subr.bf16.mxu0 0
  %4269 = vmatpush1.bf16.msra.mxu0 0
  %4270 = vmatprep.mubr.bf16.mxu0 0
  %4271 = vmatmul.mubr.bf16.gmra.mrb[0].mxu0 %v1314
  %v4272 = vpop.f32.mrb[0].mxu0
  %v4273 = vadd.f32 0.0, %v4272
  %v4274 = vpop.f32.mrb[0].mxu0
  %v4275 = vpop.f32.mrb[0].mxu0
  %v4276 = vadd.f32 0.0, %v4275
  %v4277 = vpop.f32.mrb[0].mxu0
  %4278 = vmatprep.mubr.bf16.mxu0 0
  %4279 = vmatmul.mubr.bf16.gmra.mrb[0].mxu0 %v1317
  %v4280 = vpop.f32.mrb[0].mxu0
  %v4281 = vadd.f32 0.0, %v4280
  %v4282 = vpop.f32.mrb[0].mxu0
  %v4283 = vpop.f32.mrb[0].mxu0
  %v4284 = vadd.f32 0.0, %v4283
  %v4285 = vpop.f32.mrb[0].mxu0
  %4286 = vmatprep.mubr.bf16.mxu0 0
  %4287 = vmatmul.mubr.bf16.gmra.mrb[0].mxu0 %v1320
  %v4288 = vpop.f32.mrb[0].mxu0
  %v4289 = vadd.f32 0.0, %v4288
  %v4290 = vpop.f32.mrb[0].mxu0
  %v4291 = vpop.f32.mrb[0].mxu0
  %v4292 = vadd.f32 0.0, %v4291
  %v4293 = vpop.f32.mrb[0].mxu0
  %4294 = vmatprep.mubr.bf16.mxu0 0
  %4295 = vmatmul.mubr.bf16.gmra.mrb[0].mxu0 %v1323
  %v4296 = vpop.f32.mrb[0].mxu0
  %v4297 = vadd.f32 0.0, %v4296
  %v4298 = vpop.f32.mrb[0].mxu0
  %v4299 = vpop.f32.mrb[0].mxu0
  %v4300 = vadd.f32 0.0, %v4299
  %v4301 = vpop.f32.mrb[0].mxu0
  %4302 = vmatprep.mubr.bf16.mxu0 0
  %4303 = vmatmul.mubr.bf16.gmra.mrb[0].mxu0 %v1326
  %v4304 = vpop.f32.mrb[0].mxu0
  %v4305 = vadd.f32 0.0, %v4304
  %v4306 = vpop.f32.mrb[0].mxu0
  %v4307 = vpop.f32.mrb[0].mxu0
  %v4308 = vadd.f32 0.0, %v4307
  %v4309 = vpop.f32.mrb[0].mxu0
  %4310 = vmatprep.mubr.bf16.mxu0 0
  %4311 = vmatmul.mubr.bf16.gmra.mrb[0].mxu0 %v1329
  %v4312 = vpop.f32.mrb[0].mxu0
  %v4313 = vadd.f32 0.0, %v4312
  %v4314 = vpop.f32.mrb[0].mxu0
  %v4315 = vpop.f32.mrb[0].mxu0
  %v4316 = vadd.f32 0.0, %v4315
  %v4317 = vpop.f32.mrb[0].mxu0
  %4318 = vmatprep.mubr.bf16.mxu0 0
  %4319 = vmatmul.mubr.bf16.gmra.mrb[0].mxu0 %v1332
  %v4320 = vpop.f32.mrb[0].mxu0
  %v4321 = vadd.f32 0.0, %v4320
  %v4322 = vpop.f32.mrb[0].mxu0
  %v4323 = vpop.f32.mrb[0].mxu0
  %v4324 = vadd.f32 0.0, %v4323
  %v4325 = vpop.f32.mrb[0].mxu0
  %4326 = vmatprep.mubr.bf16.mxu0 0
  %4327 = vmatmul.mubr.bf16.gmra.mrb[0].mxu0 %v1335
  %v4328 = vpop.f32.mrb[0].mxu0
  %v4329 = vadd.f32 0.0, %v4328
  %v4330 = vpop.f32.mrb[0].mxu0
  %v4331 = vpop.f32.mrb[0].mxu0
  %v4332 = vadd.f32 0.0, %v4331
  %v4333 = vpop.f32.mrb[0].mxu0
  %4334 = vmatprep.mubr.bf16.mxu0 0
  %4335 = vmatmul.mubr.bf16.gmra.mrb[0].mxu0 %v1338
  %v4336 = vpop.f32.mrb[0].mxu0
  %v4337 = vadd.f32 0.0, %v4336
  %v4338 = vpop.f32.mrb[0].mxu0
  %v4339 = vpop.f32.mrb[0].mxu0
  %v4340 = vadd.f32 0.0, %v4339
  %v4341 = vpop.f32.mrb[0].mxu0
  %4342 = vmatprep.mubr.bf16.mxu0 0
  %4343 = vmatmul.mubr.bf16.gmra.mrb[0].mxu0 %v1341
  %v4344 = vpop.f32.mrb[0].mxu0
  %v4345 = vadd.f32 0.0, %v4344
  %v4346 = vpop.f32.mrb[0].mxu0
  %v4347 = vpop.f32.mrb[0].mxu0
  %v4348 = vadd.f32 0.0, %v4347
  %v4349 = vpop.f32.mrb[0].mxu0
  %4350 = vmatprep.mubr.bf16.mxu0 0
  %4351 = vmatmul.mubr.bf16.gmra.mrb[0].mxu0 %v1344
  %v4352 = vpop.f32.mrb[0].mxu0
  %v4353 = vadd.f32 0.0, %v4352
  %v4354 = vpop.f32.mrb[0].mxu0
  %v4355 = vpop.f32.mrb[0].mxu0
  %v4356 = vadd.f32 0.0, %v4355
  %v4357 = vpop.f32.mrb[0].mxu0
  %4358 = vmatprep.mubr.bf16.mxu0 0
  %4359 = vmatmul.mubr.bf16.gmra.mrb[0].mxu0 %v1347
  %v4360 = vpop.f32.mrb[0].mxu0
  %v4361 = vadd.f32 0.0, %v4360
  %v4362 = vpop.f32.mrb[0].mxu0
  %v4363 = vpop.f32.mrb[0].mxu0
  %v4364 = vadd.f32 0.0, %v4363
  %v4365 = vpop.f32.mrb[0].mxu0
  %4366 = vmatprep.mubr.bf16.mxu0 0
  %4367 = vmatmul.mubr.bf16.gmra.mrb[0].mxu0 %v1350
  %v4368 = vpop.f32.mrb[0].mxu0
  %v4369 = vadd.f32 0.0, %v4368
  %v4370 = vpop.f32.mrb[0].mxu0
  %v4371 = vpop.f32.mrb[0].mxu0
  %v4372 = vadd.f32 0.0, %v4371
  %v4373 = vpop.f32.mrb[0].mxu0
  %4374 = vmatprep.mubr.bf16.mxu0 0
  %4375 = vmatmul.mubr.bf16.gmra.mrb[0].mxu0 %v1353
  %v4376 = vpop.f32.mrb[0].mxu0
  %v4377 = vadd.f32 0.0, %v4376
  %v4378 = vpop.f32.mrb[0].mxu0
  %v4379 = vpop.f32.mrb[0].mxu0
  %v4380 = vadd.f32 0.0, %v4379
  %v4381 = vpop.f32.mrb[0].mxu0
  %4382 = vmatprep.mubr.bf16.mxu0 0
  %4383 = vmatmul.mubr.bf16.gmra.mrb[0].mxu0 %v1356
  %v4384 = vpop.f32.mrb[0].mxu0
  %v4385 = vadd.f32 0.0, %v4384
  %v4386 = vpop.f32.mrb[0].mxu0
  %v4387 = vpop.f32.mrb[0].mxu0
  %v4388 = vadd.f32 0.0, %v4387
  %v4389 = vpop.f32.mrb[0].mxu0
  %4390 = vmatprep.mubr.bf16.mxu0 0
  %4391 = vmatmul.mubr.bf16.gmra.mrb[0].mxu0 %v4230
  %v4392 = vpop.f32.mrb[0].mxu0
  %v4393 = vadd.f32 0.0, %v4392
  %v4394 = vpop.f32.mrb[0].mxu0
  %v4395 = vpop.f32.mrb[0].mxu0
  %v4396 = vadd.f32 0.0, %v4395
  %v4397 = vpop.f32.mrb[0].mxu0
  %4398 = vmatprep.mubr.bf16.mxu0 0
  %4399 = vmatmul.mubr.bf16.gmra.mrb[0].mxu0 %v1362
  %v4400 = vpop.f32.mrb[0].mxu0
  %v4401 = vadd.f32 0.0, %v4400
  %v4402 = vpop.f32.mrb[0].mxu0
  %v4403 = vpop.f32.mrb[0].mxu0
  %v4404 = vadd.f32 0.0, %v4403
  %v4405 = vpop.f32.mrb[0].mxu0
  %4406 = vmatprep.mubr.bf16.mxu0 0
  %4407 = vmatmul.mubr.bf16.gmra.mrb[0].mxu0 %v1365
  %v4408 = vpop.f32.mrb[0].mxu0
  %v4409 = vadd.f32 0.0, %v4408
  %v4410 = vpop.f32.mrb[0].mxu0
  %v4411 = vpop.f32.mrb[0].mxu0
  %v4412 = vadd.f32 0.0, %v4411
  %v4413 = vpop.f32.mrb[0].mxu0
  %4414 = vmatprep.mubr.bf16.mxu0 0
  %4415 = vmatmul.mubr.bf16.gmra.mrb[0].mxu0 %v1368
  %v4416 = vpop.f32.mrb[0].mxu0
  %v4417 = vadd.f32 0.0, %v4416
  %v4418 = vpop.f32.mrb[0].mxu0
  %v4419 = vpop.f32.mrb[0].mxu0
  %v4420 = vadd.f32 0.0, %v4419
  %v4421 = vpop.f32.mrb[0].mxu0
  %4422 = vmatprep.mubr.bf16.mxu0 0
  %4423 = vmatmul.mubr.bf16.gmra.mrb[0].mxu0 %v1371
  %v4424 = vpop.f32.mrb[0].mxu0
  %v4425 = vadd.f32 0.0, %v4424
  %v4426 = vpop.f32.mrb[0].mxu0
  %v4427 = vpop.f32.mrb[0].mxu0
  %v4428 = vadd.f32 0.0, %v4427
  %v4429 = vpop.f32.mrb[0].mxu0
  %4430 = vmatprep.mubr.bf16.mxu0 0
  %4431 = vmatmul.mubr.bf16.gmra.mrb[0].mxu0 %v1374
  %v4432 = vpop.f32.mrb[0].mxu0
  %v4433 = vadd.f32 0.0, %v4432
  %v4434 = vpop.f32.mrb[0].mxu0
  %v4435 = vpop.f32.mrb[0].mxu0
  %v4436 = vadd.f32 0.0, %v4435
  %v4437 = vpop.f32.mrb[0].mxu0
  %4438 = vmatprep.mubr.bf16.mxu0 0
  %4439 = vmatmul.mubr.bf16.gmra.mrb[0].mxu0 %v1377
  %v4440 = vpop.f32.mrb[0].mxu0
  %v4441 = vadd.f32 0.0, %v4440
  %v4442 = vpop.f32.mrb[0].mxu0
  %v4443 = vpop.f32.mrb[0].mxu0
  %v4444 = vadd.f32 0.0, %v4443
  %v4445 = vpop.f32.mrb[0].mxu0
  %4446 = vmatprep.mubr.bf16.mxu0 0
  %4447 = vmatmul.mubr.bf16.gmra.mrb[0].mxu0 %v1380
  %v4448 = vpop.f32.mrb[0].mxu0
  %v4449 = vadd.f32 0.0, %v4448
  %v4450 = vpop.f32.mrb[0].mxu0
  %v4451 = vpop.f32.mrb[0].mxu0
  %v4452 = vadd.f32 0.0, %v4451
  %v4453 = vpop.f32.mrb[0].mxu0
  %4454 = vmatprep.mubr.bf16.mxu0 0
  %4455 = vmatmul.mubr.bf16.gmra.mrb[0].mxu0 %v1383
  %v4456 = vpop.f32.mrb[0].mxu0
  %v4457 = vadd.f32 0.0, %v4456
  %v4458 = vpop.f32.mrb[0].mxu0
  %v4459 = vpop.f32.mrb[0].mxu0
  %v4460 = vadd.f32 0.0, %v4459
  %v4461 = vpop.f32.mrb[0].mxu0
  %4462 = vmatprep.mubr.bf16.mxu0 0
  %4463 = vmatmul.mubr.bf16.gmra.mrb[0].mxu0 %v1386
  %v4464 = vpop.f32.mrb[0].mxu0
  %v4465 = vadd.f32 0.0, %v4464
  %v4466 = vpop.f32.mrb[0].mxu0
  %v4467 = vpop.f32.mrb[0].mxu0
  %v4468 = vadd.f32 0.0, %v4467
  %v4469 = vpop.f32.mrb[0].mxu0
  %4470 = vmatprep.mubr.bf16.mxu0 0
  %4471 = vmatmul.mubr.bf16.gmra.mrb[0].mxu0 %v1389
  %v4472 = vpop.f32.mrb[0].mxu0
  %v4473 = vadd.f32 0.0, %v4472
  %v4474 = vpop.f32.mrb[0].mxu0
  %v4475 = vpop.f32.mrb[0].mxu0
  %v4476 = vadd.f32 0.0, %v4475
  %v4477 = vpop.f32.mrb[0].mxu0
  %4478 = vmatprep.mubr.bf16.mxu0 0
  %4479 = vmatmul.mubr.bf16.gmra.mrb[0].mxu0 %v1392
  %v4480 = vpop.f32.mrb[0].mxu0
  %v4481 = vadd.f32 0.0, %v4480
  %v4482 = vpop.f32.mrb[0].mxu0
  %v4483 = vpop.f32.mrb[0].mxu0
  %v4484 = vadd.f32 0.0, %v4483
  %v4485 = vpop.f32.mrb[0].mxu0
  %4486 = vmatprep.mubr.bf16.mxu0 0
  %4487 = vmatmul.mubr.bf16.gmra.mrb[0].mxu0 %v1395
  %v4488 = vpop.f32.mrb[0].mxu0
  %v4489 = vadd.f32 0.0, %v4488
  %v4490 = vpop.f32.mrb[0].mxu0
  %v4491 = vpop.f32.mrb[0].mxu0
  %v4492 = vadd.f32 0.0, %v4491
  %v4493 = vpop.f32.mrb[0].mxu0
  %4494 = vmatprep.mubr.bf16.mxu0 0
  %4495 = vmatmul.mubr.bf16.gmra.mrb[0].mxu0 %v1398
  %v4496 = vpop.f32.mrb[0].mxu0
  %v4497 = vadd.f32 0.0, %v4496
  %v4498 = vpop.f32.mrb[0].mxu0
  %v4499 = vpop.f32.mrb[0].mxu0
  %v4500 = vadd.f32 0.0, %v4499
  %v4501 = vpop.f32.mrb[0].mxu0
  %4502 = vmatprep.mubr.bf16.mxu0 0
  %4503 = vmatmul.mubr.bf16.gmra.mrb[0].mxu0 %v1401
  %v4504 = vpop.f32.mrb[0].mxu0
  %v4505 = vadd.f32 0.0, %v4504
  %v4506 = vpop.f32.mrb[0].mxu0
  %v4507 = vpop.f32.mrb[0].mxu0
  %v4508 = vadd.f32 0.0, %v4507
  %v4509 = vpop.f32.mrb[0].mxu0
  %4510 = vmatprep.mubr.bf16.mxu0 0
  %4511 = vmatmul.mubr.bf16.gmra.mrb[0].mxu0 %v1404
  %v4512 = vpop.f32.mrb[0].mxu0
  %v4513 = vadd.f32 0.0, %v4512
  %v4514 = vpop.f32.mrb[0].mxu0
  %v4515 = vpop.f32.mrb[0].mxu0
  %v4516 = vadd.f32 0.0, %v4515
  %v4517 = vpop.f32.mrb[0].mxu0
  %4518 = vmatprep.mubr.bf16.mxu0 0
  %4519 = vmatmul.mubr.bf16.gmra.mrb[0].mxu0 %v4233
  %v4520 = vpop.f32.mrb[0].mxu0
  %v4521 = vadd.f32 0.0, %v4520
  %v4522 = vpop.f32.mrb[0].mxu0
  %v4523 = vpop.f32.mrb[0].mxu0
  %v4524 = vadd.f32 0.0, %v4523
  %v4525 = vpop.f32.mrb[0].mxu0
  %4526 = vdwg.mxu0
  %v4527 = vadd.f32 %v4047, %v4273
  %v4528 = vadd.f32 %v4048, %v4276
  %v4529 = vadd.f32 %v4049, %v4281
  %v4530 = vadd.f32 %v4050, %v4284
  %v4531 = vadd.f32 %v4051, %v4289
  %v4532 = vadd.f32 %v4052, %v4292
  %v4533 = vadd.f32 %v4053, %v4297
  %v4534 = vadd.f32 %v4054, %v4300
  %v4535 = vadd.f32 %v4055, %v4305
  %v4536 = vadd.f32 %v4056, %v4308
  %v4537 = vadd.f32 %v4057, %v4313
  %v4538 = vadd.f32 %v4058, %v4316
  %v4539 = vadd.f32 %v4059, %v4321
  %v4540 = vadd.f32 %v4060, %v4324
  %v4541 = vadd.f32 %v4061, %v4329
  %v4542 = vadd.f32 %v4062, %v4332
  %v4543 = vadd.f32 %v4063, %v4337
  %v4544 = vadd.f32 %v4064, %v4340
  %v4545 = vadd.f32 %v4065, %v4345
  %v4546 = vadd.f32 %v4066, %v4348
  %v4547 = vadd.f32 %v4067, %v4353
  %v4548 = vadd.f32 %v4068, %v4356
  %v4549 = vadd.f32 %v4069, %v4361
  %v4550 = vadd.f32 %v4070, %v4364
  %v4551 = vadd.f32 %v4071, %v4369
  %v4552 = vadd.f32 %v4072, %v4372
  %v4553 = vadd.f32 %v4073, %v4377
  %v4554 = vadd.f32 %v4074, %v4380
  %v4555 = vadd.f32 %v4075, %v4385
  %v4556 = vadd.f32 %v4076, %v4388
  %v4557 = vadd.f32 %v4077, %v4393
  %v4558 = vadd.f32 %v4078, %v4396
  %v4559 = vadd.f32 %v4079, %v4401
  %v4560 = vadd.f32 %v4080, %v4404
  %v4561 = vadd.f32 %v4081, %v4409
  %v4562 = vadd.f32 %v4082, %v4412
  %v4563 = vadd.f32 %v4083, %v4417
  %v4564 = vadd.f32 %v4084, %v4420
  %v4565 = vadd.f32 %v4085, %v4425
  %v4566 = vadd.f32 %v4086, %v4428
  %v4567 = vadd.f32 %v4087, %v4433
  %v4568 = vadd.f32 %v4088, %v4436
  %v4569 = vadd.f32 %v4089, %v4441
  %v4570 = vadd.f32 %v4090, %v4444
  %v4571 = vadd.f32 %v4091, %v4449
  %v4572 = vadd.f32 %v4092, %v4452
  %v4573 = vadd.f32 %v4093, %v4457
  %v4574 = vadd.f32 %v4094, %v4460
  %v4575 = vadd.f32 %v4095, %v4465
  %v4576 = vadd.f32 %v4096, %v4468
  %v4577 = vadd.f32 %v4097, %v4473
  %v4578 = vadd.f32 %v4098, %v4476
  %v4579 = vadd.f32 %v4099, %v4481
  %v4580 = vadd.f32 %v4100, %v4484
  %v4581 = vadd.f32 %v4101, %v4489
  %v4582 = vadd.f32 %v4102, %v4492
  %v4583 = vadd.f32 %v4103, %v4497
  %v4584 = vadd.f32 %v4104, %v4500
  %v4585 = vadd.f32 %v4105, %v4505
  %v4586 = vadd.f32 %v4106, %v4508
  %v4587 = vadd.f32 %v4107, %v4513
  %v4588 = vadd.f32 %v4108, %v4516
  %v4589 = vadd.f32 %v4109, %v4521
  %v4590 = vadd.f32 %v4110, %v4524
  %v4591 = vsel %vm2056, -3e+38, %v111
  %v4592 = vsel %vm2056, -3e+38, %v165
  %v4599 = vrot.slane %v4111, 1
  %v4600 = vrot.slane %v4112, 1
  %v4601 = vsel %vm571, %v4599, %v4600
  %v4602 = vrot.slane %v4591, 1
  %v4603 = vsel %vm571, %v4600, %v4602
  %v4604 = vrot.slane %v4113, 1
  %v4605 = vrot.slane %v4114, 1
  %v4606 = vsel %vm571, %v4604, %v4605
  %v4607 = vrot.slane %v4592, 1
  %v4608 = vsel %vm571, %v4605, %v4607
  %v4613 = vmax.f32 %v4115, %v4601
  %v4614 = vmax.f32 %v4116, %v4603
  %v4615 = vmax.f32 %v4117, %v4606
  %v4616 = vmax.f32 %v4118, %v4608
  %v4617 = vrot.slane %v109, 2
  %v4618 = vrot.slane %v110, 2
  %v4619 = vsel %vm2447, %v4617, %v4618
  %v4620 = vrot.slane %v111, 2
  %v4621 = vsel %vm2447, %v4618, %v4620
  %v4622 = vrot.slane %v163, 2
  %v4623 = vrot.slane %v164, 2
  %v4624 = vsel %vm2447, %v4622, %v4623
  %v4625 = vrot.slane %v165, 2
  %v4626 = vsel %vm2447, %v4623, %v4625
  %v4631 = vadd.f32 %v4139, %v2455
  %v4632 = vadd.f32 %v4140, %v2457
  %v4633 = vadd.f32 %v4141, %v2460
  %v4634 = vadd.f32 %v4142, %v2462
  %v4635 = vadd.f32 %v4143, %v2465
  %v4636 = vadd.f32 %v4144, %v2467
  %v4637 = vadd.f32 %v4145, %v2470
  %v4638 = vadd.f32 %v4146, %v2472
  %v4639 = vadd.f32 %v4147, %v2475
  %v4640 = vadd.f32 %v4148, %v2477
  %v4641 = vadd.f32 %v4149, %v2480
  %v4642 = vadd.f32 %v4150, %v2482
  %v4643 = vadd.f32 %v4151, %v2485
  %v4644 = vadd.f32 %v4152, %v2487
  %v4645 = vadd.f32 %v4153, %v2490
  %v4646 = vadd.f32 %v4154, %v2492
  %v4647 = vadd.f32 %v4155, %v2495
  %v4648 = vadd.f32 %v4156, %v2497
  %v4649 = vadd.f32 %v4157, %v2500
  %v4650 = vadd.f32 %v4158, %v2502
  %v4651 = vadd.f32 %v4159, %v2505
  %v4652 = vadd.f32 %v4160, %v2507
  %v4653 = vadd.f32 %v4161, %v2510
  %v4654 = vadd.f32 %v4162, %v2512
  %v4655 = vadd.f32 %v4163, %v2515
  %v4656 = vadd.f32 %v4164, %v2517
  %v4657 = vadd.f32 %v4165, %v2520
  %v4658 = vadd.f32 %v4166, %v2522
  %v4659 = vadd.f32 %v4167, %v2525
  %v4660 = vadd.f32 %v4168, %v2527
  %v4661 = vadd.f32 %v4169, %v4619
  %v4662 = vadd.f32 %v4170, %v4621
  %v4663 = vadd.f32 %v4171, %v2535
  %v4664 = vadd.f32 %v4172, %v2537
  %v4665 = vadd.f32 %v4173, %v2540
  %v4666 = vadd.f32 %v4174, %v2542
  %v4667 = vadd.f32 %v4175, %v2545
  %v4668 = vadd.f32 %v4176, %v2547
  %v4669 = vadd.f32 %v4177, %v2550
  %v4670 = vadd.f32 %v4178, %v2552
  %v4671 = vadd.f32 %v4179, %v2555
  %v4672 = vadd.f32 %v4180, %v2557
  %v4673 = vadd.f32 %v4181, %v2560
  %v4674 = vadd.f32 %v4182, %v2562
  %v4675 = vadd.f32 %v4183, %v2565
  %v4676 = vadd.f32 %v4184, %v2567
  %v4677 = vadd.f32 %v4185, %v2570
  %v4678 = vadd.f32 %v4186, %v2572
  %v4679 = vadd.f32 %v4187, %v2575
  %v4680 = vadd.f32 %v4188, %v2577
  %v4681 = vadd.f32 %v4189, %v2580
  %v4682 = vadd.f32 %v4190, %v2582
  %v4683 = vadd.f32 %v4191, %v2585
  %v4684 = vadd.f32 %v4192, %v2587
  %v4685 = vadd.f32 %v4193, %v2590
  %v4686 = vadd.f32 %v4194, %v2592
  %v4687 = vadd.f32 %v4195, %v2595
  %v4688 = vadd.f32 %v4196, %v2597
  %v4689 = vadd.f32 %v4197, %v2600
  %v4690 = vadd.f32 %v4198, %v2602
  %v4691 = vadd.f32 %v4199, %v2605
  %v4692 = vadd.f32 %v4200, %v2607
  %v4693 = vadd.f32 %v4201, %v4624
  %v4694 = vadd.f32 %v4202, %v4626
  %v4699 = vrot.slane %v3747, 1
  %v4700 = vrot.slane %v4205, 1
  %v4701 = vsel %vm2800, %v4699, %v4700
  %v4702 = vrot.slane %v3748, 1
  %v4703 = vrot.slane %v4206, 1
  %v4704 = vsel %vm2800, %v4702, %v4703
  %v4706 = vsel %vm1309, %v4701, 0
  %v4709 = vsel %vm1309, %v4704, 0
  %v4712 = vsel %vm1406, %v174, 0
  %4714 = vmatprep.subr.bf16.mxu0 0
  %4715 = vmatpush1.bf16.msra.mxu0 %v4712
  %4716 = vmatprep.subr.bf16.mxu0 0
  %4717 = vmatpush1.bf16.msra.mxu0 0
  %4718 = vmatprep.subr.bf16.mxu0 0
  %4719 = vmatpush1.bf16.msra.mxu0 0
  %4720 = vmatprep.subr.bf16.mxu0 0
  %4721 = vmatpush1.bf16.msra.mxu0 0
  %4722 = vmatprep.subr.bf16.mxu0 0
  %4723 = vmatpush1.bf16.msra.mxu0 0
  %4724 = vmatprep.subr.bf16.mxu0 0
  %4725 = vmatpush1.bf16.msra.mxu0 0
  %4726 = vmatprep.subr.bf16.mxu0 0
  %4727 = vmatpush1.bf16.msra.mxu0 0
  %4728 = vmatprep.subr.bf16.mxu0 0
  %4729 = vmatpush1.bf16.msra.mxu0 0
  %4730 = vmatprep.subr.bf16.mxu0 0
  %4731 = vmatpush1.bf16.msra.mxu0 0
  %4732 = vmatprep.subr.bf16.mxu0 0
  %4733 = vmatpush1.bf16.msra.mxu0 0
  %4734 = vmatprep.subr.bf16.mxu0 0
  %4735 = vmatpush1.bf16.msra.mxu0 0
  %4736 = vmatprep.subr.bf16.mxu0 0
  %4737 = vmatpush1.bf16.msra.mxu0 0
  %4738 = vmatprep.subr.bf16.mxu0 0
  %4739 = vmatpush1.bf16.msra.mxu0 0
  %4740 = vmatprep.subr.bf16.mxu0 0
  %4741 = vmatpush1.bf16.msra.mxu0 0
  %4742 = vmatprep.subr.bf16.mxu0 0
  %4743 = vmatpush1.bf16.msra.mxu0 0
  %4744 = vmatprep.subr.bf16.mxu0 0
  %4745 = vmatpush1.bf16.msra.mxu0 0
  %4746 = vmatprep.mubr.bf16.mxu0 0
  %4747 = vmatmul.mubr.bf16.gmra.mrb[0].mxu0 %v2901
  %v4748 = vpop.f32.mrb[0].mxu0
  %v4749 = vadd.f32 0.0, %v4748
  %v4750 = vpop.f32.mrb[0].mxu0
  %v4751 = vpop.f32.mrb[0].mxu0
  %v4752 = vadd.f32 0.0, %v4751
  %v4753 = vpop.f32.mrb[0].mxu0
  %4754 = vmatprep.mubr.bf16.mxu0 0
  %4755 = vmatmul.mubr.bf16.gmra.mrb[0].mxu0 %v2904
  %v4756 = vpop.f32.mrb[0].mxu0
  %v4757 = vadd.f32 0.0, %v4756
  %v4758 = vpop.f32.mrb[0].mxu0
  %v4759 = vpop.f32.mrb[0].mxu0
  %v4760 = vadd.f32 0.0, %v4759
  %v4761 = vpop.f32.mrb[0].mxu0
  %4762 = vmatprep.mubr.bf16.mxu0 0
  %4763 = vmatmul.mubr.bf16.gmra.mrb[0].mxu0 %v2907
  %v4764 = vpop.f32.mrb[0].mxu0
  %v4765 = vadd.f32 0.0, %v4764
  %v4766 = vpop.f32.mrb[0].mxu0
  %v4767 = vpop.f32.mrb[0].mxu0
  %v4768 = vadd.f32 0.0, %v4767
  %v4769 = vpop.f32.mrb[0].mxu0
  %4770 = vmatprep.mubr.bf16.mxu0 0
  %4771 = vmatmul.mubr.bf16.gmra.mrb[0].mxu0 %v2910
  %v4772 = vpop.f32.mrb[0].mxu0
  %v4773 = vadd.f32 0.0, %v4772
  %v4774 = vpop.f32.mrb[0].mxu0
  %v4775 = vpop.f32.mrb[0].mxu0
  %v4776 = vadd.f32 0.0, %v4775
  %v4777 = vpop.f32.mrb[0].mxu0
  %4778 = vmatprep.mubr.bf16.mxu0 0
  %4779 = vmatmul.mubr.bf16.gmra.mrb[0].mxu0 %v2913
  %v4780 = vpop.f32.mrb[0].mxu0
  %v4781 = vadd.f32 0.0, %v4780
  %v4782 = vpop.f32.mrb[0].mxu0
  %v4783 = vpop.f32.mrb[0].mxu0
  %v4784 = vadd.f32 0.0, %v4783
  %v4785 = vpop.f32.mrb[0].mxu0
  %4786 = vmatprep.mubr.bf16.mxu0 0
  %4787 = vmatmul.mubr.bf16.gmra.mrb[0].mxu0 %v2916
  %v4788 = vpop.f32.mrb[0].mxu0
  %v4789 = vadd.f32 0.0, %v4788
  %v4790 = vpop.f32.mrb[0].mxu0
  %v4791 = vpop.f32.mrb[0].mxu0
  %v4792 = vadd.f32 0.0, %v4791
  %v4793 = vpop.f32.mrb[0].mxu0
  %4794 = vmatprep.mubr.bf16.mxu0 0
  %4795 = vmatmul.mubr.bf16.gmra.mrb[0].mxu0 %v2919
  %v4796 = vpop.f32.mrb[0].mxu0
  %v4797 = vadd.f32 0.0, %v4796
  %v4798 = vpop.f32.mrb[0].mxu0
  %v4799 = vpop.f32.mrb[0].mxu0
  %v4800 = vadd.f32 0.0, %v4799
  %v4801 = vpop.f32.mrb[0].mxu0
  %4802 = vmatprep.mubr.bf16.mxu0 0
  %4803 = vmatmul.mubr.bf16.gmra.mrb[0].mxu0 %v2922
  %v4804 = vpop.f32.mrb[0].mxu0
  %v4805 = vadd.f32 0.0, %v4804
  %v4806 = vpop.f32.mrb[0].mxu0
  %v4807 = vpop.f32.mrb[0].mxu0
  %v4808 = vadd.f32 0.0, %v4807
  %v4809 = vpop.f32.mrb[0].mxu0
  %4810 = vmatprep.mubr.bf16.mxu0 0
  %4811 = vmatmul.mubr.bf16.gmra.mrb[0].mxu0 %v2925
  %v4812 = vpop.f32.mrb[0].mxu0
  %v4813 = vadd.f32 0.0, %v4812
  %v4814 = vpop.f32.mrb[0].mxu0
  %v4815 = vpop.f32.mrb[0].mxu0
  %v4816 = vadd.f32 0.0, %v4815
  %v4817 = vpop.f32.mrb[0].mxu0
  %4818 = vmatprep.mubr.bf16.mxu0 0
  %4819 = vmatmul.mubr.bf16.gmra.mrb[0].mxu0 %v2928
  %v4820 = vpop.f32.mrb[0].mxu0
  %v4821 = vadd.f32 0.0, %v4820
  %v4822 = vpop.f32.mrb[0].mxu0
  %v4823 = vpop.f32.mrb[0].mxu0
  %v4824 = vadd.f32 0.0, %v4823
  %v4825 = vpop.f32.mrb[0].mxu0
  %4826 = vmatprep.mubr.bf16.mxu0 0
  %4827 = vmatmul.mubr.bf16.gmra.mrb[0].mxu0 %v2931
  %v4828 = vpop.f32.mrb[0].mxu0
  %v4829 = vadd.f32 0.0, %v4828
  %v4830 = vpop.f32.mrb[0].mxu0
  %v4831 = vpop.f32.mrb[0].mxu0
  %v4832 = vadd.f32 0.0, %v4831
  %v4833 = vpop.f32.mrb[0].mxu0
  %4834 = vmatprep.mubr.bf16.mxu0 0
  %4835 = vmatmul.mubr.bf16.gmra.mrb[0].mxu0 %v2934
  %v4836 = vpop.f32.mrb[0].mxu0
  %v4837 = vadd.f32 0.0, %v4836
  %v4838 = vpop.f32.mrb[0].mxu0
  %v4839 = vpop.f32.mrb[0].mxu0
  %v4840 = vadd.f32 0.0, %v4839
  %v4841 = vpop.f32.mrb[0].mxu0
  %4842 = vmatprep.mubr.bf16.mxu0 0
  %4843 = vmatmul.mubr.bf16.gmra.mrb[0].mxu0 %v2937
  %v4844 = vpop.f32.mrb[0].mxu0
  %v4845 = vadd.f32 0.0, %v4844
  %v4846 = vpop.f32.mrb[0].mxu0
  %v4847 = vpop.f32.mrb[0].mxu0
  %v4848 = vadd.f32 0.0, %v4847
  %v4849 = vpop.f32.mrb[0].mxu0
  %4850 = vmatprep.mubr.bf16.mxu0 0
  %4851 = vmatmul.mubr.bf16.gmra.mrb[0].mxu0 %v2940
  %v4852 = vpop.f32.mrb[0].mxu0
  %v4853 = vadd.f32 0.0, %v4852
  %v4854 = vpop.f32.mrb[0].mxu0
  %v4855 = vpop.f32.mrb[0].mxu0
  %v4856 = vadd.f32 0.0, %v4855
  %v4857 = vpop.f32.mrb[0].mxu0
  %4858 = vmatprep.mubr.bf16.mxu0 0
  %4859 = vmatmul.mubr.bf16.gmra.mrb[0].mxu0 %v2943
  %v4860 = vpop.f32.mrb[0].mxu0
  %v4861 = vadd.f32 0.0, %v4860
  %v4862 = vpop.f32.mrb[0].mxu0
  %v4863 = vpop.f32.mrb[0].mxu0
  %v4864 = vadd.f32 0.0, %v4863
  %v4865 = vpop.f32.mrb[0].mxu0
  %4866 = vmatprep.mubr.bf16.mxu0 0
  %4867 = vmatmul.mubr.bf16.gmra.mrb[0].mxu0 %v4706
  %v4868 = vpop.f32.mrb[0].mxu0
  %v4869 = vadd.f32 0.0, %v4868
  %v4870 = vpop.f32.mrb[0].mxu0
  %v4871 = vpop.f32.mrb[0].mxu0
  %v4872 = vadd.f32 0.0, %v4871
  %v4873 = vpop.f32.mrb[0].mxu0
  %4874 = vmatprep.mubr.bf16.mxu0 0
  %4875 = vmatmul.mubr.bf16.gmra.mrb[0].mxu0 %v2949
  %v4876 = vpop.f32.mrb[0].mxu0
  %v4877 = vadd.f32 0.0, %v4876
  %v4878 = vpop.f32.mrb[0].mxu0
  %v4879 = vpop.f32.mrb[0].mxu0
  %v4880 = vadd.f32 0.0, %v4879
  %v4881 = vpop.f32.mrb[0].mxu0
  %4882 = vmatprep.mubr.bf16.mxu0 0
  %4883 = vmatmul.mubr.bf16.gmra.mrb[0].mxu0 %v2952
  %v4884 = vpop.f32.mrb[0].mxu0
  %v4885 = vadd.f32 0.0, %v4884
  %v4886 = vpop.f32.mrb[0].mxu0
  %v4887 = vpop.f32.mrb[0].mxu0
  %v4888 = vadd.f32 0.0, %v4887
  %v4889 = vpop.f32.mrb[0].mxu0
  %4890 = vmatprep.mubr.bf16.mxu0 0
  %4891 = vmatmul.mubr.bf16.gmra.mrb[0].mxu0 %v2955
  %v4892 = vpop.f32.mrb[0].mxu0
  %v4893 = vadd.f32 0.0, %v4892
  %v4894 = vpop.f32.mrb[0].mxu0
  %v4895 = vpop.f32.mrb[0].mxu0
  %v4896 = vadd.f32 0.0, %v4895
  %v4897 = vpop.f32.mrb[0].mxu0
  %4898 = vmatprep.mubr.bf16.mxu0 0
  %4899 = vmatmul.mubr.bf16.gmra.mrb[0].mxu0 %v2958
  %v4900 = vpop.f32.mrb[0].mxu0
  %v4901 = vadd.f32 0.0, %v4900
  %v4902 = vpop.f32.mrb[0].mxu0
  %v4903 = vpop.f32.mrb[0].mxu0
  %v4904 = vadd.f32 0.0, %v4903
  %v4905 = vpop.f32.mrb[0].mxu0
  %4906 = vmatprep.mubr.bf16.mxu0 0
  %4907 = vmatmul.mubr.bf16.gmra.mrb[0].mxu0 %v2961
  %v4908 = vpop.f32.mrb[0].mxu0
  %v4909 = vadd.f32 0.0, %v4908
  %v4910 = vpop.f32.mrb[0].mxu0
  %v4911 = vpop.f32.mrb[0].mxu0
  %v4912 = vadd.f32 0.0, %v4911
  %v4913 = vpop.f32.mrb[0].mxu0
  %4914 = vmatprep.mubr.bf16.mxu0 0
  %4915 = vmatmul.mubr.bf16.gmra.mrb[0].mxu0 %v2964
  %v4916 = vpop.f32.mrb[0].mxu0
  %v4917 = vadd.f32 0.0, %v4916
  %v4918 = vpop.f32.mrb[0].mxu0
  %v4919 = vpop.f32.mrb[0].mxu0
  %v4920 = vadd.f32 0.0, %v4919
  %v4921 = vpop.f32.mrb[0].mxu0
  %4922 = vmatprep.mubr.bf16.mxu0 0
  %4923 = vmatmul.mubr.bf16.gmra.mrb[0].mxu0 %v2967
  %v4924 = vpop.f32.mrb[0].mxu0
  %v4925 = vadd.f32 0.0, %v4924
  %v4926 = vpop.f32.mrb[0].mxu0
  %v4927 = vpop.f32.mrb[0].mxu0
  %v4928 = vadd.f32 0.0, %v4927
  %v4929 = vpop.f32.mrb[0].mxu0
  %4930 = vmatprep.mubr.bf16.mxu0 0
  %4931 = vmatmul.mubr.bf16.gmra.mrb[0].mxu0 %v2970
  %v4932 = vpop.f32.mrb[0].mxu0
  %v4933 = vadd.f32 0.0, %v4932
  %v4934 = vpop.f32.mrb[0].mxu0
  %v4935 = vpop.f32.mrb[0].mxu0
  %v4936 = vadd.f32 0.0, %v4935
  %v4937 = vpop.f32.mrb[0].mxu0
  %4938 = vmatprep.mubr.bf16.mxu0 0
  %4939 = vmatmul.mubr.bf16.gmra.mrb[0].mxu0 %v2973
  %v4940 = vpop.f32.mrb[0].mxu0
  %v4941 = vadd.f32 0.0, %v4940
  %v4942 = vpop.f32.mrb[0].mxu0
  %v4943 = vpop.f32.mrb[0].mxu0
  %v4944 = vadd.f32 0.0, %v4943
  %v4945 = vpop.f32.mrb[0].mxu0
  %4946 = vmatprep.mubr.bf16.mxu0 0
  %4947 = vmatmul.mubr.bf16.gmra.mrb[0].mxu0 %v2976
  %v4948 = vpop.f32.mrb[0].mxu0
  %v4949 = vadd.f32 0.0, %v4948
  %v4950 = vpop.f32.mrb[0].mxu0
  %v4951 = vpop.f32.mrb[0].mxu0
  %v4952 = vadd.f32 0.0, %v4951
  %v4953 = vpop.f32.mrb[0].mxu0
  %4954 = vmatprep.mubr.bf16.mxu0 0
  %4955 = vmatmul.mubr.bf16.gmra.mrb[0].mxu0 %v2979
  %v4956 = vpop.f32.mrb[0].mxu0
  %v4957 = vadd.f32 0.0, %v4956
  %v4958 = vpop.f32.mrb[0].mxu0
  %v4959 = vpop.f32.mrb[0].mxu0
  %v4960 = vadd.f32 0.0, %v4959
  %v4961 = vpop.f32.mrb[0].mxu0
  %4962 = vmatprep.mubr.bf16.mxu0 0
  %4963 = vmatmul.mubr.bf16.gmra.mrb[0].mxu0 %v2982
  %v4964 = vpop.f32.mrb[0].mxu0
  %v4965 = vadd.f32 0.0, %v4964
  %v4966 = vpop.f32.mrb[0].mxu0
  %v4967 = vpop.f32.mrb[0].mxu0
  %v4968 = vadd.f32 0.0, %v4967
  %v4969 = vpop.f32.mrb[0].mxu0
  %4970 = vmatprep.mubr.bf16.mxu0 0
  %4971 = vmatmul.mubr.bf16.gmra.mrb[0].mxu0 %v2985
  %v4972 = vpop.f32.mrb[0].mxu0
  %v4973 = vadd.f32 0.0, %v4972
  %v4974 = vpop.f32.mrb[0].mxu0
  %v4975 = vpop.f32.mrb[0].mxu0
  %v4976 = vadd.f32 0.0, %v4975
  %v4977 = vpop.f32.mrb[0].mxu0
  %4978 = vmatprep.mubr.bf16.mxu0 0
  %4979 = vmatmul.mubr.bf16.gmra.mrb[0].mxu0 %v2988
  %v4980 = vpop.f32.mrb[0].mxu0
  %v4981 = vadd.f32 0.0, %v4980
  %v4982 = vpop.f32.mrb[0].mxu0
  %v4983 = vpop.f32.mrb[0].mxu0
  %v4984 = vadd.f32 0.0, %v4983
  %v4985 = vpop.f32.mrb[0].mxu0
  %4986 = vmatprep.mubr.bf16.mxu0 0
  %4987 = vmatmul.mubr.bf16.gmra.mrb[0].mxu0 %v2991
  %v4988 = vpop.f32.mrb[0].mxu0
  %v4989 = vadd.f32 0.0, %v4988
  %v4990 = vpop.f32.mrb[0].mxu0
  %v4991 = vpop.f32.mrb[0].mxu0
  %v4992 = vadd.f32 0.0, %v4991
  %v4993 = vpop.f32.mrb[0].mxu0
  %4994 = vmatprep.mubr.bf16.mxu0 0
  %4995 = vmatmul.mubr.bf16.gmra.mrb[0].mxu0 %v4709
  %v4996 = vpop.f32.mrb[0].mxu0
  %v4997 = vadd.f32 0.0, %v4996
  %v4998 = vpop.f32.mrb[0].mxu0
  %v4999 = vpop.f32.mrb[0].mxu0
  %v5000 = vadd.f32 0.0, %v4999
  %v5001 = vpop.f32.mrb[0].mxu0
  %5002 = vdwg.mxu0
  %v5003 = vadd.f32 %v4527, %v4749
  %v5004 = vadd.f32 %v4528, %v4752
  %v5005 = vadd.f32 %v4529, %v4757
  %v5006 = vadd.f32 %v4530, %v4760
  %v5007 = vadd.f32 %v4531, %v4765
  %v5008 = vadd.f32 %v4532, %v4768
  %v5009 = vadd.f32 %v4533, %v4773
  %v5010 = vadd.f32 %v4534, %v4776
  %v5011 = vadd.f32 %v4535, %v4781
  %v5012 = vadd.f32 %v4536, %v4784
  %v5013 = vadd.f32 %v4537, %v4789
  %v5014 = vadd.f32 %v4538, %v4792
  %v5015 = vadd.f32 %v4539, %v4797
  %v5016 = vadd.f32 %v4540, %v4800
  %v5017 = vadd.f32 %v4541, %v4805
  %v5018 = vadd.f32 %v4542, %v4808
  %v5019 = vadd.f32 %v4543, %v4813
  %v5020 = vadd.f32 %v4544, %v4816
  %v5021 = vadd.f32 %v4545, %v4821
  %v5022 = vadd.f32 %v4546, %v4824
  %v5023 = vadd.f32 %v4547, %v4829
  %v5024 = vadd.f32 %v4548, %v4832
  %v5025 = vadd.f32 %v4549, %v4837
  %v5026 = vadd.f32 %v4550, %v4840
  %v5027 = vadd.f32 %v4551, %v4845
  %v5028 = vadd.f32 %v4552, %v4848
  %v5029 = vadd.f32 %v4553, %v4853
  %v5030 = vadd.f32 %v4554, %v4856
  %v5031 = vadd.f32 %v4555, %v4861
  %v5032 = vadd.f32 %v4556, %v4864
  %v5033 = vadd.f32 %v4557, %v4869
  %v5034 = vadd.f32 %v4558, %v4872
  %v5035 = vadd.f32 %v4559, %v4877
  %v5036 = vadd.f32 %v4560, %v4880
  %v5037 = vadd.f32 %v4561, %v4885
  %v5038 = vadd.f32 %v4562, %v4888
  %v5039 = vadd.f32 %v4563, %v4893
  %v5040 = vadd.f32 %v4564, %v4896
  %v5041 = vadd.f32 %v4565, %v4901
  %v5042 = vadd.f32 %v4566, %v4904
  %v5043 = vadd.f32 %v4567, %v4909
  %v5044 = vadd.f32 %v4568, %v4912
  %v5045 = vadd.f32 %v4569, %v4917
  %v5046 = vadd.f32 %v4570, %v4920
  %v5047 = vadd.f32 %v4571, %v4925
  %v5048 = vadd.f32 %v4572, %v4928
  %v5049 = vadd.f32 %v4573, %v4933
  %v5050 = vadd.f32 %v4574, %v4936
  %v5051 = vadd.f32 %v4575, %v4941
  %v5052 = vadd.f32 %v4576, %v4944
  %v5053 = vadd.f32 %v4577, %v4949
  %v5054 = vadd.f32 %v4578, %v4952
  %v5055 = vadd.f32 %v4579, %v4957
  %v5056 = vadd.f32 %v4580, %v4960
  %v5057 = vadd.f32 %v4581, %v4965
  %v5058 = vadd.f32 %v4582, %v4968
  %v5059 = vadd.f32 %v4583, %v4973
  %v5060 = vadd.f32 %v4584, %v4976
  %v5061 = vadd.f32 %v4585, %v4981
  %v5062 = vadd.f32 %v4586, %v4984
  %v5063 = vadd.f32 %v4587, %v4989
  %v5064 = vadd.f32 %v4588, %v4992
  %v5065 = vadd.f32 %v4589, %v4997
  %v5066 = vadd.f32 %v4590, %v5000
  %v5067 = vrot.slane %v4111, 2
  %v5068 = vrot.slane %v4112, 2
  %v5069 = vsel %vm2447, %v5067, %v5068
  %v5070 = vrot.slane %v4591, 2
  %v5071 = vsel %vm2447, %v5068, %v5070
  %v5072 = vrot.slane %v4113, 2
  %v5073 = vrot.slane %v4114, 2
  %v5074 = vsel %vm2447, %v5072, %v5073
  %v5075 = vrot.slane %v4592, 2
  %v5076 = vsel %vm2447, %v5073, %v5075
  %v5081 = vmax.f32 %v4613, %v5069
  %v5082 = vmax.f32 %v4614, %v5071
  %v5083 = vmax.f32 %v4615, %v5074
  %v5084 = vmax.f32 %v4616, %v5076
  %v5085 = vmax.f32 %v3619, %v3561
  %v5086 = vmax.f32 %v3620, %v3562
  %v5087 = vmax.f32 %v3621, %v3563
  %v5088 = vmax.f32 %v3622, %v3564
  %v5089 = vmax.f32 %v3623, %v3565
  %v5090 = vmax.f32 %v3624, %v3566
  %v5091 = vmax.f32 %v3625, %v3567
  %v5092 = vmax.f32 %v3626, %v3568
  %v5093 = vmax.f32 %v3627, %v3569
  %v5094 = vmax.f32 %v3628, %v3570
  %v5095 = vmax.f32 %v3629, %v3571
  %v5096 = vmax.f32 %v3630, %v3572
  %v5097 = vmax.f32 %v3631, %v3573
  %v5098 = vmax.f32 %v3632, %v3574
  %v5099 = vmax.f32 %v3633, %v3575
  %v5100 = vmax.f32 %v3634, %v3576
  %v5101 = vmax.f32 %v3635, %v3577
  %v5102 = vmax.f32 %v3636, %v3578
  %v5103 = vmax.f32 %v3637, %v3579
  %v5104 = vmax.f32 %v3638, %v3580
  %v5105 = vmax.f32 %v3639, %v3581
  %v5106 = vmax.f32 %v3640, %v3582
  %v5107 = vmax.f32 %v3641, %v3583
  %v5108 = vmax.f32 %v3642, %v3584
  %v5109 = vmax.f32 %v3643, %v3585
  %v5110 = vmax.f32 %v3644, %v3586
  %v5111 = vmax.f32 %v3645, %v3587
  %v5112 = vmax.f32 %v3646, %v3588
  %v5113 = vmax.f32 %v3647, %v3591
  %v5114 = vmax.f32 %v3648, %v3592
  %v5115 = vmax.f32 %v3649, %v3593
  %v5116 = vmax.f32 %v3650, %v3594
  %v5117 = vmax.f32 %v3651, %v3595
  %v5118 = vmax.f32 %v3652, %v3596
  %v5119 = vmax.f32 %v3653, %v3597
  %v5120 = vmax.f32 %v3654, %v3598
  %v5121 = vmax.f32 %v3655, %v3599
  %v5122 = vmax.f32 %v3656, %v3600
  %v5123 = vmax.f32 %v3657, %v3601
  %v5124 = vmax.f32 %v3658, %v3602
  %v5125 = vmax.f32 %v3659, %v3603
  %v5126 = vmax.f32 %v3660, %v3604
  %v5127 = vmax.f32 %v3661, %v3605
  %v5128 = vmax.f32 %v3662, %v3606
  %v5129 = vmax.f32 %v3663, %v3607
  %v5130 = vmax.f32 %v3664, %v3608
  %v5131 = vmax.f32 %v3665, %v3609
  %v5132 = vmax.f32 %v3666, %v3610
  %v5133 = vmax.f32 %v3667, %v3611
  %v5134 = vmax.f32 %v3668, %v3612
  %v5135 = vmax.f32 %v3669, %v3613
  %v5136 = vmax.f32 %v3670, %v3614
  %v5137 = vmax.f32 %v3671, %v3615
  %v5138 = vmax.f32 %v3672, %v3616
  %v5139 = vmax.f32 %v3673, %v3617
  %v5140 = vmax.f32 %v3674, %v3618
  %v5141 = vmax.f32 %v3675, %v5081
  %v5142 = vmax.f32 %v3676, %v5082
  %v5143 = vmax.f32 %v3677, %v5083
  %v5144 = vmax.f32 %v3678, %v5084
  %v5145 = vadd.f32 %v4631, %v67
  %v5146 = vadd.f32 %v4632, %v68
  %v5147 = vadd.f32 %v4633, %v70
  %v5148 = vadd.f32 %v4634, %v71
  %v5149 = vadd.f32 %v4635, %v73
  %v5150 = vadd.f32 %v4636, %v74
  %v5151 = vadd.f32 %v4637, %v76
  %v5152 = vadd.f32 %v4638, %v77
  %v5153 = vadd.f32 %v4639, %v79
  %v5154 = vadd.f32 %v4640, %v80
  %v5155 = vadd.f32 %v4641, %v82
  %v5156 = vadd.f32 %v4642, %v83
  %v5157 = vadd.f32 %v4643, %v85
  %v5158 = vadd.f32 %v4644, %v86
  %v5159 = vadd.f32 %v4645, %v88
  %v5160 = vadd.f32 %v4646, %v89
  %v5161 = vadd.f32 %v4647, %v91
  %v5162 = vadd.f32 %v4648, %v92
  %v5163 = vadd.f32 %v4649, %v94
  %v5164 = vadd.f32 %v4650, %v95
  %v5165 = vadd.f32 %v4651, %v97
  %v5166 = vadd.f32 %v4652, %v98
  %v5167 = vadd.f32 %v4653, %v100
  %v5168 = vadd.f32 %v4654, %v101
  %v5169 = vadd.f32 %v4655, %v103
  %v5170 = vadd.f32 %v4656, %v104
  %v5171 = vadd.f32 %v4657, %v106
  %v5172 = vadd.f32 %v4658, %v107
  %v5173 = vadd.f32 %v4659, %v109
  %v5174 = vadd.f32 %v4660, %v110
  %v5175 = vadd.f32 %v4661, %v112
  %v5176 = vadd.f32 %v4662, %v113
  %v5177 = vadd.f32 %v4663, %v121
  %v5178 = vadd.f32 %v4664, %v122
  %v5179 = vadd.f32 %v4665, %v124
  %v5180 = vadd.f32 %v4666, %v125
  %v5181 = vadd.f32 %v4667, %v127
  %v5182 = vadd.f32 %v4668, %v128
  %v5183 = vadd.f32 %v4669, %v130
  %v5184 = vadd.f32 %v4670, %v131
  %v5185 = vadd.f32 %v4671, %v133
  %v5186 = vadd.f32 %v4672, %v134
  %v5187 = vadd.f32 %v4673, %v136
  %v5188 = vadd.f32 %v4674, %v137
  %v5189 = vadd.f32 %v4675, %v139
  %v5190 = vadd.f32 %v4676, %v140
  %v5191 = vadd.f32 %v4677, %v142
  %v5192 = vadd.f32 %v4678, %v143
  %v5193 = vadd.f32 %v4679, %v145
  %v5194 = vadd.f32 %v4680, %v146
  %v5195 = vadd.f32 %v4681, %v148
  %v5196 = vadd.f32 %v4682, %v149
  %v5197 = vadd.f32 %v4683, %v151
  %v5198 = vadd.f32 %v4684, %v152
  %v5199 = vadd.f32 %v4685, %v154
  %v5200 = vadd.f32 %v4686, %v155
  %v5201 = vadd.f32 %v4687, %v157
  %v5202 = vadd.f32 %v4688, %v158
  %v5203 = vadd.f32 %v4689, %v160
  %v5204 = vadd.f32 %v4690, %v161
  %v5205 = vadd.f32 %v4691, %v163
  %v5206 = vadd.f32 %v4692, %v164
  %v5207 = vadd.f32 %v4693, %v166
  %v5208 = vadd.f32 %v4694, %v167
  %v5209 = vmax.f32 %v112, 0.0
  %v5210 = vmax.f32 %v113, 0.0
  %v5211 = vmax.f32 %v166, 0.0
  %v5212 = vmax.f32 %v167, 0.0
  %v5213 = vpack.c.bf16 %v5210, %v5209
  %v5214 = vpack.c.bf16 %v5212, %v5211
  %v5216 = vsel %vm1309, %v5213, 0
  %v5219 = vsel %vm1309, %v5214, 0
  %v5222 = vsel %vm1406, %v175, 0
  %5224 = vmatprep.subr.bf16.mxu0 0
  %5225 = vmatpush1.bf16.msra.mxu0 %v5222
  %5226 = vmatprep.subr.bf16.mxu0 0
  %5227 = vmatpush1.bf16.msra.mxu0 0
  %5228 = vmatprep.subr.bf16.mxu0 0
  %5229 = vmatpush1.bf16.msra.mxu0 0
  %5230 = vmatprep.subr.bf16.mxu0 0
  %5231 = vmatpush1.bf16.msra.mxu0 0
  %5232 = vmatprep.subr.bf16.mxu0 0
  %5233 = vmatpush1.bf16.msra.mxu0 0
  %5234 = vmatprep.subr.bf16.mxu0 0
  %5235 = vmatpush1.bf16.msra.mxu0 0
  %5236 = vmatprep.subr.bf16.mxu0 0
  %5237 = vmatpush1.bf16.msra.mxu0 0
  %5238 = vmatprep.subr.bf16.mxu0 0
  %5239 = vmatpush1.bf16.msra.mxu0 0
  %5240 = vmatprep.subr.bf16.mxu0 0
  %5241 = vmatpush1.bf16.msra.mxu0 0
  %5242 = vmatprep.subr.bf16.mxu0 0
  %5243 = vmatpush1.bf16.msra.mxu0 0
  %5244 = vmatprep.subr.bf16.mxu0 0
  %5245 = vmatpush1.bf16.msra.mxu0 0
  %5246 = vmatprep.subr.bf16.mxu0 0
  %5247 = vmatpush1.bf16.msra.mxu0 0
  %5248 = vmatprep.subr.bf16.mxu0 0
  %5249 = vmatpush1.bf16.msra.mxu0 0
  %5250 = vmatprep.subr.bf16.mxu0 0
  %5251 = vmatpush1.bf16.msra.mxu0 0
  %5252 = vmatprep.subr.bf16.mxu0 0
  %5253 = vmatpush1.bf16.msra.mxu0 0
  %5254 = vmatprep.subr.bf16.mxu0 0
  %5255 = vmatpush1.bf16.msra.mxu0 0
  %5256 = vmatprep.mubr.bf16.mxu0 0
  %5257 = vmatmul.mubr.bf16.gmra.mrb[0].mxu0 %v1703
  %v5258 = vpop.f32.mrb[0].mxu0
  %v5259 = vadd.f32 0.0, %v5258
  %v5260 = vpop.f32.mrb[0].mxu0
  %v5261 = vpop.f32.mrb[0].mxu0
  %v5262 = vadd.f32 0.0, %v5261
  %v5263 = vpop.f32.mrb[0].mxu0
  %5264 = vmatprep.mubr.bf16.mxu0 0
  %5265 = vmatmul.mubr.bf16.gmra.mrb[0].mxu0 %v1705
  %v5266 = vpop.f32.mrb[0].mxu0
  %v5267 = vadd.f32 0.0, %v5266
  %v5268 = vpop.f32.mrb[0].mxu0
  %v5269 = vpop.f32.mrb[0].mxu0
  %v5270 = vadd.f32 0.0, %v5269
  %v5271 = vpop.f32.mrb[0].mxu0
  %5272 = vmatprep.mubr.bf16.mxu0 0
  %5273 = vmatmul.mubr.bf16.gmra.mrb[0].mxu0 %v1707
  %v5274 = vpop.f32.mrb[0].mxu0
  %v5275 = vadd.f32 0.0, %v5274
  %v5276 = vpop.f32.mrb[0].mxu0
  %v5277 = vpop.f32.mrb[0].mxu0
  %v5278 = vadd.f32 0.0, %v5277
  %v5279 = vpop.f32.mrb[0].mxu0
  %5280 = vmatprep.mubr.bf16.mxu0 0
  %5281 = vmatmul.mubr.bf16.gmra.mrb[0].mxu0 %v1709
  %v5282 = vpop.f32.mrb[0].mxu0
  %v5283 = vadd.f32 0.0, %v5282
  %v5284 = vpop.f32.mrb[0].mxu0
  %v5285 = vpop.f32.mrb[0].mxu0
  %v5286 = vadd.f32 0.0, %v5285
  %v5287 = vpop.f32.mrb[0].mxu0
  %5288 = vmatprep.mubr.bf16.mxu0 0
  %5289 = vmatmul.mubr.bf16.gmra.mrb[0].mxu0 %v1711
  %v5290 = vpop.f32.mrb[0].mxu0
  %v5291 = vadd.f32 0.0, %v5290
  %v5292 = vpop.f32.mrb[0].mxu0
  %v5293 = vpop.f32.mrb[0].mxu0
  %v5294 = vadd.f32 0.0, %v5293
  %v5295 = vpop.f32.mrb[0].mxu0
  %5296 = vmatprep.mubr.bf16.mxu0 0
  %5297 = vmatmul.mubr.bf16.gmra.mrb[0].mxu0 %v1713
  %v5298 = vpop.f32.mrb[0].mxu0
  %v5299 = vadd.f32 0.0, %v5298
  %v5300 = vpop.f32.mrb[0].mxu0
  %v5301 = vpop.f32.mrb[0].mxu0
  %v5302 = vadd.f32 0.0, %v5301
  %v5303 = vpop.f32.mrb[0].mxu0
  %5304 = vmatprep.mubr.bf16.mxu0 0
  %5305 = vmatmul.mubr.bf16.gmra.mrb[0].mxu0 %v1715
  %v5306 = vpop.f32.mrb[0].mxu0
  %v5307 = vadd.f32 0.0, %v5306
  %v5308 = vpop.f32.mrb[0].mxu0
  %v5309 = vpop.f32.mrb[0].mxu0
  %v5310 = vadd.f32 0.0, %v5309
  %v5311 = vpop.f32.mrb[0].mxu0
  %5312 = vmatprep.mubr.bf16.mxu0 0
  %5313 = vmatmul.mubr.bf16.gmra.mrb[0].mxu0 %v1717
  %v5314 = vpop.f32.mrb[0].mxu0
  %v5315 = vadd.f32 0.0, %v5314
  %v5316 = vpop.f32.mrb[0].mxu0
  %v5317 = vpop.f32.mrb[0].mxu0
  %v5318 = vadd.f32 0.0, %v5317
  %v5319 = vpop.f32.mrb[0].mxu0
  %5320 = vmatprep.mubr.bf16.mxu0 0
  %5321 = vmatmul.mubr.bf16.gmra.mrb[0].mxu0 %v1719
  %v5322 = vpop.f32.mrb[0].mxu0
  %v5323 = vadd.f32 0.0, %v5322
  %v5324 = vpop.f32.mrb[0].mxu0
  %v5325 = vpop.f32.mrb[0].mxu0
  %v5326 = vadd.f32 0.0, %v5325
  %v5327 = vpop.f32.mrb[0].mxu0
  %5328 = vmatprep.mubr.bf16.mxu0 0
  %5329 = vmatmul.mubr.bf16.gmra.mrb[0].mxu0 %v1721
  %v5330 = vpop.f32.mrb[0].mxu0
  %v5331 = vadd.f32 0.0, %v5330
  %v5332 = vpop.f32.mrb[0].mxu0
  %v5333 = vpop.f32.mrb[0].mxu0
  %v5334 = vadd.f32 0.0, %v5333
  %v5335 = vpop.f32.mrb[0].mxu0
  %5336 = vmatprep.mubr.bf16.mxu0 0
  %5337 = vmatmul.mubr.bf16.gmra.mrb[0].mxu0 %v1723
  %v5338 = vpop.f32.mrb[0].mxu0
  %v5339 = vadd.f32 0.0, %v5338
  %v5340 = vpop.f32.mrb[0].mxu0
  %v5341 = vpop.f32.mrb[0].mxu0
  %v5342 = vadd.f32 0.0, %v5341
  %v5343 = vpop.f32.mrb[0].mxu0
  %5344 = vmatprep.mubr.bf16.mxu0 0
  %5345 = vmatmul.mubr.bf16.gmra.mrb[0].mxu0 %v1725
  %v5346 = vpop.f32.mrb[0].mxu0
  %v5347 = vadd.f32 0.0, %v5346
  %v5348 = vpop.f32.mrb[0].mxu0
  %v5349 = vpop.f32.mrb[0].mxu0
  %v5350 = vadd.f32 0.0, %v5349
  %v5351 = vpop.f32.mrb[0].mxu0
  %5352 = vmatprep.mubr.bf16.mxu0 0
  %5353 = vmatmul.mubr.bf16.gmra.mrb[0].mxu0 %v1727
  %v5354 = vpop.f32.mrb[0].mxu0
  %v5355 = vadd.f32 0.0, %v5354
  %v5356 = vpop.f32.mrb[0].mxu0
  %v5357 = vpop.f32.mrb[0].mxu0
  %v5358 = vadd.f32 0.0, %v5357
  %v5359 = vpop.f32.mrb[0].mxu0
  %5360 = vmatprep.mubr.bf16.mxu0 0
  %5361 = vmatmul.mubr.bf16.gmra.mrb[0].mxu0 %v1729
  %v5362 = vpop.f32.mrb[0].mxu0
  %v5363 = vadd.f32 0.0, %v5362
  %v5364 = vpop.f32.mrb[0].mxu0
  %v5365 = vpop.f32.mrb[0].mxu0
  %v5366 = vadd.f32 0.0, %v5365
  %v5367 = vpop.f32.mrb[0].mxu0
  %5368 = vmatprep.mubr.bf16.mxu0 0
  %5369 = vmatmul.mubr.bf16.gmra.mrb[0].mxu0 %v3750
  %v5370 = vpop.f32.mrb[0].mxu0
  %v5371 = vadd.f32 0.0, %v5370
  %v5372 = vpop.f32.mrb[0].mxu0
  %v5373 = vpop.f32.mrb[0].mxu0
  %v5374 = vadd.f32 0.0, %v5373
  %v5375 = vpop.f32.mrb[0].mxu0
  %5376 = vmatprep.mubr.bf16.mxu0 0
  %5377 = vmatmul.mubr.bf16.gmra.mrb[0].mxu0 %v5216
  %v5378 = vpop.f32.mrb[0].mxu0
  %v5379 = vadd.f32 0.0, %v5378
  %v5380 = vpop.f32.mrb[0].mxu0
  %v5381 = vpop.f32.mrb[0].mxu0
  %v5382 = vadd.f32 0.0, %v5381
  %v5383 = vpop.f32.mrb[0].mxu0
  %5384 = vmatprep.mubr.bf16.mxu0 0
  %5385 = vmatmul.mubr.bf16.gmra.mrb[0].mxu0 %v1735
  %v5386 = vpop.f32.mrb[0].mxu0
  %v5387 = vadd.f32 0.0, %v5386
  %v5388 = vpop.f32.mrb[0].mxu0
  %v5389 = vpop.f32.mrb[0].mxu0
  %v5390 = vadd.f32 0.0, %v5389
  %v5391 = vpop.f32.mrb[0].mxu0
  %5392 = vmatprep.mubr.bf16.mxu0 0
  %5393 = vmatmul.mubr.bf16.gmra.mrb[0].mxu0 %v1737
  %v5394 = vpop.f32.mrb[0].mxu0
  %v5395 = vadd.f32 0.0, %v5394
  %v5396 = vpop.f32.mrb[0].mxu0
  %v5397 = vpop.f32.mrb[0].mxu0
  %v5398 = vadd.f32 0.0, %v5397
  %v5399 = vpop.f32.mrb[0].mxu0
  %5400 = vmatprep.mubr.bf16.mxu0 0
  %5401 = vmatmul.mubr.bf16.gmra.mrb[0].mxu0 %v1739
  %v5402 = vpop.f32.mrb[0].mxu0
  %v5403 = vadd.f32 0.0, %v5402
  %v5404 = vpop.f32.mrb[0].mxu0
  %v5405 = vpop.f32.mrb[0].mxu0
  %v5406 = vadd.f32 0.0, %v5405
  %v5407 = vpop.f32.mrb[0].mxu0
  %5408 = vmatprep.mubr.bf16.mxu0 0
  %5409 = vmatmul.mubr.bf16.gmra.mrb[0].mxu0 %v1741
  %v5410 = vpop.f32.mrb[0].mxu0
  %v5411 = vadd.f32 0.0, %v5410
  %v5412 = vpop.f32.mrb[0].mxu0
  %v5413 = vpop.f32.mrb[0].mxu0
  %v5414 = vadd.f32 0.0, %v5413
  %v5415 = vpop.f32.mrb[0].mxu0
  %5416 = vmatprep.mubr.bf16.mxu0 0
  %5417 = vmatmul.mubr.bf16.gmra.mrb[0].mxu0 %v1743
  %v5418 = vpop.f32.mrb[0].mxu0
  %v5419 = vadd.f32 0.0, %v5418
  %v5420 = vpop.f32.mrb[0].mxu0
  %v5421 = vpop.f32.mrb[0].mxu0
  %v5422 = vadd.f32 0.0, %v5421
  %v5423 = vpop.f32.mrb[0].mxu0
  %5424 = vmatprep.mubr.bf16.mxu0 0
  %5425 = vmatmul.mubr.bf16.gmra.mrb[0].mxu0 %v1745
  %v5426 = vpop.f32.mrb[0].mxu0
  %v5427 = vadd.f32 0.0, %v5426
  %v5428 = vpop.f32.mrb[0].mxu0
  %v5429 = vpop.f32.mrb[0].mxu0
  %v5430 = vadd.f32 0.0, %v5429
  %v5431 = vpop.f32.mrb[0].mxu0
  %5432 = vmatprep.mubr.bf16.mxu0 0
  %5433 = vmatmul.mubr.bf16.gmra.mrb[0].mxu0 %v1747
  %v5434 = vpop.f32.mrb[0].mxu0
  %v5435 = vadd.f32 0.0, %v5434
  %v5436 = vpop.f32.mrb[0].mxu0
  %v5437 = vpop.f32.mrb[0].mxu0
  %v5438 = vadd.f32 0.0, %v5437
  %v5439 = vpop.f32.mrb[0].mxu0
  %5440 = vmatprep.mubr.bf16.mxu0 0
  %5441 = vmatmul.mubr.bf16.gmra.mrb[0].mxu0 %v1749
  %v5442 = vpop.f32.mrb[0].mxu0
  %v5443 = vadd.f32 0.0, %v5442
  %v5444 = vpop.f32.mrb[0].mxu0
  %v5445 = vpop.f32.mrb[0].mxu0
  %v5446 = vadd.f32 0.0, %v5445
  %v5447 = vpop.f32.mrb[0].mxu0
  %5448 = vmatprep.mubr.bf16.mxu0 0
  %5449 = vmatmul.mubr.bf16.gmra.mrb[0].mxu0 %v1751
  %v5450 = vpop.f32.mrb[0].mxu0
  %v5451 = vadd.f32 0.0, %v5450
  %v5452 = vpop.f32.mrb[0].mxu0
  %v5453 = vpop.f32.mrb[0].mxu0
  %v5454 = vadd.f32 0.0, %v5453
  %v5455 = vpop.f32.mrb[0].mxu0
  %5456 = vmatprep.mubr.bf16.mxu0 0
  %5457 = vmatmul.mubr.bf16.gmra.mrb[0].mxu0 %v1753
  %v5458 = vpop.f32.mrb[0].mxu0
  %v5459 = vadd.f32 0.0, %v5458
  %v5460 = vpop.f32.mrb[0].mxu0
  %v5461 = vpop.f32.mrb[0].mxu0
  %v5462 = vadd.f32 0.0, %v5461
  %v5463 = vpop.f32.mrb[0].mxu0
  %5464 = vmatprep.mubr.bf16.mxu0 0
  %5465 = vmatmul.mubr.bf16.gmra.mrb[0].mxu0 %v1755
  %v5466 = vpop.f32.mrb[0].mxu0
  %v5467 = vadd.f32 0.0, %v5466
  %v5468 = vpop.f32.mrb[0].mxu0
  %v5469 = vpop.f32.mrb[0].mxu0
  %v5470 = vadd.f32 0.0, %v5469
  %v5471 = vpop.f32.mrb[0].mxu0
  %5472 = vmatprep.mubr.bf16.mxu0 0
  %5473 = vmatmul.mubr.bf16.gmra.mrb[0].mxu0 %v1757
  %v5474 = vpop.f32.mrb[0].mxu0
  %v5475 = vadd.f32 0.0, %v5474
  %v5476 = vpop.f32.mrb[0].mxu0
  %v5477 = vpop.f32.mrb[0].mxu0
  %v5478 = vadd.f32 0.0, %v5477
  %v5479 = vpop.f32.mrb[0].mxu0
  %5480 = vmatprep.mubr.bf16.mxu0 0
  %5481 = vmatmul.mubr.bf16.gmra.mrb[0].mxu0 %v1759
  %v5482 = vpop.f32.mrb[0].mxu0
  %v5483 = vadd.f32 0.0, %v5482
  %v5484 = vpop.f32.mrb[0].mxu0
  %v5485 = vpop.f32.mrb[0].mxu0
  %v5486 = vadd.f32 0.0, %v5485
  %v5487 = vpop.f32.mrb[0].mxu0
  %5488 = vmatprep.mubr.bf16.mxu0 0
  %5489 = vmatmul.mubr.bf16.gmra.mrb[0].mxu0 %v1761
  %v5490 = vpop.f32.mrb[0].mxu0
  %v5491 = vadd.f32 0.0, %v5490
  %v5492 = vpop.f32.mrb[0].mxu0
  %v5493 = vpop.f32.mrb[0].mxu0
  %v5494 = vadd.f32 0.0, %v5493
  %v5495 = vpop.f32.mrb[0].mxu0
  %5496 = vmatprep.mubr.bf16.mxu0 0
  %5497 = vmatmul.mubr.bf16.gmra.mrb[0].mxu0 %v3753
  %v5498 = vpop.f32.mrb[0].mxu0
  %v5499 = vadd.f32 0.0, %v5498
  %v5500 = vpop.f32.mrb[0].mxu0
  %v5501 = vpop.f32.mrb[0].mxu0
  %v5502 = vadd.f32 0.0, %v5501
  %v5503 = vpop.f32.mrb[0].mxu0
  %5504 = vmatprep.mubr.bf16.mxu0 0
  %5505 = vmatmul.mubr.bf16.gmra.mrb[0].mxu0 %v5219
  %v5506 = vpop.f32.mrb[0].mxu0
  %v5507 = vadd.f32 0.0, %v5506
  %v5508 = vpop.f32.mrb[0].mxu0
  %v5509 = vpop.f32.mrb[0].mxu0
  %v5510 = vadd.f32 0.0, %v5509
  %v5511 = vpop.f32.mrb[0].mxu0
  %5512 = vdwg.mxu0
  %v5513 = vadd.f32 %v5003, %v5259
  %v5514 = vadd.f32 %v5004, %v5262
  %v5515 = vadd.f32 %v5005, %v5267
  %v5516 = vadd.f32 %v5006, %v5270
  %v5517 = vadd.f32 %v5007, %v5275
  %v5518 = vadd.f32 %v5008, %v5278
  %v5519 = vadd.f32 %v5009, %v5283
  %v5520 = vadd.f32 %v5010, %v5286
  %v5521 = vadd.f32 %v5011, %v5291
  %v5522 = vadd.f32 %v5012, %v5294
  %v5523 = vadd.f32 %v5013, %v5299
  %v5524 = vadd.f32 %v5014, %v5302
  %v5525 = vadd.f32 %v5015, %v5307
  %v5526 = vadd.f32 %v5016, %v5310
  %v5527 = vadd.f32 %v5017, %v5315
  %v5528 = vadd.f32 %v5018, %v5318
  %v5529 = vadd.f32 %v5019, %v5323
  %v5530 = vadd.f32 %v5020, %v5326
  %v5531 = vadd.f32 %v5021, %v5331
  %v5532 = vadd.f32 %v5022, %v5334
  %v5533 = vadd.f32 %v5023, %v5339
  %v5534 = vadd.f32 %v5024, %v5342
  %v5535 = vadd.f32 %v5025, %v5347
  %v5536 = vadd.f32 %v5026, %v5350
  %v5537 = vadd.f32 %v5027, %v5355
  %v5538 = vadd.f32 %v5028, %v5358
  %v5539 = vadd.f32 %v5029, %v5363
  %v5540 = vadd.f32 %v5030, %v5366
  %v5541 = vadd.f32 %v5031, %v5371
  %v5542 = vadd.f32 %v5032, %v5374
  %v5543 = vadd.f32 %v5033, %v5379
  %v5544 = vadd.f32 %v5034, %v5382
  %v5545 = vadd.f32 %v5035, %v5387
  %v5546 = vadd.f32 %v5036, %v5390
  %v5547 = vadd.f32 %v5037, %v5395
  %v5548 = vadd.f32 %v5038, %v5398
  %v5549 = vadd.f32 %v5039, %v5403
  %v5550 = vadd.f32 %v5040, %v5406
  %v5551 = vadd.f32 %v5041, %v5411
  %v5552 = vadd.f32 %v5042, %v5414
  %v5553 = vadd.f32 %v5043, %v5419
  %v5554 = vadd.f32 %v5044, %v5422
  %v5555 = vadd.f32 %v5045, %v5427
  %v5556 = vadd.f32 %v5046, %v5430
  %v5557 = vadd.f32 %v5047, %v5435
  %v5558 = vadd.f32 %v5048, %v5438
  %v5559 = vadd.f32 %v5049, %v5443
  %v5560 = vadd.f32 %v5050, %v5446
  %v5561 = vadd.f32 %v5051, %v5451
  %v5562 = vadd.f32 %v5052, %v5454
  %v5563 = vadd.f32 %v5053, %v5459
  %v5564 = vadd.f32 %v5054, %v5462
  %v5565 = vadd.f32 %v5055, %v5467
  %v5566 = vadd.f32 %v5056, %v5470
  %v5567 = vadd.f32 %v5057, %v5475
  %v5568 = vadd.f32 %v5058, %v5478
  %v5569 = vadd.f32 %v5059, %v5483
  %v5570 = vadd.f32 %v5060, %v5486
  %v5571 = vadd.f32 %v5061, %v5491
  %v5572 = vadd.f32 %v5062, %v5494
  %v5573 = vadd.f32 %v5063, %v5499
  %v5574 = vadd.f32 %v5064, %v5502
  %v5575 = vadd.f32 %v5065, %v5507
  %v5576 = vadd.f32 %v5066, %v5510
  %v5583 = vrot.slane %v112, 1
  %v5584 = vrot.slane %v113, 1
  %v5585 = vsel %vm571, %v5583, %v5584
  %v5586 = vrot.slane %v114, 1
  %v5587 = vsel %vm571, %v5584, %v5586
  %v5588 = vrot.slane %v166, 1
  %v5589 = vrot.slane %v167, 1
  %v5590 = vsel %vm571, %v5588, %v5589
  %v5591 = vrot.slane %v168, 1
  %v5592 = vsel %vm571, %v5589, %v5591
  %v5597 = vadd.f32 %v5145, %v584
  %v5598 = vadd.f32 %v5146, %v586
  %v5599 = vadd.f32 %v5147, %v589
  %v5600 = vadd.f32 %v5148, %v591
  %v5601 = vadd.f32 %v5149, %v594
  %v5602 = vadd.f32 %v5150, %v596
  %v5603 = vadd.f32 %v5151, %v599
  %v5604 = vadd.f32 %v5152, %v601
  %v5605 = vadd.f32 %v5153, %v604
  %v5606 = vadd.f32 %v5154, %v606
  %v5607 = vadd.f32 %v5155, %v609
  %v5608 = vadd.f32 %v5156, %v611
  %v5609 = vadd.f32 %v5157, %v614
  %v5610 = vadd.f32 %v5158, %v616
  %v5611 = vadd.f32 %v5159, %v619
  %v5612 = vadd.f32 %v5160, %v621
  %v5613 = vadd.f32 %v5161, %v624
  %v5614 = vadd.f32 %v5162, %v626
  %v5615 = vadd.f32 %v5163, %v629
  %v5616 = vadd.f32 %v5164, %v631
  %v5617 = vadd.f32 %v5165, %v634
  %v5618 = vadd.f32 %v5166, %v636
  %v5619 = vadd.f32 %v5167, %v639
  %v5620 = vadd.f32 %v5168, %v641
  %v5621 = vadd.f32 %v5169, %v644
  %v5622 = vadd.f32 %v5170, %v646
  %v5623 = vadd.f32 %v5171, %v649
  %v5624 = vadd.f32 %v5172, %v651
  %v5625 = vadd.f32 %v5173, %v4127
  %v5626 = vadd.f32 %v5174, %v4129
  %v5627 = vadd.f32 %v5175, %v5585
  %v5628 = vadd.f32 %v5176, %v5587
  %v5629 = vadd.f32 %v5177, %v664
  %v5630 = vadd.f32 %v5178, %v666
  %v5631 = vadd.f32 %v5179, %v669
  %v5632 = vadd.f32 %v5180, %v671
  %v5633 = vadd.f32 %v5181, %v674
  %v5634 = vadd.f32 %v5182, %v676
  %v5635 = vadd.f32 %v5183, %v679
  %v5636 = vadd.f32 %v5184, %v681
  %v5637 = vadd.f32 %v5185, %v684
  %v5638 = vadd.f32 %v5186, %v686
  %v5639 = vadd.f32 %v5187, %v689
  %v5640 = vadd.f32 %v5188, %v691
  %v5641 = vadd.f32 %v5189, %v694
  %v5642 = vadd.f32 %v5190, %v696
  %v5643 = vadd.f32 %v5191, %v699
  %v5644 = vadd.f32 %v5192, %v701
  %v5645 = vadd.f32 %v5193, %v704
  %v5646 = vadd.f32 %v5194, %v706
  %v5647 = vadd.f32 %v5195, %v709
  %v5648 = vadd.f32 %v5196, %v711
  %v5649 = vadd.f32 %v5197, %v714
  %v5650 = vadd.f32 %v5198, %v716
  %v5651 = vadd.f32 %v5199, %v719
  %v5652 = vadd.f32 %v5200, %v721
  %v5653 = vadd.f32 %v5201, %v724
  %v5654 = vadd.f32 %v5202, %v726
  %v5655 = vadd.f32 %v5203, %v729
  %v5656 = vadd.f32 %v5204, %v731
  %v5657 = vadd.f32 %v5205, %v4132
  %v5658 = vadd.f32 %v5206, %v4134
  %v5659 = vadd.f32 %v5207, %v5590
  %v5660 = vadd.f32 %v5208, %v5592
  %v5661 = vmax.f32 %v114, 0.0
  %v5662 = vmax.f32 %v168, 0.0
  %v5663 = vpack.c.bf16 %v5661, %v5661
  %v5664 = vpack.c.bf16 %v5662, %v5662
  %v5665 = vshrl.u32 %v5213, 16
  %v5667 = vshll.u32 %v5213, 16
  %v5669 = vrot.slane %v5667, 1
  %v5670 = vor.u32 %v5665, %v5669
  %v5672 = vshll.u32 %v5663, 16
  %v5674 = vrot.slane %v5672, 1
  %v5675 = vsel %vm924, %v5670, %v5674
  %v5676 = vshrl.u32 %v5214, 16
  %v5678 = vshll.u32 %v5214, 16
  %v5680 = vrot.slane %v5678, 1
  %v5681 = vor.u32 %v5676, %v5680
  %v5683 = vshll.u32 %v5664, 16
  %v5685 = vrot.slane %v5683, 1
  %v5686 = vsel %vm924, %v5681, %v5685
  %v5688 = vsel %vm1309, %v5675, 0
  %v5691 = vsel %vm1309, %v5686, 0
  %v5694 = vsel %vm1406, %v176, 0
  %5696 = vmatprep.subr.bf16.mxu0 0
  %5697 = vmatpush1.bf16.msra.mxu0 %v5694
  %5698 = vmatprep.subr.bf16.mxu0 0
  %5699 = vmatpush1.bf16.msra.mxu0 0
  %5700 = vmatprep.subr.bf16.mxu0 0
  %5701 = vmatpush1.bf16.msra.mxu0 0
  %5702 = vmatprep.subr.bf16.mxu0 0
  %5703 = vmatpush1.bf16.msra.mxu0 0
  %5704 = vmatprep.subr.bf16.mxu0 0
  %5705 = vmatpush1.bf16.msra.mxu0 0
  %5706 = vmatprep.subr.bf16.mxu0 0
  %5707 = vmatpush1.bf16.msra.mxu0 0
  %5708 = vmatprep.subr.bf16.mxu0 0
  %5709 = vmatpush1.bf16.msra.mxu0 0
  %5710 = vmatprep.subr.bf16.mxu0 0
  %5711 = vmatpush1.bf16.msra.mxu0 0
  %5712 = vmatprep.subr.bf16.mxu0 0
  %5713 = vmatpush1.bf16.msra.mxu0 0
  %5714 = vmatprep.subr.bf16.mxu0 0
  %5715 = vmatpush1.bf16.msra.mxu0 0
  %5716 = vmatprep.subr.bf16.mxu0 0
  %5717 = vmatpush1.bf16.msra.mxu0 0
  %5718 = vmatprep.subr.bf16.mxu0 0
  %5719 = vmatpush1.bf16.msra.mxu0 0
  %5720 = vmatprep.subr.bf16.mxu0 0
  %5721 = vmatpush1.bf16.msra.mxu0 0
  %5722 = vmatprep.subr.bf16.mxu0 0
  %5723 = vmatpush1.bf16.msra.mxu0 0
  %5724 = vmatprep.subr.bf16.mxu0 0
  %5725 = vmatpush1.bf16.msra.mxu0 0
  %5726 = vmatprep.subr.bf16.mxu0 0
  %5727 = vmatpush1.bf16.msra.mxu0 0
  %5728 = vmatprep.mubr.bf16.mxu0 0
  %5729 = vmatmul.mubr.bf16.gmra.mrb[0].mxu0 %v1317
  %v5730 = vpop.f32.mrb[0].mxu0
  %v5731 = vadd.f32 0.0, %v5730
  %v5732 = vpop.f32.mrb[0].mxu0
  %v5733 = vpop.f32.mrb[0].mxu0
  %v5734 = vadd.f32 0.0, %v5733
  %v5735 = vpop.f32.mrb[0].mxu0
  %5736 = vmatprep.mubr.bf16.mxu0 0
  %5737 = vmatmul.mubr.bf16.gmra.mrb[0].mxu0 %v1320
  %v5738 = vpop.f32.mrb[0].mxu0
  %v5739 = vadd.f32 0.0, %v5738
  %v5740 = vpop.f32.mrb[0].mxu0
  %v5741 = vpop.f32.mrb[0].mxu0
  %v5742 = vadd.f32 0.0, %v5741
  %v5743 = vpop.f32.mrb[0].mxu0
  %5744 = vmatprep.mubr.bf16.mxu0 0
  %5745 = vmatmul.mubr.bf16.gmra.mrb[0].mxu0 %v1323
  %v5746 = vpop.f32.mrb[0].mxu0
  %v5747 = vadd.f32 0.0, %v5746
  %v5748 = vpop.f32.mrb[0].mxu0
  %v5749 = vpop.f32.mrb[0].mxu0
  %v5750 = vadd.f32 0.0, %v5749
  %v5751 = vpop.f32.mrb[0].mxu0
  %5752 = vmatprep.mubr.bf16.mxu0 0
  %5753 = vmatmul.mubr.bf16.gmra.mrb[0].mxu0 %v1326
  %v5754 = vpop.f32.mrb[0].mxu0
  %v5755 = vadd.f32 0.0, %v5754
  %v5756 = vpop.f32.mrb[0].mxu0
  %v5757 = vpop.f32.mrb[0].mxu0
  %v5758 = vadd.f32 0.0, %v5757
  %v5759 = vpop.f32.mrb[0].mxu0
  %5760 = vmatprep.mubr.bf16.mxu0 0
  %5761 = vmatmul.mubr.bf16.gmra.mrb[0].mxu0 %v1329
  %v5762 = vpop.f32.mrb[0].mxu0
  %v5763 = vadd.f32 0.0, %v5762
  %v5764 = vpop.f32.mrb[0].mxu0
  %v5765 = vpop.f32.mrb[0].mxu0
  %v5766 = vadd.f32 0.0, %v5765
  %v5767 = vpop.f32.mrb[0].mxu0
  %5768 = vmatprep.mubr.bf16.mxu0 0
  %5769 = vmatmul.mubr.bf16.gmra.mrb[0].mxu0 %v1332
  %v5770 = vpop.f32.mrb[0].mxu0
  %v5771 = vadd.f32 0.0, %v5770
  %v5772 = vpop.f32.mrb[0].mxu0
  %v5773 = vpop.f32.mrb[0].mxu0
  %v5774 = vadd.f32 0.0, %v5773
  %v5775 = vpop.f32.mrb[0].mxu0
  %5776 = vmatprep.mubr.bf16.mxu0 0
  %5777 = vmatmul.mubr.bf16.gmra.mrb[0].mxu0 %v1335
  %v5778 = vpop.f32.mrb[0].mxu0
  %v5779 = vadd.f32 0.0, %v5778
  %v5780 = vpop.f32.mrb[0].mxu0
  %v5781 = vpop.f32.mrb[0].mxu0
  %v5782 = vadd.f32 0.0, %v5781
  %v5783 = vpop.f32.mrb[0].mxu0
  %5784 = vmatprep.mubr.bf16.mxu0 0
  %5785 = vmatmul.mubr.bf16.gmra.mrb[0].mxu0 %v1338
  %v5786 = vpop.f32.mrb[0].mxu0
  %v5787 = vadd.f32 0.0, %v5786
  %v5788 = vpop.f32.mrb[0].mxu0
  %v5789 = vpop.f32.mrb[0].mxu0
  %v5790 = vadd.f32 0.0, %v5789
  %v5791 = vpop.f32.mrb[0].mxu0
  %5792 = vmatprep.mubr.bf16.mxu0 0
  %5793 = vmatmul.mubr.bf16.gmra.mrb[0].mxu0 %v1341
  %v5794 = vpop.f32.mrb[0].mxu0
  %v5795 = vadd.f32 0.0, %v5794
  %v5796 = vpop.f32.mrb[0].mxu0
  %v5797 = vpop.f32.mrb[0].mxu0
  %v5798 = vadd.f32 0.0, %v5797
  %v5799 = vpop.f32.mrb[0].mxu0
  %5800 = vmatprep.mubr.bf16.mxu0 0
  %5801 = vmatmul.mubr.bf16.gmra.mrb[0].mxu0 %v1344
  %v5802 = vpop.f32.mrb[0].mxu0
  %v5803 = vadd.f32 0.0, %v5802
  %v5804 = vpop.f32.mrb[0].mxu0
  %v5805 = vpop.f32.mrb[0].mxu0
  %v5806 = vadd.f32 0.0, %v5805
  %v5807 = vpop.f32.mrb[0].mxu0
  %5808 = vmatprep.mubr.bf16.mxu0 0
  %5809 = vmatmul.mubr.bf16.gmra.mrb[0].mxu0 %v1347
  %v5810 = vpop.f32.mrb[0].mxu0
  %v5811 = vadd.f32 0.0, %v5810
  %v5812 = vpop.f32.mrb[0].mxu0
  %v5813 = vpop.f32.mrb[0].mxu0
  %v5814 = vadd.f32 0.0, %v5813
  %v5815 = vpop.f32.mrb[0].mxu0
  %5816 = vmatprep.mubr.bf16.mxu0 0
  %5817 = vmatmul.mubr.bf16.gmra.mrb[0].mxu0 %v1350
  %v5818 = vpop.f32.mrb[0].mxu0
  %v5819 = vadd.f32 0.0, %v5818
  %v5820 = vpop.f32.mrb[0].mxu0
  %v5821 = vpop.f32.mrb[0].mxu0
  %v5822 = vadd.f32 0.0, %v5821
  %v5823 = vpop.f32.mrb[0].mxu0
  %5824 = vmatprep.mubr.bf16.mxu0 0
  %5825 = vmatmul.mubr.bf16.gmra.mrb[0].mxu0 %v1353
  %v5826 = vpop.f32.mrb[0].mxu0
  %v5827 = vadd.f32 0.0, %v5826
  %v5828 = vpop.f32.mrb[0].mxu0
  %v5829 = vpop.f32.mrb[0].mxu0
  %v5830 = vadd.f32 0.0, %v5829
  %v5831 = vpop.f32.mrb[0].mxu0
  %5832 = vmatprep.mubr.bf16.mxu0 0
  %5833 = vmatmul.mubr.bf16.gmra.mrb[0].mxu0 %v1356
  %v5834 = vpop.f32.mrb[0].mxu0
  %v5835 = vadd.f32 0.0, %v5834
  %v5836 = vpop.f32.mrb[0].mxu0
  %v5837 = vpop.f32.mrb[0].mxu0
  %v5838 = vadd.f32 0.0, %v5837
  %v5839 = vpop.f32.mrb[0].mxu0
  %5840 = vmatprep.mubr.bf16.mxu0 0
  %5841 = vmatmul.mubr.bf16.gmra.mrb[0].mxu0 %v4230
  %v5842 = vpop.f32.mrb[0].mxu0
  %v5843 = vadd.f32 0.0, %v5842
  %v5844 = vpop.f32.mrb[0].mxu0
  %v5845 = vpop.f32.mrb[0].mxu0
  %v5846 = vadd.f32 0.0, %v5845
  %v5847 = vpop.f32.mrb[0].mxu0
  %5848 = vmatprep.mubr.bf16.mxu0 0
  %5849 = vmatmul.mubr.bf16.gmra.mrb[0].mxu0 %v5688
  %v5850 = vpop.f32.mrb[0].mxu0
  %v5851 = vadd.f32 0.0, %v5850
  %v5852 = vpop.f32.mrb[0].mxu0
  %v5853 = vpop.f32.mrb[0].mxu0
  %v5854 = vadd.f32 0.0, %v5853
  %v5855 = vpop.f32.mrb[0].mxu0
  %5856 = vmatprep.mubr.bf16.mxu0 0
  %5857 = vmatmul.mubr.bf16.gmra.mrb[0].mxu0 %v1365
  %v5858 = vpop.f32.mrb[0].mxu0
  %v5859 = vadd.f32 0.0, %v5858
  %v5860 = vpop.f32.mrb[0].mxu0
  %v5861 = vpop.f32.mrb[0].mxu0
  %v5862 = vadd.f32 0.0, %v5861
  %v5863 = vpop.f32.mrb[0].mxu0
  %5864 = vmatprep.mubr.bf16.mxu0 0
  %5865 = vmatmul.mubr.bf16.gmra.mrb[0].mxu0 %v1368
  %v5866 = vpop.f32.mrb[0].mxu0
  %v5867 = vadd.f32 0.0, %v5866
  %v5868 = vpop.f32.mrb[0].mxu0
  %v5869 = vpop.f32.mrb[0].mxu0
  %v5870 = vadd.f32 0.0, %v5869
  %v5871 = vpop.f32.mrb[0].mxu0
  %5872 = vmatprep.mubr.bf16.mxu0 0
  %5873 = vmatmul.mubr.bf16.gmra.mrb[0].mxu0 %v1371
  %v5874 = vpop.f32.mrb[0].mxu0
  %v5875 = vadd.f32 0.0, %v5874
  %v5876 = vpop.f32.mrb[0].mxu0
  %v5877 = vpop.f32.mrb[0].mxu0
  %v5878 = vadd.f32 0.0, %v5877
  %v5879 = vpop.f32.mrb[0].mxu0
  %5880 = vmatprep.mubr.bf16.mxu0 0
  %5881 = vmatmul.mubr.bf16.gmra.mrb[0].mxu0 %v1374
  %v5882 = vpop.f32.mrb[0].mxu0
  %v5883 = vadd.f32 0.0, %v5882
  %v5884 = vpop.f32.mrb[0].mxu0
  %v5885 = vpop.f32.mrb[0].mxu0
  %v5886 = vadd.f32 0.0, %v5885
  %v5887 = vpop.f32.mrb[0].mxu0
  %5888 = vmatprep.mubr.bf16.mxu0 0
  %5889 = vmatmul.mubr.bf16.gmra.mrb[0].mxu0 %v1377
  %v5890 = vpop.f32.mrb[0].mxu0
  %v5891 = vadd.f32 0.0, %v5890
  %v5892 = vpop.f32.mrb[0].mxu0
  %v5893 = vpop.f32.mrb[0].mxu0
  %v5894 = vadd.f32 0.0, %v5893
  %v5895 = vpop.f32.mrb[0].mxu0
  %5896 = vmatprep.mubr.bf16.mxu0 0
  %5897 = vmatmul.mubr.bf16.gmra.mrb[0].mxu0 %v1380
  %v5898 = vpop.f32.mrb[0].mxu0
  %v5899 = vadd.f32 0.0, %v5898
  %v5900 = vpop.f32.mrb[0].mxu0
  %v5901 = vpop.f32.mrb[0].mxu0
  %v5902 = vadd.f32 0.0, %v5901
  %v5903 = vpop.f32.mrb[0].mxu0
  %5904 = vmatprep.mubr.bf16.mxu0 0
  %5905 = vmatmul.mubr.bf16.gmra.mrb[0].mxu0 %v1383
  %v5906 = vpop.f32.mrb[0].mxu0
  %v5907 = vadd.f32 0.0, %v5906
  %v5908 = vpop.f32.mrb[0].mxu0
  %v5909 = vpop.f32.mrb[0].mxu0
  %v5910 = vadd.f32 0.0, %v5909
  %v5911 = vpop.f32.mrb[0].mxu0
  %5912 = vmatprep.mubr.bf16.mxu0 0
  %5913 = vmatmul.mubr.bf16.gmra.mrb[0].mxu0 %v1386
  %v5914 = vpop.f32.mrb[0].mxu0
  %v5915 = vadd.f32 0.0, %v5914
  %v5916 = vpop.f32.mrb[0].mxu0
  %v5917 = vpop.f32.mrb[0].mxu0
  %v5918 = vadd.f32 0.0, %v5917
  %v5919 = vpop.f32.mrb[0].mxu0
  %5920 = vmatprep.mubr.bf16.mxu0 0
  %5921 = vmatmul.mubr.bf16.gmra.mrb[0].mxu0 %v1389
  %v5922 = vpop.f32.mrb[0].mxu0
  %v5923 = vadd.f32 0.0, %v5922
  %v5924 = vpop.f32.mrb[0].mxu0
  %v5925 = vpop.f32.mrb[0].mxu0
  %v5926 = vadd.f32 0.0, %v5925
  %v5927 = vpop.f32.mrb[0].mxu0
  %5928 = vmatprep.mubr.bf16.mxu0 0
  %5929 = vmatmul.mubr.bf16.gmra.mrb[0].mxu0 %v1392
  %v5930 = vpop.f32.mrb[0].mxu0
  %v5931 = vadd.f32 0.0, %v5930
  %v5932 = vpop.f32.mrb[0].mxu0
  %v5933 = vpop.f32.mrb[0].mxu0
  %v5934 = vadd.f32 0.0, %v5933
  %v5935 = vpop.f32.mrb[0].mxu0
  %5936 = vmatprep.mubr.bf16.mxu0 0
  %5937 = vmatmul.mubr.bf16.gmra.mrb[0].mxu0 %v1395
  %v5938 = vpop.f32.mrb[0].mxu0
  %v5939 = vadd.f32 0.0, %v5938
  %v5940 = vpop.f32.mrb[0].mxu0
  %v5941 = vpop.f32.mrb[0].mxu0
  %v5942 = vadd.f32 0.0, %v5941
  %v5943 = vpop.f32.mrb[0].mxu0
  %5944 = vmatprep.mubr.bf16.mxu0 0
  %5945 = vmatmul.mubr.bf16.gmra.mrb[0].mxu0 %v1398
  %v5946 = vpop.f32.mrb[0].mxu0
  %v5947 = vadd.f32 0.0, %v5946
  %v5948 = vpop.f32.mrb[0].mxu0
  %v5949 = vpop.f32.mrb[0].mxu0
  %v5950 = vadd.f32 0.0, %v5949
  %v5951 = vpop.f32.mrb[0].mxu0
  %5952 = vmatprep.mubr.bf16.mxu0 0
  %5953 = vmatmul.mubr.bf16.gmra.mrb[0].mxu0 %v1401
  %v5954 = vpop.f32.mrb[0].mxu0
  %v5955 = vadd.f32 0.0, %v5954
  %v5956 = vpop.f32.mrb[0].mxu0
  %v5957 = vpop.f32.mrb[0].mxu0
  %v5958 = vadd.f32 0.0, %v5957
  %v5959 = vpop.f32.mrb[0].mxu0
  %5960 = vmatprep.mubr.bf16.mxu0 0
  %5961 = vmatmul.mubr.bf16.gmra.mrb[0].mxu0 %v1404
  %v5962 = vpop.f32.mrb[0].mxu0
  %v5963 = vadd.f32 0.0, %v5962
  %v5964 = vpop.f32.mrb[0].mxu0
  %v5965 = vpop.f32.mrb[0].mxu0
  %v5966 = vadd.f32 0.0, %v5965
  %v5967 = vpop.f32.mrb[0].mxu0
  %5968 = vmatprep.mubr.bf16.mxu0 0
  %5969 = vmatmul.mubr.bf16.gmra.mrb[0].mxu0 %v4233
  %v5970 = vpop.f32.mrb[0].mxu0
  %v5971 = vadd.f32 0.0, %v5970
  %v5972 = vpop.f32.mrb[0].mxu0
  %v5973 = vpop.f32.mrb[0].mxu0
  %v5974 = vadd.f32 0.0, %v5973
  %v5975 = vpop.f32.mrb[0].mxu0
  %5976 = vmatprep.mubr.bf16.mxu0 0
  %5977 = vmatmul.mubr.bf16.gmra.mrb[0].mxu0 %v5691
  %v5978 = vpop.f32.mrb[0].mxu0
  %v5979 = vadd.f32 0.0, %v5978
  %v5980 = vpop.f32.mrb[0].mxu0
  %v5981 = vpop.f32.mrb[0].mxu0
  %v5982 = vadd.f32 0.0, %v5981
  %v5983 = vpop.f32.mrb[0].mxu0
  %5984 = vdwg.mxu0
  %v5985 = vadd.f32 %v5513, %v5731
  %v5986 = vadd.f32 %v5514, %v5734
  %v5987 = vadd.f32 %v5515, %v5739
  %v5988 = vadd.f32 %v5516, %v5742
  %v5989 = vadd.f32 %v5517, %v5747
  %v5990 = vadd.f32 %v5518, %v5750
  %v5991 = vadd.f32 %v5519, %v5755
  %v5992 = vadd.f32 %v5520, %v5758
  %v5993 = vadd.f32 %v5521, %v5763
  %v5994 = vadd.f32 %v5522, %v5766
  %v5995 = vadd.f32 %v5523, %v5771
  %v5996 = vadd.f32 %v5524, %v5774
  %v5997 = vadd.f32 %v5525, %v5779
  %v5998 = vadd.f32 %v5526, %v5782
  %v5999 = vadd.f32 %v5527, %v5787
  %v6000 = vadd.f32 %v5528, %v5790
  %v6001 = vadd.f32 %v5529, %v5795
  %v6002 = vadd.f32 %v5530, %v5798
  %v6003 = vadd.f32 %v5531, %v5803
  %v6004 = vadd.f32 %v5532, %v5806
  %v6005 = vadd.f32 %v5533, %v5811
  %v6006 = vadd.f32 %v5534, %v5814
  %v6007 = vadd.f32 %v5535, %v5819
  %v6008 = vadd.f32 %v5536, %v5822
  %v6009 = vadd.f32 %v5537, %v5827
  %v6010 = vadd.f32 %v5538, %v5830
  %v6011 = vadd.f32 %v5539, %v5835
  %v6012 = vadd.f32 %v5540, %v5838
  %v6013 = vadd.f32 %v5541, %v5843
  %v6014 = vadd.f32 %v5542, %v5846
  %v6015 = vadd.f32 %v5543, %v5851
  %v6016 = vadd.f32 %v5544, %v5854
  %v6017 = vadd.f32 %v5545, %v5859
  %v6018 = vadd.f32 %v5546, %v5862
  %v6019 = vadd.f32 %v5547, %v5867
  %v6020 = vadd.f32 %v5548, %v5870
  %v6021 = vadd.f32 %v5549, %v5875
  %v6022 = vadd.f32 %v5550, %v5878
  %v6023 = vadd.f32 %v5551, %v5883
  %v6024 = vadd.f32 %v5552, %v5886
  %v6025 = vadd.f32 %v5553, %v5891
  %v6026 = vadd.f32 %v5554, %v5894
  %v6027 = vadd.f32 %v5555, %v5899
  %v6028 = vadd.f32 %v5556, %v5902
  %v6029 = vadd.f32 %v5557, %v5907
  %v6030 = vadd.f32 %v5558, %v5910
  %v6031 = vadd.f32 %v5559, %v5915
  %v6032 = vadd.f32 %v5560, %v5918
  %v6033 = vadd.f32 %v5561, %v5923
  %v6034 = vadd.f32 %v5562, %v5926
  %v6035 = vadd.f32 %v5563, %v5931
  %v6036 = vadd.f32 %v5564, %v5934
  %v6037 = vadd.f32 %v5565, %v5939
  %v6038 = vadd.f32 %v5566, %v5942
  %v6039 = vadd.f32 %v5567, %v5947
  %v6040 = vadd.f32 %v5568, %v5950
  %v6041 = vadd.f32 %v5569, %v5955
  %v6042 = vadd.f32 %v5570, %v5958
  %v6043 = vadd.f32 %v5571, %v5963
  %v6044 = vadd.f32 %v5572, %v5966
  %v6045 = vadd.f32 %v5573, %v5971
  %v6046 = vadd.f32 %v5574, %v5974
  %v6047 = vadd.f32 %v5575, %v5979
  %v6048 = vadd.f32 %v5576, %v5982
  %v6049 = vrot.slane %v112, 2
  %v6050 = vrot.slane %v113, 2
  %v6051 = vsel %vm2447, %v6049, %v6050
  %v6052 = vrot.slane %v114, 2
  %v6053 = vsel %vm2447, %v6050, %v6052
  %v6054 = vrot.slane %v166, 2
  %v6055 = vrot.slane %v167, 2
  %v6056 = vsel %vm2447, %v6054, %v6055
  %v6057 = vrot.slane %v168, 2
  %v6058 = vsel %vm2447, %v6055, %v6057
  %v6063 = vadd.f32 %v5597, %v2460
  %v6064 = vadd.f32 %v5598, %v2462
  %v6065 = vadd.f32 %v5599, %v2465
  %v6066 = vadd.f32 %v5600, %v2467
  %v6067 = vadd.f32 %v5601, %v2470
  %v6068 = vadd.f32 %v5602, %v2472
  %v6069 = vadd.f32 %v5603, %v2475
  %v6070 = vadd.f32 %v5604, %v2477
  %v6071 = vadd.f32 %v5605, %v2480
  %v6072 = vadd.f32 %v5606, %v2482
  %v6073 = vadd.f32 %v5607, %v2485
  %v6074 = vadd.f32 %v5608, %v2487
  %v6075 = vadd.f32 %v5609, %v2490
  %v6076 = vadd.f32 %v5610, %v2492
  %v6077 = vadd.f32 %v5611, %v2495
  %v6078 = vadd.f32 %v5612, %v2497
  %v6079 = vadd.f32 %v5613, %v2500
  %v6080 = vadd.f32 %v5614, %v2502
  %v6081 = vadd.f32 %v5615, %v2505
  %v6082 = vadd.f32 %v5616, %v2507
  %v6083 = vadd.f32 %v5617, %v2510
  %v6084 = vadd.f32 %v5618, %v2512
  %v6085 = vadd.f32 %v5619, %v2515
  %v6086 = vadd.f32 %v5620, %v2517
  %v6087 = vadd.f32 %v5621, %v2520
  %v6088 = vadd.f32 %v5622, %v2522
  %v6089 = vadd.f32 %v5623, %v2525
  %v6090 = vadd.f32 %v5624, %v2527
  %v6091 = vadd.f32 %v5625, %v4619
  %v6092 = vadd.f32 %v5626, %v4621
  %v6093 = vadd.f32 %v5627, %v6051
  %v6094 = vadd.f32 %v5628, %v6053
  %v6095 = vadd.f32 %v5629, %v2540
  %v6096 = vadd.f32 %v5630, %v2542
  %v6097 = vadd.f32 %v5631, %v2545
  %v6098 = vadd.f32 %v5632, %v2547
  %v6099 = vadd.f32 %v5633, %v2550
  %v6100 = vadd.f32 %v5634, %v2552
  %v6101 = vadd.f32 %v5635, %v2555
  %v6102 = vadd.f32 %v5636, %v2557
  %v6103 = vadd.f32 %v5637, %v2560
  %v6104 = vadd.f32 %v5638, %v2562
  %v6105 = vadd.f32 %v5639, %v2565
  %v6106 = vadd.f32 %v5640, %v2567
  %v6107 = vadd.f32 %v5641, %v2570
  %v6108 = vadd.f32 %v5642, %v2572
  %v6109 = vadd.f32 %v5643, %v2575
  %v6110 = vadd.f32 %v5644, %v2577
  %v6111 = vadd.f32 %v5645, %v2580
  %v6112 = vadd.f32 %v5646, %v2582
  %v6113 = vadd.f32 %v5647, %v2585
  %v6114 = vadd.f32 %v5648, %v2587
  %v6115 = vadd.f32 %v5649, %v2590
  %v6116 = vadd.f32 %v5650, %v2592
  %v6117 = vadd.f32 %v5651, %v2595
  %v6118 = vadd.f32 %v5652, %v2597
  %v6119 = vadd.f32 %v5653, %v2600
  %v6120 = vadd.f32 %v5654, %v2602
  %v6121 = vadd.f32 %v5655, %v2605
  %v6122 = vadd.f32 %v5656, %v2607
  %v6123 = vadd.f32 %v5657, %v4624
  %v6124 = vadd.f32 %v5658, %v4626
  %v6125 = vadd.f32 %v5659, %v6056
  %v6126 = vadd.f32 %v5660, %v6058
  %v6131 = vrot.slane %v5213, 1
  %v6132 = vrot.slane %v5663, 1
  %v6133 = vsel %vm2800, %v6131, %v6132
  %v6134 = vrot.slane %v5214, 1
  %v6135 = vrot.slane %v5664, 1
  %v6136 = vsel %vm2800, %v6134, %v6135
  %v6138 = vsel %vm1309, %v6133, 0
  %v6141 = vsel %vm1309, %v6136, 0
  %v6144 = vsel %vm1406, %v177, 0
  %6146 = vmatprep.subr.bf16.mxu0 0
  %6147 = vmatpush1.bf16.msra.mxu0 %v6144
  %6148 = vmatprep.subr.bf16.mxu0 0
  %6149 = vmatpush1.bf16.msra.mxu0 0
  %6150 = vmatprep.subr.bf16.mxu0 0
  %6151 = vmatpush1.bf16.msra.mxu0 0
  %6152 = vmatprep.subr.bf16.mxu0 0
  %6153 = vmatpush1.bf16.msra.mxu0 0
  %6154 = vmatprep.subr.bf16.mxu0 0
  %6155 = vmatpush1.bf16.msra.mxu0 0
  %6156 = vmatprep.subr.bf16.mxu0 0
  %6157 = vmatpush1.bf16.msra.mxu0 0
  %6158 = vmatprep.subr.bf16.mxu0 0
  %6159 = vmatpush1.bf16.msra.mxu0 0
  %6160 = vmatprep.subr.bf16.mxu0 0
  %6161 = vmatpush1.bf16.msra.mxu0 0
  %6162 = vmatprep.subr.bf16.mxu0 0
  %6163 = vmatpush1.bf16.msra.mxu0 0
  %6164 = vmatprep.subr.bf16.mxu0 0
  %6165 = vmatpush1.bf16.msra.mxu0 0
  %6166 = vmatprep.subr.bf16.mxu0 0
  %6167 = vmatpush1.bf16.msra.mxu0 0
  %6168 = vmatprep.subr.bf16.mxu0 0
  %6169 = vmatpush1.bf16.msra.mxu0 0
  %6170 = vmatprep.subr.bf16.mxu0 0
  %6171 = vmatpush1.bf16.msra.mxu0 0
  %6172 = vmatprep.subr.bf16.mxu0 0
  %6173 = vmatpush1.bf16.msra.mxu0 0
  %6174 = vmatprep.subr.bf16.mxu0 0
  %6175 = vmatpush1.bf16.msra.mxu0 0
  %6176 = vmatprep.subr.bf16.mxu0 0
  %6177 = vmatpush1.bf16.msra.mxu0 0
  %6178 = vmatprep.mubr.bf16.mxu0 0
  %6179 = vmatmul.mubr.bf16.gmra.mrb[0].mxu0 %v2904
  %v6180 = vpop.f32.mrb[0].mxu0
  %v6181 = vadd.f32 0.0, %v6180
  %v6182 = vpop.f32.mrb[0].mxu0
  %v6183 = vpop.f32.mrb[0].mxu0
  %v6184 = vadd.f32 0.0, %v6183
  %v6185 = vpop.f32.mrb[0].mxu0
  %6186 = vmatprep.mubr.bf16.mxu0 0
  %6187 = vmatmul.mubr.bf16.gmra.mrb[0].mxu0 %v2907
  %v6188 = vpop.f32.mrb[0].mxu0
  %v6189 = vadd.f32 0.0, %v6188
  %v6190 = vpop.f32.mrb[0].mxu0
  %v6191 = vpop.f32.mrb[0].mxu0
  %v6192 = vadd.f32 0.0, %v6191
  %v6193 = vpop.f32.mrb[0].mxu0
  %6194 = vmatprep.mubr.bf16.mxu0 0
  %6195 = vmatmul.mubr.bf16.gmra.mrb[0].mxu0 %v2910
  %v6196 = vpop.f32.mrb[0].mxu0
  %v6197 = vadd.f32 0.0, %v6196
  %v6198 = vpop.f32.mrb[0].mxu0
  %v6199 = vpop.f32.mrb[0].mxu0
  %v6200 = vadd.f32 0.0, %v6199
  %v6201 = vpop.f32.mrb[0].mxu0
  %6202 = vmatprep.mubr.bf16.mxu0 0
  %6203 = vmatmul.mubr.bf16.gmra.mrb[0].mxu0 %v2913
  %v6204 = vpop.f32.mrb[0].mxu0
  %v6205 = vadd.f32 0.0, %v6204
  %v6206 = vpop.f32.mrb[0].mxu0
  %v6207 = vpop.f32.mrb[0].mxu0
  %v6208 = vadd.f32 0.0, %v6207
  %v6209 = vpop.f32.mrb[0].mxu0
  %6210 = vmatprep.mubr.bf16.mxu0 0
  %6211 = vmatmul.mubr.bf16.gmra.mrb[0].mxu0 %v2916
  %v6212 = vpop.f32.mrb[0].mxu0
  %v6213 = vadd.f32 0.0, %v6212
  %v6214 = vpop.f32.mrb[0].mxu0
  %v6215 = vpop.f32.mrb[0].mxu0
  %v6216 = vadd.f32 0.0, %v6215
  %v6217 = vpop.f32.mrb[0].mxu0
  %6218 = vmatprep.mubr.bf16.mxu0 0
  %6219 = vmatmul.mubr.bf16.gmra.mrb[0].mxu0 %v2919
  %v6220 = vpop.f32.mrb[0].mxu0
  %v6221 = vadd.f32 0.0, %v6220
  %v6222 = vpop.f32.mrb[0].mxu0
  %v6223 = vpop.f32.mrb[0].mxu0
  %v6224 = vadd.f32 0.0, %v6223
  %v6225 = vpop.f32.mrb[0].mxu0
  %6226 = vmatprep.mubr.bf16.mxu0 0
  %6227 = vmatmul.mubr.bf16.gmra.mrb[0].mxu0 %v2922
  %v6228 = vpop.f32.mrb[0].mxu0
  %v6229 = vadd.f32 0.0, %v6228
  %v6230 = vpop.f32.mrb[0].mxu0
  %v6231 = vpop.f32.mrb[0].mxu0
  %v6232 = vadd.f32 0.0, %v6231
  %v6233 = vpop.f32.mrb[0].mxu0
  %6234 = vmatprep.mubr.bf16.mxu0 0
  %6235 = vmatmul.mubr.bf16.gmra.mrb[0].mxu0 %v2925
  %v6236 = vpop.f32.mrb[0].mxu0
  %v6237 = vadd.f32 0.0, %v6236
  %v6238 = vpop.f32.mrb[0].mxu0
  %v6239 = vpop.f32.mrb[0].mxu0
  %v6240 = vadd.f32 0.0, %v6239
  %v6241 = vpop.f32.mrb[0].mxu0
  %6242 = vmatprep.mubr.bf16.mxu0 0
  %6243 = vmatmul.mubr.bf16.gmra.mrb[0].mxu0 %v2928
  %v6244 = vpop.f32.mrb[0].mxu0
  %v6245 = vadd.f32 0.0, %v6244
  %v6246 = vpop.f32.mrb[0].mxu0
  %v6247 = vpop.f32.mrb[0].mxu0
  %v6248 = vadd.f32 0.0, %v6247
  %v6249 = vpop.f32.mrb[0].mxu0
  %6250 = vmatprep.mubr.bf16.mxu0 0
  %6251 = vmatmul.mubr.bf16.gmra.mrb[0].mxu0 %v2931
  %v6252 = vpop.f32.mrb[0].mxu0
  %v6253 = vadd.f32 0.0, %v6252
  %v6254 = vpop.f32.mrb[0].mxu0
  %v6255 = vpop.f32.mrb[0].mxu0
  %v6256 = vadd.f32 0.0, %v6255
  %v6257 = vpop.f32.mrb[0].mxu0
  %6258 = vmatprep.mubr.bf16.mxu0 0
  %6259 = vmatmul.mubr.bf16.gmra.mrb[0].mxu0 %v2934
  %v6260 = vpop.f32.mrb[0].mxu0
  %v6261 = vadd.f32 0.0, %v6260
  %v6262 = vpop.f32.mrb[0].mxu0
  %v6263 = vpop.f32.mrb[0].mxu0
  %v6264 = vadd.f32 0.0, %v6263
  %v6265 = vpop.f32.mrb[0].mxu0
  %6266 = vmatprep.mubr.bf16.mxu0 0
  %6267 = vmatmul.mubr.bf16.gmra.mrb[0].mxu0 %v2937
  %v6268 = vpop.f32.mrb[0].mxu0
  %v6269 = vadd.f32 0.0, %v6268
  %v6270 = vpop.f32.mrb[0].mxu0
  %v6271 = vpop.f32.mrb[0].mxu0
  %v6272 = vadd.f32 0.0, %v6271
  %v6273 = vpop.f32.mrb[0].mxu0
  %6274 = vmatprep.mubr.bf16.mxu0 0
  %6275 = vmatmul.mubr.bf16.gmra.mrb[0].mxu0 %v2940
  %v6276 = vpop.f32.mrb[0].mxu0
  %v6277 = vadd.f32 0.0, %v6276
  %v6278 = vpop.f32.mrb[0].mxu0
  %v6279 = vpop.f32.mrb[0].mxu0
  %v6280 = vadd.f32 0.0, %v6279
  %v6281 = vpop.f32.mrb[0].mxu0
  %6282 = vmatprep.mubr.bf16.mxu0 0
  %6283 = vmatmul.mubr.bf16.gmra.mrb[0].mxu0 %v2943
  %v6284 = vpop.f32.mrb[0].mxu0
  %v6285 = vadd.f32 0.0, %v6284
  %v6286 = vpop.f32.mrb[0].mxu0
  %v6287 = vpop.f32.mrb[0].mxu0
  %v6288 = vadd.f32 0.0, %v6287
  %v6289 = vpop.f32.mrb[0].mxu0
  %6290 = vmatprep.mubr.bf16.mxu0 0
  %6291 = vmatmul.mubr.bf16.gmra.mrb[0].mxu0 %v4706
  %v6292 = vpop.f32.mrb[0].mxu0
  %v6293 = vadd.f32 0.0, %v6292
  %v6294 = vpop.f32.mrb[0].mxu0
  %v6295 = vpop.f32.mrb[0].mxu0
  %v6296 = vadd.f32 0.0, %v6295
  %v6297 = vpop.f32.mrb[0].mxu0
  %6298 = vmatprep.mubr.bf16.mxu0 0
  %6299 = vmatmul.mubr.bf16.gmra.mrb[0].mxu0 %v6138
  %v6300 = vpop.f32.mrb[0].mxu0
  %v6301 = vadd.f32 0.0, %v6300
  %v6302 = vpop.f32.mrb[0].mxu0
  %v6303 = vpop.f32.mrb[0].mxu0
  %v6304 = vadd.f32 0.0, %v6303
  %v6305 = vpop.f32.mrb[0].mxu0
  %6306 = vmatprep.mubr.bf16.mxu0 0
  %6307 = vmatmul.mubr.bf16.gmra.mrb[0].mxu0 %v2952
  %v6308 = vpop.f32.mrb[0].mxu0
  %v6309 = vadd.f32 0.0, %v6308
  %v6310 = vpop.f32.mrb[0].mxu0
  %v6311 = vpop.f32.mrb[0].mxu0
  %v6312 = vadd.f32 0.0, %v6311
  %v6313 = vpop.f32.mrb[0].mxu0
  %6314 = vmatprep.mubr.bf16.mxu0 0
  %6315 = vmatmul.mubr.bf16.gmra.mrb[0].mxu0 %v2955
  %v6316 = vpop.f32.mrb[0].mxu0
  %v6317 = vadd.f32 0.0, %v6316
  %v6318 = vpop.f32.mrb[0].mxu0
  %v6319 = vpop.f32.mrb[0].mxu0
  %v6320 = vadd.f32 0.0, %v6319
  %v6321 = vpop.f32.mrb[0].mxu0
  %6322 = vmatprep.mubr.bf16.mxu0 0
  %6323 = vmatmul.mubr.bf16.gmra.mrb[0].mxu0 %v2958
  %v6324 = vpop.f32.mrb[0].mxu0
  %v6325 = vadd.f32 0.0, %v6324
  %v6326 = vpop.f32.mrb[0].mxu0
  %v6327 = vpop.f32.mrb[0].mxu0
  %v6328 = vadd.f32 0.0, %v6327
  %v6329 = vpop.f32.mrb[0].mxu0
  %6330 = vmatprep.mubr.bf16.mxu0 0
  %6331 = vmatmul.mubr.bf16.gmra.mrb[0].mxu0 %v2961
  %v6332 = vpop.f32.mrb[0].mxu0
  %v6333 = vadd.f32 0.0, %v6332
  %v6334 = vpop.f32.mrb[0].mxu0
  %v6335 = vpop.f32.mrb[0].mxu0
  %v6336 = vadd.f32 0.0, %v6335
  %v6337 = vpop.f32.mrb[0].mxu0
  %6338 = vmatprep.mubr.bf16.mxu0 0
  %6339 = vmatmul.mubr.bf16.gmra.mrb[0].mxu0 %v2964
  %v6340 = vpop.f32.mrb[0].mxu0
  %v6341 = vadd.f32 0.0, %v6340
  %v6342 = vpop.f32.mrb[0].mxu0
  %v6343 = vpop.f32.mrb[0].mxu0
  %v6344 = vadd.f32 0.0, %v6343
  %v6345 = vpop.f32.mrb[0].mxu0
  %6346 = vmatprep.mubr.bf16.mxu0 0
  %6347 = vmatmul.mubr.bf16.gmra.mrb[0].mxu0 %v2967
  %v6348 = vpop.f32.mrb[0].mxu0
  %v6349 = vadd.f32 0.0, %v6348
  %v6350 = vpop.f32.mrb[0].mxu0
  %v6351 = vpop.f32.mrb[0].mxu0
  %v6352 = vadd.f32 0.0, %v6351
  %v6353 = vpop.f32.mrb[0].mxu0
  %6354 = vmatprep.mubr.bf16.mxu0 0
  %6355 = vmatmul.mubr.bf16.gmra.mrb[0].mxu0 %v2970
  %v6356 = vpop.f32.mrb[0].mxu0
  %v6357 = vadd.f32 0.0, %v6356
  %v6358 = vpop.f32.mrb[0].mxu0
  %v6359 = vpop.f32.mrb[0].mxu0
  %v6360 = vadd.f32 0.0, %v6359
  %v6361 = vpop.f32.mrb[0].mxu0
  %6362 = vmatprep.mubr.bf16.mxu0 0
  %6363 = vmatmul.mubr.bf16.gmra.mrb[0].mxu0 %v2973
  %v6364 = vpop.f32.mrb[0].mxu0
  %v6365 = vadd.f32 0.0, %v6364
  %v6366 = vpop.f32.mrb[0].mxu0
  %v6367 = vpop.f32.mrb[0].mxu0
  %v6368 = vadd.f32 0.0, %v6367
  %v6369 = vpop.f32.mrb[0].mxu0
  %6370 = vmatprep.mubr.bf16.mxu0 0
  %6371 = vmatmul.mubr.bf16.gmra.mrb[0].mxu0 %v2976
  %v6372 = vpop.f32.mrb[0].mxu0
  %v6373 = vadd.f32 0.0, %v6372
  %v6374 = vpop.f32.mrb[0].mxu0
  %v6375 = vpop.f32.mrb[0].mxu0
  %v6376 = vadd.f32 0.0, %v6375
  %v6377 = vpop.f32.mrb[0].mxu0
  %6378 = vmatprep.mubr.bf16.mxu0 0
  %6379 = vmatmul.mubr.bf16.gmra.mrb[0].mxu0 %v2979
  %v6380 = vpop.f32.mrb[0].mxu0
  %v6381 = vadd.f32 0.0, %v6380
  %v6382 = vpop.f32.mrb[0].mxu0
  %v6383 = vpop.f32.mrb[0].mxu0
  %v6384 = vadd.f32 0.0, %v6383
  %v6385 = vpop.f32.mrb[0].mxu0
  %6386 = vmatprep.mubr.bf16.mxu0 0
  %6387 = vmatmul.mubr.bf16.gmra.mrb[0].mxu0 %v2982
  %v6388 = vpop.f32.mrb[0].mxu0
  %v6389 = vadd.f32 0.0, %v6388
  %v6390 = vpop.f32.mrb[0].mxu0
  %v6391 = vpop.f32.mrb[0].mxu0
  %v6392 = vadd.f32 0.0, %v6391
  %v6393 = vpop.f32.mrb[0].mxu0
  %6394 = vmatprep.mubr.bf16.mxu0 0
  %6395 = vmatmul.mubr.bf16.gmra.mrb[0].mxu0 %v2985
  %v6396 = vpop.f32.mrb[0].mxu0
  %v6397 = vadd.f32 0.0, %v6396
  %v6398 = vpop.f32.mrb[0].mxu0
  %v6399 = vpop.f32.mrb[0].mxu0
  %v6400 = vadd.f32 0.0, %v6399
  %v6401 = vpop.f32.mrb[0].mxu0
  %6402 = vmatprep.mubr.bf16.mxu0 0
  %6403 = vmatmul.mubr.bf16.gmra.mrb[0].mxu0 %v2988
  %v6404 = vpop.f32.mrb[0].mxu0
  %v6405 = vadd.f32 0.0, %v6404
  %v6406 = vpop.f32.mrb[0].mxu0
  %v6407 = vpop.f32.mrb[0].mxu0
  %v6408 = vadd.f32 0.0, %v6407
  %v6409 = vpop.f32.mrb[0].mxu0
  %6410 = vmatprep.mubr.bf16.mxu0 0
  %6411 = vmatmul.mubr.bf16.gmra.mrb[0].mxu0 %v2991
  %v6412 = vpop.f32.mrb[0].mxu0
  %v6413 = vadd.f32 0.0, %v6412
  %v6414 = vpop.f32.mrb[0].mxu0
  %v6415 = vpop.f32.mrb[0].mxu0
  %v6416 = vadd.f32 0.0, %v6415
  %v6417 = vpop.f32.mrb[0].mxu0
  %6418 = vmatprep.mubr.bf16.mxu0 0
  %6419 = vmatmul.mubr.bf16.gmra.mrb[0].mxu0 %v4709
  %v6420 = vpop.f32.mrb[0].mxu0
  %v6421 = vadd.f32 0.0, %v6420
  %v6422 = vpop.f32.mrb[0].mxu0
  %v6423 = vpop.f32.mrb[0].mxu0
  %v6424 = vadd.f32 0.0, %v6423
  %v6425 = vpop.f32.mrb[0].mxu0
  %6426 = vmatprep.mubr.bf16.mxu0 0
  %6427 = vmatmul.mubr.bf16.gmra.mrb[0].mxu0 %v6141
  %v6428 = vpop.f32.mrb[0].mxu0
  %v6429 = vadd.f32 0.0, %v6428
  %v6430 = vpop.f32.mrb[0].mxu0
  %v6431 = vpop.f32.mrb[0].mxu0
  %v6432 = vadd.f32 0.0, %v6431
  %v6433 = vpop.f32.mrb[0].mxu0
  %6434 = vdwg.mxu0
  %v6435 = vadd.f32 %v5985, %v6181
  %v6436 = vadd.f32 %v5986, %v6184
  %v6437 = vadd.f32 %v5987, %v6189
  %v6438 = vadd.f32 %v5988, %v6192
  %v6439 = vadd.f32 %v5989, %v6197
  %v6440 = vadd.f32 %v5990, %v6200
  %v6441 = vadd.f32 %v5991, %v6205
  %v6442 = vadd.f32 %v5992, %v6208
  %v6443 = vadd.f32 %v5993, %v6213
  %v6444 = vadd.f32 %v5994, %v6216
  %v6445 = vadd.f32 %v5995, %v6221
  %v6446 = vadd.f32 %v5996, %v6224
  %v6447 = vadd.f32 %v5997, %v6229
  %v6448 = vadd.f32 %v5998, %v6232
  %v6449 = vadd.f32 %v5999, %v6237
  %v6450 = vadd.f32 %v6000, %v6240
  %v6451 = vadd.f32 %v6001, %v6245
  %v6452 = vadd.f32 %v6002, %v6248
  %v6453 = vadd.f32 %v6003, %v6253
  %v6454 = vadd.f32 %v6004, %v6256
  %v6455 = vadd.f32 %v6005, %v6261
  %v6456 = vadd.f32 %v6006, %v6264
  %v6457 = vadd.f32 %v6007, %v6269
  %v6458 = vadd.f32 %v6008, %v6272
  %v6459 = vadd.f32 %v6009, %v6277
  %v6460 = vadd.f32 %v6010, %v6280
  %v6461 = vadd.f32 %v6011, %v6285
  %v6462 = vadd.f32 %v6012, %v6288
  %v6463 = vadd.f32 %v6013, %v6293
  %v6464 = vadd.f32 %v6014, %v6296
  %v6465 = vadd.f32 %v6015, %v6301
  %v6466 = vadd.f32 %v6016, %v6304
  %v6467 = vadd.f32 %v6017, %v6309
  %v6468 = vadd.f32 %v6018, %v6312
  %v6469 = vadd.f32 %v6019, %v6317
  %v6470 = vadd.f32 %v6020, %v6320
  %v6471 = vadd.f32 %v6021, %v6325
  %v6472 = vadd.f32 %v6022, %v6328
  %v6473 = vadd.f32 %v6023, %v6333
  %v6474 = vadd.f32 %v6024, %v6336
  %v6475 = vadd.f32 %v6025, %v6341
  %v6476 = vadd.f32 %v6026, %v6344
  %v6477 = vadd.f32 %v6027, %v6349
  %v6478 = vadd.f32 %v6028, %v6352
  %v6479 = vadd.f32 %v6029, %v6357
  %v6480 = vadd.f32 %v6030, %v6360
  %v6481 = vadd.f32 %v6031, %v6365
  %v6482 = vadd.f32 %v6032, %v6368
  %v6483 = vadd.f32 %v6033, %v6373
  %v6484 = vadd.f32 %v6034, %v6376
  %v6485 = vadd.f32 %v6035, %v6381
  %v6486 = vadd.f32 %v6036, %v6384
  %v6487 = vadd.f32 %v6037, %v6389
  %v6488 = vadd.f32 %v6038, %v6392
  %v6489 = vadd.f32 %v6039, %v6397
  %v6490 = vadd.f32 %v6040, %v6400
  %v6491 = vadd.f32 %v6041, %v6405
  %v6492 = vadd.f32 %v6042, %v6408
  %v6493 = vadd.f32 %v6043, %v6413
  %v6494 = vadd.f32 %v6044, %v6416
  %v6495 = vadd.f32 %v6045, %v6421
  %v6496 = vadd.f32 %v6046, %v6424
  %v6497 = vadd.f32 %v6047, %v6429
  %v6498 = vadd.f32 %v6048, %v6432
  %v6499 = vmax.f32 %v5085, %v3563
  %v6500 = vmax.f32 %v5086, %v3564
  %v6501 = vmax.f32 %v5087, %v3565
  %v6502 = vmax.f32 %v5088, %v3566
  %v6503 = vmax.f32 %v5089, %v3567
  %v6504 = vmax.f32 %v5090, %v3568
  %v6505 = vmax.f32 %v5091, %v3569
  %v6506 = vmax.f32 %v5092, %v3570
  %v6507 = vmax.f32 %v5093, %v3571
  %v6508 = vmax.f32 %v5094, %v3572
  %v6509 = vmax.f32 %v5095, %v3573
  %v6510 = vmax.f32 %v5096, %v3574
  %v6511 = vmax.f32 %v5097, %v3575
  %v6512 = vmax.f32 %v5098, %v3576
  %v6513 = vmax.f32 %v5099, %v3577
  %v6514 = vmax.f32 %v5100, %v3578
  %v6515 = vmax.f32 %v5101, %v3579
  %v6516 = vmax.f32 %v5102, %v3580
  %v6517 = vmax.f32 %v5103, %v3581
  %v6518 = vmax.f32 %v5104, %v3582
  %v6519 = vmax.f32 %v5105, %v3583
  %v6520 = vmax.f32 %v5106, %v3584
  %v6521 = vmax.f32 %v5107, %v3585
  %v6522 = vmax.f32 %v5108, %v3586
  %v6523 = vmax.f32 %v5109, %v3587
  %v6524 = vmax.f32 %v5110, %v3588
  %v6525 = vmax.f32 %v5111, %v5081
  %v6526 = vmax.f32 %v5112, %v5082
  %v6527 = vmax.f32 %v5113, %v3593
  %v6528 = vmax.f32 %v5114, %v3594
  %v6529 = vmax.f32 %v5115, %v3595
  %v6530 = vmax.f32 %v5116, %v3596
  %v6531 = vmax.f32 %v5117, %v3597
  %v6532 = vmax.f32 %v5118, %v3598
  %v6533 = vmax.f32 %v5119, %v3599
  %v6534 = vmax.f32 %v5120, %v3600
  %v6535 = vmax.f32 %v5121, %v3601
  %v6536 = vmax.f32 %v5122, %v3602
  %v6537 = vmax.f32 %v5123, %v3603
  %v6538 = vmax.f32 %v5124, %v3604
  %v6539 = vmax.f32 %v5125, %v3605
  %v6540 = vmax.f32 %v5126, %v3606
  %v6541 = vmax.f32 %v5127, %v3607
  %v6542 = vmax.f32 %v5128, %v3608
  %v6543 = vmax.f32 %v5129, %v3609
  %v6544 = vmax.f32 %v5130, %v3610
  %v6545 = vmax.f32 %v5131, %v3611
  %v6546 = vmax.f32 %v5132, %v3612
  %v6547 = vmax.f32 %v5133, %v3613
  %v6548 = vmax.f32 %v5134, %v3614
  %v6549 = vmax.f32 %v5135, %v3615
  %v6550 = vmax.f32 %v5136, %v3616
  %v6551 = vmax.f32 %v5137, %v3617
  %v6552 = vmax.f32 %v5138, %v3618
  %v6553 = vmax.f32 %v5139, %v5083
  %v6554 = vmax.f32 %v5140, %v5084
  %v6555 = vsel %vm182, 1, 0
  %v6556 = vsel %vm183, 1, 0
  %v6557 = vcvt.s32.f32 %v6555
  %v6558 = vcvt.s32.f32 %v6556
  %v6559 = vsub.f32 3.0, %v6557
  %v6560 = vsub.f32 3.0, %v6558
  %vm6561 = vcmp.eq.s32.totalorder %v179, 15
  %vm6562 = vcmp.eq.s32.totalorder %v180, 15
  %v6563 = vsel %vm6561, 1, 0
  %v6564 = vsel %vm6562, 1, 0
  %v6565 = vcvt.s32.f32 %v6563
  %v6566 = vcvt.s32.f32 %v6564
  %v6567 = vsub.f32 %v6559, %v6565
  %v6568 = vsub.f32 %v6560, %v6566
  %v6569 = vrcp.pop %v6567
  %v6570 = vmul.f32 1.0, %v6569
  %v6571 = vrcp.pop %v6568
  %v6572 = vmul.f32 1.0, %v6571
  %v6573 = vmul.f32 %v6063, %v6570
  %v6574 = vmul.f32 %v6064, %v6572
  %v6575 = vmul.f32 %v6065, %v6570
  %v6576 = vmul.f32 %v6066, %v6572
  %v6577 = vmul.f32 %v6067, %v6570
  %v6578 = vmul.f32 %v6068, %v6572
  %v6579 = vmul.f32 %v6069, %v6570
  %v6580 = vmul.f32 %v6070, %v6572
  %v6581 = vmul.f32 %v6071, %v6570
  %v6582 = vmul.f32 %v6072, %v6572
  %v6583 = vmul.f32 %v6073, %v6570
  %v6584 = vmul.f32 %v6074, %v6572
  %v6585 = vmul.f32 %v6075, %v6570
  %v6586 = vmul.f32 %v6076, %v6572
  %v6587 = vmul.f32 %v6077, %v6570
  %v6588 = vmul.f32 %v6078, %v6572
  %v6589 = vmul.f32 %v6079, %v6570
  %v6590 = vmul.f32 %v6080, %v6572
  %v6591 = vmul.f32 %v6081, %v6570
  %v6592 = vmul.f32 %v6082, %v6572
  %v6593 = vmul.f32 %v6083, %v6570
  %v6594 = vmul.f32 %v6084, %v6572
  %v6595 = vmul.f32 %v6085, %v6570
  %v6596 = vmul.f32 %v6086, %v6572
  %v6597 = vmul.f32 %v6087, %v6570
  %v6598 = vmul.f32 %v6088, %v6572
  %v6599 = vmul.f32 %v6089, %v6570
  %v6600 = vmul.f32 %v6090, %v6572
  %v6601 = vmul.f32 %v6091, %v6570
  %v6602 = vmul.f32 %v6092, %v6572
  %v6603 = vmul.f32 %v6093, %v6570
  %v6604 = vmul.f32 %v6094, %v6572
  %v6605 = vmul.f32 %v6095, %v6570
  %v6606 = vmul.f32 %v6096, %v6572
  %v6607 = vmul.f32 %v6097, %v6570
  %v6608 = vmul.f32 %v6098, %v6572
  %v6609 = vmul.f32 %v6099, %v6570
  %v6610 = vmul.f32 %v6100, %v6572
  %v6611 = vmul.f32 %v6101, %v6570
  %v6612 = vmul.f32 %v6102, %v6572
  %v6613 = vmul.f32 %v6103, %v6570
  %v6614 = vmul.f32 %v6104, %v6572
  %v6615 = vmul.f32 %v6105, %v6570
  %v6616 = vmul.f32 %v6106, %v6572
  %v6617 = vmul.f32 %v6107, %v6570
  %v6618 = vmul.f32 %v6108, %v6572
  %v6619 = vmul.f32 %v6109, %v6570
  %v6620 = vmul.f32 %v6110, %v6572
  %v6621 = vmul.f32 %v6111, %v6570
  %v6622 = vmul.f32 %v6112, %v6572
  %v6623 = vmul.f32 %v6113, %v6570
  %v6624 = vmul.f32 %v6114, %v6572
  %v6625 = vmul.f32 %v6115, %v6570
  %v6626 = vmul.f32 %v6116, %v6572
  %v6627 = vmul.f32 %v6117, %v6570
  %v6628 = vmul.f32 %v6118, %v6572
  %v6629 = vmul.f32 %v6119, %v6570
  %v6630 = vmul.f32 %v6120, %v6572
  %v6631 = vmul.f32 %v6121, %v6570
  %v6632 = vmul.f32 %v6122, %v6572
  %v6633 = vmul.f32 %v6123, %v6570
  %v6634 = vmul.f32 %v6124, %v6572
  %v6635 = vmul.f32 %v6125, %v6570
  %v6636 = vmul.f32 %v6126, %v6572
  %v6637 = vmul.f32 %v6573, 0.5
  %v6638 = vmul.f32 %v6574, 0.5
  %v6639 = vmul.f32 %v6605, 0.5
  %v6640 = vmul.f32 %v6606, 0.5
  %v6641 = vmul.f32 %v6575, 0.33333334
  %v6642 = vmul.f32 %v6576, 0.33333334
  %v6643 = vmul.f32 %v6577, 0.33333334
  %v6644 = vmul.f32 %v6578, 0.33333334
  %v6645 = vmul.f32 %v6579, 0.33333334
  %v6646 = vmul.f32 %v6580, 0.33333334
  %v6647 = vmul.f32 %v6581, 0.33333334
  %v6648 = vmul.f32 %v6582, 0.33333334
  %v6649 = vmul.f32 %v6583, 0.33333334
  %v6650 = vmul.f32 %v6584, 0.33333334
  %v6651 = vmul.f32 %v6585, 0.33333334
  %v6652 = vmul.f32 %v6586, 0.33333334
  %v6653 = vmul.f32 %v6587, 0.33333334
  %v6654 = vmul.f32 %v6588, 0.33333334
  %v6655 = vmul.f32 %v6589, 0.33333334
  %v6656 = vmul.f32 %v6590, 0.33333334
  %v6657 = vmul.f32 %v6591, 0.33333334
  %v6658 = vmul.f32 %v6592, 0.33333334
  %v6659 = vmul.f32 %v6593, 0.33333334
  %v6660 = vmul.f32 %v6594, 0.33333334
  %v6661 = vmul.f32 %v6595, 0.33333334
  %v6662 = vmul.f32 %v6596, 0.33333334
  %v6663 = vmul.f32 %v6597, 0.33333334
  %v6664 = vmul.f32 %v6598, 0.33333334
  %v6665 = vmul.f32 %v6599, 0.33333334
  %v6666 = vmul.f32 %v6600, 0.33333334
  %v6667 = vmul.f32 %v6601, 0.33333334
  %v6668 = vmul.f32 %v6602, 0.33333334
  %v6669 = vmul.f32 %v6607, 0.33333334
  %v6670 = vmul.f32 %v6608, 0.33333334
  %v6671 = vmul.f32 %v6609, 0.33333334
  %v6672 = vmul.f32 %v6610, 0.33333334
  %v6673 = vmul.f32 %v6611, 0.33333334
  %v6674 = vmul.f32 %v6612, 0.33333334
  %v6675 = vmul.f32 %v6613, 0.33333334
  %v6676 = vmul.f32 %v6614, 0.33333334
  %v6677 = vmul.f32 %v6615, 0.33333334
  %v6678 = vmul.f32 %v6616, 0.33333334
  %v6679 = vmul.f32 %v6617, 0.33333334
  %v6680 = vmul.f32 %v6618, 0.33333334
  %v6681 = vmul.f32 %v6619, 0.33333334
  %v6682 = vmul.f32 %v6620, 0.33333334
  %v6683 = vmul.f32 %v6621, 0.33333334
  %v6684 = vmul.f32 %v6622, 0.33333334
  %v6685 = vmul.f32 %v6623, 0.33333334
  %v6686 = vmul.f32 %v6624, 0.33333334
  %v6687 = vmul.f32 %v6625, 0.33333334
  %v6688 = vmul.f32 %v6626, 0.33333334
  %v6689 = vmul.f32 %v6627, 0.33333334
  %v6690 = vmul.f32 %v6628, 0.33333334
  %v6691 = vmul.f32 %v6629, 0.33333334
  %v6692 = vmul.f32 %v6630, 0.33333334
  %v6693 = vmul.f32 %v6631, 0.33333334
  %v6694 = vmul.f32 %v6632, 0.33333334
  %v6695 = vmul.f32 %v6633, 0.33333334
  %v6696 = vmul.f32 %v6634, 0.33333334
  %v6697 = vmul.f32 %v6603, 0.5
  %v6698 = vmul.f32 %v6604, 0.5
  %v6699 = vmul.f32 %v6635, 0.5
  %v6700 = vmul.f32 %v6636, 0.5
  %v6701 = vpack.c.bf16 %v6436, %v6435
  %v6702 = vpack.c.bf16 %v6438, %v6437
  %v6703 = vpack.c.bf16 %v6440, %v6439
  %v6704 = vpack.c.bf16 %v6442, %v6441
  %v6705 = vpack.c.bf16 %v6444, %v6443
  %v6706 = vpack.c.bf16 %v6446, %v6445
  %v6707 = vpack.c.bf16 %v6448, %v6447
  %v6708 = vpack.c.bf16 %v6450, %v6449
  %v6709 = vpack.c.bf16 %v6452, %v6451
  %v6710 = vpack.c.bf16 %v6454, %v6453
  %v6711 = vpack.c.bf16 %v6456, %v6455
  %v6712 = vpack.c.bf16 %v6458, %v6457
  %v6713 = vpack.c.bf16 %v6460, %v6459
  %v6714 = vpack.c.bf16 %v6462, %v6461
  %v6715 = vpack.c.bf16 %v6464, %v6463
  %v6716 = vpack.c.bf16 %v6466, %v6465
  %v6717 = vpack.c.bf16 %v6468, %v6467
  %v6718 = vpack.c.bf16 %v6470, %v6469
  %v6719 = vpack.c.bf16 %v6472, %v6471
  %v6720 = vpack.c.bf16 %v6474, %v6473
  %v6721 = vpack.c.bf16 %v6476, %v6475
  %v6722 = vpack.c.bf16 %v6478, %v6477
  %v6723 = vpack.c.bf16 %v6480, %v6479
  %v6724 = vpack.c.bf16 %v6482, %v6481
  %v6725 = vpack.c.bf16 %v6484, %v6483
  %v6726 = vpack.c.bf16 %v6486, %v6485
  %v6727 = vpack.c.bf16 %v6488, %v6487
  %v6728 = vpack.c.bf16 %v6490, %v6489
  %v6729 = vpack.c.bf16 %v6492, %v6491
  %v6730 = vpack.c.bf16 %v6494, %v6493
  %v6731 = vpack.c.bf16 %v6496, %v6495
  %v6732 = vpack.c.bf16 %v6498, %v6497
  %v6765 = vunpack.c.l.b16 %v6701
  %v6766 = vunpack.c.h.b16 %v6701
  %v6767 = vunpack.c.l.b16 %v6702
  %v6768 = vunpack.c.h.b16 %v6702
  %v6769 = vunpack.c.l.b16 %v6703
  %v6770 = vunpack.c.h.b16 %v6703
  %v6771 = vunpack.c.l.b16 %v6704
  %v6772 = vunpack.c.h.b16 %v6704
  %v6773 = vunpack.c.l.b16 %v6705
  %v6774 = vunpack.c.h.b16 %v6705
  %v6775 = vunpack.c.l.b16 %v6706
  %v6776 = vunpack.c.h.b16 %v6706
  %v6777 = vunpack.c.l.b16 %v6707
  %v6778 = vunpack.c.h.b16 %v6707
  %v6779 = vunpack.c.l.b16 %v6708
  %v6780 = vunpack.c.h.b16 %v6708
  %v6781 = vunpack.c.l.b16 %v6709
  %v6782 = vunpack.c.h.b16 %v6709
  %v6783 = vunpack.c.l.b16 %v6710
  %v6784 = vunpack.c.h.b16 %v6710
  %v6785 = vunpack.c.l.b16 %v6711
  %v6786 = vunpack.c.h.b16 %v6711
  %v6787 = vunpack.c.l.b16 %v6712
  %v6788 = vunpack.c.h.b16 %v6712
  %v6789 = vunpack.c.l.b16 %v6713
  %v6790 = vunpack.c.h.b16 %v6713
  %v6791 = vunpack.c.l.b16 %v6714
  %v6792 = vunpack.c.h.b16 %v6714
  %v6793 = vunpack.c.l.b16 %v6715
  %v6794 = vunpack.c.h.b16 %v6715
  %v6795 = vunpack.c.l.b16 %v6716
  %v6796 = vunpack.c.h.b16 %v6716
  %v6797 = vunpack.c.l.b16 %v6717
  %v6798 = vunpack.c.h.b16 %v6717
  %v6799 = vunpack.c.l.b16 %v6718
  %v6800 = vunpack.c.h.b16 %v6718
  %v6801 = vunpack.c.l.b16 %v6719
  %v6802 = vunpack.c.h.b16 %v6719
  %v6803 = vunpack.c.l.b16 %v6720
  %v6804 = vunpack.c.h.b16 %v6720
  %v6805 = vunpack.c.l.b16 %v6721
  %v6806 = vunpack.c.h.b16 %v6721
  %v6807 = vunpack.c.l.b16 %v6722
  %v6808 = vunpack.c.h.b16 %v6722
  %v6809 = vunpack.c.l.b16 %v6723
  %v6810 = vunpack.c.h.b16 %v6723
  %v6811 = vunpack.c.l.b16 %v6724
  %v6812 = vunpack.c.h.b16 %v6724
  %v6813 = vunpack.c.l.b16 %v6725
  %v6814 = vunpack.c.h.b16 %v6725
  %v6815 = vunpack.c.l.b16 %v6726
  %v6816 = vunpack.c.h.b16 %v6726
  %v6817 = vunpack.c.l.b16 %v6727
  %v6818 = vunpack.c.h.b16 %v6727
  %v6819 = vunpack.c.l.b16 %v6728
  %v6820 = vunpack.c.h.b16 %v6728
  %v6821 = vunpack.c.l.b16 %v6729
  %v6822 = vunpack.c.h.b16 %v6729
  %v6823 = vunpack.c.l.b16 %v6730
  %v6824 = vunpack.c.h.b16 %v6730
  %v6825 = vunpack.c.l.b16 %v6731
  %v6826 = vunpack.c.h.b16 %v6731
  %v6827 = vunpack.c.l.b16 %v6732
  %v6828 = vunpack.c.h.b16 %v6732
  %v6829 = vpack.c.b16 %v6765, %v6765
  %v6830 = vpack.c.b16 %v6766, %v6766
  %v6831 = vpack.c.b16 %v6767, %v6767
  %v6832 = vpack.c.b16 %v6768, %v6768
  %v6833 = vpack.c.b16 %v6769, %v6769
  %v6834 = vpack.c.b16 %v6770, %v6770
  %v6835 = vpack.c.b16 %v6771, %v6771
  %v6836 = vpack.c.b16 %v6772, %v6772
  %v6837 = vpack.c.b16 %v6773, %v6773
  %v6838 = vpack.c.b16 %v6774, %v6774
  %v6839 = vpack.c.b16 %v6775, %v6775
  %v6840 = vpack.c.b16 %v6776, %v6776
  %v6841 = vpack.c.b16 %v6777, %v6777
  %v6842 = vpack.c.b16 %v6778, %v6778
  %v6843 = vpack.c.b16 %v6779, %v6779
  %v6844 = vpack.c.b16 %v6780, %v6780
  %v6845 = vpack.c.b16 %v6781, %v6781
  %v6846 = vpack.c.b16 %v6782, %v6782
  %v6847 = vpack.c.b16 %v6783, %v6783
  %v6848 = vpack.c.b16 %v6784, %v6784
  %v6849 = vpack.c.b16 %v6785, %v6785
  %v6850 = vpack.c.b16 %v6786, %v6786
  %v6851 = vpack.c.b16 %v6787, %v6787
  %v6852 = vpack.c.b16 %v6788, %v6788
  %v6853 = vpack.c.b16 %v6789, %v6789
  %v6854 = vpack.c.b16 %v6790, %v6790
  %v6855 = vpack.c.b16 %v6791, %v6791
  %v6856 = vpack.c.b16 %v6792, %v6792
  %v6857 = vpack.c.b16 %v6793, %v6793
  %v6858 = vpack.c.b16 %v6794, %v6794
  %v6859 = vpack.c.b16 %v6795, %v6795
  %v6860 = vpack.c.b16 %v6796, %v6796
  %v6861 = vpack.c.b16 %v6797, %v6797
  %v6862 = vpack.c.b16 %v6798, %v6798
  %v6863 = vpack.c.b16 %v6799, %v6799
  %v6864 = vpack.c.b16 %v6800, %v6800
  %v6865 = vpack.c.b16 %v6801, %v6801
  %v6866 = vpack.c.b16 %v6802, %v6802
  %v6867 = vpack.c.b16 %v6803, %v6803
  %v6868 = vpack.c.b16 %v6804, %v6804
  %v6869 = vpack.c.b16 %v6805, %v6805
  %v6870 = vpack.c.b16 %v6806, %v6806
  %v6871 = vpack.c.b16 %v6807, %v6807
  %v6872 = vpack.c.b16 %v6808, %v6808
  %v6873 = vpack.c.b16 %v6809, %v6809
  %v6874 = vpack.c.b16 %v6810, %v6810
  %v6875 = vpack.c.b16 %v6811, %v6811
  %v6876 = vpack.c.b16 %v6812, %v6812
  %v6877 = vpack.c.b16 %v6813, %v6813
  %v6878 = vpack.c.b16 %v6814, %v6814
  %v6879 = vpack.c.b16 %v6815, %v6815
  %v6880 = vpack.c.b16 %v6816, %v6816
  %v6881 = vpack.c.b16 %v6817, %v6817
  %v6882 = vpack.c.b16 %v6818, %v6818
  %v6883 = vpack.c.b16 %v6819, %v6819
  %v6884 = vpack.c.b16 %v6820, %v6820
  %v6885 = vpack.c.b16 %v6821, %v6821
  %v6886 = vpack.c.b16 %v6822, %v6822
  %v6887 = vpack.c.b16 %v6823, %v6823
  %v6888 = vpack.c.b16 %v6824, %v6824
  %v6889 = vpack.c.b16 %v6825, %v6825
  %v6890 = vpack.c.b16 %v6826, %v6826
  %v6891 = vpack.c.b16 %v6827, %v6827
  %v6892 = vpack.c.b16 %v6828, %v6828
  %vm6957 = vcmask 27648
  %6958 = vst.msk [vmem:[%s51] sm:$0xf] %vm6957, %v6829
  %6959 = vst.msk [vmem:[%s51 + $0x4] sm:$0xf] %vm6957, %v6830
  %6960 = vst.msk [vmem:[%s51 + $0x8] sm:$0xf] %vm6957, %v6831
  %6961 = vst.msk [vmem:[%s51 + $0xc] sm:$0xf] %vm6957, %v6832
  %6962 = vst.msk [vmem:[%s51 + $0x10] sm:$0xf] %vm6957, %v6833
  %6963 = vst.msk [vmem:[%s51 + $0x14] sm:$0xf] %vm6957, %v6834
  %6964 = vst.msk [vmem:[%s51 + $0x18] sm:$0xf] %vm6957, %v6835
  %6965 = vst.msk [vmem:[%s51 + $0x1c] sm:$0xf] %vm6957, %v6836
  %6966 = vst.msk [vmem:[%s51 + $0x20] sm:$0xf] %vm6957, %v6837
  %6967 = vst.msk [vmem:[%s51 + $0x24] sm:$0xf] %vm6957, %v6838
  %6968 = vst.msk [vmem:[%s51 + $0x28] sm:$0xf] %vm6957, %v6839
  %6969 = vst.msk [vmem:[%s51 + $0x2c] sm:$0xf] %vm6957, %v6840
  %6970 = vst.msk [vmem:[%s51 + $0x30] sm:$0xf] %vm6957, %v6841
  %6971 = vst.msk [vmem:[%s51 + $0x34] sm:$0xf] %vm6957, %v6842
  %6972 = vst.msk [vmem:[%s51 + $0x38] sm:$0xf] %vm6957, %v6843
  %6973 = vst.msk [vmem:[%s51 + $0x3c] sm:$0xf] %vm6957, %v6844
  %6974 = vst.msk [vmem:[%s51 + $0x40] sm:$0xf] %vm6957, %v6845
  %6975 = vst.msk [vmem:[%s51 + $0x44] sm:$0xf] %vm6957, %v6846
  %6976 = vst.msk [vmem:[%s51 + $0x48] sm:$0xf] %vm6957, %v6847
  %6977 = vst.msk [vmem:[%s51 + $0x4c] sm:$0xf] %vm6957, %v6848
  %6978 = vst.msk [vmem:[%s51 + $0x50] sm:$0xf] %vm6957, %v6849
  %6979 = vst.msk [vmem:[%s51 + $0x54] sm:$0xf] %vm6957, %v6850
  %6980 = vst.msk [vmem:[%s51 + $0x58] sm:$0xf] %vm6957, %v6851
  %6981 = vst.msk [vmem:[%s51 + $0x5c] sm:$0xf] %vm6957, %v6852
  %6982 = vst.msk [vmem:[%s51 + $0x60] sm:$0xf] %vm6957, %v6853
  %6983 = vst.msk [vmem:[%s51 + $0x64] sm:$0xf] %vm6957, %v6854
  %6984 = vst.msk [vmem:[%s51 + $0x68] sm:$0xf] %vm6957, %v6855
  %6985 = vst.msk [vmem:[%s51 + $0x6c] sm:$0xf] %vm6957, %v6856
  %6986 = vst.msk [vmem:[%s51 + $0x70] sm:$0xf] %vm6957, %v6857
  %6987 = vst.msk [vmem:[%s51 + $0x74] sm:$0xf] %vm6957, %v6858
  %6988 = vst.msk [vmem:[%s51 + $0x78] sm:$0xf] %vm6957, %v6859
  %6989 = vst.msk [vmem:[%s51 + $0x7c] sm:$0xf] %vm6957, %v6860
  %6990 = vst.msk [vmem:[%s51 + $0x80] sm:$0xf] %vm6957, %v6861
  %6991 = vst.msk [vmem:[%s51 + $0x84] sm:$0xf] %vm6957, %v6862
  %6992 = vst.msk [vmem:[%s51 + $0x88] sm:$0xf] %vm6957, %v6863
  %6993 = vst.msk [vmem:[%s51 + $0x8c] sm:$0xf] %vm6957, %v6864
  %6994 = vst.msk [vmem:[%s51 + $0x90] sm:$0xf] %vm6957, %v6865
  %6995 = vst.msk [vmem:[%s51 + $0x94] sm:$0xf] %vm6957, %v6866
  %6996 = vst.msk [vmem:[%s51 + $0x98] sm:$0xf] %vm6957, %v6867
  %6997 = vst.msk [vmem:[%s51 + $0x9c] sm:$0xf] %vm6957, %v6868
  %6998 = vst.msk [vmem:[%s51 + $0xa0] sm:$0xf] %vm6957, %v6869
  %6999 = vst.msk [vmem:[%s51 + $0xa4] sm:$0xf] %vm6957, %v6870
  %7000 = vst.msk [vmem:[%s51 + $0xa8] sm:$0xf] %vm6957, %v6871
  %7001 = vst.msk [vmem:[%s51 + $0xac] sm:$0xf] %vm6957, %v6872
  %7002 = vst.msk [vmem:[%s51 + $0xb0] sm:$0xf] %vm6957, %v6873
  %7003 = vst.msk [vmem:[%s51 + $0xb4] sm:$0xf] %vm6957, %v6874
  %7004 = vst.msk [vmem:[%s51 + $0xb8] sm:$0xf] %vm6957, %v6875
  %7005 = vst.msk [vmem:[%s51 + $0xbc] sm:$0xf] %vm6957, %v6876
  %7006 = vst.msk [vmem:[%s51 + $0xc0] sm:$0xf] %vm6957, %v6877
  %7007 = vst.msk [vmem:[%s51 + $0xc4] sm:$0xf] %vm6957, %v6878
  %7008 = vst.msk [vmem:[%s51 + $0xc8] sm:$0xf] %vm6957, %v6879
  %7009 = vst.msk [vmem:[%s51 + $0xcc] sm:$0xf] %vm6957, %v6880
  %7010 = vst.msk [vmem:[%s51 + $0xd0] sm:$0xf] %vm6957, %v6881
  %7011 = vst.msk [vmem:[%s51 + $0xd4] sm:$0xf] %vm6957, %v6882
  %7012 = vst.msk [vmem:[%s51 + $0xd8] sm:$0xf] %vm6957, %v6883
  %7013 = vst.msk [vmem:[%s51 + $0xdc] sm:$0xf] %vm6957, %v6884
  %7014 = vst.msk [vmem:[%s51 + $0xe0] sm:$0xf] %vm6957, %v6885
  %7015 = vst.msk [vmem:[%s51 + $0xe4] sm:$0xf] %vm6957, %v6886
  %7016 = vst.msk [vmem:[%s51 + $0xe8] sm:$0xf] %vm6957, %v6887
  %7017 = vst.msk [vmem:[%s51 + $0xec] sm:$0xf] %vm6957, %v6888
  %7018 = vst.msk [vmem:[%s51 + $0xf0] sm:$0xf] %vm6957, %v6889
  %7019 = vst.msk [vmem:[%s51 + $0xf4] sm:$0xf] %vm6957, %v6890
  %7020 = vst.msk [vmem:[%s51 + $0xf8] sm:$0xf] %vm6957, %v6891
  %7021 = vst.msk [vmem:[%s51 + $0xfc] sm:$0xf] %vm6957, %v6892
  %v7022 = vld [vmem:[%s2] sm:$0x3]
  %v7023 = vsel %vm1309, %v5085, 0.0
  %v7024 = vsel %vm1309, %v6499, 0.0
  %v7025 = vadd.f32 %v7023, %v7024
  %v7026 = vsel %vm1309, %v6501, 0.0
  %v7027 = vadd.f32 %v7025, %v7026
  %v7028 = vsel %vm1309, %v6503, 0.0
  %v7029 = vadd.f32 %v7027, %v7028
  %v7030 = vsel %vm1309, %v6505, 0.0
  %v7031 = vadd.f32 %v7029, %v7030
  %v7032 = vsel %vm1309, %v6507, 0.0
  %v7033 = vadd.f32 %v7031, %v7032
  %v7034 = vsel %vm1309, %v6509, 0.0
  %v7035 = vadd.f32 %v7033, %v7034
  %v7036 = vsel %vm1309, %v6511, 0.0
  %v7037 = vadd.f32 %v7035, %v7036
  %v7038 = vsel %vm1309, %v6513, 0.0
  %v7039 = vadd.f32 %v7037, %v7038
  %v7040 = vsel %vm1309, %v6515, 0.0
  %v7041 = vadd.f32 %v7039, %v7040
  %v7042 = vsel %vm1309, %v6517, 0.0
  %v7043 = vadd.f32 %v7041, %v7042
  %v7044 = vsel %vm1309, %v6519, 0.0
  %v7045 = vadd.f32 %v7043, %v7044
  %v7046 = vsel %vm1309, %v6521, 0.0
  %v7047 = vadd.f32 %v7045, %v7046
  %v7048 = vsel %vm1309, %v6523, 0.0
  %v7049 = vadd.f32 %v7047, %v7048
  %v7050 = vsel %vm1309, %v6525, 0.0
  %v7051 = vadd.f32 %v7049, %v7050
  %v7052 = vsel %vm1309, %v5141, 0.0
  %v7053 = vadd.f32 %v7051, %v7052
  %v7054 = vsel %vm1309, %v5086, 0.0
  %v7055 = vsel %vm1309, %v6500, 0.0
  %v7056 = vadd.f32 %v7054, %v7055
  %v7057 = vsel %vm1309, %v6502, 0.0
  %v7058 = vadd.f32 %v7056, %v7057
  %v7059 = vsel %vm1309, %v6504, 0.0
  %v7060 = vadd.f32 %v7058, %v7059
  %v7061 = vsel %vm1309, %v6506, 0.0
  %v7062 = vadd.f32 %v7060, %v7061
  %v7063 = vsel %vm1309, %v6508, 0.0
  %v7064 = vadd.f32 %v7062, %v7063
  %v7065 = vsel %vm1309, %v6510, 0.0
  %v7066 = vadd.f32 %v7064, %v7065
  %v7067 = vsel %vm1309, %v6512, 0.0
  %v7068 = vadd.f32 %v7066, %v7067
  %v7069 = vsel %vm1309, %v6514, 0.0
  %v7070 = vadd.f32 %v7068, %v7069
  %v7071 = vsel %vm1309, %v6516, 0.0
  %v7072 = vadd.f32 %v7070, %v7071
  %v7073 = vsel %vm1309, %v6518, 0.0
  %v7074 = vadd.f32 %v7072, %v7073
  %v7075 = vsel %vm1309, %v6520, 0.0
  %v7076 = vadd.f32 %v7074, %v7075
  %v7077 = vsel %vm1309, %v6522, 0.0
  %v7078 = vadd.f32 %v7076, %v7077
  %v7079 = vsel %vm1309, %v6524, 0.0
  %v7080 = vadd.f32 %v7078, %v7079
  %v7081 = vsel %vm1309, %v6526, 0.0
  %v7082 = vadd.f32 %v7080, %v7081
  %v7083 = vsel %vm1309, %v5142, 0.0
  %v7084 = vadd.f32 %v7082, %v7083
  %v7085 = vsel %vm1309, %v5113, 0.0
  %v7086 = vsel %vm1309, %v6527, 0.0
  %v7087 = vadd.f32 %v7085, %v7086
  %v7088 = vsel %vm1309, %v6529, 0.0
  %v7089 = vadd.f32 %v7087, %v7088
  %v7090 = vsel %vm1309, %v6531, 0.0
  %v7091 = vadd.f32 %v7089, %v7090
  %v7092 = vsel %vm1309, %v6533, 0.0
  %v7093 = vadd.f32 %v7091, %v7092
  %v7094 = vsel %vm1309, %v6535, 0.0
  %v7095 = vadd.f32 %v7093, %v7094
  %v7096 = vsel %vm1309, %v6537, 0.0
  %v7097 = vadd.f32 %v7095, %v7096
  %v7098 = vsel %vm1309, %v6539, 0.0
  %v7099 = vadd.f32 %v7097, %v7098
  %v7100 = vsel %vm1309, %v6541, 0.0
  %v7101 = vadd.f32 %v7099, %v7100
  %v7102 = vsel %vm1309, %v6543, 0.0
  %v7103 = vadd.f32 %v7101, %v7102
  %v7104 = vsel %vm1309, %v6545, 0.0
  %v7105 = vadd.f32 %v7103, %v7104
  %v7106 = vsel %vm1309, %v6547, 0.0
  %v7107 = vadd.f32 %v7105, %v7106
  %v7108 = vsel %vm1309, %v6549, 0.0
  %v7109 = vadd.f32 %v7107, %v7108
  %v7110 = vsel %vm1309, %v6551, 0.0
  %v7111 = vadd.f32 %v7109, %v7110
  %v7112 = vsel %vm1309, %v6553, 0.0
  %v7113 = vadd.f32 %v7111, %v7112
  %v7114 = vsel %vm1309, %v5143, 0.0
  %v7115 = vadd.f32 %v7113, %v7114
  %v7116 = vsel %vm1309, %v5114, 0.0
  %v7117 = vsel %vm1309, %v6528, 0.0
  %v7118 = vadd.f32 %v7116, %v7117
  %v7119 = vsel %vm1309, %v6530, 0.0
  %v7120 = vadd.f32 %v7118, %v7119
  %v7121 = vsel %vm1309, %v6532, 0.0
  %v7122 = vadd.f32 %v7120, %v7121
  %v7123 = vsel %vm1309, %v6534, 0.0
  %v7124 = vadd.f32 %v7122, %v7123
  %v7125 = vsel %vm1309, %v6536, 0.0
  %v7126 = vadd.f32 %v7124, %v7125
  %v7127 = vsel %vm1309, %v6538, 0.0
  %v7128 = vadd.f32 %v7126, %v7127
  %v7129 = vsel %vm1309, %v6540, 0.0
  %v7130 = vadd.f32 %v7128, %v7129
  %v7131 = vsel %vm1309, %v6542, 0.0
  %v7132 = vadd.f32 %v7130, %v7131
  %v7133 = vsel %vm1309, %v6544, 0.0
  %v7134 = vadd.f32 %v7132, %v7133
  %v7135 = vsel %vm1309, %v6546, 0.0
  %v7136 = vadd.f32 %v7134, %v7135
  %v7137 = vsel %vm1309, %v6548, 0.0
  %v7138 = vadd.f32 %v7136, %v7137
  %v7139 = vsel %vm1309, %v6550, 0.0
  %v7140 = vadd.f32 %v7138, %v7139
  %v7141 = vsel %vm1309, %v6552, 0.0
  %v7142 = vadd.f32 %v7140, %v7141
  %v7143 = vsel %vm1309, %v6554, 0.0
  %v7144 = vadd.f32 %v7142, %v7143
  %v7145 = vsel %vm1309, %v5144, 0.0
  %v7146 = vadd.f32 %v7144, %v7145
  %v7147 = vsel %vm1309, %v7053, 0.0
  %v7148 = vsel %vm1309, %v7115, 0.0
  %v7149 = vadd.f32 %v7147, %v7148
  %v7150 = vsel %vm1309, %v7084, 0.0
  %v7151 = vsel %vm1309, %v7146, 0.0
  %v7152 = vadd.f32 %v7150, %v7151
  %v7153 = vmul.f32 %v5085, %v5085
  %v7154 = vmul.f32 %v5086, %v5086
  %v7155 = vmul.f32 %v6499, %v6499
  %v7156 = vmul.f32 %v6500, %v6500
  %v7157 = vmul.f32 %v6501, %v6501
  %v7158 = vmul.f32 %v6502, %v6502
  %v7159 = vmul.f32 %v6503, %v6503
  %v7160 = vmul.f32 %v6504, %v6504
  %v7161 = vmul.f32 %v6505, %v6505
  %v7162 = vmul.f32 %v6506, %v6506
  %v7163 = vmul.f32 %v6507, %v6507
  %v7164 = vmul.f32 %v6508, %v6508
  %v7165 = vmul.f32 %v6509, %v6509
  %v7166 = vmul.f32 %v6510, %v6510
  %v7167 = vmul.f32 %v6511, %v6511
  %v7168 = vmul.f32 %v6512, %v6512
  %v7169 = vmul.f32 %v6513, %v6513
  %v7170 = vmul.f32 %v6514, %v6514
  %v7171 = vmul.f32 %v6515, %v6515
  %v7172 = vmul.f32 %v6516, %v6516
  %v7173 = vmul.f32 %v6517, %v6517
  %v7174 = vmul.f32 %v6518, %v6518
  %v7175 = vmul.f32 %v6519, %v6519
  %v7176 = vmul.f32 %v6520, %v6520
  %v7177 = vmul.f32 %v6521, %v6521
  %v7178 = vmul.f32 %v6522, %v6522
  %v7179 = vmul.f32 %v6523, %v6523
  %v7180 = vmul.f32 %v6524, %v6524
  %v7181 = vmul.f32 %v6525, %v6525
  %v7182 = vmul.f32 %v6526, %v6526
  %v7183 = vmul.f32 %v5141, %v5141
  %v7184 = vmul.f32 %v5142, %v5142
  %v7185 = vmul.f32 %v5113, %v5113
  %v7186 = vmul.f32 %v5114, %v5114
  %v7187 = vmul.f32 %v6527, %v6527
  %v7188 = vmul.f32 %v6528, %v6528
  %v7189 = vmul.f32 %v6529, %v6529
  %v7190 = vmul.f32 %v6530, %v6530
  %v7191 = vmul.f32 %v6531, %v6531
  %v7192 = vmul.f32 %v6532, %v6532
  %v7193 = vmul.f32 %v6533, %v6533
  %v7194 = vmul.f32 %v6534, %v6534
  %v7195 = vmul.f32 %v6535, %v6535
  %v7196 = vmul.f32 %v6536, %v6536
  %v7197 = vmul.f32 %v6537, %v6537
  %v7198 = vmul.f32 %v6538, %v6538
  %v7199 = vmul.f32 %v6539, %v6539
  %v7200 = vmul.f32 %v6540, %v6540
  %v7201 = vmul.f32 %v6541, %v6541
  %v7202 = vmul.f32 %v6542, %v6542
  %v7203 = vmul.f32 %v6543, %v6543
  %v7204 = vmul.f32 %v6544, %v6544
  %v7205 = vmul.f32 %v6545, %v6545
  %v7206 = vmul.f32 %v6546, %v6546
  %v7207 = vmul.f32 %v6547, %v6547
  %v7208 = vmul.f32 %v6548, %v6548
  %v7209 = vmul.f32 %v6549, %v6549
  %v7210 = vmul.f32 %v6550, %v6550
  %v7211 = vmul.f32 %v6551, %v6551
  %v7212 = vmul.f32 %v6552, %v6552
  %v7213 = vmul.f32 %v6553, %v6553
  %v7214 = vmul.f32 %v6554, %v6554
  %v7215 = vmul.f32 %v5143, %v5143
  %v7216 = vmul.f32 %v5144, %v5144
  %v7217 = vsel %vm1309, %v7153, 0.0
  %v7218 = vsel %vm1309, %v7155, 0.0
  %v7219 = vadd.f32 %v7217, %v7218
  %v7220 = vsel %vm1309, %v7157, 0.0
  %v7221 = vadd.f32 %v7219, %v7220
  %v7222 = vsel %vm1309, %v7159, 0.0
  %v7223 = vadd.f32 %v7221, %v7222
  %v7224 = vsel %vm1309, %v7161, 0.0
  %v7225 = vadd.f32 %v7223, %v7224
  %v7226 = vsel %vm1309, %v7163, 0.0
  %v7227 = vadd.f32 %v7225, %v7226
  %v7228 = vsel %vm1309, %v7165, 0.0
  %v7229 = vadd.f32 %v7227, %v7228
  %v7230 = vsel %vm1309, %v7167, 0.0
  %v7231 = vadd.f32 %v7229, %v7230
  %v7232 = vsel %vm1309, %v7169, 0.0
  %v7233 = vadd.f32 %v7231, %v7232
  %v7234 = vsel %vm1309, %v7171, 0.0
  %v7235 = vadd.f32 %v7233, %v7234
  %v7236 = vsel %vm1309, %v7173, 0.0
  %v7237 = vadd.f32 %v7235, %v7236
  %v7238 = vsel %vm1309, %v7175, 0.0
  %v7239 = vadd.f32 %v7237, %v7238
  %v7240 = vsel %vm1309, %v7177, 0.0
  %v7241 = vadd.f32 %v7239, %v7240
  %v7242 = vsel %vm1309, %v7179, 0.0
  %v7243 = vadd.f32 %v7241, %v7242
  %v7244 = vsel %vm1309, %v7181, 0.0
  %v7245 = vadd.f32 %v7243, %v7244
  %v7246 = vsel %vm1309, %v7183, 0.0
  %v7247 = vadd.f32 %v7245, %v7246
  %v7248 = vsel %vm1309, %v7154, 0.0
  %v7249 = vsel %vm1309, %v7156, 0.0
  %v7250 = vadd.f32 %v7248, %v7249
  %v7251 = vsel %vm1309, %v7158, 0.0
  %v7252 = vadd.f32 %v7250, %v7251
  %v7253 = vsel %vm1309, %v7160, 0.0
  %v7254 = vadd.f32 %v7252, %v7253
  %v7255 = vsel %vm1309, %v7162, 0.0
  %v7256 = vadd.f32 %v7254, %v7255
  %v7257 = vsel %vm1309, %v7164, 0.0
  %v7258 = vadd.f32 %v7256, %v7257
  %v7259 = vsel %vm1309, %v7166, 0.0
  %v7260 = vadd.f32 %v7258, %v7259
  %v7261 = vsel %vm1309, %v7168, 0.0
  %v7262 = vadd.f32 %v7260, %v7261
  %v7263 = vsel %vm1309, %v7170, 0.0
  %v7264 = vadd.f32 %v7262, %v7263
  %v7265 = vsel %vm1309, %v7172, 0.0
  %v7266 = vadd.f32 %v7264, %v7265
  %v7267 = vsel %vm1309, %v7174, 0.0
  %v7268 = vadd.f32 %v7266, %v7267
  %v7269 = vsel %vm1309, %v7176, 0.0
  %v7270 = vadd.f32 %v7268, %v7269
  %v7271 = vsel %vm1309, %v7178, 0.0
  %v7272 = vadd.f32 %v7270, %v7271
  %v7273 = vsel %vm1309, %v7180, 0.0
  %v7274 = vadd.f32 %v7272, %v7273
  %v7275 = vsel %vm1309, %v7182, 0.0
  %v7276 = vadd.f32 %v7274, %v7275
  %v7277 = vsel %vm1309, %v7184, 0.0
  %v7278 = vadd.f32 %v7276, %v7277
  %v7279 = vsel %vm1309, %v7185, 0.0
  %v7280 = vsel %vm1309, %v7187, 0.0
  %v7281 = vadd.f32 %v7279, %v7280
  %v7282 = vsel %vm1309, %v7189, 0.0
  %v7283 = vadd.f32 %v7281, %v7282
  %v7284 = vsel %vm1309, %v7191, 0.0
  %v7285 = vadd.f32 %v7283, %v7284
  %v7286 = vsel %vm1309, %v7193, 0.0
  %v7287 = vadd.f32 %v7285, %v7286
  %v7288 = vsel %vm1309, %v7195, 0.0
  %v7289 = vadd.f32 %v7287, %v7288
  %v7290 = vsel %vm1309, %v7197, 0.0
  %v7291 = vadd.f32 %v7289, %v7290
  %v7292 = vsel %vm1309, %v7199, 0.0
  %v7293 = vadd.f32 %v7291, %v7292
  %v7294 = vsel %vm1309, %v7201, 0.0
  %v7295 = vadd.f32 %v7293, %v7294
  %v7296 = vsel %vm1309, %v7203, 0.0
  %v7297 = vadd.f32 %v7295, %v7296
  %v7298 = vsel %vm1309, %v7205, 0.0
  %v7299 = vadd.f32 %v7297, %v7298
  %v7300 = vsel %vm1309, %v7207, 0.0
  %v7301 = vadd.f32 %v7299, %v7300
  %v7302 = vsel %vm1309, %v7209, 0.0
  %v7303 = vadd.f32 %v7301, %v7302
  %v7304 = vsel %vm1309, %v7211, 0.0
  %v7305 = vadd.f32 %v7303, %v7304
  %v7306 = vsel %vm1309, %v7213, 0.0
  %v7307 = vadd.f32 %v7305, %v7306
  %v7308 = vsel %vm1309, %v7215, 0.0
  %v7309 = vadd.f32 %v7307, %v7308
  %v7310 = vsel %vm1309, %v7186, 0.0
  %v7311 = vsel %vm1309, %v7188, 0.0
  %v7312 = vadd.f32 %v7310, %v7311
  %v7313 = vsel %vm1309, %v7190, 0.0
  %v7314 = vadd.f32 %v7312, %v7313
  %v7315 = vsel %vm1309, %v7192, 0.0
  %v7316 = vadd.f32 %v7314, %v7315
  %v7317 = vsel %vm1309, %v7194, 0.0
  %v7318 = vadd.f32 %v7316, %v7317
  %v7319 = vsel %vm1309, %v7196, 0.0
  %v7320 = vadd.f32 %v7318, %v7319
  %v7321 = vsel %vm1309, %v7198, 0.0
  %v7322 = vadd.f32 %v7320, %v7321
  %v7323 = vsel %vm1309, %v7200, 0.0
  %v7324 = vadd.f32 %v7322, %v7323
  %v7325 = vsel %vm1309, %v7202, 0.0
  %v7326 = vadd.f32 %v7324, %v7325
  %v7327 = vsel %vm1309, %v7204, 0.0
  %v7328 = vadd.f32 %v7326, %v7327
  %v7329 = vsel %vm1309, %v7206, 0.0
  %v7330 = vadd.f32 %v7328, %v7329
  %v7331 = vsel %vm1309, %v7208, 0.0
  %v7332 = vadd.f32 %v7330, %v7331
  %v7333 = vsel %vm1309, %v7210, 0.0
  %v7334 = vadd.f32 %v7332, %v7333
  %v7335 = vsel %vm1309, %v7212, 0.0
  %v7336 = vadd.f32 %v7334, %v7335
  %v7337 = vsel %vm1309, %v7214, 0.0
  %v7338 = vadd.f32 %v7336, %v7337
  %v7339 = vsel %vm1309, %v7216, 0.0
  %v7340 = vadd.f32 %v7338, %v7339
  %v7341 = vsel %vm1309, %v7247, 0.0
  %v7342 = vsel %vm1309, %v7309, 0.0
  %v7343 = vadd.f32 %v7341, %v7342
  %v7344 = vsel %vm1309, %v7278, 0.0
  %v7345 = vsel %vm1309, %v7340, 0.0
  %v7346 = vadd.f32 %v7344, %v7345
  %v7347 = vsel %vm1309, %v7149, 0.0
  %v7348 = vsel %vm1309, %v7152, 0.0
  %v7349 = vadd.f32 %v7347, %v7348
  %v7350 = vrot.slane %v7349, 4
  %v7351 = vadd.f32 %v7349, %v7350
  %v7352 = vrot.slane %v7351, 2
  %v7353 = vadd.f32 %v7351, %v7352
  %v7354 = vrot.slane %v7353, 1
  %v7355 = vadd.f32 %v7353, %v7354
  %v7356 = vsel %vm1309, %v7343, 0.0
  %v7357 = vsel %vm1309, %v7346, 0.0
  %v7358 = vadd.f32 %v7356, %v7357
  %v7359 = vrot.slane %v7358, 4
  %v7360 = vadd.f32 %v7358, %v7359
  %v7361 = vrot.slane %v7360, 2
  %v7362 = vadd.f32 %v7360, %v7361
  %v7363 = vrot.slane %v7362, 1
  %v7364 = vadd.f32 %v7362, %v7363
  %vm7367 = vcmask 1041409
  %v7368 = vsel %vm7367, %v7364, %v7355
  %v7370 = vadd.f32 %v7022, %v7368
  %vm7371 = vcmask 25600
  %7372 = vst.msk [vmem:[%s2] sm:$0x3] %vm7371, %v7370
  %v7373 = vld [vmem:[%s2 + $0x2] sm:$0x3]
  %v7374 = vsel %vm1309, %v6637, 0.0
  %v7375 = vsel %vm1309, %v6641, 0.0
  %v7376 = vadd.f32 %v7374, %v7375
  %v7377 = vsel %vm1309, %v6643, 0.0
  %v7378 = vadd.f32 %v7376, %v7377
  %v7379 = vsel %vm1309, %v6645, 0.0
  %v7380 = vadd.f32 %v7378, %v7379
  %v7381 = vsel %vm1309, %v6647, 0.0
  %v7382 = vadd.f32 %v7380, %v7381
  %v7383 = vsel %vm1309, %v6649, 0.0
  %v7384 = vadd.f32 %v7382, %v7383
  %v7385 = vsel %vm1309, %v6651, 0.0
  %v7386 = vadd.f32 %v7384, %v7385
  %v7387 = vsel %vm1309, %v6653, 0.0
  %v7388 = vadd.f32 %v7386, %v7387
  %v7389 = vsel %vm1309, %v6655, 0.0
  %v7390 = vadd.f32 %v7388, %v7389
  %v7391 = vsel %vm1309, %v6657, 0.0
  %v7392 = vadd.f32 %v7390, %v7391
  %v7393 = vsel %vm1309, %v6659, 0.0
  %v7394 = vadd.f32 %v7392, %v7393
  %v7395 = vsel %vm1309, %v6661, 0.0
  %v7396 = vadd.f32 %v7394, %v7395
  %v7397 = vsel %vm1309, %v6663, 0.0
  %v7398 = vadd.f32 %v7396, %v7397
  %v7399 = vsel %vm1309, %v6665, 0.0
  %v7400 = vadd.f32 %v7398, %v7399
  %v7401 = vsel %vm1309, %v6667, 0.0
  %v7402 = vadd.f32 %v7400, %v7401
  %v7403 = vsel %vm1309, %v6697, 0.0
  %v7404 = vadd.f32 %v7402, %v7403
  %v7405 = vsel %vm1309, %v6638, 0.0
  %v7406 = vsel %vm1309, %v6642, 0.0
  %v7407 = vadd.f32 %v7405, %v7406
  %v7408 = vsel %vm1309, %v6644, 0.0
  %v7409 = vadd.f32 %v7407, %v7408
  %v7410 = vsel %vm1309, %v6646, 0.0
  %v7411 = vadd.f32 %v7409, %v7410
  %v7412 = vsel %vm1309, %v6648, 0.0
  %v7413 = vadd.f32 %v7411, %v7412
  %v7414 = vsel %vm1309, %v6650, 0.0
  %v7415 = vadd.f32 %v7413, %v7414
  %v7416 = vsel %vm1309, %v6652, 0.0
  %v7417 = vadd.f32 %v7415, %v7416
  %v7418 = vsel %vm1309, %v6654, 0.0
  %v7419 = vadd.f32 %v7417, %v7418
  %v7420 = vsel %vm1309, %v6656, 0.0
  %v7421 = vadd.f32 %v7419, %v7420
  %v7422 = vsel %vm1309, %v6658, 0.0
  %v7423 = vadd.f32 %v7421, %v7422
  %v7424 = vsel %vm1309, %v6660, 0.0
  %v7425 = vadd.f32 %v7423, %v7424
  %v7426 = vsel %vm1309, %v6662, 0.0
  %v7427 = vadd.f32 %v7425, %v7426
  %v7428 = vsel %vm1309, %v6664, 0.0
  %v7429 = vadd.f32 %v7427, %v7428
  %v7430 = vsel %vm1309, %v6666, 0.0
  %v7431 = vadd.f32 %v7429, %v7430
  %v7432 = vsel %vm1309, %v6668, 0.0
  %v7433 = vadd.f32 %v7431, %v7432
  %v7434 = vsel %vm1309, %v6698, 0.0
  %v7435 = vadd.f32 %v7433, %v7434
  %v7436 = vsel %vm1309, %v6639, 0.0
  %v7437 = vsel %vm1309, %v6669, 0.0
  %v7438 = vadd.f32 %v7436, %v7437
  %v7439 = vsel %vm1309, %v6671, 0.0
  %v7440 = vadd.f32 %v7438, %v7439
  %v7441 = vsel %vm1309, %v6673, 0.0
  %v7442 = vadd.f32 %v7440, %v7441
  %v7443 = vsel %vm1309, %v6675, 0.0
  %v7444 = vadd.f32 %v7442, %v7443
  %v7445 = vsel %vm1309, %v6677, 0.0
  %v7446 = vadd.f32 %v7444, %v7445
  %v7447 = vsel %vm1309, %v6679, 0.0
  %v7448 = vadd.f32 %v7446, %v7447
  %v7449 = vsel %vm1309, %v6681, 0.0
  %v7450 = vadd.f32 %v7448, %v7449
  %v7451 = vsel %vm1309, %v6683, 0.0
  %v7452 = vadd.f32 %v7450, %v7451
  %v7453 = vsel %vm1309, %v6685, 0.0
  %v7454 = vadd.f32 %v7452, %v7453
  %v7455 = vsel %vm1309, %v6687, 0.0
  %v7456 = vadd.f32 %v7454, %v7455
  %v7457 = vsel %vm1309, %v6689, 0.0
  %v7458 = vadd.f32 %v7456, %v7457
  %v7459 = vsel %vm1309, %v6691, 0.0
  %v7460 = vadd.f32 %v7458, %v7459
  %v7461 = vsel %vm1309, %v6693, 0.0
  %v7462 = vadd.f32 %v7460, %v7461
  %v7463 = vsel %vm1309, %v6695, 0.0
  %v7464 = vadd.f32 %v7462, %v7463
  %v7465 = vsel %vm1309, %v6699, 0.0
  %v7466 = vadd.f32 %v7464, %v7465
  %v7467 = vsel %vm1309, %v6640, 0.0
  %v7468 = vsel %vm1309, %v6670, 0.0
  %v7469 = vadd.f32 %v7467, %v7468
  %v7470 = vsel %vm1309, %v6672, 0.0
  %v7471 = vadd.f32 %v7469, %v7470
  %v7472 = vsel %vm1309, %v6674, 0.0
  %v7473 = vadd.f32 %v7471, %v7472
  %v7474 = vsel %vm1309, %v6676, 0.0
  %v7475 = vadd.f32 %v7473, %v7474
  %v7476 = vsel %vm1309, %v6678, 0.0
  %v7477 = vadd.f32 %v7475, %v7476
  %v7478 = vsel %vm1309, %v6680, 0.0
  %v7479 = vadd.f32 %v7477, %v7478
  %v7480 = vsel %vm1309, %v6682, 0.0
  %v7481 = vadd.f32 %v7479, %v7480
  %v7482 = vsel %vm1309, %v6684, 0.0
  %v7483 = vadd.f32 %v7481, %v7482
  %v7484 = vsel %vm1309, %v6686, 0.0
  %v7485 = vadd.f32 %v7483, %v7484
  %v7486 = vsel %vm1309, %v6688, 0.0
  %v7487 = vadd.f32 %v7485, %v7486
  %v7488 = vsel %vm1309, %v6690, 0.0
  %v7489 = vadd.f32 %v7487, %v7488
  %v7490 = vsel %vm1309, %v6692, 0.0
  %v7491 = vadd.f32 %v7489, %v7490
  %v7492 = vsel %vm1309, %v6694, 0.0
  %v7493 = vadd.f32 %v7491, %v7492
  %v7494 = vsel %vm1309, %v6696, 0.0
  %v7495 = vadd.f32 %v7493, %v7494
  %v7496 = vsel %vm1309, %v6700, 0.0
  %v7497 = vadd.f32 %v7495, %v7496
  %v7498 = vsel %vm1309, %v7404, 0.0
  %v7499 = vsel %vm1309, %v7466, 0.0
  %v7500 = vadd.f32 %v7498, %v7499
  %v7501 = vsel %vm1309, %v7435, 0.0
  %v7502 = vsel %vm1309, %v7497, 0.0
  %v7503 = vadd.f32 %v7501, %v7502
  %v7504 = vmul.f32 %v6637, %v6637
  %v7505 = vmul.f32 %v6638, %v6638
  %v7506 = vmul.f32 %v6641, %v6641
  %v7507 = vmul.f32 %v6642, %v6642
  %v7508 = vmul.f32 %v6643, %v6643
  %v7509 = vmul.f32 %v6644, %v6644
  %v7510 = vmul.f32 %v6645, %v6645
  %v7511 = vmul.f32 %v6646, %v6646
  %v7512 = vmul.f32 %v6647, %v6647
  %v7513 = vmul.f32 %v6648, %v6648
  %v7514 = vmul.f32 %v6649, %v6649
  %v7515 = vmul.f32 %v6650, %v6650
  %v7516 = vmul.f32 %v6651, %v6651
  %v7517 = vmul.f32 %v6652, %v6652
  %v7518 = vmul.f32 %v6653, %v6653
  %v7519 = vmul.f32 %v6654, %v6654
  %v7520 = vmul.f32 %v6655, %v6655
  %v7521 = vmul.f32 %v6656, %v6656
  %v7522 = vmul.f32 %v6657, %v6657
  %v7523 = vmul.f32 %v6658, %v6658
  %v7524 = vmul.f32 %v6659, %v6659
  %v7525 = vmul.f32 %v6660, %v6660
  %v7526 = vmul.f32 %v6661, %v6661
  %v7527 = vmul.f32 %v6662, %v6662
  %v7528 = vmul.f32 %v6663, %v6663
  %v7529 = vmul.f32 %v6664, %v6664
  %v7530 = vmul.f32 %v6665, %v6665
  %v7531 = vmul.f32 %v6666, %v6666
  %v7532 = vmul.f32 %v6667, %v6667
  %v7533 = vmul.f32 %v6668, %v6668
  %v7534 = vmul.f32 %v6697, %v6697
  %v7535 = vmul.f32 %v6698, %v6698
  %v7536 = vmul.f32 %v6639, %v6639
  %v7537 = vmul.f32 %v6640, %v6640
  %v7538 = vmul.f32 %v6669, %v6669
  %v7539 = vmul.f32 %v6670, %v6670
  %v7540 = vmul.f32 %v6671, %v6671
  %v7541 = vmul.f32 %v6672, %v6672
  %v7542 = vmul.f32 %v6673, %v6673
  %v7543 = vmul.f32 %v6674, %v6674
  %v7544 = vmul.f32 %v6675, %v6675
  %v7545 = vmul.f32 %v6676, %v6676
  %v7546 = vmul.f32 %v6677, %v6677
  %v7547 = vmul.f32 %v6678, %v6678
  %v7548 = vmul.f32 %v6679, %v6679
  %v7549 = vmul.f32 %v6680, %v6680
  %v7550 = vmul.f32 %v6681, %v6681
  %v7551 = vmul.f32 %v6682, %v6682
  %v7552 = vmul.f32 %v6683, %v6683
  %v7553 = vmul.f32 %v6684, %v6684
  %v7554 = vmul.f32 %v6685, %v6685
  %v7555 = vmul.f32 %v6686, %v6686
  %v7556 = vmul.f32 %v6687, %v6687
  %v7557 = vmul.f32 %v6688, %v6688
  %v7558 = vmul.f32 %v6689, %v6689
  %v7559 = vmul.f32 %v6690, %v6690
  %v7560 = vmul.f32 %v6691, %v6691
  %v7561 = vmul.f32 %v6692, %v6692
  %v7562 = vmul.f32 %v6693, %v6693
  %v7563 = vmul.f32 %v6694, %v6694
  %v7564 = vmul.f32 %v6695, %v6695
  %v7565 = vmul.f32 %v6696, %v6696
  %v7566 = vmul.f32 %v6699, %v6699
  %v7567 = vmul.f32 %v6700, %v6700
  %v7568 = vsel %vm1309, %v7504, 0.0
  %v7569 = vsel %vm1309, %v7506, 0.0
  %v7570 = vadd.f32 %v7568, %v7569
  %v7571 = vsel %vm1309, %v7508, 0.0
  %v7572 = vadd.f32 %v7570, %v7571
  %v7573 = vsel %vm1309, %v7510, 0.0
  %v7574 = vadd.f32 %v7572, %v7573
  %v7575 = vsel %vm1309, %v7512, 0.0
  %v7576 = vadd.f32 %v7574, %v7575
  %v7577 = vsel %vm1309, %v7514, 0.0
  %v7578 = vadd.f32 %v7576, %v7577
  %v7579 = vsel %vm1309, %v7516, 0.0
  %v7580 = vadd.f32 %v7578, %v7579
  %v7581 = vsel %vm1309, %v7518, 0.0
  %v7582 = vadd.f32 %v7580, %v7581
  %v7583 = vsel %vm1309, %v7520, 0.0
  %v7584 = vadd.f32 %v7582, %v7583
  %v7585 = vsel %vm1309, %v7522, 0.0
  %v7586 = vadd.f32 %v7584, %v7585
  %v7587 = vsel %vm1309, %v7524, 0.0
  %v7588 = vadd.f32 %v7586, %v7587
  %v7589 = vsel %vm1309, %v7526, 0.0
  %v7590 = vadd.f32 %v7588, %v7589
  %v7591 = vsel %vm1309, %v7528, 0.0
  %v7592 = vadd.f32 %v7590, %v7591
  %v7593 = vsel %vm1309, %v7530, 0.0
  %v7594 = vadd.f32 %v7592, %v7593
  %v7595 = vsel %vm1309, %v7532, 0.0
  %v7596 = vadd.f32 %v7594, %v7595
  %v7597 = vsel %vm1309, %v7534, 0.0
  %v7598 = vadd.f32 %v7596, %v7597
  %v7599 = vsel %vm1309, %v7505, 0.0
  %v7600 = vsel %vm1309, %v7507, 0.0
  %v7601 = vadd.f32 %v7599, %v7600
  %v7602 = vsel %vm1309, %v7509, 0.0
  %v7603 = vadd.f32 %v7601, %v7602
  %v7604 = vsel %vm1309, %v7511, 0.0
  %v7605 = vadd.f32 %v7603, %v7604
  %v7606 = vsel %vm1309, %v7513, 0.0
  %v7607 = vadd.f32 %v7605, %v7606
  %v7608 = vsel %vm1309, %v7515, 0.0
  %v7609 = vadd.f32 %v7607, %v7608
  %v7610 = vsel %vm1309, %v7517, 0.0
  %v7611 = vadd.f32 %v7609, %v7610
  %v7612 = vsel %vm1309, %v7519, 0.0
  %v7613 = vadd.f32 %v7611, %v7612
  %v7614 = vsel %vm1309, %v7521, 0.0
  %v7615 = vadd.f32 %v7613, %v7614
  %v7616 = vsel %vm1309, %v7523, 0.0
  %v7617 = vadd.f32 %v7615, %v7616
  %v7618 = vsel %vm1309, %v7525, 0.0
  %v7619 = vadd.f32 %v7617, %v7618
  %v7620 = vsel %vm1309, %v7527, 0.0
  %v7621 = vadd.f32 %v7619, %v7620
  %v7622 = vsel %vm1309, %v7529, 0.0
  %v7623 = vadd.f32 %v7621, %v7622
  %v7624 = vsel %vm1309, %v7531, 0.0
  %v7625 = vadd.f32 %v7623, %v7624
  %v7626 = vsel %vm1309, %v7533, 0.0
  %v7627 = vadd.f32 %v7625, %v7626
  %v7628 = vsel %vm1309, %v7535, 0.0
  %v7629 = vadd.f32 %v7627, %v7628
  %v7630 = vsel %vm1309, %v7536, 0.0
  %v7631 = vsel %vm1309, %v7538, 0.0
  %v7632 = vadd.f32 %v7630, %v7631
  %v7633 = vsel %vm1309, %v7540, 0.0
  %v7634 = vadd.f32 %v7632, %v7633
  %v7635 = vsel %vm1309, %v7542, 0.0
  %v7636 = vadd.f32 %v7634, %v7635
  %v7637 = vsel %vm1309, %v7544, 0.0
  %v7638 = vadd.f32 %v7636, %v7637
  %v7639 = vsel %vm1309, %v7546, 0.0
  %v7640 = vadd.f32 %v7638, %v7639
  %v7641 = vsel %vm1309, %v7548, 0.0
  %v7642 = vadd.f32 %v7640, %v7641
  %v7643 = vsel %vm1309, %v7550, 0.0
  %v7644 = vadd.f32 %v7642, %v7643
  %v7645 = vsel %vm1309, %v7552, 0.0
  %v7646 = vadd.f32 %v7644, %v7645
  %v7647 = vsel %vm1309, %v7554, 0.0
  %v7648 = vadd.f32 %v7646, %v7647
  %v7649 = vsel %vm1309, %v7556, 0.0
  %v7650 = vadd.f32 %v7648, %v7649
  %v7651 = vsel %vm1309, %v7558, 0.0
  %v7652 = vadd.f32 %v7650, %v7651
  %v7653 = vsel %vm1309, %v7560, 0.0
  %v7654 = vadd.f32 %v7652, %v7653
  %v7655 = vsel %vm1309, %v7562, 0.0
  %v7656 = vadd.f32 %v7654, %v7655
  %v7657 = vsel %vm1309, %v7564, 0.0
  %v7658 = vadd.f32 %v7656, %v7657
  %v7659 = vsel %vm1309, %v7566, 0.0
  %v7660 = vadd.f32 %v7658, %v7659
  %v7661 = vsel %vm1309, %v7537, 0.0
  %v7662 = vsel %vm1309, %v7539, 0.0
  %v7663 = vadd.f32 %v7661, %v7662
  %v7664 = vsel %vm1309, %v7541, 0.0
  %v7665 = vadd.f32 %v7663, %v7664
  %v7666 = vsel %vm1309, %v7543, 0.0
  %v7667 = vadd.f32 %v7665, %v7666
  %v7668 = vsel %vm1309, %v7545, 0.0
  %v7669 = vadd.f32 %v7667, %v7668
  %v7670 = vsel %vm1309, %v7547, 0.0
  %v7671 = vadd.f32 %v7669, %v7670
  %v7672 = vsel %vm1309, %v7549, 0.0
  %v7673 = vadd.f32 %v7671, %v7672
  %v7674 = vsel %vm1309, %v7551, 0.0
  %v7675 = vadd.f32 %v7673, %v7674
  %v7676 = vsel %vm1309, %v7553, 0.0
  %v7677 = vadd.f32 %v7675, %v7676
  %v7678 = vsel %vm1309, %v7555, 0.0
  %v7679 = vadd.f32 %v7677, %v7678
  %v7680 = vsel %vm1309, %v7557, 0.0
  %v7681 = vadd.f32 %v7679, %v7680
  %v7682 = vsel %vm1309, %v7559, 0.0
  %v7683 = vadd.f32 %v7681, %v7682
  %v7684 = vsel %vm1309, %v7561, 0.0
  %v7685 = vadd.f32 %v7683, %v7684
  %v7686 = vsel %vm1309, %v7563, 0.0
  %v7687 = vadd.f32 %v7685, %v7686
  %v7688 = vsel %vm1309, %v7565, 0.0
  %v7689 = vadd.f32 %v7687, %v7688
  %v7690 = vsel %vm1309, %v7567, 0.0
  %v7691 = vadd.f32 %v7689, %v7690
  %v7692 = vsel %vm1309, %v7598, 0.0
  %v7693 = vsel %vm1309, %v7660, 0.0
  %v7694 = vadd.f32 %v7692, %v7693
  %v7695 = vsel %vm1309, %v7629, 0.0
  %v7696 = vsel %vm1309, %v7691, 0.0
  %v7697 = vadd.f32 %v7695, %v7696
  %v7698 = vsel %vm1309, %v7500, 0.0
  %v7699 = vsel %vm1309, %v7503, 0.0
  %v7700 = vadd.f32 %v7698, %v7699
  %v7701 = vrot.slane %v7700, 4
  %v7702 = vadd.f32 %v7700, %v7701
  %v7703 = vrot.slane %v7702, 2
  %v7704 = vadd.f32 %v7702, %v7703
  %v7705 = vrot.slane %v7704, 1
  %v7706 = vadd.f32 %v7704, %v7705
  %v7707 = vsel %vm1309, %v7694, 0.0
  %v7708 = vsel %vm1309, %v7697, 0.0
  %v7709 = vadd.f32 %v7707, %v7708
  %v7710 = vrot.slane %v7709, 4
  %v7711 = vadd.f32 %v7709, %v7710
  %v7712 = vrot.slane %v7711, 2
  %v7713 = vadd.f32 %v7711, %v7712
  %v7714 = vrot.slane %v7713, 1
  %v7715 = vadd.f32 %v7713, %v7714
  %v7718 = vsel %vm7367, %v7715, %v7706
  %v7720 = vadd.f32 %v7373, %v7718
  %7721 = vst.msk [vmem:[%s2 + $0x2] sm:$0x3] %vm7371, %v7720
  %v7722 = vld [vmem:[%s2 + $0x4] sm:$0x3]
  %v7723 = vunpack.c.l.bf16 %v6701
  %v7724 = vunpack.c.h.bf16 %v6701
  %v7725 = vunpack.c.l.bf16 %v6702
  %v7726 = vunpack.c.h.bf16 %v6702
  %v7727 = vunpack.c.l.bf16 %v6703
  %v7728 = vunpack.c.h.bf16 %v6703
  %v7729 = vunpack.c.l.bf16 %v6704
  %v7730 = vunpack.c.h.bf16 %v6704
  %v7731 = vunpack.c.l.bf16 %v6705
  %v7732 = vunpack.c.h.bf16 %v6705
  %v7733 = vunpack.c.l.bf16 %v6706
  %v7734 = vunpack.c.h.bf16 %v6706
  %v7735 = vunpack.c.l.bf16 %v6707
  %v7736 = vunpack.c.h.bf16 %v6707
  %v7737 = vunpack.c.l.bf16 %v6708
  %v7738 = vunpack.c.h.bf16 %v6708
  %v7739 = vunpack.c.l.bf16 %v6709
  %v7740 = vunpack.c.h.bf16 %v6709
  %v7741 = vunpack.c.l.bf16 %v6710
  %v7742 = vunpack.c.h.bf16 %v6710
  %v7743 = vunpack.c.l.bf16 %v6711
  %v7744 = vunpack.c.h.bf16 %v6711
  %v7745 = vunpack.c.l.bf16 %v6712
  %v7746 = vunpack.c.h.bf16 %v6712
  %v7747 = vunpack.c.l.bf16 %v6713
  %v7748 = vunpack.c.h.bf16 %v6713
  %v7749 = vunpack.c.l.bf16 %v6714
  %v7750 = vunpack.c.h.bf16 %v6714
  %v7751 = vunpack.c.l.bf16 %v6715
  %v7752 = vunpack.c.h.bf16 %v6715
  %v7753 = vunpack.c.l.bf16 %v6716
  %v7754 = vunpack.c.h.bf16 %v6716
  %v7755 = vunpack.c.l.bf16 %v6717
  %v7756 = vunpack.c.h.bf16 %v6717
  %v7757 = vunpack.c.l.bf16 %v6718
  %v7758 = vunpack.c.h.bf16 %v6718
  %v7759 = vunpack.c.l.bf16 %v6719
  %v7760 = vunpack.c.h.bf16 %v6719
  %v7761 = vunpack.c.l.bf16 %v6720
  %v7762 = vunpack.c.h.bf16 %v6720
  %v7763 = vunpack.c.l.bf16 %v6721
  %v7764 = vunpack.c.h.bf16 %v6721
  %v7765 = vunpack.c.l.bf16 %v6722
  %v7766 = vunpack.c.h.bf16 %v6722
  %v7767 = vunpack.c.l.bf16 %v6723
  %v7768 = vunpack.c.h.bf16 %v6723
  %v7769 = vunpack.c.l.bf16 %v6724
  %v7770 = vunpack.c.h.bf16 %v6724
  %v7771 = vunpack.c.l.bf16 %v6725
  %v7772 = vunpack.c.h.bf16 %v6725
  %v7773 = vunpack.c.l.bf16 %v6726
  %v7774 = vunpack.c.h.bf16 %v6726
  %v7775 = vunpack.c.l.bf16 %v6727
  %v7776 = vunpack.c.h.bf16 %v6727
  %v7777 = vunpack.c.l.bf16 %v6728
  %v7778 = vunpack.c.h.bf16 %v6728
  %v7779 = vunpack.c.l.bf16 %v6729
  %v7780 = vunpack.c.h.bf16 %v6729
  %v7781 = vunpack.c.l.bf16 %v6730
  %v7782 = vunpack.c.h.bf16 %v6730
  %v7783 = vunpack.c.l.bf16 %v6731
  %v7784 = vunpack.c.h.bf16 %v6731
  %v7785 = vunpack.c.l.bf16 %v6732
  %v7786 = vunpack.c.h.bf16 %v6732
  %v7787 = vsel %vm1309, %v7723, 0.0
  %v7788 = vsel %vm1309, %v7725, 0.0
  %v7789 = vadd.f32 %v7787, %v7788
  %v7790 = vsel %vm1309, %v7727, 0.0
  %v7791 = vadd.f32 %v7789, %v7790
  %v7792 = vsel %vm1309, %v7729, 0.0
  %v7793 = vadd.f32 %v7791, %v7792
  %v7794 = vsel %vm1309, %v7731, 0.0
  %v7795 = vadd.f32 %v7793, %v7794
  %v7796 = vsel %vm1309, %v7733, 0.0
  %v7797 = vadd.f32 %v7795, %v7796
  %v7798 = vsel %vm1309, %v7735, 0.0
  %v7799 = vadd.f32 %v7797, %v7798
  %v7800 = vsel %vm1309, %v7737, 0.0
  %v7801 = vadd.f32 %v7799, %v7800
  %v7802 = vsel %vm1309, %v7739, 0.0
  %v7803 = vadd.f32 %v7801, %v7802
  %v7804 = vsel %vm1309, %v7741, 0.0
  %v7805 = vadd.f32 %v7803, %v7804
  %v7806 = vsel %vm1309, %v7743, 0.0
  %v7807 = vadd.f32 %v7805, %v7806
  %v7808 = vsel %vm1309, %v7745, 0.0
  %v7809 = vadd.f32 %v7807, %v7808
  %v7810 = vsel %vm1309, %v7747, 0.0
  %v7811 = vadd.f32 %v7809, %v7810
  %v7812 = vsel %vm1309, %v7749, 0.0
  %v7813 = vadd.f32 %v7811, %v7812
  %v7814 = vsel %vm1309, %v7751, 0.0
  %v7815 = vadd.f32 %v7813, %v7814
  %v7816 = vsel %vm1309, %v7753, 0.0
  %v7817 = vadd.f32 %v7815, %v7816
  %v7818 = vsel %vm1309, %v7724, 0.0
  %v7819 = vsel %vm1309, %v7726, 0.0
  %v7820 = vadd.f32 %v7818, %v7819
  %v7821 = vsel %vm1309, %v7728, 0.0
  %v7822 = vadd.f32 %v7820, %v7821
  %v7823 = vsel %vm1309, %v7730, 0.0
  %v7824 = vadd.f32 %v7822, %v7823
  %v7825 = vsel %vm1309, %v7732, 0.0
  %v7826 = vadd.f32 %v7824, %v7825
  %v7827 = vsel %vm1309, %v7734, 0.0
  %v7828 = vadd.f32 %v7826, %v7827
  %v7829 = vsel %vm1309, %v7736, 0.0
  %v7830 = vadd.f32 %v7828, %v7829
  %v7831 = vsel %vm1309, %v7738, 0.0
  %v7832 = vadd.f32 %v7830, %v7831
  %v7833 = vsel %vm1309, %v7740, 0.0
  %v7834 = vadd.f32 %v7832, %v7833
  %v7835 = vsel %vm1309, %v7742, 0.0
  %v7836 = vadd.f32 %v7834, %v7835
  %v7837 = vsel %vm1309, %v7744, 0.0
  %v7838 = vadd.f32 %v7836, %v7837
  %v7839 = vsel %vm1309, %v7746, 0.0
  %v7840 = vadd.f32 %v7838, %v7839
  %v7841 = vsel %vm1309, %v7748, 0.0
  %v7842 = vadd.f32 %v7840, %v7841
  %v7843 = vsel %vm1309, %v7750, 0.0
  %v7844 = vadd.f32 %v7842, %v7843
  %v7845 = vsel %vm1309, %v7752, 0.0
  %v7846 = vadd.f32 %v7844, %v7845
  %v7847 = vsel %vm1309, %v7754, 0.0
  %v7848 = vadd.f32 %v7846, %v7847
  %v7849 = vsel %vm1309, %v7755, 0.0
  %v7850 = vsel %vm1309, %v7757, 0.0
  %v7851 = vadd.f32 %v7849, %v7850
  %v7852 = vsel %vm1309, %v7759, 0.0
  %v7853 = vadd.f32 %v7851, %v7852
  %v7854 = vsel %vm1309, %v7761, 0.0
  %v7855 = vadd.f32 %v7853, %v7854
  %v7856 = vsel %vm1309, %v7763, 0.0
  %v7857 = vadd.f32 %v7855, %v7856
  %v7858 = vsel %vm1309, %v7765, 0.0
  %v7859 = vadd.f32 %v7857, %v7858
  %v7860 = vsel %vm1309, %v7767, 0.0
  %v7861 = vadd.f32 %v7859, %v7860
  %v7862 = vsel %vm1309, %v7769, 0.0
  %v7863 = vadd.f32 %v7861, %v7862
  %v7864 = vsel %vm1309, %v7771, 0.0
  %v7865 = vadd.f32 %v7863, %v7864
  %v7866 = vsel %vm1309, %v7773, 0.0
  %v7867 = vadd.f32 %v7865, %v7866
  %v7868 = vsel %vm1309, %v7775, 0.0
  %v7869 = vadd.f32 %v7867, %v7868
  %v7870 = vsel %vm1309, %v7777, 0.0
  %v7871 = vadd.f32 %v7869, %v7870
  %v7872 = vsel %vm1309, %v7779, 0.0
  %v7873 = vadd.f32 %v7871, %v7872
  %v7874 = vsel %vm1309, %v7781, 0.0
  %v7875 = vadd.f32 %v7873, %v7874
  %v7876 = vsel %vm1309, %v7783, 0.0
  %v7877 = vadd.f32 %v7875, %v7876
  %v7878 = vsel %vm1309, %v7785, 0.0
  %v7879 = vadd.f32 %v7877, %v7878
  %v7880 = vsel %vm1309, %v7756, 0.0
  %v7881 = vsel %vm1309, %v7758, 0.0
  %v7882 = vadd.f32 %v7880, %v7881
  %v7883 = vsel %vm1309, %v7760, 0.0
  %v7884 = vadd.f32 %v7882, %v7883
  %v7885 = vsel %vm1309, %v7762, 0.0
  %v7886 = vadd.f32 %v7884, %v7885
  %v7887 = vsel %vm1309, %v7764, 0.0
  %v7888 = vadd.f32 %v7886, %v7887
  %v7889 = vsel %vm1309, %v7766, 0.0
  %v7890 = vadd.f32 %v7888, %v7889
  %v7891 = vsel %vm1309, %v7768, 0.0
  %v7892 = vadd.f32 %v7890, %v7891
  %v7893 = vsel %vm1309, %v7770, 0.0
  %v7894 = vadd.f32 %v7892, %v7893
  %v7895 = vsel %vm1309, %v7772, 0.0
  %v7896 = vadd.f32 %v7894, %v7895
  %v7897 = vsel %vm1309, %v7774, 0.0
  %v7898 = vadd.f32 %v7896, %v7897
  %v7899 = vsel %vm1309, %v7776, 0.0
  %v7900 = vadd.f32 %v7898, %v7899
  %v7901 = vsel %vm1309, %v7778, 0.0
  %v7902 = vadd.f32 %v7900, %v7901
  %v7903 = vsel %vm1309, %v7780, 0.0
  %v7904 = vadd.f32 %v7902, %v7903
  %v7905 = vsel %vm1309, %v7782, 0.0
  %v7906 = vadd.f32 %v7904, %v7905
  %v7907 = vsel %vm1309, %v7784, 0.0
  %v7908 = vadd.f32 %v7906, %v7907
  %v7909 = vsel %vm1309, %v7786, 0.0
  %v7910 = vadd.f32 %v7908, %v7909
  %v7911 = vsel %vm1309, %v7817, 0.0
  %v7912 = vsel %vm1309, %v7879, 0.0
  %v7913 = vadd.f32 %v7911, %v7912
  %v7914 = vsel %vm1309, %v7848, 0.0
  %v7915 = vsel %vm1309, %v7910, 0.0
  %v7916 = vadd.f32 %v7914, %v7915
  %v7917 = vmul.f32 %v7723, %v7723
  %v7918 = vmul.f32 %v7724, %v7724
  %v7919 = vmul.f32 %v7725, %v7725
  %v7920 = vmul.f32 %v7726, %v7726
  %v7921 = vmul.f32 %v7727, %v7727
  %v7922 = vmul.f32 %v7728, %v7728
  %v7923 = vmul.f32 %v7729, %v7729
  %v7924 = vmul.f32 %v7730, %v7730
  %v7925 = vmul.f32 %v7731, %v7731
  %v7926 = vmul.f32 %v7732, %v7732
  %v7927 = vmul.f32 %v7733, %v7733
  %v7928 = vmul.f32 %v7734, %v7734
  %v7929 = vmul.f32 %v7735, %v7735
  %v7930 = vmul.f32 %v7736, %v7736
  %v7931 = vmul.f32 %v7737, %v7737
  %v7932 = vmul.f32 %v7738, %v7738
  %v7933 = vmul.f32 %v7739, %v7739
  %v7934 = vmul.f32 %v7740, %v7740
  %v7935 = vmul.f32 %v7741, %v7741
  %v7936 = vmul.f32 %v7742, %v7742
  %v7937 = vmul.f32 %v7743, %v7743
  %v7938 = vmul.f32 %v7744, %v7744
  %v7939 = vmul.f32 %v7745, %v7745
  %v7940 = vmul.f32 %v7746, %v7746
  %v7941 = vmul.f32 %v7747, %v7747
  %v7942 = vmul.f32 %v7748, %v7748
  %v7943 = vmul.f32 %v7749, %v7749
  %v7944 = vmul.f32 %v7750, %v7750
  %v7945 = vmul.f32 %v7751, %v7751
  %v7946 = vmul.f32 %v7752, %v7752
  %v7947 = vmul.f32 %v7753, %v7753
  %v7948 = vmul.f32 %v7754, %v7754
  %v7949 = vmul.f32 %v7755, %v7755
  %v7950 = vmul.f32 %v7756, %v7756
  %v7951 = vmul.f32 %v7757, %v7757
  %v7952 = vmul.f32 %v7758, %v7758
  %v7953 = vmul.f32 %v7759, %v7759
  %v7954 = vmul.f32 %v7760, %v7760
  %v7955 = vmul.f32 %v7761, %v7761
  %v7956 = vmul.f32 %v7762, %v7762
  %v7957 = vmul.f32 %v7763, %v7763
  %v7958 = vmul.f32 %v7764, %v7764
  %v7959 = vmul.f32 %v7765, %v7765
  %v7960 = vmul.f32 %v7766, %v7766
  %v7961 = vmul.f32 %v7767, %v7767
  %v7962 = vmul.f32 %v7768, %v7768
  %v7963 = vmul.f32 %v7769, %v7769
  %v7964 = vmul.f32 %v7770, %v7770
  %v7965 = vmul.f32 %v7771, %v7771
  %v7966 = vmul.f32 %v7772, %v7772
  %v7967 = vmul.f32 %v7773, %v7773
  %v7968 = vmul.f32 %v7774, %v7774
  %v7969 = vmul.f32 %v7775, %v7775
  %v7970 = vmul.f32 %v7776, %v7776
  %v7971 = vmul.f32 %v7777, %v7777
  %v7972 = vmul.f32 %v7778, %v7778
  %v7973 = vmul.f32 %v7779, %v7779
  %v7974 = vmul.f32 %v7780, %v7780
  %v7975 = vmul.f32 %v7781, %v7781
  %v7976 = vmul.f32 %v7782, %v7782
  %v7977 = vmul.f32 %v7783, %v7783
  %v7978 = vmul.f32 %v7784, %v7784
  %v7979 = vmul.f32 %v7785, %v7785
  %v7980 = vmul.f32 %v7786, %v7786
  %v7981 = vsel %vm1309, %v7917, 0.0
  %v7982 = vsel %vm1309, %v7919, 0.0
  %v7983 = vadd.f32 %v7981, %v7982
  %v7984 = vsel %vm1309, %v7921, 0.0
  %v7985 = vadd.f32 %v7983, %v7984
  %v7986 = vsel %vm1309, %v7923, 0.0
  %v7987 = vadd.f32 %v7985, %v7986
  %v7988 = vsel %vm1309, %v7925, 0.0
  %v7989 = vadd.f32 %v7987, %v7988
  %v7990 = vsel %vm1309, %v7927, 0.0
  %v7991 = vadd.f32 %v7989, %v7990
  %v7992 = vsel %vm1309, %v7929, 0.0
  %v7993 = vadd.f32 %v7991, %v7992
  %v7994 = vsel %vm1309, %v7931, 0.0
  %v7995 = vadd.f32 %v7993, %v7994
  %v7996 = vsel %vm1309, %v7933, 0.0
  %v7997 = vadd.f32 %v7995, %v7996
  %v7998 = vsel %vm1309, %v7935, 0.0
  %v7999 = vadd.f32 %v7997, %v7998
  %v8000 = vsel %vm1309, %v7937, 0.0
  %v8001 = vadd.f32 %v7999, %v8000
  %v8002 = vsel %vm1309, %v7939, 0.0
  %v8003 = vadd.f32 %v8001, %v8002
  %v8004 = vsel %vm1309, %v7941, 0.0
  %v8005 = vadd.f32 %v8003, %v8004
  %v8006 = vsel %vm1309, %v7943, 0.0
  %v8007 = vadd.f32 %v8005, %v8006
  %v8008 = vsel %vm1309, %v7945, 0.0
  %v8009 = vadd.f32 %v8007, %v8008
  %v8010 = vsel %vm1309, %v7947, 0.0
  %v8011 = vadd.f32 %v8009, %v8010
  %v8012 = vsel %vm1309, %v7918, 0.0
  %v8013 = vsel %vm1309, %v7920, 0.0
  %v8014 = vadd.f32 %v8012, %v8013
  %v8015 = vsel %vm1309, %v7922, 0.0
  %v8016 = vadd.f32 %v8014, %v8015
  %v8017 = vsel %vm1309, %v7924, 0.0
  %v8018 = vadd.f32 %v8016, %v8017
  %v8019 = vsel %vm1309, %v7926, 0.0
  %v8020 = vadd.f32 %v8018, %v8019
  %v8021 = vsel %vm1309, %v7928, 0.0
  %v8022 = vadd.f32 %v8020, %v8021
  %v8023 = vsel %vm1309, %v7930, 0.0
  %v8024 = vadd.f32 %v8022, %v8023
  %v8025 = vsel %vm1309, %v7932, 0.0
  %v8026 = vadd.f32 %v8024, %v8025
  %v8027 = vsel %vm1309, %v7934, 0.0
  %v8028 = vadd.f32 %v8026, %v8027
  %v8029 = vsel %vm1309, %v7936, 0.0
  %v8030 = vadd.f32 %v8028, %v8029
  %v8031 = vsel %vm1309, %v7938, 0.0
  %v8032 = vadd.f32 %v8030, %v8031
  %v8033 = vsel %vm1309, %v7940, 0.0
  %v8034 = vadd.f32 %v8032, %v8033
  %v8035 = vsel %vm1309, %v7942, 0.0
  %v8036 = vadd.f32 %v8034, %v8035
  %v8037 = vsel %vm1309, %v7944, 0.0
  %v8038 = vadd.f32 %v8036, %v8037
  %v8039 = vsel %vm1309, %v7946, 0.0
  %v8040 = vadd.f32 %v8038, %v8039
  %v8041 = vsel %vm1309, %v7948, 0.0
  %v8042 = vadd.f32 %v8040, %v8041
  %v8043 = vsel %vm1309, %v7949, 0.0
  %v8044 = vsel %vm1309, %v7951, 0.0
  %v8045 = vadd.f32 %v8043, %v8044
  %v8046 = vsel %vm1309, %v7953, 0.0
  %v8047 = vadd.f32 %v8045, %v8046
  %v8048 = vsel %vm1309, %v7955, 0.0
  %v8049 = vadd.f32 %v8047, %v8048
  %v8050 = vsel %vm1309, %v7957, 0.0
  %v8051 = vadd.f32 %v8049, %v8050
  %v8052 = vsel %vm1309, %v7959, 0.0
  %v8053 = vadd.f32 %v8051, %v8052
  %v8054 = vsel %vm1309, %v7961, 0.0
  %v8055 = vadd.f32 %v8053, %v8054
  %v8056 = vsel %vm1309, %v7963, 0.0
  %v8057 = vadd.f32 %v8055, %v8056
  %v8058 = vsel %vm1309, %v7965, 0.0
  %v8059 = vadd.f32 %v8057, %v8058
  %v8060 = vsel %vm1309, %v7967, 0.0
  %v8061 = vadd.f32 %v8059, %v8060
  %v8062 = vsel %vm1309, %v7969, 0.0
  %v8063 = vadd.f32 %v8061, %v8062
  %v8064 = vsel %vm1309, %v7971, 0.0
  %v8065 = vadd.f32 %v8063, %v8064
  %v8066 = vsel %vm1309, %v7973, 0.0
  %v8067 = vadd.f32 %v8065, %v8066
  %v8068 = vsel %vm1309, %v7975, 0.0
  %v8069 = vadd.f32 %v8067, %v8068
  %v8070 = vsel %vm1309, %v7977, 0.0
  %v8071 = vadd.f32 %v8069, %v8070
  %v8072 = vsel %vm1309, %v7979, 0.0
  %v8073 = vadd.f32 %v8071, %v8072
  %v8074 = vsel %vm1309, %v7950, 0.0
  %v8075 = vsel %vm1309, %v7952, 0.0
  %v8076 = vadd.f32 %v8074, %v8075
  %v8077 = vsel %vm1309, %v7954, 0.0
  %v8078 = vadd.f32 %v8076, %v8077
  %v8079 = vsel %vm1309, %v7956, 0.0
  %v8080 = vadd.f32 %v8078, %v8079
  %v8081 = vsel %vm1309, %v7958, 0.0
  %v8082 = vadd.f32 %v8080, %v8081
  %v8083 = vsel %vm1309, %v7960, 0.0
  %v8084 = vadd.f32 %v8082, %v8083
  %v8085 = vsel %vm1309, %v7962, 0.0
  %v8086 = vadd.f32 %v8084, %v8085
  %v8087 = vsel %vm1309, %v7964, 0.0
  %v8088 = vadd.f32 %v8086, %v8087
  %v8089 = vsel %vm1309, %v7966, 0.0
  %v8090 = vadd.f32 %v8088, %v8089
  %v8091 = vsel %vm1309, %v7968, 0.0
  %v8092 = vadd.f32 %v8090, %v8091
  %v8093 = vsel %vm1309, %v7970, 0.0
  %v8094 = vadd.f32 %v8092, %v8093
  %v8095 = vsel %vm1309, %v7972, 0.0
  %v8096 = vadd.f32 %v8094, %v8095
  %v8097 = vsel %vm1309, %v7974, 0.0
  %v8098 = vadd.f32 %v8096, %v8097
  %v8099 = vsel %vm1309, %v7976, 0.0
  %v8100 = vadd.f32 %v8098, %v8099
  %v8101 = vsel %vm1309, %v7978, 0.0
  %v8102 = vadd.f32 %v8100, %v8101
  %v8103 = vsel %vm1309, %v7980, 0.0
  %v8104 = vadd.f32 %v8102, %v8103
  %v8105 = vsel %vm1309, %v8011, 0.0
  %v8106 = vsel %vm1309, %v8073, 0.0
  %v8107 = vadd.f32 %v8105, %v8106
  %v8108 = vsel %vm1309, %v8042, 0.0
  %v8109 = vsel %vm1309, %v8104, 0.0
  %v8110 = vadd.f32 %v8108, %v8109
  %v8111 = vsel %vm1309, %v7913, 0.0
  %v8112 = vsel %vm1309, %v7916, 0.0
  %v8113 = vadd.f32 %v8111, %v8112
  %v8114 = vrot.slane %v8113, 4
  %v8115 = vadd.f32 %v8113, %v8114
  %v8116 = vrot.slane %v8115, 2
  %v8117 = vadd.f32 %v8115, %v8116
  %v8118 = vrot.slane %v8117, 1
  %v8119 = vadd.f32 %v8117, %v8118
  %v8120 = vsel %vm1309, %v8107, 0.0
  %v8121 = vsel %vm1309, %v8110, 0.0
  %v8122 = vadd.f32 %v8120, %v8121
  %v8123 = vrot.slane %v8122, 4
  %v8124 = vadd.f32 %v8122, %v8123
  %v8125 = vrot.slane %v8124, 2
  %v8126 = vadd.f32 %v8124, %v8125
  %v8127 = vrot.slane %v8126, 1
  %v8128 = vadd.f32 %v8126, %v8127
  %v8131 = vsel %vm7367, %v8128, %v8119
  %v8133 = vadd.f32 %v7722, %v8131
  %8134 = vst.msk [vmem:[%s2 + $0x4] sm:$0x3] %vm7371, %v8133
  %s8135 = sadd.s32 0, 0
  %s8136 = smul.u32 2, %s8135
  %p8137 = scmp.lt.s32.totalorder %s8136, 1
  %s8138 = scalar_select %p8137, %s8136, 1
  %s8139 = smul.addr %s8138, 32
  %s8140 = smul.addr %s8139, 4
  %s8141 = scalar_lea.vmem %s3, %s8140
  // Predicated region
  $region14: #{mixed_op_forward.2} parent=0 // pred_check
    _
  $region15: #{mixed_op_forward.2} parent=0 // pred_check_branch
    %8143 = sbr.rel (0) target = $region17
  $region16: #{mixed_op_forward.2} parent=0 // pred_region
    _
  $region17: #{mixed_op_forward.2} parent=0 // pred_fallthru
    _
  // Predicated region
  $region18: #{mixed_op_forward.2} parent=0 // pred_check
    _
  $region19: #{mixed_op_forward.2} parent=0 // pred_check_branch
    %8145 = sbr.rel (0) target = $region21
  $region20: #{mixed_op_forward.2} parent=0 // pred_region
    %s8146 = sadd.s32 0, 0
    %s8147 = smul.u32 2, %s8146
  $region21: #{mixed_op_forward.2} parent=0 // pred_fallthru
    _
  // Predicated region
  $region22: #{mixed_op_forward.2} parent=0 // pred_check
    _
  $region23: #{mixed_op_forward.2} parent=0 // pred_check_branch
    %8149 = sbr.rel (0) target = $region25
  $region24: #{mixed_op_forward.2} parent=0 // pred_region
    _
  $region25: #{mixed_op_forward.2} parent=0 // pred_fallthru
    _
  // Predicated region
  $region26: #{mixed_op_forward.2} parent=0 // pred_check
    _
  $region27: #{mixed_op_forward.2} parent=0 // pred_check_branch
    %8151 = sbr.rel (0) target = $region29
  $region28: #{mixed_op_forward.2} parent=0 // pred_region
    %s8152 = sadd.s32 0, 0
    %s8153 = smul.u32 2, %s8152
    %p8154 = scmp.lt.s32.totalorder %s8153, 1
    %s8155 = scalar_select %p8154, %s8153, 1
    %s8156 = smul.addr %s8155, 32
    %s8157 = smul.addr %s8156, 4
    %s8158 = scalar_lea.vmem %s3, %s8157
  $region29: #{mixed_op_forward.2} parent=0 // pred_fallthru
    _

</llo_original>
